<compile_context>
chip_gen: v5e
topology: v5e:2x2
jax: 0.10.0
libtpu: 0.0.40
codegen_flags: <defaults>
</compile_context>

<pallas_src>
import functools

import jax
import jax.numpy as jnp
from jax.experimental import pallas as pl
from jax.experimental.pallas import tpu as pltpu

BN_EPS = 1e-5
VMEM_LIMIT = 48 * 1024 * 1024   # conservative: fits v7x 64 MiB/TC; fine on v5e/v6e


# ---------------------------------------------------------------------------
# Fused BasicBlock kernel (shifted-window convs, all in VMEM)
# ---------------------------------------------------------------------------
def _window(xp_ref, di, dj, oh, ow, stride):
    """Shifted (and, for stride>1, strided) (oh, ow, C) window of the padded input."""
    if stride == 1:
        return xp_ref[0, pl.ds(di, oh), pl.ds(dj, ow), :]
    # TODO(synk): stride > 1 uses strided pl.ds; semantically correct but not
    #             exercised by the tests below.
    return xp_ref[0, pl.ds(di, oh, stride), pl.ds(dj, ow, stride), :]


def _basic_block_kernel(*refs, stride, is_shortcut, oh, ow, cin, cmid, cout):
    if is_shortcut:
        (xp_ref, w1_ref, b1_ref, w2_ref, b2_ref,
         ws_ref, bs_ref, o_ref, zp_ref) = refs
    else:
        (xp_ref, w1_ref, b1_ref, w2_ref, b2_ref, o_ref, zp_ref) = refs

    m = oh * ow

    # ---- conv_bn1: 3x3 / stride / pad=1 as 9 shifted-window MXU matmuls ----
    acc1 = jnp.zeros((m, cmid), jnp.float32)
    for di in range(3):
        for dj in range(3):
            win = _window(xp_ref, di, dj, oh, ow, stride)          # (oh,ow,cin) bf16
            acc1 = acc1 + jnp.dot(win.reshape(m, cin), w1_ref[3 * di + dj],
                                  preferred_element_type=jnp.float32)
    z = jnp.maximum(acc1 + b1_ref[...], 0.0).astype(jnp.bfloat16)

    # Intermediate z stays in VMEM: zero-haloed scratch feeding the second conv.
    zp_ref[...] = jnp.zeros_like(zp_ref)
    zp_ref[pl.ds(1, oh), pl.ds(1, ow), :] = z.reshape(oh, ow, cmid)

    # ---- conv_bn2: 3x3 / stride=1 / pad=1 ----------------------------------
    acc2 = jnp.zeros((m, cout), jnp.float32)
    for di in range(3):
        for dj in range(3):
            win = zp_ref[pl.ds(di, oh), pl.ds(dj, ow), :]          # (oh,ow,cmid) bf16
            acc2 = acc2 + jnp.dot(win.reshape(m, cmid), w2_ref[3 * di + dj],
                                  preferred_element_type=jnp.float32)
    acc2 = acc2 + b2_ref[...]

    # ---- residual (fused): 1x1 projection conv_bn OR bf16 identity ---------
    xs = _window(xp_ref, 1, 1, oh, ow, stride)   # center taps == unpadded input
    if is_shortcut:
        acc2 = (acc2
                + jnp.dot(xs.reshape(m, cin), ws_ref[0],
                          preferred_element_type=jnp.float32)
                + bs_ref[...])
    else:
        acc2 = acc2 + xs.reshape(m, cout).astype(jnp.float32)      # bf16 residual

    o_ref[0] = jnp.maximum(acc2, 0.0).reshape(oh, ow, cout).astype(o_ref.dtype)


# ---------------------------------------------------------------------------
# JAX glue: BN folding + pallas_call wrapper
# ---------------------------------------------------------------------------
def _fold_conv_bn(w_oihw, gamma, beta, rmean, rvar, eps=BN_EPS):
    """Fold eval-mode BN scale into the conv weights.

    Returns (kh*kw, cin, cout) bf16 weights and a (1, cout) f32 bias row."""
    cout, cin, kh, kw = w_oihw.shape
    scale = gamma / jnp.sqrt(rvar + eps)
    bias = (beta - rmean * scale).astype(jnp.float32)
    w = jnp.transpose(w_oihw, (2, 3, 1, 0)).reshape(kh * kw, cin, cout)
    w = w * scale[None, None, :]
    return w.astype(jnp.bfloat16), bias[None, :]


@functools.partial(jax.jit, static_argnames=("stride", "is_shortcut"))
def basic_block_forward(x_nchw, params, stride, is_shortcut):
    N, Cin, H, W = x_nchw.shape
    Cmid = params["w1"].shape[0]
    Cout = params["w2"].shape[0]
    OH = (H + 2 - 3) // stride + 1
    OW = (W + 2 - 3) // stride + 1

    if not is_shortcut:
        assert stride == 1 and Cin == Cout, "identity shortcut needs stride=1, Cin==Cout"

    # NHWC bf16 with a 1-pixel spatial halo; this is the ONLY activation read.
    x_nhwc = jnp.transpose(x_nchw, (0, 2, 3, 1)).astype(jnp.bfloat16)
    xp = jnp.pad(x_nhwc, ((0, 0), (1, 1), (1, 1), (0, 0)))

    w1, b1 = _fold_conv_bn(params["w1"], params["g1"], params["be1"],
                           params["rm1"], params["rv1"])
    w2, b2 = _fold_conv_bn(params["w2"], params["g2"], params["be2"],
                           params["rm2"], params["rv2"])

    def full(arr):
        # whole array VMEM-resident across the grid (constant index_map -> no refetch)
        return pl.BlockSpec(arr.shape, lambda n, nd=arr.ndim: (0,) * nd)

    in_arrays = [xp, w1, b1, w2, b2]
    in_specs = [
        pl.BlockSpec((1, H + 2, W + 2, Cin), lambda n: (n, 0, 0, 0)),
        full(w1), full(b1), full(w2), full(b2),
    ]
    flops = 2 * N * OH * OW * (9 * Cin * Cmid + 9 * Cmid * Cout)
    if is_shortcut:
        ws, bs = _fold_conv_bn(params["ws"], params["gs"], params["bes"],
                               params["rms"], params["rvs"])
        in_arrays += [ws, bs]
        in_specs += [full(ws), full(bs)]
        flops += 2 * N * OH * OW * Cin * Cout

    bytes_accessed = sum(int(a.size) * int(a.dtype.itemsize) for a in in_arrays)
    bytes_accessed += N * OH * OW * Cout * 4

    kernel = functools.partial(
        _basic_block_kernel, stride=stride, is_shortcut=is_shortcut,
        oh=OH, ow=OW, cin=Cin, cmid=Cmid, cout=Cout)

    out = pl.pallas_call(
        kernel,
        out_shape=jax.ShapeDtypeStruct((N, OH, OW, Cout), jnp.float32),
        grid=(N,),
        in_specs=in_specs,
        out_specs=pl.BlockSpec((1, OH, OW, Cout), lambda n: (n, 0, 0, 0)),
        scratch_shapes=[pltpu.VMEM((OH + 2, OW + 2, Cmid), jnp.bfloat16)],
        compiler_params=pltpu.CompilerParams(
            dimension_semantics=("parallel",),
            vmem_limit_bytes=VMEM_LIMIT,
        ),
        cost_estimate=pl.CostEstimate(
            flops=int(flops), transcendentals=0, bytes_accessed=int(bytes_accessed)),
    )(*in_arrays)

    return jnp.transpose(out, (0, 3, 1, 2))            # NHWC -> NCHW (PyTorch layout)


# ---------------------------------------------------------------------------
# Pure-JAX f32 reference (mirrors PyTorch eval-mode forward) for verification
# ---------------------------------------------------------------------------
def conv_bn_ref(x_nchw, w, gamma, beta, rm, rv, stride, padding, eps=BN_EPS):
    y = jax.lax.conv_general_dilated(
        x_nchw, w, (stride, stride),
        [(padding, padding), (padding, padding)],
        dimension_numbers=("NCHW", "OIHW", "NCHW"))
    scale = gamma / jnp.sqrt(rv + eps)
    bias = beta - rm * scale
    return y * scale[None, :, None, None] + bias[None, :, None, None]


def basic_block_ref(x, p, stride, is_shortcut):
    z = jax.nn.relu(conv_bn_ref(x, p["w1"], p["g1"], p["be1"], p["rm1"], p["rv1"], stride, 1))
    z = conv_bn_ref(z, p["w2"], p["g2"], p["be2"], p["rm2"], p["rv2"], 1, 1)
    if is_shortcut:
        x = conv_bn_ref(x, p["ws"], p["gs"], p["bes"], p["rms"], p["rvs"], stride, 0)
    return jax.nn.relu(z + x)


# ---------------------------------------------------------------------------
# Main
# ---------------------------------------------------------------------------
if __name__ == "__main__":
    # BasicBlock(in_channel=4, channel=8, out_channel=8, stride=1, is_shortcut=True)
    N, Cin, H, W = 2, 4, 16, 16
    Cmid, Cout = 8, 8
    stride = 1

    key = jax.random.PRNGKey(0)
    ks = jax.random.split(key, 16)

    def bn_params(k, c):
        k1, k2, k3, k4 = jax.random.split(k, 4)
        return (1.0 + 0.1 * jax.random.normal(k1, (c,), jnp.float32),   # gamma
                0.1 * jax.random.normal(k2, (c,), jnp.float32),         # beta
                0.1 * jax.random.normal(k3, (c,), jnp.float32),         # running_mean
                1.0 + 0.5 * jax.nn.softplus(jax.random.normal(k4, (c,), jnp.float32)))  # running_var

    g1, be1, rm1, rv1 = bn_params(ks[0], Cmid)
    g2, be2, rm2, rv2 = bn_params(ks[1], Cout)
    gs, bes, rms, rvs = bn_params(ks[2], Cout)

    params = {
        "w1": 0.1 * jax.random.normal(ks[3], (Cmid, Cin, 3, 3), jnp.float32),
        "g1": g1, "be1": be1, "rm1": rm1, "rv1": rv1,
        "w2": 0.1 * jax.random.normal(ks[4], (Cout, Cmid, 3, 3), jnp.float32),
        "g2": g2, "be2": be2, "rm2": rm2, "rv2": rv2,
        "ws": 0.1 * jax.random.normal(ks[5], (Cout, Cin, 1, 1), jnp.float32),
        "gs": gs, "bes": bes, "rms": rms, "rvs": rvs,
    }
    x = jax.random.normal(ks[6], (N, Cin, H, W), jnp.float32)

    def check(out, ref, name):
        assert out.shape == ref.shape, (out.shape, ref.shape)
        err = float(jnp.max(jnp.abs(out - ref)))
        denom = max(float(jnp.max(jnp.abs(ref))), 1.0)
        # bf16 MXU operands / bf16 intermediate z vs an f32 reference.
        assert err <= 5e-2 * denom, f"{name}: max abs err {err} (ref max {denom})"

    # ---- variant 1: projection shortcut (is_shortcut=True, fused 1x1 conv) ----
    out = jax.block_until_ready(
        basic_block_forward(x, params, stride=stride, is_shortcut=True))
    ref = jax.block_until_ready(basic_block_ref(x, params, stride, True))
    assert out.shape == (N, Cout, H // stride, W // stride)
    check(out, ref, "shortcut-conv")

    # ---- variant 2: identity shortcut (is_shortcut=False; Cin == Cout) ----
    params_id = dict(params)
    params_id["w1"] = 0.1 * jax.random.normal(ks[7], (Cmid, Cout, 3, 3), jnp.float32)
    x_id = jax.random.normal(ks[8], (N, Cout, H, W), jnp.float32)
    out_id = jax.block_until_ready(
        basic_block_forward(x_id, params_id, stride=1, is_shortcut=False))
    ref_id = jax.block_until_ready(basic_block_ref(x_id, params_id, 1, False))
    check(out_id, ref_id, "identity-shortcut")

    print("KERNEL_OK")
</pallas_src>

<mosaic_0001>
module attributes {stable_mosaic.version = 11 : i64} {
  func.func @_basic_block_kernel(%arg0: i32, %arg1: memref<1x18x18x4xbf16, #tpu.memory_space<vmem>>, %arg2: memref<9x4x8xbf16, #tpu.memory_space<vmem>>, %arg3: memref<1x8xf32, #tpu.memory_space<vmem>>, %arg4: memref<9x8x8xbf16, #tpu.memory_space<vmem>>, %arg5: memref<1x8xf32, #tpu.memory_space<vmem>>, %arg6: memref<1x4x8xbf16, #tpu.memory_space<vmem>>, %arg7: memref<1x8xf32, #tpu.memory_space<vmem>>, %arg8: memref<1x16x16x8xf32, #tpu.memory_space<vmem>>, %arg9: memref<18x18x8xbf16, #tpu.memory_space<vmem>>) attributes {dimension_semantics = [#tpu.dimension_semantics<parallel>], iteration_bounds = array<i64: 2>, scalar_prefetch = 0 : i64, scratch_operands = 1 : i64, tpu.core_type = #tpu.core_type<tc>, window_params = [{transform_indices = @transform_0, window_bounds = array<i64: 1, 18, 18, 4>}, {pipeline_mode = #tpu.pipeline_mode<synchronous>, transform_indices = @transform_1, window_bounds = array<i64: 9, 4, 8>}, {pipeline_mode = #tpu.pipeline_mode<synchronous>, transform_indices = @transform_2, window_bounds = array<i64: 1, 8>}, {pipeline_mode = #tpu.pipeline_mode<synchronous>, transform_indices = @transform_3, window_bounds = array<i64: 9, 8, 8>}, {pipeline_mode = #tpu.pipeline_mode<synchronous>, transform_indices = @transform_4, window_bounds = array<i64: 1, 8>}, {pipeline_mode = #tpu.pipeline_mode<synchronous>, transform_indices = @transform_5, window_bounds = array<i64: 1, 4, 8>}, {pipeline_mode = #tpu.pipeline_mode<synchronous>, transform_indices = @transform_6, window_bounds = array<i64: 1, 8>}, {transform_indices = @transform_7, window_bounds = array<i64: 1, 16, 16, 8>}]} {
    %cst = arith.constant 0.000000e+00 : f32
    %0 = vector.broadcast %cst : f32 to vector<256x8xf32>
    %c0 = arith.constant 0 : index
    %c0_0 = arith.constant 0 : index
    %c0_1 = arith.constant 0 : index
    %c0_2 = arith.constant 0 : index
    %1 = vector.load %arg1[%c0, %c0_0, %c0_1, %c0_2] : memref<1x18x18x4xbf16, #tpu.memory_space<vmem>>, vector<1x16x16x4xbf16>
    %2 = vector.shape_cast %1 : vector<1x16x16x4xbf16> to vector<16x16x4xbf16>
    %3 = vector.shape_cast %2 : vector<16x16x4xbf16> to vector<256x4xbf16>
    %c0_3 = arith.constant 0 : index
    %c0_4 = arith.constant 0 : index
    %c0_5 = arith.constant 0 : index
    %4 = vector.load %arg2[%c0_3, %c0_4, %c0_5] : memref<9x4x8xbf16, #tpu.memory_space<vmem>>, vector<1x4x8xbf16>
    %5 = vector.shape_cast %4 : vector<1x4x8xbf16> to vector<4x8xbf16>
    %cst_6 = arith.constant dense<0.000000e+00> : vector<256x8xf32>
    %6 = tpu.matmul %3, %5, %cst_6 {dimension_numbers = #tpu.dot_dimension_numbers<[1], [0], [0], [1], [0, 0, 1, 1], [], []>} : vector<256x4xbf16>, vector<4x8xbf16>, vector<256x8xf32> -> vector<256x8xf32>
    %7 = arith.addf %0, %6 : vector<256x8xf32>
    %c0_7 = arith.constant 0 : index
    %c0_8 = arith.constant 0 : index
    %c1 = arith.constant 1 : index
    %c0_9 = arith.constant 0 : index
    %8 = vector.load %arg1[%c0_7, %c0_8, %c1, %c0_9] : memref<1x18x18x4xbf16, #tpu.memory_space<vmem>>, vector<1x16x16x4xbf16>
    %9 = vector.shape_cast %8 : vector<1x16x16x4xbf16> to vector<16x16x4xbf16>
    %10 = vector.shape_cast %9 : vector<16x16x4xbf16> to vector<256x4xbf16>
    %c1_10 = arith.constant 1 : index
    %c0_11 = arith.constant 0 : index
    %c0_12 = arith.constant 0 : index
    %11 = vector.load %arg2[%c1_10, %c0_11, %c0_12] : memref<9x4x8xbf16, #tpu.memory_space<vmem>>, vector<1x4x8xbf16>
    %12 = vector.shape_cast %11 : vector<1x4x8xbf16> to vector<4x8xbf16>
    %cst_13 = arith.constant dense<0.000000e+00> : vector<256x8xf32>
    %13 = tpu.matmul %10, %12, %cst_13 {dimension_numbers = #tpu.dot_dimension_numbers<[1], [0], [0], [1], [0, 0, 1, 1], [], []>} : vector<256x4xbf16>, vector<4x8xbf16>, vector<256x8xf32> -> vector<256x8xf32>
    %14 = arith.addf %7, %13 : vector<256x8xf32>
    %c0_14 = arith.constant 0 : index
    %c0_15 = arith.constant 0 : index
    %c2 = arith.constant 2 : index
    %c0_16 = arith.constant 0 : index
    %15 = vector.load %arg1[%c0_14, %c0_15, %c2, %c0_16] : memref<1x18x18x4xbf16, #tpu.memory_space<vmem>>, vector<1x16x16x4xbf16>
    %16 = vector.shape_cast %15 : vector<1x16x16x4xbf16> to vector<16x16x4xbf16>
    %17 = vector.shape_cast %16 : vector<16x16x4xbf16> to vector<256x4xbf16>
    %c2_17 = arith.constant 2 : index
    %c0_18 = arith.constant 0 : index
    %c0_19 = arith.constant 0 : index
    %18 = vector.load %arg2[%c2_17, %c0_18, %c0_19] : memref<9x4x8xbf16, #tpu.memory_space<vmem>>, vector<1x4x8xbf16>
    %19 = vector.shape_cast %18 : vector<1x4x8xbf16> to vector<4x8xbf16>
    %cst_20 = arith.constant dense<0.000000e+00> : vector<256x8xf32>
    %20 = tpu.matmul %17, %19, %cst_20 {dimension_numbers = #tpu.dot_dimension_numbers<[1], [0], [0], [1], [0, 0, 1, 1], [], []>} : vector<256x4xbf16>, vector<4x8xbf16>, vector<256x8xf32> -> vector<256x8xf32>
    %21 = arith.addf %14, %20 : vector<256x8xf32>
    %c0_21 = arith.constant 0 : index
    %c1_22 = arith.constant 1 : index
    %c0_23 = arith.constant 0 : index
    %c0_24 = arith.constant 0 : index
    %22 = vector.load %arg1[%c0_21, %c1_22, %c0_23, %c0_24] : memref<1x18x18x4xbf16, #tpu.memory_space<vmem>>, vector<1x16x16x4xbf16>
    %23 = vector.shape_cast %22 : vector<1x16x16x4xbf16> to vector<16x16x4xbf16>
    %24 = vector.shape_cast %23 : vector<16x16x4xbf16> to vector<256x4xbf16>
    %c3 = arith.constant 3 : index
    %c0_25 = arith.constant 0 : index
    %c0_26 = arith.constant 0 : index
    %25 = vector.load %arg2[%c3, %c0_25, %c0_26] : memref<9x4x8xbf16, #tpu.memory_space<vmem>>, vector<1x4x8xbf16>
    %26 = vector.shape_cast %25 : vector<1x4x8xbf16> to vector<4x8xbf16>
    %cst_27 = arith.constant dense<0.000000e+00> : vector<256x8xf32>
    %27 = tpu.matmul %24, %26, %cst_27 {dimension_numbers = #tpu.dot_dimension_numbers<[1], [0], [0], [1], [0, 0, 1, 1], [], []>} : vector<256x4xbf16>, vector<4x8xbf16>, vector<256x8xf32> -> vector<256x8xf32>
    %28 = arith.addf %21, %27 : vector<256x8xf32>
    %c0_28 = arith.constant 0 : index
    %c1_29 = arith.constant 1 : index
    %c1_30 = arith.constant 1 : index
    %c0_31 = arith.constant 0 : index
    %29 = vector.load %arg1[%c0_28, %c1_29, %c1_30, %c0_31] : memref<1x18x18x4xbf16, #tpu.memory_space<vmem>>, vector<1x16x16x4xbf16>
    %30 = vector.shape_cast %29 : vector<1x16x16x4xbf16> to vector<16x16x4xbf16>
    %31 = vector.shape_cast %30 : vector<16x16x4xbf16> to vector<256x4xbf16>
    %c4 = arith.constant 4 : index
    %c0_32 = arith.constant 0 : index
    %c0_33 = arith.constant 0 : index
    %32 = vector.load %arg2[%c4, %c0_32, %c0_33] : memref<9x4x8xbf16, #tpu.memory_space<vmem>>, vector<1x4x8xbf16>
    %33 = vector.shape_cast %32 : vector<1x4x8xbf16> to vector<4x8xbf16>
    %cst_34 = arith.constant dense<0.000000e+00> : vector<256x8xf32>
    %34 = tpu.matmul %31, %33, %cst_34 {dimension_numbers = #tpu.dot_dimension_numbers<[1], [0], [0], [1], [0, 0, 1, 1], [], []>} : vector<256x4xbf16>, vector<4x8xbf16>, vector<256x8xf32> -> vector<256x8xf32>
    %35 = arith.addf %28, %34 : vector<256x8xf32>
    %c0_35 = arith.constant 0 : index
    %c1_36 = arith.constant 1 : index
    %c2_37 = arith.constant 2 : index
    %c0_38 = arith.constant 0 : index
    %36 = vector.load %arg1[%c0_35, %c1_36, %c2_37, %c0_38] : memref<1x18x18x4xbf16, #tpu.memory_space<vmem>>, vector<1x16x16x4xbf16>
    %37 = vector.shape_cast %36 : vector<1x16x16x4xbf16> to vector<16x16x4xbf16>
    %38 = vector.shape_cast %37 : vector<16x16x4xbf16> to vector<256x4xbf16>
    %c5 = arith.constant 5 : index
    %c0_39 = arith.constant 0 : index
    %c0_40 = arith.constant 0 : index
    %39 = vector.load %arg2[%c5, %c0_39, %c0_40] : memref<9x4x8xbf16, #tpu.memory_space<vmem>>, vector<1x4x8xbf16>
    %40 = vector.shape_cast %39 : vector<1x4x8xbf16> to vector<4x8xbf16>
    %cst_41 = arith.constant dense<0.000000e+00> : vector<256x8xf32>
    %41 = tpu.matmul %38, %40, %cst_41 {dimension_numbers = #tpu.dot_dimension_numbers<[1], [0], [0], [1], [0, 0, 1, 1], [], []>} : vector<256x4xbf16>, vector<4x8xbf16>, vector<256x8xf32> -> vector<256x8xf32>
    %42 = arith.addf %35, %41 : vector<256x8xf32>
    %c0_42 = arith.constant 0 : index
    %c2_43 = arith.constant 2 : index
    %c0_44 = arith.constant 0 : index
    %c0_45 = arith.constant 0 : index
    %43 = vector.load %arg1[%c0_42, %c2_43, %c0_44, %c0_45] : memref<1x18x18x4xbf16, #tpu.memory_space<vmem>>, vector<1x16x16x4xbf16>
    %44 = vector.shape_cast %43 : vector<1x16x16x4xbf16> to vector<16x16x4xbf16>
    %45 = vector.shape_cast %44 : vector<16x16x4xbf16> to vector<256x4xbf16>
    %c6 = arith.constant 6 : index
    %c0_46 = arith.constant 0 : index
    %c0_47 = arith.constant 0 : index
    %46 = vector.load %arg2[%c6, %c0_46, %c0_47] : memref<9x4x8xbf16, #tpu.memory_space<vmem>>, vector<1x4x8xbf16>
    %47 = vector.shape_cast %46 : vector<1x4x8xbf16> to vector<4x8xbf16>
    %cst_48 = arith.constant dense<0.000000e+00> : vector<256x8xf32>
    %48 = tpu.matmul %45, %47, %cst_48 {dimension_numbers = #tpu.dot_dimension_numbers<[1], [0], [0], [1], [0, 0, 1, 1], [], []>} : vector<256x4xbf16>, vector<4x8xbf16>, vector<256x8xf32> -> vector<256x8xf32>
    %49 = arith.addf %42, %48 : vector<256x8xf32>
    %c0_49 = arith.constant 0 : index
    %c2_50 = arith.constant 2 : index
    %c1_51 = arith.constant 1 : index
    %c0_52 = arith.constant 0 : index
    %50 = vector.load %arg1[%c0_49, %c2_50, %c1_51, %c0_52] : memref<1x18x18x4xbf16, #tpu.memory_space<vmem>>, vector<1x16x16x4xbf16>
    %51 = vector.shape_cast %50 : vector<1x16x16x4xbf16> to vector<16x16x4xbf16>
    %52 = vector.shape_cast %51 : vector<16x16x4xbf16> to vector<256x4xbf16>
    %c7 = arith.constant 7 : index
    %c0_53 = arith.constant 0 : index
    %c0_54 = arith.constant 0 : index
    %53 = vector.load %arg2[%c7, %c0_53, %c0_54] : memref<9x4x8xbf16, #tpu.memory_space<vmem>>, vector<1x4x8xbf16>
    %54 = vector.shape_cast %53 : vector<1x4x8xbf16> to vector<4x8xbf16>
    %cst_55 = arith.constant dense<0.000000e+00> : vector<256x8xf32>
    %55 = tpu.matmul %52, %54, %cst_55 {dimension_numbers = #tpu.dot_dimension_numbers<[1], [0], [0], [1], [0, 0, 1, 1], [], []>} : vector<256x4xbf16>, vector<4x8xbf16>, vector<256x8xf32> -> vector<256x8xf32>
    %56 = arith.addf %49, %55 : vector<256x8xf32>
    %c0_56 = arith.constant 0 : index
    %c2_57 = arith.constant 2 : index
    %c2_58 = arith.constant 2 : index
    %c0_59 = arith.constant 0 : index
    %57 = vector.load %arg1[%c0_56, %c2_57, %c2_58, %c0_59] : memref<1x18x18x4xbf16, #tpu.memory_space<vmem>>, vector<1x16x16x4xbf16>
    %58 = vector.shape_cast %57 : vector<1x16x16x4xbf16> to vector<16x16x4xbf16>
    %59 = vector.shape_cast %58 : vector<16x16x4xbf16> to vector<256x4xbf16>
    %c8 = arith.constant 8 : index
    %c0_60 = arith.constant 0 : index
    %c0_61 = arith.constant 0 : index
    %60 = vector.load %arg2[%c8, %c0_60, %c0_61] : memref<9x4x8xbf16, #tpu.memory_space<vmem>>, vector<1x4x8xbf16>
    %61 = vector.shape_cast %60 : vector<1x4x8xbf16> to vector<4x8xbf16>
    %cst_62 = arith.constant dense<0.000000e+00> : vector<256x8xf32>
    %62 = tpu.matmul %59, %61, %cst_62 {dimension_numbers = #tpu.dot_dimension_numbers<[1], [0], [0], [1], [0, 0, 1, 1], [], []>} : vector<256x4xbf16>, vector<4x8xbf16>, vector<256x8xf32> -> vector<256x8xf32>
    %63 = arith.addf %56, %62 : vector<256x8xf32>
    %c0_63 = arith.constant 0 : index
    %c0_64 = arith.constant 0 : index
    %64 = vector.load %arg3[%c0_63, %c0_64] : memref<1x8xf32, #tpu.memory_space<vmem>>, vector<1x8xf32>
    %65 = vector.broadcast %64 : vector<1x8xf32> to vector<256x8xf32>
    %66 = arith.addf %63, %65 : vector<256x8xf32>
    %cst_65 = arith.constant 0.000000e+00 : f32
    %67 = vector.broadcast %cst_65 : f32 to vector<256x8xf32>
    %68 = arith.maximumf %66, %67 : vector<256x8xf32>
    %69 = arith.truncf %68 : vector<256x8xf32> to vector<256x8xbf16>
    %cst_66 = arith.constant 0.000000e+00 : bf16
    %70 = vector.broadcast %cst_66 : bf16 to vector<18x18x8xbf16>
    %c0_67 = arith.constant 0 : index
    %c0_68 = arith.constant 0 : index
    %c0_69 = arith.constant 0 : index
    %71 = vector.load %arg9[%c0_67, %c0_68, %c0_69] : memref<18x18x8xbf16, #tpu.memory_space<vmem>>, vector<18x18x8xbf16>
    tpu.vector_store %arg9[%c0_67, %c0_68, %c0_69], %70 {strides = array<i32>} : memref<18x18x8xbf16, #tpu.memory_space<vmem>>, vector<18x18x8xbf16>,
    %72 = vector.shape_cast %69 : vector<256x8xbf16> to vector<16x16x8xbf16>
    %c1_70 = arith.constant 1 : index
    %c1_71 = arith.constant 1 : index
    %c0_72 = arith.constant 0 : index
    %73 = vector.load %arg9[%c1_70, %c1_71, %c0_72] : memref<18x18x8xbf16, #tpu.memory_space<vmem>>, vector<16x16x8xbf16>
    tpu.vector_store %arg9[%c1_70, %c1_71, %c0_72], %72 {strides = array<i32>} : memref<18x18x8xbf16, #tpu.memory_space<vmem>>, vector<16x16x8xbf16>,
    %cst_73 = arith.constant 0.000000e+00 : f32
    %74 = vector.broadcast %cst_73 : f32 to vector<256x8xf32>
    %c0_74 = arith.constant 0 : index
    %c0_75 = arith.constant 0 : index
    %c0_76 = arith.constant 0 : index
    %75 = vector.load %arg9[%c0_74, %c0_75, %c0_76] : memref<18x18x8xbf16, #tpu.memory_space<vmem>>, vector<16x16x8xbf16>
    %76 = vector.shape_cast %75 : vector<16x16x8xbf16> to vector<256x8xbf16>
    %c0_77 = arith.constant 0 : index
    %c0_78 = arith.constant 0 : index
    %c0_79 = arith.constant 0 : index
    %77 = vector.load %arg4[%c0_77, %c0_78, %c0_79] : memref<9x8x8xbf16, #tpu.memory_space<vmem>>, vector<1x8x8xbf16>
    %78 = vector.shape_cast %77 : vector<1x8x8xbf16> to vector<8x8xbf16>
    %cst_80 = arith.constant dense<0.000000e+00> : vector<256x8xf32>
    %79 = tpu.matmul %76, %78, %cst_80 {dimension_numbers = #tpu.dot_dimension_numbers<[1], [0], [0], [1], [0, 0, 1, 1], [], []>} : vector<256x8xbf16>, vector<8x8xbf16>, vector<256x8xf32> -> vector<256x8xf32>
    %80 = arith.addf %74, %79 : vector<256x8xf32>
    %c0_81 = arith.constant 0 : index
    %c1_82 = arith.constant 1 : index
    %c0_83 = arith.constant 0 : index
    %81 = vector.load %arg9[%c0_81, %c1_82, %c0_83] : memref<18x18x8xbf16, #tpu.memory_space<vmem>>, vector<16x16x8xbf16>
    %82 = vector.shape_cast %81 : vector<16x16x8xbf16> to vector<256x8xbf16>
    %c1_84 = arith.constant 1 : index
    %c0_85 = arith.constant 0 : index
    %c0_86 = arith.constant 0 : index
    %83 = vector.load %arg4[%c1_84, %c0_85, %c0_86] : memref<9x8x8xbf16, #tpu.memory_space<vmem>>, vector<1x8x8xbf16>
    %84 = vector.shape_cast %83 : vector<1x8x8xbf16> to vector<8x8xbf16>
    %cst_87 = arith.constant dense<0.000000e+00> : vector<256x8xf32>
    %85 = tpu.matmul %82, %84, %cst_87 {dimension_numbers = #tpu.dot_dimension_numbers<[1], [0], [0], [1], [0, 0, 1, 1], [], []>} : vector<256x8xbf16>, vector<8x8xbf16>, vector<256x8xf32> -> vector<256x8xf32>
    %86 = arith.addf %80, %85 : vector<256x8xf32>
    %c0_88 = arith.constant 0 : index
    %c2_89 = arith.constant 2 : index
    %c0_90 = arith.constant 0 : index
    %87 = vector.load %arg9[%c0_88, %c2_89, %c0_90] : memref<18x18x8xbf16, #tpu.memory_space<vmem>>, vector<16x16x8xbf16>
    %88 = vector.shape_cast %87 : vector<16x16x8xbf16> to vector<256x8xbf16>
    %c2_91 = arith.constant 2 : index
    %c0_92 = arith.constant 0 : index
    %c0_93 = arith.constant 0 : index
    %89 = vector.load %arg4[%c2_91, %c0_92, %c0_93] : memref<9x8x8xbf16, #tpu.memory_space<vmem>>, vector<1x8x8xbf16>
    %90 = vector.shape_cast %89 : vector<1x8x8xbf16> to vector<8x8xbf16>
    %cst_94 = arith.constant dense<0.000000e+00> : vector<256x8xf32>
    %91 = tpu.matmul %88, %90, %cst_94 {dimension_numbers = #tpu.dot_dimension_numbers<[1], [0], [0], [1], [0, 0, 1, 1], [], []>} : vector<256x8xbf16>, vector<8x8xbf16>, vector<256x8xf32> -> vector<256x8xf32>
    %92 = arith.addf %86, %91 : vector<256x8xf32>
    %c1_95 = arith.constant 1 : index
    %c0_96 = arith.constant 0 : index
    %c0_97 = arith.constant 0 : index
    %93 = vector.load %arg9[%c1_95, %c0_96, %c0_97] : memref<18x18x8xbf16, #tpu.memory_space<vmem>>, vector<16x16x8xbf16>
    %94 = vector.shape_cast %93 : vector<16x16x8xbf16> to vector<256x8xbf16>
    %c3_98 = arith.constant 3 : index
    %c0_99 = arith.constant 0 : index
    %c0_100 = arith.constant 0 : index
    %95 = vector.load %arg4[%c3_98, %c0_99, %c0_100] : memref<9x8x8xbf16, #tpu.memory_space<vmem>>, vector<1x8x8xbf16>
    %96 = vector.shape_cast %95 : vector<1x8x8xbf16> to vector<8x8xbf16>
    %cst_101 = arith.constant dense<0.000000e+00> : vector<256x8xf32>
    %97 = tpu.matmul %94, %96, %cst_101 {dimension_numbers = #tpu.dot_dimension_numbers<[1], [0], [0], [1], [0, 0, 1, 1], [], []>} : vector<256x8xbf16>, vector<8x8xbf16>, vector<256x8xf32> -> vector<256x8xf32>
    %98 = arith.addf %92, %97 : vector<256x8xf32>
    %c1_102 = arith.constant 1 : index
    %c1_103 = arith.constant 1 : index
    %c0_104 = arith.constant 0 : index
    %99 = vector.load %arg9[%c1_102, %c1_103, %c0_104] : memref<18x18x8xbf16, #tpu.memory_space<vmem>>, vector<16x16x8xbf16>
    %100 = vector.shape_cast %99 : vector<16x16x8xbf16> to vector<256x8xbf16>
    %c4_105 = arith.constant 4 : index
    %c0_106 = arith.constant 0 : index
    %c0_107 = arith.constant 0 : index
    %101 = vector.load %arg4[%c4_105, %c0_106, %c0_107] : memref<9x8x8xbf16, #tpu.memory_space<vmem>>, vector<1x8x8xbf16>
    %102 = vector.shape_cast %101 : vector<1x8x8xbf16> to vector<8x8xbf16>
    %cst_108 = arith.constant dense<0.000000e+00> : vector<256x8xf32>
    %103 = tpu.matmul %100, %102, %cst_108 {dimension_numbers = #tpu.dot_dimension_numbers<[1], [0], [0], [1], [0, 0, 1, 1], [], []>} : vector<256x8xbf16>, vector<8x8xbf16>, vector<256x8xf32> -> vector<256x8xf32>
    %104 = arith.addf %98, %103 : vector<256x8xf32>
    %c1_109 = arith.constant 1 : index
    %c2_110 = arith.constant 2 : index
    %c0_111 = arith.constant 0 : index
    %105 = vector.load %arg9[%c1_109, %c2_110, %c0_111] : memref<18x18x8xbf16, #tpu.memory_space<vmem>>, vector<16x16x8xbf16>
    %106 = vector.shape_cast %105 : vector<16x16x8xbf16> to vector<256x8xbf16>
    %c5_112 = arith.constant 5 : index
    %c0_113 = arith.constant 0 : index
    %c0_114 = arith.constant 0 : index
    %107 = vector.load %arg4[%c5_112, %c0_113, %c0_114] : memref<9x8x8xbf16, #tpu.memory_space<vmem>>, vector<1x8x8xbf16>
    %108 = vector.shape_cast %107 : vector<1x8x8xbf16> to vector<8x8xbf16>
    %cst_115 = arith.constant dense<0.000000e+00> : vector<256x8xf32>
    %109 = tpu.matmul %106, %108, %cst_115 {dimension_numbers = #tpu.dot_dimension_numbers<[1], [0], [0], [1], [0, 0, 1, 1], [], []>} : vector<256x8xbf16>, vector<8x8xbf16>, vector<256x8xf32> -> vector<256x8xf32>
    %110 = arith.addf %104, %109 : vector<256x8xf32>
    %c2_116 = arith.constant 2 : index
    %c0_117 = arith.constant 0 : index
    %c0_118 = arith.constant 0 : index
    %111 = vector.load %arg9[%c2_116, %c0_117, %c0_118] : memref<18x18x8xbf16, #tpu.memory_space<vmem>>, vector<16x16x8xbf16>
    %112 = vector.shape_cast %111 : vector<16x16x8xbf16> to vector<256x8xbf16>
    %c6_119 = arith.constant 6 : index
    %c0_120 = arith.constant 0 : index
    %c0_121 = arith.constant 0 : index
    %113 = vector.load %arg4[%c6_119, %c0_120, %c0_121] : memref<9x8x8xbf16, #tpu.memory_space<vmem>>, vector<1x8x8xbf16>
    %114 = vector.shape_cast %113 : vector<1x8x8xbf16> to vector<8x8xbf16>
    %cst_122 = arith.constant dense<0.000000e+00> : vector<256x8xf32>
    %115 = tpu.matmul %112, %114, %cst_122 {dimension_numbers = #tpu.dot_dimension_numbers<[1], [0], [0], [1], [0, 0, 1, 1], [], []>} : vector<256x8xbf16>, vector<8x8xbf16>, vector<256x8xf32> -> vector<256x8xf32>
    %116 = arith.addf %110, %115 : vector<256x8xf32>
    %c2_123 = arith.constant 2 : index
    %c1_124 = arith.constant 1 : index
    %c0_125 = arith.constant 0 : index
    %117 = vector.load %arg9[%c2_123, %c1_124, %c0_125] : memref<18x18x8xbf16, #tpu.memory_space<vmem>>, vector<16x16x8xbf16>
    %118 = vector.shape_cast %117 : vector<16x16x8xbf16> to vector<256x8xbf16>
    %c7_126 = arith.constant 7 : index
    %c0_127 = arith.constant 0 : index
    %c0_128 = arith.constant 0 : index
    %119 = vector.load %arg4[%c7_126, %c0_127, %c0_128] : memref<9x8x8xbf16, #tpu.memory_space<vmem>>, vector<1x8x8xbf16>
    %120 = vector.shape_cast %119 : vector<1x8x8xbf16> to vector<8x8xbf16>
    %cst_129 = arith.constant dense<0.000000e+00> : vector<256x8xf32>
    %121 = tpu.matmul %118, %120, %cst_129 {dimension_numbers = #tpu.dot_dimension_numbers<[1], [0], [0], [1], [0, 0, 1, 1], [], []>} : vector<256x8xbf16>, vector<8x8xbf16>, vector<256x8xf32> -> vector<256x8xf32>
    %122 = arith.addf %116, %121 : vector<256x8xf32>
    %c2_130 = arith.constant 2 : index
    %c2_131 = arith.constant 2 : index
    %c0_132 = arith.constant 0 : index
    %123 = vector.load %arg9[%c2_130, %c2_131, %c0_132] : memref<18x18x8xbf16, #tpu.memory_space<vmem>>, vector<16x16x8xbf16>
    %124 = vector.shape_cast %123 : vector<16x16x8xbf16> to vector<256x8xbf16>
    %c8_133 = arith.constant 8 : index
    %c0_134 = arith.constant 0 : index
    %c0_135 = arith.constant 0 : index
    %125 = vector.load %arg4[%c8_133, %c0_134, %c0_135] : memref<9x8x8xbf16, #tpu.memory_space<vmem>>, vector<1x8x8xbf16>
    %126 = vector.shape_cast %125 : vector<1x8x8xbf16> to vector<8x8xbf16>
    %cst_136 = arith.constant dense<0.000000e+00> : vector<256x8xf32>
    %127 = tpu.matmul %124, %126, %cst_136 {dimension_numbers = #tpu.dot_dimension_numbers<[1], [0], [0], [1], [0, 0, 1, 1], [], []>} : vector<256x8xbf16>, vector<8x8xbf16>, vector<256x8xf32> -> vector<256x8xf32>
    %128 = arith.addf %122, %127 : vector<256x8xf32>
    %c0_137 = arith.constant 0 : index
    %c0_138 = arith.constant 0 : index
    %129 = vector.load %arg5[%c0_137, %c0_138] : memref<1x8xf32, #tpu.memory_space<vmem>>, vector<1x8xf32>
    %130 = vector.broadcast %129 : vector<1x8xf32> to vector<256x8xf32>
    %131 = arith.addf %128, %130 : vector<256x8xf32>
    %c0_139 = arith.constant 0 : index
    %c1_140 = arith.constant 1 : index
    %c1_141 = arith.constant 1 : index
    %c0_142 = arith.constant 0 : index
    %132 = vector.load %arg1[%c0_139, %c1_140, %c1_141, %c0_142] : memref<1x18x18x4xbf16, #tpu.memory_space<vmem>>, vector<1x16x16x4xbf16>
    %133 = vector.shape_cast %132 : vector<1x16x16x4xbf16> to vector<16x16x4xbf16>
    %134 = vector.shape_cast %133 : vector<16x16x4xbf16> to vector<256x4xbf16>
    %c0_143 = arith.constant 0 : index
    %c0_144 = arith.constant 0 : index
    %c0_145 = arith.constant 0 : index
    %135 = vector.load %arg6[%c0_143, %c0_144, %c0_145] : memref<1x4x8xbf16, #tpu.memory_space<vmem>>, vector<1x4x8xbf16>
    %136 = vector.shape_cast %135 : vector<1x4x8xbf16> to vector<4x8xbf16>
    %cst_146 = arith.constant dense<0.000000e+00> : vector<256x8xf32>
    %137 = tpu.matmul %134, %136, %cst_146 {dimension_numbers = #tpu.dot_dimension_numbers<[1], [0], [0], [1], [0, 0, 1, 1], [], []>} : vector<256x4xbf16>, vector<4x8xbf16>, vector<256x8xf32> -> vector<256x8xf32>
    %138 = arith.addf %131, %137 : vector<256x8xf32>
    %c0_147 = arith.constant 0 : index
    %c0_148 = arith.constant 0 : index
    %139 = vector.load %arg7[%c0_147, %c0_148] : memref<1x8xf32, #tpu.memory_space<vmem>>, vector<1x8xf32>
    %140 = vector.broadcast %139 : vector<1x8xf32> to vector<256x8xf32>
    %141 = arith.addf %138, %140 : vector<256x8xf32>
    %cst_149 = arith.constant 0.000000e+00 : f32
    %142 = vector.broadcast %cst_149 : f32 to vector<256x8xf32>
    %143 = arith.maximumf %141, %142 : vector<256x8xf32>
    %144 = vector.shape_cast %143 : vector<256x8xf32> to vector<16x16x8xf32>
    %c0_150 = arith.constant 0 : index
    %c0_151 = arith.constant 0 : index
    %c0_152 = arith.constant 0 : index
    %c0_153 = arith.constant 0 : index
    %145 = vector.load %arg8[%c0_150, %c0_151, %c0_152, %c0_153] : memref<1x16x16x8xf32, #tpu.memory_space<vmem>>, vector<1x16x16x8xf32>
    %146 = vector.shape_cast %145 : vector<1x16x16x8xf32> to vector<16x16x8xf32>
    %147 = vector.shape_cast %144 : vector<16x16x8xf32> to vector<1x16x16x8xf32>
    tpu.vector_store %arg8[%c0_150, %c0_151, %c0_152, %c0_153], %147 {strides = array<i32>} : memref<1x16x16x8xf32, #tpu.memory_space<vmem>>, vector<1x16x16x8xf32>,
    return
  }
  func.func @transform_0(%arg0: i32) -> (i32, i32, i32, i32) {
    %c0_i32 = arith.constant 0 : i32
    %c0_i32_0 = arith.constant 0 : i32
    %c0_i32_1 = arith.constant 0 : i32
    %c0_i32_2 = arith.constant 0 : i32
    return %arg0, %c0_i32, %c0_i32_0, %c0_i32_1 : i32, i32, i32, i32
  }
  func.func @transform_1(%arg0: i32) -> (i32, i32, i32) {
    %c0_i32 = arith.constant 0 : i32
    %c0_i32_0 = arith.constant 0 : i32
    %c0_i32_1 = arith.constant 0 : i32
    %c0_i32_2 = arith.constant 0 : i32
    return %c0_i32, %c0_i32_0, %c0_i32_1 : i32, i32, i32
  }
  func.func @transform_2(%arg0: i32) -> (i32, i32) {
    %c0_i32 = arith.constant 0 : i32
    %c0_i32_0 = arith.constant 0 : i32
    %c0_i32_1 = arith.constant 0 : i32
    return %c0_i32, %c0_i32_0 : i32, i32
  }
  func.func @transform_3(%arg0: i32) -> (i32, i32, i32) {
    %c0_i32 = arith.constant 0 : i32
    %c0_i32_0 = arith.constant 0 : i32
    %c0_i32_1 = arith.constant 0 : i32
    %c0_i32_2 = arith.constant 0 : i32
    return %c0_i32, %c0_i32_0, %c0_i32_1 : i32, i32, i32
  }
  func.func @transform_4(%arg0: i32) -> (i32, i32) {
    %c0_i32 = arith.constant 0 : i32
    %c0_i32_0 = arith.constant 0 : i32
    %c0_i32_1 = arith.constant 0 : i32
    return %c0_i32, %c0_i32_0 : i32, i32
  }
  func.func @transform_5(%arg0: i32) -> (i32, i32, i32) {
    %c0_i32 = arith.constant 0 : i32
    %c0_i32_0 = arith.constant 0 : i32
    %c0_i32_1 = arith.constant 0 : i32
    %c0_i32_2 = arith.constant 0 : i32
    return %c0_i32, %c0_i32_0, %c0_i32_1 : i32, i32, i32
  }
  func.func @transform_6(%arg0: i32) -> (i32, i32) {
    %c0_i32 = arith.constant 0 : i32
    %c0_i32_0 = arith.constant 0 : i32
    %c0_i32_1 = arith.constant 0 : i32
    return %c0_i32, %c0_i32_0 : i32, i32
  }
  func.func @transform_7(%arg0: i32) -> (i32, i32, i32, i32) {
    %c0_i32 = arith.constant 0 : i32
    %c0_i32_0 = arith.constant 0 : i32
    %c0_i32_1 = arith.constant 0 : i32
    %c0_i32_2 = arith.constant 0 : i32
    return %arg0, %c0_i32, %c0_i32_0, %c0_i32_1 : i32, i32, i32, i32
  }
}

</mosaic_0001>

<llo_original>
// kernel: basic_block_forward.1
$region0: #{basic_block_forward.1}
  #allocation0 [shape = 'u32[]', space=smem, size = 0x4, offset = 0x4, fixed_abs, tag = 'smem constant byte address 0x4 - core index']
  #allocation1 [shape = 'u32[72,128]{1,0:T(1,128)}', space=vmem, size = 0x9000, scoped, tag = 'internal scratch']
  #allocation2 [shape = 'bf16[18,18,8]{2,1,0:T(8,128)(2,1)}', space=vmem, size = 0x1b000, scoped, tag = 'scratch operand']
  %s0 = inlined_call_operand.vmem [shape: bf16[2,18,18,4], index: 0, kind: input, shape index: {}]
  %s1 = inlined_call_operand.vmem [shape: bf16[9,4,8], index: 1, kind: input, shape index: {}]
  %s2 = inlined_call_operand.vmem [shape: f32[1,8], index: 2, kind: input, shape index: {}]
  %s3 = inlined_call_operand.vmem [shape: bf16[9,8,8], index: 3, kind: input, shape index: {}]
  %s4 = inlined_call_operand.vmem [shape: f32[1,8], index: 4, kind: input, shape index: {}]
  %s5 = inlined_call_operand.vmem [shape: bf16[1,4,8], index: 5, kind: input, shape index: {}]
  %s6 = inlined_call_operand.vmem [shape: f32[1,8], index: 6, kind: input, shape index: {}]
  %s7 = inlined_call_operand.vmem [shape: f32[2,16,16,8], index: 7, kind: output, shape index: {}]
  %s8 = sld [smem:[#allocation0]]
  $region61: #{basic_block_forward.1} parent=0
    _
  %s10 = ssub.s32 1, %s8
  %s11 = scalar_select 0, %s10, %s8
  loop: start=0, step=1, limit=4
  $region2: #{basic_block_forward.1} parent=0 // loop_pre_header
    _
  $region3: #{basic_block_forward.1} parent=0 // loop_header
    %s13 = sphi 0, %s17
    %p14 = scmp.ge.s32.totalorder %s13, 4
    %s23 = sphi 0, %s25
    %s26 = sphi 0, %s23
    %s27 = sphi 0, %s26
    %s43 = sphi 0, %s27
    %s47 = sphi 0, %s47
    %s49 = sphi 0, %s47
    %s50 = sphi 0, %s49
    %s64 = sphi 0, %s50
    %s68 = sphi 0, %s68
    %s70 = sphi 0, %s68
    %s71 = sphi 0, %s70
    %s85 = sphi 0, %s71
    %s89 = sphi 0, %s89
    %s91 = sphi 0, %s89
    %s92 = sphi 0, %s91
    %s106 = sphi 0, %s92
    %s110 = sphi 0, %s110
    %s112 = sphi 0, %s110
    %s113 = sphi 0, %s112
    %s127 = sphi 0, %s113
    %s131 = sphi 0, %s131
    %s133 = sphi 0, %s131
    %s134 = sphi 0, %s133
    %s148 = sphi 0, %s134
    %s152 = sphi 0, %s152
    %s154 = sphi 0, %s152
    %s155 = sphi 0, %s154
    %s169 = sphi 0, %s155
    %s175 = sphi 0, %s177
    %s178 = sphi 0, %s175
    %s179 = sphi 0, %s178
    %s195 = sphi 0, %s179
  $region4: #{basic_block_forward.1} parent=0 // loop_header_branch
    %16 = sbr.rel (%p14) target = $region8
  $region5: #{basic_block_forward.1} parent=0 // loop_body
    %s18 = ssub.s32 %s13, 1
    %s19 = ssub.s32 %s13, 2
    %s20 = sadd.s32 %s13, 1
    %s21 = ssub.s32 %s13, %s20
    %p22 = scmp.eq.s32.totalorder %s21, 0
    %s24 = sadd.s32 %s23, 1
    %s25 = scalar_select %p22, %s23, %s24
    %p28 = pneg %p22
    %p29 = scmp.eq.s32.totalorder %s13, 1
    %p30 = por %p28, %p29
    %p31 = scmp.ne.s32.totalorder %s23, %s26
    %p32 = scmp.eq.s32.totalorder %s13, 0
    %p33 = por %p31, %p32
    %p34 = scmp.ne.s32.totalorder %s23, %s26
    %p35 = scmp.eq.s32.totalorder %s18, 1
    %p36 = por %p34, %p35
    %p37 = scmp.ne.s32.totalorder %s26, %s27
    %p38 = scmp.eq.s32.totalorder %s18, 0
    %p39 = por %p37, %p38
    %p40 = scmp.ne.s32.totalorder %s26, %s27
    %p41 = scmp.eq.s32.totalorder %s19, 1
    %p42 = por %p40, %p41
    %p44 = scmp.ne.s32.totalorder %s27, %s43
    %p45 = scmp.eq.s32.totalorder %s19, 0
    %p46 = por %p44, %p45
    %s48 = sadd.s32 %s47, 1
    %p51 = scmp.eq.s32.totalorder %s13, 1
    %p52 = scmp.ne.s32.totalorder %s47, %s49
    %p53 = scmp.eq.s32.totalorder %s13, 0
    %p54 = por %p52, %p53
    %p55 = scmp.ne.s32.totalorder %s47, %s49
    %p56 = scmp.eq.s32.totalorder %s18, 1
    %p57 = por %p55, %p56
    %p58 = scmp.ne.s32.totalorder %s49, %s50
    %p59 = scmp.eq.s32.totalorder %s18, 0
    %p60 = por %p58, %p59
    %p61 = scmp.ne.s32.totalorder %s49, %s50
    %p62 = scmp.eq.s32.totalorder %s19, 1
    %p63 = por %p61, %p62
    %p65 = scmp.ne.s32.totalorder %s50, %s64
    %p66 = scmp.eq.s32.totalorder %s19, 0
    %p67 = por %p65, %p66
    %s69 = sadd.s32 %s68, 1
    %p72 = scmp.eq.s32.totalorder %s13, 1
    %p73 = scmp.ne.s32.totalorder %s68, %s70
    %p74 = scmp.eq.s32.totalorder %s13, 0
    %p75 = por %p73, %p74
    %p76 = scmp.ne.s32.totalorder %s68, %s70
    %p77 = scmp.eq.s32.totalorder %s18, 1
    %p78 = por %p76, %p77
    %p79 = scmp.ne.s32.totalorder %s70, %s71
    %p80 = scmp.eq.s32.totalorder %s18, 0
    %p81 = por %p79, %p80
    %p82 = scmp.ne.s32.totalorder %s70, %s71
    %p83 = scmp.eq.s32.totalorder %s19, 1
    %p84 = por %p82, %p83
    %p86 = scmp.ne.s32.totalorder %s71, %s85
    %p87 = scmp.eq.s32.totalorder %s19, 0
    %p88 = por %p86, %p87
    %s90 = sadd.s32 %s89, 1
    %p93 = scmp.eq.s32.totalorder %s13, 1
    %p94 = scmp.ne.s32.totalorder %s89, %s91
    %p95 = scmp.eq.s32.totalorder %s13, 0
    %p96 = por %p94, %p95
    %p97 = scmp.ne.s32.totalorder %s89, %s91
    %p98 = scmp.eq.s32.totalorder %s18, 1
    %p99 = por %p97, %p98
    %p100 = scmp.ne.s32.totalorder %s91, %s92
    %p101 = scmp.eq.s32.totalorder %s18, 0
    %p102 = por %p100, %p101
    %p103 = scmp.ne.s32.totalorder %s91, %s92
    %p104 = scmp.eq.s32.totalorder %s19, 1
    %p105 = por %p103, %p104
    %p107 = scmp.ne.s32.totalorder %s92, %s106
    %p108 = scmp.eq.s32.totalorder %s19, 0
    %p109 = por %p107, %p108
    %s111 = sadd.s32 %s110, 1
    %p114 = scmp.eq.s32.totalorder %s13, 1
    %p115 = scmp.ne.s32.totalorder %s110, %s112
    %p116 = scmp.eq.s32.totalorder %s13, 0
    %p117 = por %p115, %p116
    %p118 = scmp.ne.s32.totalorder %s110, %s112
    %p119 = scmp.eq.s32.totalorder %s18, 1
    %p120 = por %p118, %p119
    %p121 = scmp.ne.s32.totalorder %s112, %s113
    %p122 = scmp.eq.s32.totalorder %s18, 0
    %p123 = por %p121, %p122
    %p124 = scmp.ne.s32.totalorder %s112, %s113
    %p125 = scmp.eq.s32.totalorder %s19, 1
    %p126 = por %p124, %p125
    %p128 = scmp.ne.s32.totalorder %s113, %s127
    %p129 = scmp.eq.s32.totalorder %s19, 0
    %p130 = por %p128, %p129
    %s132 = sadd.s32 %s131, 1
    %p135 = scmp.eq.s32.totalorder %s13, 1
    %p136 = scmp.ne.s32.totalorder %s131, %s133
    %p137 = scmp.eq.s32.totalorder %s13, 0
    %p138 = por %p136, %p137
    %p139 = scmp.ne.s32.totalorder %s131, %s133
    %p140 = scmp.eq.s32.totalorder %s18, 1
    %p141 = por %p139, %p140
    %p142 = scmp.ne.s32.totalorder %s133, %s134
    %p143 = scmp.eq.s32.totalorder %s18, 0
    %p144 = por %p142, %p143
    %p145 = scmp.ne.s32.totalorder %s133, %s134
    %p146 = scmp.eq.s32.totalorder %s19, 1
    %p147 = por %p145, %p146
    %p149 = scmp.ne.s32.totalorder %s134, %s148
    %p150 = scmp.eq.s32.totalorder %s19, 0
    %p151 = por %p149, %p150
    %s153 = sadd.s32 %s152, 1
    %p156 = scmp.eq.s32.totalorder %s13, 1
    %p157 = scmp.ne.s32.totalorder %s152, %s154
    %p158 = scmp.eq.s32.totalorder %s13, 0
    %p159 = por %p157, %p158
    %p160 = scmp.ne.s32.totalorder %s152, %s154
    %p161 = scmp.eq.s32.totalorder %s18, 1
    %p162 = por %p160, %p161
    %p163 = scmp.ne.s32.totalorder %s154, %s155
    %p164 = scmp.eq.s32.totalorder %s18, 0
    %p165 = por %p163, %p164
    %p166 = scmp.ne.s32.totalorder %s154, %s155
    %p167 = scmp.eq.s32.totalorder %s19, 1
    %p168 = por %p166, %p167
    %p170 = scmp.ne.s32.totalorder %s155, %s169
    %p171 = scmp.eq.s32.totalorder %s19, 0
    %p172 = por %p170, %p171
    %s173 = ssub.s32 %s13, %s20
    %p174 = scmp.eq.s32.totalorder %s173, 0
    %s176 = sadd.s32 %s175, 1
    %s177 = scalar_select %p174, %s175, %s176
    %p180 = pneg %p174
    %p181 = scmp.eq.s32.totalorder %s13, 1
    %p182 = por %p180, %p181
    %p183 = scmp.ne.s32.totalorder %s175, %s178
    %p184 = scmp.eq.s32.totalorder %s13, 0
    %p185 = por %p183, %p184
    %p186 = scmp.ne.s32.totalorder %s175, %s178
    %p187 = scmp.eq.s32.totalorder %s18, 1
    %p188 = por %p186, %p187
    %p189 = scmp.ne.s32.totalorder %s178, %s179
    %p190 = scmp.eq.s32.totalorder %s18, 0
    %p191 = por %p189, %p190
    %p192 = scmp.ne.s32.totalorder %s178, %s179
    %p193 = scmp.eq.s32.totalorder %s19, 1
    %p194 = por %p192, %p193
    %p196 = scmp.ne.s32.totalorder %s179, %s195
    %p197 = scmp.eq.s32.totalorder %s19, 0
    %p198 = por %p196, %p197
    %p199 = scmp.le.s32.totalorder 1, %s13
    %p200 = scmp.lt.s32.totalorder %s13, 3
    %p201 = pnand %p199, %p200
    %p202 = pneg %p201
    // Predicated region
    $region9: #{basic_block_forward.1} parent=5 // pred_check
      _
    $region10: #{basic_block_forward.1} parent=5 // pred_check_branch
      %204 = sbr.rel (%p201) target = $region12
    $region11: #{basic_block_forward.1} parent=5 // pred_region
      %s205 = ssub.s32 %s13, 1
      // Predicated region
      $region13: #{basic_block_forward.1} parent=11 // pred_check
        %p206 = pneg %p60
      $region14: #{basic_block_forward.1} parent=11 // pred_check_branch
        %208 = sbr.rel (%p206) target = $region16
      $region15: #{basic_block_forward.1} parent=11 // pred_region
        _
      $region16: #{basic_block_forward.1} parent=11 // pred_fallthru
        _
      // Predicated region
      $region17: #{basic_block_forward.1} parent=11 // pred_check
        %p209 = pneg %p81
      $region18: #{basic_block_forward.1} parent=11 // pred_check_branch
        %211 = sbr.rel (%p209) target = $region20
      $region19: #{basic_block_forward.1} parent=11 // pred_region
        _
      $region20: #{basic_block_forward.1} parent=11 // pred_fallthru
        _
      // Predicated region
      $region21: #{basic_block_forward.1} parent=11 // pred_check
        %p212 = pneg %p102
      $region22: #{basic_block_forward.1} parent=11 // pred_check_branch
        %214 = sbr.rel (%p212) target = $region24
      $region23: #{basic_block_forward.1} parent=11 // pred_region
        _
      $region24: #{basic_block_forward.1} parent=11 // pred_fallthru
        _
      // Predicated region
      $region25: #{basic_block_forward.1} parent=11 // pred_check
        %p215 = pneg %p123
      $region26: #{basic_block_forward.1} parent=11 // pred_check_branch
        %217 = sbr.rel (%p215) target = $region28
      $region27: #{basic_block_forward.1} parent=11 // pred_region
        _
      $region28: #{basic_block_forward.1} parent=11 // pred_fallthru
        _
      // Predicated region
      $region29: #{basic_block_forward.1} parent=11 // pred_check
        %p218 = pneg %p144
      $region30: #{basic_block_forward.1} parent=11 // pred_check_branch
        %220 = sbr.rel (%p218) target = $region32
      $region31: #{basic_block_forward.1} parent=11 // pred_region
        _
      $region32: #{basic_block_forward.1} parent=11 // pred_fallthru
        _
      // Predicated region
      $region33: #{basic_block_forward.1} parent=11 // pred_check
        %p221 = pneg %p165
      $region34: #{basic_block_forward.1} parent=11 // pred_check_branch
        %223 = sbr.rel (%p221) target = $region36
      $region35: #{basic_block_forward.1} parent=11 // pred_region
        _
      $region36: #{basic_block_forward.1} parent=11 // pred_fallthru
        _
    $region12: #{basic_block_forward.1} parent=5 // pred_fallthru
      _
    %p224 = scmp.lt.s32.totalorder %s13, 2
    // Predicated region
    $region37: #{basic_block_forward.1} parent=5 // pred_check
      %p225 = pneg %p224
    $region38: #{basic_block_forward.1} parent=5 // pred_check_branch
      %227 = sbr.rel (%p225) target = $region40
    $region39: #{basic_block_forward.1} parent=5 // pred_region
      // Predicated region
      $region41: #{basic_block_forward.1} parent=39 // pred_check
        %p228 = pneg %p33
      $region42: #{basic_block_forward.1} parent=39 // pred_check_branch
        %230 = sbr.rel (%p228) target = $region44
      $region43: #{basic_block_forward.1} parent=39 // pred_region
        %p231 = scmp.lt.s32.totalorder %s13, 1
        %s232 = scalar_select %p231, %s13, 1
        %s233 = smul.addr %s232, 54
        %s234 = smul.addr %s233, 4
        %s235 = scalar_lea.vmem %s0, %s234
      $region44: #{basic_block_forward.1} parent=39 // pred_fallthru
        _
    $region40: #{basic_block_forward.1} parent=5 // pred_fallthru
      _
    %p236 = scmp.le.s32.totalorder 1, %s13
    %p237 = scmp.lt.s32.totalorder %s13, 3
    %p238 = pnand %p236, %p237
    %p239 = pneg %p238
    // Predicated region
    $region45: #{basic_block_forward.1} parent=5 // pred_check
      _
    $region46: #{basic_block_forward.1} parent=5 // pred_check_branch
      %241 = sbr.rel (%p238) target = $region48
    $region47: #{basic_block_forward.1} parent=5 // pred_region
      %s242 = ssub.s32 %s13, 1
      %p243 = scmp.lt.s32.totalorder %s18, 1
      %s244 = scalar_select %p243, %s18, 1
      %s245 = smul.addr %s244, 54
      %s246 = smul.addr %s245, 4
      %s247 = scalar_lea.vmem %s0, %s246
      %p248 = pneg %p39
      %p249 = pneg %p36
      %p250 = pneg %p60
      %p251 = pneg %p57
      %p252 = pneg %p81
      %p253 = pneg %p78
      %p254 = pneg %p102
      %p255 = pneg %p99
      %p256 = pneg %p123
      %p257 = pneg %p120
      %p258 = pneg %p144
      %p259 = pneg %p141
      %p260 = pneg %p165
      %p261 = pneg %p162
      %p262 = pneg %p191
      %p263 = pneg %p188
      %p264 = scmp.lt.s32.totalorder %s18, 1
      %s265 = scalar_select %p264, %s18, 1
      %s266 = smul.addr %s265, 32
      %s267 = smul.addr %s266, 8
      %s268 = scalar_lea.vmem %s7, %s267
      %p269 = scmp.lt.s32.totalorder %s18, 1
      %s270 = scalar_select %p269, %s18, 1
      %s271 = smul.addr %s270, 54
      %s272 = smul.addr %s271, 4
      %s273 = scalar_lea.vmem %s0, %s272
      %p274 = scmp.lt.s32.totalorder %s18, 1
      %s275 = scalar_select %p274, %s18, 1
      %s276 = smul.addr %s275, 32
      %s277 = smul.addr %s276, 8
      %s278 = scalar_lea.vmem %s7, %s277
      %v280 = vld [vmem:[%s273] sm:$0xf]
      %v281 = vld [vmem:[%s273 + $0x4] sm:$0xf]
      %v282 = vld [vmem:[%s273 + $0xc] sm:$0xf]
      %v283 = vld [vmem:[%s273 + $0x10] sm:$0xf]
      %v284 = vld [vmem:[%s273 + $0x18] sm:$0xf]
      %v285 = vld [vmem:[%s273 + $0x1c] sm:$0xf]
      %v286 = vld [vmem:[%s273 + $0x24] sm:$0xf]
      %v287 = vld [vmem:[%s273 + $0x28] sm:$0xf]
      %v288 = vld [vmem:[%s273 + $0x30] sm:$0xf]
      %v289 = vld [vmem:[%s273 + $0x34] sm:$0xf]
      %v290 = vld [vmem:[%s273 + $0x3c] sm:$0xf]
      %v291 = vld [vmem:[%s273 + $0x40] sm:$0xf]
      %v292 = vld [vmem:[%s273 + $0x48] sm:$0xf]
      %v293 = vld [vmem:[%s273 + $0x4c] sm:$0xf]
      %v294 = vld [vmem:[%s273 + $0x54] sm:$0xf]
      %v295 = vld [vmem:[%s273 + $0x58] sm:$0xf]
      %v296 = vld [vmem:[%s273 + $0x60] sm:$0xf]
      %v297 = vld [vmem:[%s273 + $0x64] sm:$0xf]
      %v298 = vld [vmem:[%s273 + $0x6c] sm:$0xf]
      %v299 = vld [vmem:[%s273 + $0x70] sm:$0xf]
      %v300 = vld [vmem:[%s273 + $0x78] sm:$0xf]
      %v301 = vld [vmem:[%s273 + $0x7c] sm:$0xf]
      %v302 = vld [vmem:[%s273 + $0x84] sm:$0xf]
      %v303 = vld [vmem:[%s273 + $0x88] sm:$0xf]
      %v304 = vld [vmem:[%s273 + $0x90] sm:$0xf]
      %v305 = vld [vmem:[%s273 + $0x94] sm:$0xf]
      %v306 = vld [vmem:[%s273 + $0x9c] sm:$0xf]
      %v307 = vld [vmem:[%s273 + $0xa0] sm:$0xf]
      %v308 = vld [vmem:[%s273 + $0xa8] sm:$0xf]
      %v309 = vld [vmem:[%s273 + $0xac] sm:$0xf]
      %v310 = vld [vmem:[%s273 + $0xb4] sm:$0xf]
      %v311 = vld [vmem:[%s273 + $0xb8] sm:$0xf]
      %v312 = vld [vmem:[%s1] sm:$0x3]
      %v313 = vld [vmem:[%s273 + $0x8] sm:$0x1]
      %v314 = vld [vmem:[%s273 + $0x14] sm:$0x1]
      %v315 = vld [vmem:[%s273 + $0x20] sm:$0x1]
      %v316 = vld [vmem:[%s273 + $0x2c] sm:$0x1]
      %v317 = vld [vmem:[%s273 + $0x38] sm:$0x1]
      %v318 = vld [vmem:[%s273 + $0x44] sm:$0x1]
      %v319 = vld [vmem:[%s273 + $0x50] sm:$0x1]
      %v320 = vld [vmem:[%s273 + $0x5c] sm:$0x1]
      %v321 = vld [vmem:[%s273 + $0x68] sm:$0x1]
      %v322 = vld [vmem:[%s273 + $0x74] sm:$0x1]
      %v323 = vld [vmem:[%s273 + $0x80] sm:$0x1]
      %v324 = vld [vmem:[%s273 + $0x8c] sm:$0x1]
      %v325 = vld [vmem:[%s273 + $0x98] sm:$0x1]
      %v326 = vld [vmem:[%s273 + $0xa4] sm:$0x1]
      %v327 = vld [vmem:[%s273 + $0xb0] sm:$0x1]
      %v328 = vld [vmem:[%s273 + $0xbc] sm:$0x1]
      %vm329 = vsmask.f32 3328
      %vm330 = vsmask.f32 7440
      %vm331 = vmor %vm329, %vm330
      %v333 = vshrl.u32 %v280, 16
      %v335 = vrot.slane %v333, 4
      %v336 = vshll.u32 %v280, 16
      %v338 = vrot.slane %v336, 5
      %v339 = vor.u32 %v335, %v338
      %v340 = vrot.slane %v339, 4
      %v342 = vshll.u32 %v281, 16
      %v344 = vrot.slane %v342, 5
      %v345 = vsel %vm331, %v340, %v344
      %v346 = vshrl.u32 %v281, 16
      %v348 = vrot.slane %v346, 4
      %v349 = vor.u32 %v348, %v344
      %v350 = vrot.slane %v349, 4
      %v352 = vshll.u32 %v313, 16
      %v354 = vrot.slane %v352, 5
      %v355 = vsel %vm331, %v350, %v354
      %v357 = vshrl.u32 %v282, 16
      %v359 = vrot.slane %v357, 4
      %v360 = vshll.u32 %v282, 16
      %v362 = vrot.slane %v360, 5
      %v363 = vor.u32 %v359, %v362
      %v364 = vrot.slane %v363, 4
      %v366 = vshll.u32 %v283, 16
      %v368 = vrot.slane %v366, 5
      %v369 = vsel %vm331, %v364, %v368
      %v370 = vshrl.u32 %v283, 16
      %v372 = vrot.slane %v370, 4
      %v373 = vor.u32 %v372, %v368
      %v374 = vrot.slane %v373, 4
      %v376 = vshll.u32 %v314, 16
      %v378 = vrot.slane %v376, 5
      %v379 = vsel %vm331, %v374, %v378
      %v381 = vshrl.u32 %v284, 16
      %v383 = vrot.slane %v381, 4
      %v384 = vshll.u32 %v284, 16
      %v386 = vrot.slane %v384, 5
      %v387 = vor.u32 %v383, %v386
      %v388 = vrot.slane %v387, 4
      %v390 = vshll.u32 %v285, 16
      %v392 = vrot.slane %v390, 5
      %v393 = vsel %vm331, %v388, %v392
      %v394 = vshrl.u32 %v285, 16
      %v396 = vrot.slane %v394, 4
      %v397 = vor.u32 %v396, %v392
      %v398 = vrot.slane %v397, 4
      %v400 = vshll.u32 %v315, 16
      %v402 = vrot.slane %v400, 5
      %v403 = vsel %vm331, %v398, %v402
      %v405 = vshrl.u32 %v286, 16
      %v407 = vrot.slane %v405, 4
      %v408 = vshll.u32 %v286, 16
      %v410 = vrot.slane %v408, 5
      %v411 = vor.u32 %v407, %v410
      %v412 = vrot.slane %v411, 4
      %v414 = vshll.u32 %v287, 16
      %v416 = vrot.slane %v414, 5
      %v417 = vsel %vm331, %v412, %v416
      %v418 = vshrl.u32 %v287, 16
      %v420 = vrot.slane %v418, 4
      %v421 = vor.u32 %v420, %v416
      %v422 = vrot.slane %v421, 4
      %v424 = vshll.u32 %v316, 16
      %v426 = vrot.slane %v424, 5
      %v427 = vsel %vm331, %v422, %v426
      %v429 = vshrl.u32 %v288, 16
      %v431 = vrot.slane %v429, 4
      %v432 = vshll.u32 %v288, 16
      %v434 = vrot.slane %v432, 5
      %v435 = vor.u32 %v431, %v434
      %v436 = vrot.slane %v435, 4
      %v438 = vshll.u32 %v289, 16
      %v440 = vrot.slane %v438, 5
      %v441 = vsel %vm331, %v436, %v440
      %v442 = vshrl.u32 %v289, 16
      %v444 = vrot.slane %v442, 4
      %v445 = vor.u32 %v444, %v440
      %v446 = vrot.slane %v445, 4
      %v448 = vshll.u32 %v317, 16
      %v450 = vrot.slane %v448, 5
      %v451 = vsel %vm331, %v446, %v450
      %v453 = vshrl.u32 %v290, 16
      %v455 = vrot.slane %v453, 4
      %v456 = vshll.u32 %v290, 16
      %v458 = vrot.slane %v456, 5
      %v459 = vor.u32 %v455, %v458
      %v460 = vrot.slane %v459, 4
      %v462 = vshll.u32 %v291, 16
      %v464 = vrot.slane %v462, 5
      %v465 = vsel %vm331, %v460, %v464
      %v466 = vshrl.u32 %v291, 16
      %v468 = vrot.slane %v466, 4
      %v469 = vor.u32 %v468, %v464
      %v470 = vrot.slane %v469, 4
      %v472 = vshll.u32 %v318, 16
      %v474 = vrot.slane %v472, 5
      %v475 = vsel %vm331, %v470, %v474
      %v477 = vshrl.u32 %v292, 16
      %v479 = vrot.slane %v477, 4
      %v480 = vshll.u32 %v292, 16
      %v482 = vrot.slane %v480, 5
      %v483 = vor.u32 %v479, %v482
      %v484 = vrot.slane %v483, 4
      %v486 = vshll.u32 %v293, 16
      %v488 = vrot.slane %v486, 5
      %v489 = vsel %vm331, %v484, %v488
      %v490 = vshrl.u32 %v293, 16
      %v492 = vrot.slane %v490, 4
      %v493 = vor.u32 %v492, %v488
      %v494 = vrot.slane %v493, 4
      %v496 = vshll.u32 %v319, 16
      %v498 = vrot.slane %v496, 5
      %v499 = vsel %vm331, %v494, %v498
      %v501 = vshrl.u32 %v294, 16
      %v503 = vrot.slane %v501, 4
      %v504 = vshll.u32 %v294, 16
      %v506 = vrot.slane %v504, 5
      %v507 = vor.u32 %v503, %v506
      %v508 = vrot.slane %v507, 4
      %v510 = vshll.u32 %v295, 16
      %v512 = vrot.slane %v510, 5
      %v513 = vsel %vm331, %v508, %v512
      %v514 = vshrl.u32 %v295, 16
      %v516 = vrot.slane %v514, 4
      %v517 = vor.u32 %v516, %v512
      %v518 = vrot.slane %v517, 4
      %v520 = vshll.u32 %v320, 16
      %v522 = vrot.slane %v520, 5
      %v523 = vsel %vm331, %v518, %v522
      %v525 = vshrl.u32 %v296, 16
      %v527 = vrot.slane %v525, 4
      %v528 = vshll.u32 %v296, 16
      %v530 = vrot.slane %v528, 5
      %v531 = vor.u32 %v527, %v530
      %v532 = vrot.slane %v531, 4
      %v534 = vshll.u32 %v297, 16
      %v536 = vrot.slane %v534, 5
      %v537 = vsel %vm331, %v532, %v536
      %v538 = vshrl.u32 %v297, 16
      %v540 = vrot.slane %v538, 4
      %v541 = vor.u32 %v540, %v536
      %v542 = vrot.slane %v541, 4
      %v544 = vshll.u32 %v321, 16
      %v546 = vrot.slane %v544, 5
      %v547 = vsel %vm331, %v542, %v546
      %v549 = vshrl.u32 %v298, 16
      %v551 = vrot.slane %v549, 4
      %v552 = vshll.u32 %v298, 16
      %v554 = vrot.slane %v552, 5
      %v555 = vor.u32 %v551, %v554
      %v556 = vrot.slane %v555, 4
      %v558 = vshll.u32 %v299, 16
      %v560 = vrot.slane %v558, 5
      %v561 = vsel %vm331, %v556, %v560
      %v562 = vshrl.u32 %v299, 16
      %v564 = vrot.slane %v562, 4
      %v565 = vor.u32 %v564, %v560
      %v566 = vrot.slane %v565, 4
      %v568 = vshll.u32 %v322, 16
      %v570 = vrot.slane %v568, 5
      %v571 = vsel %vm331, %v566, %v570
      %v573 = vshrl.u32 %v300, 16
      %v575 = vrot.slane %v573, 4
      %v576 = vshll.u32 %v300, 16
      %v578 = vrot.slane %v576, 5
      %v579 = vor.u32 %v575, %v578
      %v580 = vrot.slane %v579, 4
      %v582 = vshll.u32 %v301, 16
      %v584 = vrot.slane %v582, 5
      %v585 = vsel %vm331, %v580, %v584
      %v586 = vshrl.u32 %v301, 16
      %v588 = vrot.slane %v586, 4
      %v589 = vor.u32 %v588, %v584
      %v590 = vrot.slane %v589, 4
      %v592 = vshll.u32 %v323, 16
      %v594 = vrot.slane %v592, 5
      %v595 = vsel %vm331, %v590, %v594
      %v597 = vshrl.u32 %v302, 16
      %v599 = vrot.slane %v597, 4
      %v600 = vshll.u32 %v302, 16
      %v602 = vrot.slane %v600, 5
      %v603 = vor.u32 %v599, %v602
      %v604 = vrot.slane %v603, 4
      %v606 = vshll.u32 %v303, 16
      %v608 = vrot.slane %v606, 5
      %v609 = vsel %vm331, %v604, %v608
      %v610 = vshrl.u32 %v303, 16
      %v612 = vrot.slane %v610, 4
      %v613 = vor.u32 %v612, %v608
      %v614 = vrot.slane %v613, 4
      %v616 = vshll.u32 %v324, 16
      %v618 = vrot.slane %v616, 5
      %v619 = vsel %vm331, %v614, %v618
      %v621 = vshrl.u32 %v304, 16
      %v623 = vrot.slane %v621, 4
      %v624 = vshll.u32 %v304, 16
      %v626 = vrot.slane %v624, 5
      %v627 = vor.u32 %v623, %v626
      %v628 = vrot.slane %v627, 4
      %v630 = vshll.u32 %v305, 16
      %v632 = vrot.slane %v630, 5
      %v633 = vsel %vm331, %v628, %v632
      %v634 = vshrl.u32 %v305, 16
      %v636 = vrot.slane %v634, 4
      %v637 = vor.u32 %v636, %v632
      %v638 = vrot.slane %v637, 4
      %v640 = vshll.u32 %v325, 16
      %v642 = vrot.slane %v640, 5
      %v643 = vsel %vm331, %v638, %v642
      %v645 = vshrl.u32 %v306, 16
      %v647 = vrot.slane %v645, 4
      %v648 = vshll.u32 %v306, 16
      %v650 = vrot.slane %v648, 5
      %v651 = vor.u32 %v647, %v650
      %v652 = vrot.slane %v651, 4
      %v654 = vshll.u32 %v307, 16
      %v656 = vrot.slane %v654, 5
      %v657 = vsel %vm331, %v652, %v656
      %v658 = vshrl.u32 %v307, 16
      %v660 = vrot.slane %v658, 4
      %v661 = vor.u32 %v660, %v656
      %v662 = vrot.slane %v661, 4
      %v664 = vshll.u32 %v326, 16
      %v666 = vrot.slane %v664, 5
      %v667 = vsel %vm331, %v662, %v666
      %v669 = vshrl.u32 %v308, 16
      %v671 = vrot.slane %v669, 4
      %v672 = vshll.u32 %v308, 16
      %v674 = vrot.slane %v672, 5
      %v675 = vor.u32 %v671, %v674
      %v676 = vrot.slane %v675, 4
      %v678 = vshll.u32 %v309, 16
      %v680 = vrot.slane %v678, 5
      %v681 = vsel %vm331, %v676, %v680
      %v682 = vshrl.u32 %v309, 16
      %v684 = vrot.slane %v682, 4
      %v685 = vor.u32 %v684, %v680
      %v686 = vrot.slane %v685, 4
      %v688 = vshll.u32 %v327, 16
      %v690 = vrot.slane %v688, 5
      %v691 = vsel %vm331, %v686, %v690
      %v693 = vshrl.u32 %v310, 16
      %v695 = vrot.slane %v693, 4
      %v696 = vshll.u32 %v310, 16
      %v698 = vrot.slane %v696, 5
      %v699 = vor.u32 %v695, %v698
      %v700 = vrot.slane %v699, 4
      %v702 = vshll.u32 %v311, 16
      %v704 = vrot.slane %v702, 5
      %v705 = vsel %vm331, %v700, %v704
      %v706 = vshrl.u32 %v311, 16
      %v708 = vrot.slane %v706, 4
      %v709 = vor.u32 %v708, %v704
      %v710 = vrot.slane %v709, 4
      %v712 = vshll.u32 %v328, 16
      %v714 = vrot.slane %v712, 5
      %v715 = vsel %vm331, %v710, %v714
      %s716 = scalar_lea.vmem %s1, 2
      %v717 = vld [vmem:[%s716] sm:$0x3]
      %v718 = vunpack.c.l.b16 %v345
      %v719 = vunpack.c.l.b16 %v355
      %v720 = vunpack.c.l.b16 %v369
      %v721 = vunpack.c.l.b16 %v379
      %v722 = vunpack.c.l.b16 %v393
      %v723 = vunpack.c.l.b16 %v403
      %v724 = vunpack.c.l.b16 %v417
      %v725 = vunpack.c.l.b16 %v427
      %v726 = vunpack.c.l.b16 %v441
      %v727 = vunpack.c.l.b16 %v451
      %v728 = vunpack.c.l.b16 %v465
      %v729 = vunpack.c.l.b16 %v475
      %v730 = vunpack.c.l.b16 %v489
      %v731 = vunpack.c.l.b16 %v499
      %v732 = vunpack.c.l.b16 %v513
      %v733 = vunpack.c.l.b16 %v523
      %v734 = vunpack.c.l.b16 %v537
      %v735 = vunpack.c.l.b16 %v547
      %v736 = vunpack.c.l.b16 %v561
      %v737 = vunpack.c.l.b16 %v571
      %v738 = vunpack.c.l.b16 %v585
      %v739 = vunpack.c.l.b16 %v595
      %v740 = vunpack.c.l.b16 %v609
      %v741 = vunpack.c.l.b16 %v619
      %v742 = vunpack.c.l.b16 %v633
      %v743 = vunpack.c.l.b16 %v643
      %v744 = vunpack.c.l.b16 %v657
      %v745 = vunpack.c.l.b16 %v667
      %v746 = vunpack.c.l.b16 %v681
      %v747 = vunpack.c.l.b16 %v691
      %v748 = vunpack.c.l.b16 %v705
      %v749 = vunpack.c.l.b16 %v715
      %v750 = vpack.c.b16 %v719, %v718
      %v751 = vpack.c.b16 %v721, %v720
      %v752 = vpack.c.b16 %v723, %v722
      %v753 = vpack.c.b16 %v725, %v724
      %v754 = vpack.c.b16 %v727, %v726
      %v755 = vpack.c.b16 %v729, %v728
      %v756 = vpack.c.b16 %v731, %v730
      %v757 = vpack.c.b16 %v733, %v732
      %v758 = vpack.c.b16 %v735, %v734
      %v759 = vpack.c.b16 %v737, %v736
      %v760 = vpack.c.b16 %v739, %v738
      %v761 = vpack.c.b16 %v741, %v740
      %v762 = vpack.c.b16 %v743, %v742
      %v763 = vpack.c.b16 %v745, %v744
      %v764 = vpack.c.b16 %v747, %v746
      %v765 = vpack.c.b16 %v749, %v748
      %vm766 = vcmask 31744
      %v768 = vsel %vm766, %v750, 0
      %v771 = vsel %vm766, %v751, 0
      %v774 = vsel %vm766, %v752, 0
      %v777 = vsel %vm766, %v753, 0
      %v780 = vsel %vm766, %v754, 0
      %v783 = vsel %vm766, %v755, 0
      %v786 = vsel %vm766, %v756, 0
      %v789 = vsel %vm766, %v757, 0
      %v792 = vsel %vm766, %v758, 0
      %v795 = vsel %vm766, %v759, 0
      %v798 = vsel %vm766, %v760, 0
      %v801 = vsel %vm766, %v761, 0
      %v804 = vsel %vm766, %v762, 0
      %v807 = vsel %vm766, %v763, 0
      %v810 = vsel %vm766, %v764, 0
      %v813 = vsel %vm766, %v765, 0
      %vm815 = vcmask 1041408
      %v817 = vsel %vm815, %v717, 0
      %819 = vmatpush.bf16.msra.mxu0 0
      %820 = vmatpush.bf16.msra.mxu0 0
      %821 = vmatpush.bf16.msra.mxu0 0
      %822 = vmatpush.bf16.msra.mxu0 0
      %823 = vmatpush.bf16.msra.mxu0 0
      %824 = vmatpush.bf16.msra.mxu0 0
      %825 = vmatpush.bf16.msra.mxu0 0
      %826 = vmatpush.bf16.msra.mxu0 %v817
      %827 = vmatmul.bf16.gmra.mxu0 %v768
      %v828 = vpop.f32.mrf.mxu0
      %v829 = vadd.f32 0.0, %v828
      %v830 = vpop.f32.mrf.mxu0
      %v831 = vadd.f32 0.0, %v830
      %832 = vmatmul.bf16.gmra.mxu0 %v771
      %v833 = vpop.f32.mrf.mxu0
      %v834 = vadd.f32 0.0, %v833
      %v835 = vpop.f32.mrf.mxu0
      %v836 = vadd.f32 0.0, %v835
      %837 = vmatmul.bf16.gmra.mxu0 %v774
      %v838 = vpop.f32.mrf.mxu0
      %v839 = vadd.f32 0.0, %v838
      %v840 = vpop.f32.mrf.mxu0
      %v841 = vadd.f32 0.0, %v840
      %842 = vmatmul.bf16.gmra.mxu0 %v777
      %v843 = vpop.f32.mrf.mxu0
      %v844 = vadd.f32 0.0, %v843
      %v845 = vpop.f32.mrf.mxu0
      %v846 = vadd.f32 0.0, %v845
      %847 = vmatmul.bf16.gmra.mxu0 %v780
      %v848 = vpop.f32.mrf.mxu0
      %v849 = vadd.f32 0.0, %v848
      %v850 = vpop.f32.mrf.mxu0
      %v851 = vadd.f32 0.0, %v850
      %852 = vmatmul.bf16.gmra.mxu0 %v783
      %v853 = vpop.f32.mrf.mxu0
      %v854 = vadd.f32 0.0, %v853
      %v855 = vpop.f32.mrf.mxu0
      %v856 = vadd.f32 0.0, %v855
      %857 = vmatmul.bf16.gmra.mxu0 %v786
      %v858 = vpop.f32.mrf.mxu0
      %v859 = vadd.f32 0.0, %v858
      %v860 = vpop.f32.mrf.mxu0
      %v861 = vadd.f32 0.0, %v860
      %862 = vmatmul.bf16.gmra.mxu0 %v789
      %v863 = vpop.f32.mrf.mxu0
      %v864 = vadd.f32 0.0, %v863
      %v865 = vpop.f32.mrf.mxu0
      %v866 = vadd.f32 0.0, %v865
      %867 = vmatmul.bf16.gmra.mxu0 %v792
      %v868 = vpop.f32.mrf.mxu0
      %v869 = vadd.f32 0.0, %v868
      %v870 = vpop.f32.mrf.mxu0
      %v871 = vadd.f32 0.0, %v870
      %872 = vmatmul.bf16.gmra.mxu0 %v795
      %v873 = vpop.f32.mrf.mxu0
      %v874 = vadd.f32 0.0, %v873
      %v875 = vpop.f32.mrf.mxu0
      %v876 = vadd.f32 0.0, %v875
      %877 = vmatmul.bf16.gmra.mxu0 %v798
      %v878 = vpop.f32.mrf.mxu0
      %v879 = vadd.f32 0.0, %v878
      %v880 = vpop.f32.mrf.mxu0
      %v881 = vadd.f32 0.0, %v880
      %882 = vmatmul.bf16.gmra.mxu0 %v801
      %v883 = vpop.f32.mrf.mxu0
      %v884 = vadd.f32 0.0, %v883
      %v885 = vpop.f32.mrf.mxu0
      %v886 = vadd.f32 0.0, %v885
      %887 = vmatmul.bf16.gmra.mxu0 %v804
      %v888 = vpop.f32.mrf.mxu0
      %v889 = vadd.f32 0.0, %v888
      %v890 = vpop.f32.mrf.mxu0
      %v891 = vadd.f32 0.0, %v890
      %892 = vmatmul.bf16.gmra.mxu0 %v807
      %v893 = vpop.f32.mrf.mxu0
      %v894 = vadd.f32 0.0, %v893
      %v895 = vpop.f32.mrf.mxu0
      %v896 = vadd.f32 0.0, %v895
      %897 = vmatmul.bf16.gmra.mxu0 %v810
      %v898 = vpop.f32.mrf.mxu0
      %v899 = vadd.f32 0.0, %v898
      %v900 = vpop.f32.mrf.mxu0
      %v901 = vadd.f32 0.0, %v900
      %902 = vmatmul.bf16.gmra.mxu0 %v813
      %v903 = vpop.f32.mrf.mxu0
      %v904 = vadd.f32 0.0, %v903
      %v905 = vpop.f32.mrf.mxu0
      %v906 = vadd.f32 0.0, %v905
      %907 = vdwg.mxu0
      %v940 = vunpack.c.l.b16 %v280
      %v941 = vunpack.c.l.b16 %v281
      %v942 = vunpack.c.l.b16 %v282
      %v943 = vunpack.c.l.b16 %v283
      %v944 = vunpack.c.l.b16 %v284
      %v945 = vunpack.c.l.b16 %v285
      %v946 = vunpack.c.l.b16 %v286
      %v947 = vunpack.c.l.b16 %v287
      %v948 = vunpack.c.l.b16 %v288
      %v949 = vunpack.c.l.b16 %v289
      %v950 = vunpack.c.l.b16 %v290
      %v951 = vunpack.c.l.b16 %v291
      %v952 = vunpack.c.l.b16 %v292
      %v953 = vunpack.c.l.b16 %v293
      %v954 = vunpack.c.l.b16 %v294
      %v955 = vunpack.c.l.b16 %v295
      %v956 = vunpack.c.l.b16 %v296
      %v957 = vunpack.c.l.b16 %v297
      %v958 = vunpack.c.l.b16 %v298
      %v959 = vunpack.c.l.b16 %v299
      %v960 = vunpack.c.l.b16 %v300
      %v961 = vunpack.c.l.b16 %v301
      %v962 = vunpack.c.l.b16 %v302
      %v963 = vunpack.c.l.b16 %v303
      %v964 = vunpack.c.l.b16 %v304
      %v965 = vunpack.c.l.b16 %v305
      %v966 = vunpack.c.l.b16 %v306
      %v967 = vunpack.c.l.b16 %v307
      %v968 = vunpack.c.l.b16 %v308
      %v969 = vunpack.c.l.b16 %v309
      %v970 = vunpack.c.l.b16 %v310
      %v971 = vunpack.c.l.b16 %v311
      %v972 = vpack.c.b16 %v941, %v940
      %v973 = vpack.c.b16 %v943, %v942
      %v974 = vpack.c.b16 %v945, %v944
      %v975 = vpack.c.b16 %v947, %v946
      %v976 = vpack.c.b16 %v949, %v948
      %v977 = vpack.c.b16 %v951, %v950
      %v978 = vpack.c.b16 %v953, %v952
      %v979 = vpack.c.b16 %v955, %v954
      %v980 = vpack.c.b16 %v957, %v956
      %v981 = vpack.c.b16 %v959, %v958
      %v982 = vpack.c.b16 %v961, %v960
      %v983 = vpack.c.b16 %v963, %v962
      %v984 = vpack.c.b16 %v965, %v964
      %v985 = vpack.c.b16 %v967, %v966
      %v986 = vpack.c.b16 %v969, %v968
      %v987 = vpack.c.b16 %v971, %v970
      %v989 = vsel %vm766, %v972, 0
      %v992 = vsel %vm766, %v973, 0
      %v995 = vsel %vm766, %v974, 0
      %v998 = vsel %vm766, %v975, 0
      %v1001 = vsel %vm766, %v976, 0
      %v1004 = vsel %vm766, %v977, 0
      %v1007 = vsel %vm766, %v978, 0
      %v1010 = vsel %vm766, %v979, 0
      %v1013 = vsel %vm766, %v980, 0
      %v1016 = vsel %vm766, %v981, 0
      %v1019 = vsel %vm766, %v982, 0
      %v1022 = vsel %vm766, %v983, 0
      %v1025 = vsel %vm766, %v984, 0
      %v1028 = vsel %vm766, %v985, 0
      %v1031 = vsel %vm766, %v986, 0
      %v1034 = vsel %vm766, %v987, 0
      %v1037 = vsel %vm815, %v312, 0
      %1039 = vmatpush.bf16.msra.mxu0 0
      %1040 = vmatpush.bf16.msra.mxu0 0
      %1041 = vmatpush.bf16.msra.mxu0 0
      %1042 = vmatpush.bf16.msra.mxu0 0
      %1043 = vmatpush.bf16.msra.mxu0 0
      %1044 = vmatpush.bf16.msra.mxu0 0
      %1045 = vmatpush.bf16.msra.mxu0 0
      %1046 = vmatpush.bf16.msra.mxu0 %v1037
      %1047 = vmatmul.bf16.gmra.mxu0 %v989
      %v1048 = vpop.f32.mrf.mxu0
      %v1049 = vadd.f32 %v829, %v1048
      %v1050 = vpop.f32.mrf.mxu0
      %v1051 = vadd.f32 %v831, %v1050
      %1052 = vmatmul.bf16.gmra.mxu0 %v992
      %v1053 = vpop.f32.mrf.mxu0
      %v1054 = vadd.f32 %v834, %v1053
      %v1055 = vpop.f32.mrf.mxu0
      %v1056 = vadd.f32 %v836, %v1055
      %1057 = vmatmul.bf16.gmra.mxu0 %v995
      %v1058 = vpop.f32.mrf.mxu0
      %v1059 = vadd.f32 %v839, %v1058
      %v1060 = vpop.f32.mrf.mxu0
      %v1061 = vadd.f32 %v841, %v1060
      %1062 = vmatmul.bf16.gmra.mxu0 %v998
      %v1063 = vpop.f32.mrf.mxu0
      %v1064 = vadd.f32 %v844, %v1063
      %v1065 = vpop.f32.mrf.mxu0
      %v1066 = vadd.f32 %v846, %v1065
      %1067 = vmatmul.bf16.gmra.mxu0 %v1001
      %v1068 = vpop.f32.mrf.mxu0
      %v1069 = vadd.f32 %v849, %v1068
      %v1070 = vpop.f32.mrf.mxu0
      %v1071 = vadd.f32 %v851, %v1070
      %1072 = vmatmul.bf16.gmra.mxu0 %v1004
      %v1073 = vpop.f32.mrf.mxu0
      %v1074 = vadd.f32 %v854, %v1073
      %v1075 = vpop.f32.mrf.mxu0
      %v1076 = vadd.f32 %v856, %v1075
      %1077 = vmatmul.bf16.gmra.mxu0 %v1007
      %v1078 = vpop.f32.mrf.mxu0
      %v1079 = vadd.f32 %v859, %v1078
      %v1080 = vpop.f32.mrf.mxu0
      %v1081 = vadd.f32 %v861, %v1080
      %1082 = vmatmul.bf16.gmra.mxu0 %v1010
      %v1083 = vpop.f32.mrf.mxu0
      %v1084 = vadd.f32 %v864, %v1083
      %v1085 = vpop.f32.mrf.mxu0
      %v1086 = vadd.f32 %v866, %v1085
      %1087 = vmatmul.bf16.gmra.mxu0 %v1013
      %v1088 = vpop.f32.mrf.mxu0
      %v1089 = vadd.f32 %v869, %v1088
      %v1090 = vpop.f32.mrf.mxu0
      %v1091 = vadd.f32 %v871, %v1090
      %1092 = vmatmul.bf16.gmra.mxu0 %v1016
      %v1093 = vpop.f32.mrf.mxu0
      %v1094 = vadd.f32 %v874, %v1093
      %v1095 = vpop.f32.mrf.mxu0
      %v1096 = vadd.f32 %v876, %v1095
      %1097 = vmatmul.bf16.gmra.mxu0 %v1019
      %v1098 = vpop.f32.mrf.mxu0
      %v1099 = vadd.f32 %v879, %v1098
      %v1100 = vpop.f32.mrf.mxu0
      %v1101 = vadd.f32 %v881, %v1100
      %1102 = vmatmul.bf16.gmra.mxu0 %v1022
      %v1103 = vpop.f32.mrf.mxu0
      %v1104 = vadd.f32 %v884, %v1103
      %v1105 = vpop.f32.mrf.mxu0
      %v1106 = vadd.f32 %v886, %v1105
      %1107 = vmatmul.bf16.gmra.mxu0 %v1025
      %v1108 = vpop.f32.mrf.mxu0
      %v1109 = vadd.f32 %v889, %v1108
      %v1110 = vpop.f32.mrf.mxu0
      %v1111 = vadd.f32 %v891, %v1110
      %1112 = vmatmul.bf16.gmra.mxu0 %v1028
      %v1113 = vpop.f32.mrf.mxu0
      %v1114 = vadd.f32 %v894, %v1113
      %v1115 = vpop.f32.mrf.mxu0
      %v1116 = vadd.f32 %v896, %v1115
      %1117 = vmatmul.bf16.gmra.mxu0 %v1031
      %v1118 = vpop.f32.mrf.mxu0
      %v1119 = vadd.f32 %v899, %v1118
      %v1120 = vpop.f32.mrf.mxu0
      %v1121 = vadd.f32 %v901, %v1120
      %1122 = vmatmul.bf16.gmra.mxu0 %v1034
      %v1123 = vpop.f32.mrf.mxu0
      %v1124 = vadd.f32 %v904, %v1123
      %v1125 = vpop.f32.mrf.mxu0
      %v1126 = vadd.f32 %v906, %v1125
      %1127 = vdwg.mxu0
      %v1128 = vld [vmem:[%s273] sm:$0xe]
      %v1129 = vld [vmem:[%s273 + $0xc] sm:$0xe]
      %v1130 = vld [vmem:[%s273 + $0x18] sm:$0xe]
      %v1131 = vld [vmem:[%s273 + $0x24] sm:$0xe]
      %v1132 = vld [vmem:[%s273 + $0x30] sm:$0xe]
      %v1133 = vld [vmem:[%s273 + $0x3c] sm:$0xe]
      %v1134 = vld [vmem:[%s273 + $0x48] sm:$0xe]
      %v1135 = vld [vmem:[%s273 + $0x54] sm:$0xe]
      %v1136 = vld [vmem:[%s273 + $0x60] sm:$0xe]
      %v1137 = vld [vmem:[%s273 + $0x6c] sm:$0xe]
      %v1138 = vld [vmem:[%s273 + $0x78] sm:$0xe]
      %v1139 = vld [vmem:[%s273 + $0x84] sm:$0xe]
      %v1140 = vld [vmem:[%s273 + $0x90] sm:$0xe]
      %v1141 = vld [vmem:[%s273 + $0x9c] sm:$0xe]
      %v1142 = vld [vmem:[%s273 + $0xa8] sm:$0xe]
      %v1143 = vld [vmem:[%s273 + $0xb4] sm:$0xe]
      %vm1176 = vcmask 1042432
      %vm1177 = vcmask 1046532
      %vm1178 = vmor %vm1176, %vm1177
      %v1179 = vrot.slane %v1128, 5
      %v1180 = vrot.slane %v1179, 4
      %v1181 = vrot.slane %v281, 5
      %v1182 = vsel %vm1178, %v1180, %v1181
      %v1183 = vrot.slane %v1181, 4
      %v1184 = vrot.slane %v313, 5
      %v1185 = vsel %vm1178, %v1183, %v1184
      %v1186 = vrot.slane %v1129, 5
      %v1187 = vrot.slane %v1186, 4
      %v1188 = vrot.slane %v283, 5
      %v1189 = vsel %vm1178, %v1187, %v1188
      %v1190 = vrot.slane %v1188, 4
      %v1191 = vrot.slane %v314, 5
      %v1192 = vsel %vm1178, %v1190, %v1191
      %v1193 = vrot.slane %v1130, 5
      %v1194 = vrot.slane %v1193, 4
      %v1195 = vrot.slane %v285, 5
      %v1196 = vsel %vm1178, %v1194, %v1195
      %v1197 = vrot.slane %v1195, 4
      %v1198 = vrot.slane %v315, 5
      %v1199 = vsel %vm1178, %v1197, %v1198
      %v1200 = vrot.slane %v1131, 5
      %v1201 = vrot.slane %v1200, 4
      %v1202 = vrot.slane %v287, 5
      %v1203 = vsel %vm1178, %v1201, %v1202
      %v1204 = vrot.slane %v1202, 4
      %v1205 = vrot.slane %v316, 5
      %v1206 = vsel %vm1178, %v1204, %v1205
      %v1207 = vrot.slane %v1132, 5
      %v1208 = vrot.slane %v1207, 4
      %v1209 = vrot.slane %v289, 5
      %v1210 = vsel %vm1178, %v1208, %v1209
      %v1211 = vrot.slane %v1209, 4
      %v1212 = vrot.slane %v317, 5
      %v1213 = vsel %vm1178, %v1211, %v1212
      %v1214 = vrot.slane %v1133, 5
      %v1215 = vrot.slane %v1214, 4
      %v1216 = vrot.slane %v291, 5
      %v1217 = vsel %vm1178, %v1215, %v1216
      %v1218 = vrot.slane %v1216, 4
      %v1219 = vrot.slane %v318, 5
      %v1220 = vsel %vm1178, %v1218, %v1219
      %v1221 = vrot.slane %v1134, 5
      %v1222 = vrot.slane %v1221, 4
      %v1223 = vrot.slane %v293, 5
      %v1224 = vsel %vm1178, %v1222, %v1223
      %v1225 = vrot.slane %v1223, 4
      %v1226 = vrot.slane %v319, 5
      %v1227 = vsel %vm1178, %v1225, %v1226
      %v1228 = vrot.slane %v1135, 5
      %v1229 = vrot.slane %v1228, 4
      %v1230 = vrot.slane %v295, 5
      %v1231 = vsel %vm1178, %v1229, %v1230
      %v1232 = vrot.slane %v1230, 4
      %v1233 = vrot.slane %v320, 5
      %v1234 = vsel %vm1178, %v1232, %v1233
      %v1235 = vrot.slane %v1136, 5
      %v1236 = vrot.slane %v1235, 4
      %v1237 = vrot.slane %v297, 5
      %v1238 = vsel %vm1178, %v1236, %v1237
      %v1239 = vrot.slane %v1237, 4
      %v1240 = vrot.slane %v321, 5
      %v1241 = vsel %vm1178, %v1239, %v1240
      %v1242 = vrot.slane %v1137, 5
      %v1243 = vrot.slane %v1242, 4
      %v1244 = vrot.slane %v299, 5
      %v1245 = vsel %vm1178, %v1243, %v1244
      %v1246 = vrot.slane %v1244, 4
      %v1247 = vrot.slane %v322, 5
      %v1248 = vsel %vm1178, %v1246, %v1247
      %v1249 = vrot.slane %v1138, 5
      %v1250 = vrot.slane %v1249, 4
      %v1251 = vrot.slane %v301, 5
      %v1252 = vsel %vm1178, %v1250, %v1251
      %v1253 = vrot.slane %v1251, 4
      %v1254 = vrot.slane %v323, 5
      %v1255 = vsel %vm1178, %v1253, %v1254
      %v1256 = vrot.slane %v1139, 5
      %v1257 = vrot.slane %v1256, 4
      %v1258 = vrot.slane %v303, 5
      %v1259 = vsel %vm1178, %v1257, %v1258
      %v1260 = vrot.slane %v1258, 4
      %v1261 = vrot.slane %v324, 5
      %v1262 = vsel %vm1178, %v1260, %v1261
      %v1263 = vrot.slane %v1140, 5
      %v1264 = vrot.slane %v1263, 4
      %v1265 = vrot.slane %v305, 5
      %v1266 = vsel %vm1178, %v1264, %v1265
      %v1267 = vrot.slane %v1265, 4
      %v1268 = vrot.slane %v325, 5
      %v1269 = vsel %vm1178, %v1267, %v1268
      %v1270 = vrot.slane %v1141, 5
      %v1271 = vrot.slane %v1270, 4
      %v1272 = vrot.slane %v307, 5
      %v1273 = vsel %vm1178, %v1271, %v1272
      %v1274 = vrot.slane %v1272, 4
      %v1275 = vrot.slane %v326, 5
      %v1276 = vsel %vm1178, %v1274, %v1275
      %v1277 = vrot.slane %v1142, 5
      %v1278 = vrot.slane %v1277, 4
      %v1279 = vrot.slane %v309, 5
      %v1280 = vsel %vm1178, %v1278, %v1279
      %v1281 = vrot.slane %v1279, 4
      %v1282 = vrot.slane %v327, 5
      %v1283 = vsel %vm1178, %v1281, %v1282
      %v1284 = vrot.slane %v1143, 5
      %v1285 = vrot.slane %v1284, 4
      %v1286 = vrot.slane %v311, 5
      %v1287 = vsel %vm1178, %v1285, %v1286
      %v1288 = vrot.slane %v1286, 4
      %v1289 = vrot.slane %v328, 5
      %v1290 = vsel %vm1178, %v1288, %v1289
      %s1291 = scalar_lea.vmem %s1, 4
      %v1292 = vld [vmem:[%s1291] sm:$0x3]
      %v1293 = vunpack.c.l.b16 %v1182
      %v1294 = vunpack.c.l.b16 %v1185
      %v1295 = vunpack.c.l.b16 %v1189
      %v1296 = vunpack.c.l.b16 %v1192
      %v1297 = vunpack.c.l.b16 %v1196
      %v1298 = vunpack.c.l.b16 %v1199
      %v1299 = vunpack.c.l.b16 %v1203
      %v1300 = vunpack.c.l.b16 %v1206
      %v1301 = vunpack.c.l.b16 %v1210
      %v1302 = vunpack.c.l.b16 %v1213
      %v1303 = vunpack.c.l.b16 %v1217
      %v1304 = vunpack.c.l.b16 %v1220
      %v1305 = vunpack.c.l.b16 %v1224
      %v1306 = vunpack.c.l.b16 %v1227
      %v1307 = vunpack.c.l.b16 %v1231
      %v1308 = vunpack.c.l.b16 %v1234
      %v1309 = vunpack.c.l.b16 %v1238
      %v1310 = vunpack.c.l.b16 %v1241
      %v1311 = vunpack.c.l.b16 %v1245
      %v1312 = vunpack.c.l.b16 %v1248
      %v1313 = vunpack.c.l.b16 %v1252
      %v1314 = vunpack.c.l.b16 %v1255
      %v1315 = vunpack.c.l.b16 %v1259
      %v1316 = vunpack.c.l.b16 %v1262
      %v1317 = vunpack.c.l.b16 %v1266
      %v1318 = vunpack.c.l.b16 %v1269
      %v1319 = vunpack.c.l.b16 %v1273
      %v1320 = vunpack.c.l.b16 %v1276
      %v1321 = vunpack.c.l.b16 %v1280
      %v1322 = vunpack.c.l.b16 %v1283
      %v1323 = vunpack.c.l.b16 %v1287
      %v1324 = vunpack.c.l.b16 %v1290
      %v1325 = vpack.c.b16 %v1294, %v1293
      %v1326 = vpack.c.b16 %v1296, %v1295
      %v1327 = vpack.c.b16 %v1298, %v1297
      %v1328 = vpack.c.b16 %v1300, %v1299
      %v1329 = vpack.c.b16 %v1302, %v1301
      %v1330 = vpack.c.b16 %v1304, %v1303
      %v1331 = vpack.c.b16 %v1306, %v1305
      %v1332 = vpack.c.b16 %v1308, %v1307
      %v1333 = vpack.c.b16 %v1310, %v1309
      %v1334 = vpack.c.b16 %v1312, %v1311
      %v1335 = vpack.c.b16 %v1314, %v1313
      %v1336 = vpack.c.b16 %v1316, %v1315
      %v1337 = vpack.c.b16 %v1318, %v1317
      %v1338 = vpack.c.b16 %v1320, %v1319
      %v1339 = vpack.c.b16 %v1322, %v1321
      %v1340 = vpack.c.b16 %v1324, %v1323
      %v1342 = vsel %vm766, %v1325, 0
      %v1345 = vsel %vm766, %v1326, 0
      %v1348 = vsel %vm766, %v1327, 0
      %v1351 = vsel %vm766, %v1328, 0
      %v1354 = vsel %vm766, %v1329, 0
      %v1357 = vsel %vm766, %v1330, 0
      %v1360 = vsel %vm766, %v1331, 0
      %v1363 = vsel %vm766, %v1332, 0
      %v1366 = vsel %vm766, %v1333, 0
      %v1369 = vsel %vm766, %v1334, 0
      %v1372 = vsel %vm766, %v1335, 0
      %v1375 = vsel %vm766, %v1336, 0
      %v1378 = vsel %vm766, %v1337, 0
      %v1381 = vsel %vm766, %v1338, 0
      %v1384 = vsel %vm766, %v1339, 0
      %v1387 = vsel %vm766, %v1340, 0
      %v1390 = vsel %vm815, %v1292, 0
      %1392 = vmatpush.bf16.msra.mxu0 0
      %1393 = vmatpush.bf16.msra.mxu0 0
      %1394 = vmatpush.bf16.msra.mxu0 0
      %1395 = vmatpush.bf16.msra.mxu0 0
      %1396 = vmatpush.bf16.msra.mxu0 0
      %1397 = vmatpush.bf16.msra.mxu0 0
      %1398 = vmatpush.bf16.msra.mxu0 0
      %1399 = vmatpush.bf16.msra.mxu0 %v1390
      %1400 = vmatmul.bf16.gmra.mxu0 %v1342
      %v1401 = vpop.f32.mrf.mxu0
      %v1402 = vadd.f32 0.0, %v1401
      %v1403 = vpop.f32.mrf.mxu0
      %v1404 = vadd.f32 0.0, %v1403
      %1405 = vmatmul.bf16.gmra.mxu0 %v1345
      %v1406 = vpop.f32.mrf.mxu0
      %v1407 = vadd.f32 0.0, %v1406
      %v1408 = vpop.f32.mrf.mxu0
      %v1409 = vadd.f32 0.0, %v1408
      %1410 = vmatmul.bf16.gmra.mxu0 %v1348
      %v1411 = vpop.f32.mrf.mxu0
      %v1412 = vadd.f32 0.0, %v1411
      %v1413 = vpop.f32.mrf.mxu0
      %v1414 = vadd.f32 0.0, %v1413
      %1415 = vmatmul.bf16.gmra.mxu0 %v1351
      %v1416 = vpop.f32.mrf.mxu0
      %v1417 = vadd.f32 0.0, %v1416
      %v1418 = vpop.f32.mrf.mxu0
      %v1419 = vadd.f32 0.0, %v1418
      %1420 = vmatmul.bf16.gmra.mxu0 %v1354
      %v1421 = vpop.f32.mrf.mxu0
      %v1422 = vadd.f32 0.0, %v1421
      %v1423 = vpop.f32.mrf.mxu0
      %v1424 = vadd.f32 0.0, %v1423
      %1425 = vmatmul.bf16.gmra.mxu0 %v1357
      %v1426 = vpop.f32.mrf.mxu0
      %v1427 = vadd.f32 0.0, %v1426
      %v1428 = vpop.f32.mrf.mxu0
      %v1429 = vadd.f32 0.0, %v1428
      %1430 = vmatmul.bf16.gmra.mxu0 %v1360
      %v1431 = vpop.f32.mrf.mxu0
      %v1432 = vadd.f32 0.0, %v1431
      %v1433 = vpop.f32.mrf.mxu0
      %v1434 = vadd.f32 0.0, %v1433
      %1435 = vmatmul.bf16.gmra.mxu0 %v1363
      %v1436 = vpop.f32.mrf.mxu0
      %v1437 = vadd.f32 0.0, %v1436
      %v1438 = vpop.f32.mrf.mxu0
      %v1439 = vadd.f32 0.0, %v1438
      %1440 = vmatmul.bf16.gmra.mxu0 %v1366
      %v1441 = vpop.f32.mrf.mxu0
      %v1442 = vadd.f32 0.0, %v1441
      %v1443 = vpop.f32.mrf.mxu0
      %v1444 = vadd.f32 0.0, %v1443
      %1445 = vmatmul.bf16.gmra.mxu0 %v1369
      %v1446 = vpop.f32.mrf.mxu0
      %v1447 = vadd.f32 0.0, %v1446
      %v1448 = vpop.f32.mrf.mxu0
      %v1449 = vadd.f32 0.0, %v1448
      %1450 = vmatmul.bf16.gmra.mxu0 %v1372
      %v1451 = vpop.f32.mrf.mxu0
      %v1452 = vadd.f32 0.0, %v1451
      %v1453 = vpop.f32.mrf.mxu0
      %v1454 = vadd.f32 0.0, %v1453
      %1455 = vmatmul.bf16.gmra.mxu0 %v1375
      %v1456 = vpop.f32.mrf.mxu0
      %v1457 = vadd.f32 0.0, %v1456
      %v1458 = vpop.f32.mrf.mxu0
      %v1459 = vadd.f32 0.0, %v1458
      %1460 = vmatmul.bf16.gmra.mxu0 %v1378
      %v1461 = vpop.f32.mrf.mxu0
      %v1462 = vadd.f32 0.0, %v1461
      %v1463 = vpop.f32.mrf.mxu0
      %v1464 = vadd.f32 0.0, %v1463
      %1465 = vmatmul.bf16.gmra.mxu0 %v1381
      %v1466 = vpop.f32.mrf.mxu0
      %v1467 = vadd.f32 0.0, %v1466
      %v1468 = vpop.f32.mrf.mxu0
      %v1469 = vadd.f32 0.0, %v1468
      %1470 = vmatmul.bf16.gmra.mxu0 %v1384
      %v1471 = vpop.f32.mrf.mxu0
      %v1472 = vadd.f32 0.0, %v1471
      %v1473 = vpop.f32.mrf.mxu0
      %v1474 = vadd.f32 0.0, %v1473
      %1475 = vmatmul.bf16.gmra.mxu0 %v1387
      %v1476 = vpop.f32.mrf.mxu0
      %v1477 = vadd.f32 0.0, %v1476
      %v1478 = vpop.f32.mrf.mxu0
      %v1479 = vadd.f32 0.0, %v1478
      %1480 = vdwg.mxu0
      %v1481 = vadd.f32 %v1049, %v1402
      %v1482 = vadd.f32 %v1051, %v1404
      %v1483 = vadd.f32 %v1054, %v1407
      %v1484 = vadd.f32 %v1056, %v1409
      %v1485 = vadd.f32 %v1059, %v1412
      %v1486 = vadd.f32 %v1061, %v1414
      %v1487 = vadd.f32 %v1064, %v1417
      %v1488 = vadd.f32 %v1066, %v1419
      %v1489 = vadd.f32 %v1069, %v1422
      %v1490 = vadd.f32 %v1071, %v1424
      %v1491 = vadd.f32 %v1074, %v1427
      %v1492 = vadd.f32 %v1076, %v1429
      %v1493 = vadd.f32 %v1079, %v1432
      %v1494 = vadd.f32 %v1081, %v1434
      %v1495 = vadd.f32 %v1084, %v1437
      %v1496 = vadd.f32 %v1086, %v1439
      %v1497 = vadd.f32 %v1089, %v1442
      %v1498 = vadd.f32 %v1091, %v1444
      %v1499 = vadd.f32 %v1094, %v1447
      %v1500 = vadd.f32 %v1096, %v1449
      %v1501 = vadd.f32 %v1099, %v1452
      %v1502 = vadd.f32 %v1101, %v1454
      %v1503 = vadd.f32 %v1104, %v1457
      %v1504 = vadd.f32 %v1106, %v1459
      %v1505 = vadd.f32 %v1109, %v1462
      %v1506 = vadd.f32 %v1111, %v1464
      %v1507 = vadd.f32 %v1114, %v1467
      %v1508 = vadd.f32 %v1116, %v1469
      %v1509 = vadd.f32 %v1119, %v1472
      %v1510 = vadd.f32 %v1121, %v1474
      %v1511 = vadd.f32 %v1124, %v1477
      %v1512 = vadd.f32 %v1126, %v1479
      %s1513 = scalar_lea.vmem %s273, 12
      %v1514 = vld [vmem:[%s1513] sm:$0xf]
      %v1515 = vld [vmem:[%s1513 + $0x4] sm:$0xf]
      %v1516 = vld [vmem:[%s1513 + $0xc] sm:$0xf]
      %v1517 = vld [vmem:[%s1513 + $0x10] sm:$0xf]
      %v1518 = vld [vmem:[%s1513 + $0x18] sm:$0xf]
      %v1519 = vld [vmem:[%s1513 + $0x1c] sm:$0xf]
      %v1520 = vld [vmem:[%s1513 + $0x24] sm:$0xf]
      %v1521 = vld [vmem:[%s1513 + $0x28] sm:$0xf]
      %v1522 = vld [vmem:[%s1513 + $0x30] sm:$0xf]
      %v1523 = vld [vmem:[%s1513 + $0x34] sm:$0xf]
      %v1524 = vld [vmem:[%s1513 + $0x3c] sm:$0xf]
      %v1525 = vld [vmem:[%s1513 + $0x40] sm:$0xf]
      %v1526 = vld [vmem:[%s1513 + $0x48] sm:$0xf]
      %v1527 = vld [vmem:[%s1513 + $0x4c] sm:$0xf]
      %v1528 = vld [vmem:[%s1513 + $0x54] sm:$0xf]
      %v1529 = vld [vmem:[%s1513 + $0x58] sm:$0xf]
      %v1530 = vld [vmem:[%s1513 + $0x60] sm:$0xf]
      %v1531 = vld [vmem:[%s1513 + $0x64] sm:$0xf]
      %v1532 = vld [vmem:[%s1513 + $0x6c] sm:$0xf]
      %v1533 = vld [vmem:[%s1513 + $0x70] sm:$0xf]
      %v1534 = vld [vmem:[%s1513 + $0x78] sm:$0xf]
      %v1535 = vld [vmem:[%s1513 + $0x7c] sm:$0xf]
      %v1536 = vld [vmem:[%s1513 + $0x84] sm:$0xf]
      %v1537 = vld [vmem:[%s1513 + $0x88] sm:$0xf]
      %v1538 = vld [vmem:[%s1513 + $0x90] sm:$0xf]
      %v1539 = vld [vmem:[%s1513 + $0x94] sm:$0xf]
      %v1540 = vld [vmem:[%s1513 + $0x9c] sm:$0xf]
      %v1541 = vld [vmem:[%s1513 + $0xa0] sm:$0xf]
      %v1542 = vld [vmem:[%s1513 + $0xa8] sm:$0xf]
      %v1543 = vld [vmem:[%s1513 + $0xac] sm:$0xf]
      %v1544 = vld [vmem:[%s1513 + $0xb4] sm:$0xf]
      %v1545 = vld [vmem:[%s1513 + $0xb8] sm:$0xf]
      %s1546 = scalar_lea.vmem %s1, 6
      %v1547 = vld [vmem:[%s1546] sm:$0x3]
      %v1580 = vunpack.c.l.b16 %v1514
      %v1581 = vunpack.c.l.b16 %v1515
      %v1582 = vunpack.c.l.b16 %v1516
      %v1583 = vunpack.c.l.b16 %v1517
      %v1584 = vunpack.c.l.b16 %v1518
      %v1585 = vunpack.c.l.b16 %v1519
      %v1586 = vunpack.c.l.b16 %v1520
      %v1587 = vunpack.c.l.b16 %v1521
      %v1588 = vunpack.c.l.b16 %v1522
      %v1589 = vunpack.c.l.b16 %v1523
      %v1590 = vunpack.c.l.b16 %v1524
      %v1591 = vunpack.c.l.b16 %v1525
      %v1592 = vunpack.c.l.b16 %v1526
      %v1593 = vunpack.c.l.b16 %v1527
      %v1594 = vunpack.c.l.b16 %v1528
      %v1595 = vunpack.c.l.b16 %v1529
      %v1596 = vunpack.c.l.b16 %v1530
      %v1597 = vunpack.c.l.b16 %v1531
      %v1598 = vunpack.c.l.b16 %v1532
      %v1599 = vunpack.c.l.b16 %v1533
      %v1600 = vunpack.c.l.b16 %v1534
      %v1601 = vunpack.c.l.b16 %v1535
      %v1602 = vunpack.c.l.b16 %v1536
      %v1603 = vunpack.c.l.b16 %v1537
      %v1604 = vunpack.c.l.b16 %v1538
      %v1605 = vunpack.c.l.b16 %v1539
      %v1606 = vunpack.c.l.b16 %v1540
      %v1607 = vunpack.c.l.b16 %v1541
      %v1608 = vunpack.c.l.b16 %v1542
      %v1609 = vunpack.c.l.b16 %v1543
      %v1610 = vunpack.c.l.b16 %v1544
      %v1611 = vunpack.c.l.b16 %v1545
      %v1612 = vpack.c.b16 %v1581, %v1580
      %v1613 = vpack.c.b16 %v1583, %v1582
      %v1614 = vpack.c.b16 %v1585, %v1584
      %v1615 = vpack.c.b16 %v1587, %v1586
      %v1616 = vpack.c.b16 %v1589, %v1588
      %v1617 = vpack.c.b16 %v1591, %v1590
      %v1618 = vpack.c.b16 %v1593, %v1592
      %v1619 = vpack.c.b16 %v1595, %v1594
      %v1620 = vpack.c.b16 %v1597, %v1596
      %v1621 = vpack.c.b16 %v1599, %v1598
      %v1622 = vpack.c.b16 %v1601, %v1600
      %v1623 = vpack.c.b16 %v1603, %v1602
      %v1624 = vpack.c.b16 %v1605, %v1604
      %v1625 = vpack.c.b16 %v1607, %v1606
      %v1626 = vpack.c.b16 %v1609, %v1608
      %v1627 = vpack.c.b16 %v1611, %v1610
      %v1629 = vsel %vm766, %v1612, 0
      %v1632 = vsel %vm766, %v1613, 0
      %v1635 = vsel %vm766, %v1614, 0
      %v1638 = vsel %vm766, %v1615, 0
      %v1641 = vsel %vm766, %v1616, 0
      %v1644 = vsel %vm766, %v1617, 0
      %v1647 = vsel %vm766, %v1618, 0
      %v1650 = vsel %vm766, %v1619, 0
      %v1653 = vsel %vm766, %v1620, 0
      %v1656 = vsel %vm766, %v1621, 0
      %v1659 = vsel %vm766, %v1622, 0
      %v1662 = vsel %vm766, %v1623, 0
      %v1665 = vsel %vm766, %v1624, 0
      %v1668 = vsel %vm766, %v1625, 0
      %v1671 = vsel %vm766, %v1626, 0
      %v1674 = vsel %vm766, %v1627, 0
      %v1677 = vsel %vm815, %v1547, 0
      %1679 = vmatpush.bf16.msra.mxu0 0
      %1680 = vmatpush.bf16.msra.mxu0 0
      %1681 = vmatpush.bf16.msra.mxu0 0
      %1682 = vmatpush.bf16.msra.mxu0 0
      %1683 = vmatpush.bf16.msra.mxu0 0
      %1684 = vmatpush.bf16.msra.mxu0 0
      %1685 = vmatpush.bf16.msra.mxu0 0
      %1686 = vmatpush.bf16.msra.mxu0 %v1677
      %1687 = vmatmul.bf16.gmra.mxu0 %v1629
      %v1688 = vpop.f32.mrf.mxu0
      %v1689 = vadd.f32 0.0, %v1688
      %v1690 = vpop.f32.mrf.mxu0
      %v1691 = vadd.f32 0.0, %v1690
      %1692 = vmatmul.bf16.gmra.mxu0 %v1632
      %v1693 = vpop.f32.mrf.mxu0
      %v1694 = vadd.f32 0.0, %v1693
      %v1695 = vpop.f32.mrf.mxu0
      %v1696 = vadd.f32 0.0, %v1695
      %1697 = vmatmul.bf16.gmra.mxu0 %v1635
      %v1698 = vpop.f32.mrf.mxu0
      %v1699 = vadd.f32 0.0, %v1698
      %v1700 = vpop.f32.mrf.mxu0
      %v1701 = vadd.f32 0.0, %v1700
      %1702 = vmatmul.bf16.gmra.mxu0 %v1638
      %v1703 = vpop.f32.mrf.mxu0
      %v1704 = vadd.f32 0.0, %v1703
      %v1705 = vpop.f32.mrf.mxu0
      %v1706 = vadd.f32 0.0, %v1705
      %1707 = vmatmul.bf16.gmra.mxu0 %v1641
      %v1708 = vpop.f32.mrf.mxu0
      %v1709 = vadd.f32 0.0, %v1708
      %v1710 = vpop.f32.mrf.mxu0
      %v1711 = vadd.f32 0.0, %v1710
      %1712 = vmatmul.bf16.gmra.mxu0 %v1644
      %v1713 = vpop.f32.mrf.mxu0
      %v1714 = vadd.f32 0.0, %v1713
      %v1715 = vpop.f32.mrf.mxu0
      %v1716 = vadd.f32 0.0, %v1715
      %1717 = vmatmul.bf16.gmra.mxu0 %v1647
      %v1718 = vpop.f32.mrf.mxu0
      %v1719 = vadd.f32 0.0, %v1718
      %v1720 = vpop.f32.mrf.mxu0
      %v1721 = vadd.f32 0.0, %v1720
      %1722 = vmatmul.bf16.gmra.mxu0 %v1650
      %v1723 = vpop.f32.mrf.mxu0
      %v1724 = vadd.f32 0.0, %v1723
      %v1725 = vpop.f32.mrf.mxu0
      %v1726 = vadd.f32 0.0, %v1725
      %1727 = vmatmul.bf16.gmra.mxu0 %v1653
      %v1728 = vpop.f32.mrf.mxu0
      %v1729 = vadd.f32 0.0, %v1728
      %v1730 = vpop.f32.mrf.mxu0
      %v1731 = vadd.f32 0.0, %v1730
      %1732 = vmatmul.bf16.gmra.mxu0 %v1656
      %v1733 = vpop.f32.mrf.mxu0
      %v1734 = vadd.f32 0.0, %v1733
      %v1735 = vpop.f32.mrf.mxu0
      %v1736 = vadd.f32 0.0, %v1735
      %1737 = vmatmul.bf16.gmra.mxu0 %v1659
      %v1738 = vpop.f32.mrf.mxu0
      %v1739 = vadd.f32 0.0, %v1738
      %v1740 = vpop.f32.mrf.mxu0
      %v1741 = vadd.f32 0.0, %v1740
      %1742 = vmatmul.bf16.gmra.mxu0 %v1662
      %v1743 = vpop.f32.mrf.mxu0
      %v1744 = vadd.f32 0.0, %v1743
      %v1745 = vpop.f32.mrf.mxu0
      %v1746 = vadd.f32 0.0, %v1745
      %1747 = vmatmul.bf16.gmra.mxu0 %v1665
      %v1748 = vpop.f32.mrf.mxu0
      %v1749 = vadd.f32 0.0, %v1748
      %v1750 = vpop.f32.mrf.mxu0
      %v1751 = vadd.f32 0.0, %v1750
      %1752 = vmatmul.bf16.gmra.mxu0 %v1668
      %v1753 = vpop.f32.mrf.mxu0
      %v1754 = vadd.f32 0.0, %v1753
      %v1755 = vpop.f32.mrf.mxu0
      %v1756 = vadd.f32 0.0, %v1755
      %1757 = vmatmul.bf16.gmra.mxu0 %v1671
      %v1758 = vpop.f32.mrf.mxu0
      %v1759 = vadd.f32 0.0, %v1758
      %v1760 = vpop.f32.mrf.mxu0
      %v1761 = vadd.f32 0.0, %v1760
      %1762 = vmatmul.bf16.gmra.mxu0 %v1674
      %v1763 = vpop.f32.mrf.mxu0
      %v1764 = vadd.f32 0.0, %v1763
      %v1765 = vpop.f32.mrf.mxu0
      %v1766 = vadd.f32 0.0, %v1765
      %1767 = vdwg.mxu0
      %v1768 = vadd.f32 %v1481, %v1689
      %v1769 = vadd.f32 %v1482, %v1691
      %v1770 = vadd.f32 %v1483, %v1694
      %v1771 = vadd.f32 %v1484, %v1696
      %v1772 = vadd.f32 %v1485, %v1699
      %v1773 = vadd.f32 %v1486, %v1701
      %v1774 = vadd.f32 %v1487, %v1704
      %v1775 = vadd.f32 %v1488, %v1706
      %v1776 = vadd.f32 %v1489, %v1709
      %v1777 = vadd.f32 %v1490, %v1711
      %v1778 = vadd.f32 %v1491, %v1714
      %v1779 = vadd.f32 %v1492, %v1716
      %v1780 = vadd.f32 %v1493, %v1719
      %v1781 = vadd.f32 %v1494, %v1721
      %v1782 = vadd.f32 %v1495, %v1724
      %v1783 = vadd.f32 %v1496, %v1726
      %v1784 = vadd.f32 %v1497, %v1729
      %v1785 = vadd.f32 %v1498, %v1731
      %v1786 = vadd.f32 %v1499, %v1734
      %v1787 = vadd.f32 %v1500, %v1736
      %v1788 = vadd.f32 %v1501, %v1739
      %v1789 = vadd.f32 %v1502, %v1741
      %v1790 = vadd.f32 %v1503, %v1744
      %v1791 = vadd.f32 %v1504, %v1746
      %v1792 = vadd.f32 %v1505, %v1749
      %v1793 = vadd.f32 %v1506, %v1751
      %v1794 = vadd.f32 %v1507, %v1754
      %v1795 = vadd.f32 %v1508, %v1756
      %v1796 = vadd.f32 %v1509, %v1759
      %v1797 = vadd.f32 %v1510, %v1761
      %v1798 = vadd.f32 %v1511, %v1764
      %v1799 = vadd.f32 %v1512, %v1766
      %v1800 = vld [vmem:[%s1513] sm:$0xf]
      %v1801 = vld [vmem:[%s1513 + $0x4] sm:$0xf]
      %v1802 = vld [vmem:[%s1513 + $0x8] sm:$0x1]
      %v1803 = vld [vmem:[%s1513 + $0xc] sm:$0xf]
      %v1804 = vld [vmem:[%s1513 + $0x10] sm:$0xf]
      %v1805 = vld [vmem:[%s1513 + $0x14] sm:$0x1]
      %v1806 = vld [vmem:[%s1513 + $0x18] sm:$0xf]
      %v1807 = vld [vmem:[%s1513 + $0x1c] sm:$0xf]
      %v1808 = vld [vmem:[%s1513 + $0x20] sm:$0x1]
      %v1809 = vld [vmem:[%s1513 + $0x24] sm:$0xf]
      %v1810 = vld [vmem:[%s1513 + $0x28] sm:$0xf]
      %v1811 = vld [vmem:[%s1513 + $0x2c] sm:$0x1]
      %v1812 = vld [vmem:[%s1513 + $0x30] sm:$0xf]
      %v1813 = vld [vmem:[%s1513 + $0x34] sm:$0xf]
      %v1814 = vld [vmem:[%s1513 + $0x38] sm:$0x1]
      %v1815 = vld [vmem:[%s1513 + $0x3c] sm:$0xf]
      %v1816 = vld [vmem:[%s1513 + $0x40] sm:$0xf]
      %v1817 = vld [vmem:[%s1513 + $0x44] sm:$0x1]
      %v1818 = vld [vmem:[%s1513 + $0x48] sm:$0xf]
      %v1819 = vld [vmem:[%s1513 + $0x4c] sm:$0xf]
      %v1820 = vld [vmem:[%s1513 + $0x50] sm:$0x1]
      %v1821 = vld [vmem:[%s1513 + $0x54] sm:$0xf]
      %v1822 = vld [vmem:[%s1513 + $0x58] sm:$0xf]
      %v1823 = vld [vmem:[%s1513 + $0x5c] sm:$0x1]
      %v1824 = vld [vmem:[%s1513 + $0x60] sm:$0xf]
      %v1825 = vld [vmem:[%s1513 + $0x64] sm:$0xf]
      %v1826 = vld [vmem:[%s1513 + $0x68] sm:$0x1]
      %v1827 = vld [vmem:[%s1513 + $0x6c] sm:$0xf]
      %v1828 = vld [vmem:[%s1513 + $0x70] sm:$0xf]
      %v1829 = vld [vmem:[%s1513 + $0x74] sm:$0x1]
      %v1830 = vld [vmem:[%s1513 + $0x78] sm:$0xf]
      %v1831 = vld [vmem:[%s1513 + $0x7c] sm:$0xf]
      %v1832 = vld [vmem:[%s1513 + $0x80] sm:$0x1]
      %v1833 = vld [vmem:[%s1513 + $0x84] sm:$0xf]
      %v1834 = vld [vmem:[%s1513 + $0x88] sm:$0xf]
      %v1835 = vld [vmem:[%s1513 + $0x8c] sm:$0x1]
      %v1836 = vld [vmem:[%s1513 + $0x90] sm:$0xf]
      %v1837 = vld [vmem:[%s1513 + $0x94] sm:$0xf]
      %v1838 = vld [vmem:[%s1513 + $0x98] sm:$0x1]
      %v1839 = vld [vmem:[%s1513 + $0x9c] sm:$0xf]
      %v1840 = vld [vmem:[%s1513 + $0xa0] sm:$0xf]
      %v1841 = vld [vmem:[%s1513 + $0xa4] sm:$0x1]
      %v1842 = vld [vmem:[%s1513 + $0xa8] sm:$0xf]
      %v1843 = vld [vmem:[%s1513 + $0xac] sm:$0xf]
      %v1844 = vld [vmem:[%s1513 + $0xb0] sm:$0x1]
      %v1845 = vld [vmem:[%s1513 + $0xb4] sm:$0xf]
      %v1846 = vld [vmem:[%s1513 + $0xb8] sm:$0xf]
      %v1847 = vld [vmem:[%s1513 + $0xbc] sm:$0x1]
      %v1849 = vshrl.u32 %v1800, 16
      %v1851 = vrot.slane %v1849, 4
      %v1852 = vshll.u32 %v1800, 16
      %v1854 = vrot.slane %v1852, 5
      %v1855 = vor.u32 %v1851, %v1854
      %v1856 = vrot.slane %v1855, 4
      %v1858 = vshll.u32 %v1801, 16
      %v1860 = vrot.slane %v1858, 5
      %v1861 = vsel %vm331, %v1856, %v1860
      %v1862 = vshrl.u32 %v1801, 16
      %v1864 = vrot.slane %v1862, 4
      %v1865 = vor.u32 %v1864, %v1860
      %v1866 = vrot.slane %v1865, 4
      %v1868 = vshll.u32 %v1802, 16
      %v1870 = vrot.slane %v1868, 5
      %v1871 = vsel %vm331, %v1866, %v1870
      %v1873 = vshrl.u32 %v1803, 16
      %v1875 = vrot.slane %v1873, 4
      %v1876 = vshll.u32 %v1803, 16
      %v1878 = vrot.slane %v1876, 5
      %v1879 = vor.u32 %v1875, %v1878
      %v1880 = vrot.slane %v1879, 4
      %v1882 = vshll.u32 %v1804, 16
      %v1884 = vrot.slane %v1882, 5
      %v1885 = vsel %vm331, %v1880, %v1884
      %v1886 = vshrl.u32 %v1804, 16
      %v1888 = vrot.slane %v1886, 4
      %v1889 = vor.u32 %v1888, %v1884
      %v1890 = vrot.slane %v1889, 4
      %v1892 = vshll.u32 %v1805, 16
      %v1894 = vrot.slane %v1892, 5
      %v1895 = vsel %vm331, %v1890, %v1894
      %v1897 = vshrl.u32 %v1806, 16
      %v1899 = vrot.slane %v1897, 4
      %v1900 = vshll.u32 %v1806, 16
      %v1902 = vrot.slane %v1900, 5
      %v1903 = vor.u32 %v1899, %v1902
      %v1904 = vrot.slane %v1903, 4
      %v1906 = vshll.u32 %v1807, 16
      %v1908 = vrot.slane %v1906, 5
      %v1909 = vsel %vm331, %v1904, %v1908
      %v1910 = vshrl.u32 %v1807, 16
      %v1912 = vrot.slane %v1910, 4
      %v1913 = vor.u32 %v1912, %v1908
      %v1914 = vrot.slane %v1913, 4
      %v1916 = vshll.u32 %v1808, 16
      %v1918 = vrot.slane %v1916, 5
      %v1919 = vsel %vm331, %v1914, %v1918
      %v1921 = vshrl.u32 %v1809, 16
      %v1923 = vrot.slane %v1921, 4
      %v1924 = vshll.u32 %v1809, 16
      %v1926 = vrot.slane %v1924, 5
      %v1927 = vor.u32 %v1923, %v1926
      %v1928 = vrot.slane %v1927, 4
      %v1930 = vshll.u32 %v1810, 16
      %v1932 = vrot.slane %v1930, 5
      %v1933 = vsel %vm331, %v1928, %v1932
      %v1934 = vshrl.u32 %v1810, 16
      %v1936 = vrot.slane %v1934, 4
      %v1937 = vor.u32 %v1936, %v1932
      %v1938 = vrot.slane %v1937, 4
      %v1940 = vshll.u32 %v1811, 16
      %v1942 = vrot.slane %v1940, 5
      %v1943 = vsel %vm331, %v1938, %v1942
      %v1945 = vshrl.u32 %v1812, 16
      %v1947 = vrot.slane %v1945, 4
      %v1948 = vshll.u32 %v1812, 16
      %v1950 = vrot.slane %v1948, 5
      %v1951 = vor.u32 %v1947, %v1950
      %v1952 = vrot.slane %v1951, 4
      %v1954 = vshll.u32 %v1813, 16
      %v1956 = vrot.slane %v1954, 5
      %v1957 = vsel %vm331, %v1952, %v1956
      %v1958 = vshrl.u32 %v1813, 16
      %v1960 = vrot.slane %v1958, 4
      %v1961 = vor.u32 %v1960, %v1956
      %v1962 = vrot.slane %v1961, 4
      %v1964 = vshll.u32 %v1814, 16
      %v1966 = vrot.slane %v1964, 5
      %v1967 = vsel %vm331, %v1962, %v1966
      %v1969 = vshrl.u32 %v1815, 16
      %v1971 = vrot.slane %v1969, 4
      %v1972 = vshll.u32 %v1815, 16
      %v1974 = vrot.slane %v1972, 5
      %v1975 = vor.u32 %v1971, %v1974
      %v1976 = vrot.slane %v1975, 4
      %v1978 = vshll.u32 %v1816, 16
      %v1980 = vrot.slane %v1978, 5
      %v1981 = vsel %vm331, %v1976, %v1980
      %v1982 = vshrl.u32 %v1816, 16
      %v1984 = vrot.slane %v1982, 4
      %v1985 = vor.u32 %v1984, %v1980
      %v1986 = vrot.slane %v1985, 4
      %v1988 = vshll.u32 %v1817, 16
      %v1990 = vrot.slane %v1988, 5
      %v1991 = vsel %vm331, %v1986, %v1990
      %v1993 = vshrl.u32 %v1818, 16
      %v1995 = vrot.slane %v1993, 4
      %v1996 = vshll.u32 %v1818, 16
      %v1998 = vrot.slane %v1996, 5
      %v1999 = vor.u32 %v1995, %v1998
      %v2000 = vrot.slane %v1999, 4
      %v2002 = vshll.u32 %v1819, 16
      %v2004 = vrot.slane %v2002, 5
      %v2005 = vsel %vm331, %v2000, %v2004
      %v2006 = vshrl.u32 %v1819, 16
      %v2008 = vrot.slane %v2006, 4
      %v2009 = vor.u32 %v2008, %v2004
      %v2010 = vrot.slane %v2009, 4
      %v2012 = vshll.u32 %v1820, 16
      %v2014 = vrot.slane %v2012, 5
      %v2015 = vsel %vm331, %v2010, %v2014
      %v2017 = vshrl.u32 %v1821, 16
      %v2019 = vrot.slane %v2017, 4
      %v2020 = vshll.u32 %v1821, 16
      %v2022 = vrot.slane %v2020, 5
      %v2023 = vor.u32 %v2019, %v2022
      %v2024 = vrot.slane %v2023, 4
      %v2026 = vshll.u32 %v1822, 16
      %v2028 = vrot.slane %v2026, 5
      %v2029 = vsel %vm331, %v2024, %v2028
      %v2030 = vshrl.u32 %v1822, 16
      %v2032 = vrot.slane %v2030, 4
      %v2033 = vor.u32 %v2032, %v2028
      %v2034 = vrot.slane %v2033, 4
      %v2036 = vshll.u32 %v1823, 16
      %v2038 = vrot.slane %v2036, 5
      %v2039 = vsel %vm331, %v2034, %v2038
      %v2041 = vshrl.u32 %v1824, 16
      %v2043 = vrot.slane %v2041, 4
      %v2044 = vshll.u32 %v1824, 16
      %v2046 = vrot.slane %v2044, 5
      %v2047 = vor.u32 %v2043, %v2046
      %v2048 = vrot.slane %v2047, 4
      %v2050 = vshll.u32 %v1825, 16
      %v2052 = vrot.slane %v2050, 5
      %v2053 = vsel %vm331, %v2048, %v2052
      %v2054 = vshrl.u32 %v1825, 16
      %v2056 = vrot.slane %v2054, 4
      %v2057 = vor.u32 %v2056, %v2052
      %v2058 = vrot.slane %v2057, 4
      %v2060 = vshll.u32 %v1826, 16
      %v2062 = vrot.slane %v2060, 5
      %v2063 = vsel %vm331, %v2058, %v2062
      %v2065 = vshrl.u32 %v1827, 16
      %v2067 = vrot.slane %v2065, 4
      %v2068 = vshll.u32 %v1827, 16
      %v2070 = vrot.slane %v2068, 5
      %v2071 = vor.u32 %v2067, %v2070
      %v2072 = vrot.slane %v2071, 4
      %v2074 = vshll.u32 %v1828, 16
      %v2076 = vrot.slane %v2074, 5
      %v2077 = vsel %vm331, %v2072, %v2076
      %v2078 = vshrl.u32 %v1828, 16
      %v2080 = vrot.slane %v2078, 4
      %v2081 = vor.u32 %v2080, %v2076
      %v2082 = vrot.slane %v2081, 4
      %v2084 = vshll.u32 %v1829, 16
      %v2086 = vrot.slane %v2084, 5
      %v2087 = vsel %vm331, %v2082, %v2086
      %v2089 = vshrl.u32 %v1830, 16
      %v2091 = vrot.slane %v2089, 4
      %v2092 = vshll.u32 %v1830, 16
      %v2094 = vrot.slane %v2092, 5
      %v2095 = vor.u32 %v2091, %v2094
      %v2096 = vrot.slane %v2095, 4
      %v2098 = vshll.u32 %v1831, 16
      %v2100 = vrot.slane %v2098, 5
      %v2101 = vsel %vm331, %v2096, %v2100
      %v2102 = vshrl.u32 %v1831, 16
      %v2104 = vrot.slane %v2102, 4
      %v2105 = vor.u32 %v2104, %v2100
      %v2106 = vrot.slane %v2105, 4
      %v2108 = vshll.u32 %v1832, 16
      %v2110 = vrot.slane %v2108, 5
      %v2111 = vsel %vm331, %v2106, %v2110
      %v2113 = vshrl.u32 %v1833, 16
      %v2115 = vrot.slane %v2113, 4
      %v2116 = vshll.u32 %v1833, 16
      %v2118 = vrot.slane %v2116, 5
      %v2119 = vor.u32 %v2115, %v2118
      %v2120 = vrot.slane %v2119, 4
      %v2122 = vshll.u32 %v1834, 16
      %v2124 = vrot.slane %v2122, 5
      %v2125 = vsel %vm331, %v2120, %v2124
      %v2126 = vshrl.u32 %v1834, 16
      %v2128 = vrot.slane %v2126, 4
      %v2129 = vor.u32 %v2128, %v2124
      %v2130 = vrot.slane %v2129, 4
      %v2132 = vshll.u32 %v1835, 16
      %v2134 = vrot.slane %v2132, 5
      %v2135 = vsel %vm331, %v2130, %v2134
      %v2137 = vshrl.u32 %v1836, 16
      %v2139 = vrot.slane %v2137, 4
      %v2140 = vshll.u32 %v1836, 16
      %v2142 = vrot.slane %v2140, 5
      %v2143 = vor.u32 %v2139, %v2142
      %v2144 = vrot.slane %v2143, 4
      %v2146 = vshll.u32 %v1837, 16
      %v2148 = vrot.slane %v2146, 5
      %v2149 = vsel %vm331, %v2144, %v2148
      %v2150 = vshrl.u32 %v1837, 16
      %v2152 = vrot.slane %v2150, 4
      %v2153 = vor.u32 %v2152, %v2148
      %v2154 = vrot.slane %v2153, 4
      %v2156 = vshll.u32 %v1838, 16
      %v2158 = vrot.slane %v2156, 5
      %v2159 = vsel %vm331, %v2154, %v2158
      %v2161 = vshrl.u32 %v1839, 16
      %v2163 = vrot.slane %v2161, 4
      %v2164 = vshll.u32 %v1839, 16
      %v2166 = vrot.slane %v2164, 5
      %v2167 = vor.u32 %v2163, %v2166
      %v2168 = vrot.slane %v2167, 4
      %v2170 = vshll.u32 %v1840, 16
      %v2172 = vrot.slane %v2170, 5
      %v2173 = vsel %vm331, %v2168, %v2172
      %v2174 = vshrl.u32 %v1840, 16
      %v2176 = vrot.slane %v2174, 4
      %v2177 = vor.u32 %v2176, %v2172
      %v2178 = vrot.slane %v2177, 4
      %v2180 = vshll.u32 %v1841, 16
      %v2182 = vrot.slane %v2180, 5
      %v2183 = vsel %vm331, %v2178, %v2182
      %v2185 = vshrl.u32 %v1842, 16
      %v2187 = vrot.slane %v2185, 4
      %v2188 = vshll.u32 %v1842, 16
      %v2190 = vrot.slane %v2188, 5
      %v2191 = vor.u32 %v2187, %v2190
      %v2192 = vrot.slane %v2191, 4
      %v2194 = vshll.u32 %v1843, 16
      %v2196 = vrot.slane %v2194, 5
      %v2197 = vsel %vm331, %v2192, %v2196
      %v2198 = vshrl.u32 %v1843, 16
      %v2200 = vrot.slane %v2198, 4
      %v2201 = vor.u32 %v2200, %v2196
      %v2202 = vrot.slane %v2201, 4
      %v2204 = vshll.u32 %v1844, 16
      %v2206 = vrot.slane %v2204, 5
      %v2207 = vsel %vm331, %v2202, %v2206
      %v2209 = vshrl.u32 %v1845, 16
      %v2211 = vrot.slane %v2209, 4
      %v2212 = vshll.u32 %v1845, 16
      %v2214 = vrot.slane %v2212, 5
      %v2215 = vor.u32 %v2211, %v2214
      %v2216 = vrot.slane %v2215, 4
      %v2218 = vshll.u32 %v1846, 16
      %v2220 = vrot.slane %v2218, 5
      %v2221 = vsel %vm331, %v2216, %v2220
      %v2222 = vshrl.u32 %v1846, 16
      %v2224 = vrot.slane %v2222, 4
      %v2225 = vor.u32 %v2224, %v2220
      %v2226 = vrot.slane %v2225, 4
      %v2228 = vshll.u32 %v1847, 16
      %v2230 = vrot.slane %v2228, 5
      %v2231 = vsel %vm331, %v2226, %v2230
      %s2232 = scalar_lea.vmem %s1, 8
      %v2233 = vld [vmem:[%s2232] sm:$0x3]
      %v2234 = vunpack.c.l.b16 %v1861
      %v2235 = vunpack.c.l.b16 %v1871
      %v2236 = vunpack.c.l.b16 %v1885
      %v2237 = vunpack.c.l.b16 %v1895
      %v2238 = vunpack.c.l.b16 %v1909
      %v2239 = vunpack.c.l.b16 %v1919
      %v2240 = vunpack.c.l.b16 %v1933
      %v2241 = vunpack.c.l.b16 %v1943
      %v2242 = vunpack.c.l.b16 %v1957
      %v2243 = vunpack.c.l.b16 %v1967
      %v2244 = vunpack.c.l.b16 %v1981
      %v2245 = vunpack.c.l.b16 %v1991
      %v2246 = vunpack.c.l.b16 %v2005
      %v2247 = vunpack.c.l.b16 %v2015
      %v2248 = vunpack.c.l.b16 %v2029
      %v2249 = vunpack.c.l.b16 %v2039
      %v2250 = vunpack.c.l.b16 %v2053
      %v2251 = vunpack.c.l.b16 %v2063
      %v2252 = vunpack.c.l.b16 %v2077
      %v2253 = vunpack.c.l.b16 %v2087
      %v2254 = vunpack.c.l.b16 %v2101
      %v2255 = vunpack.c.l.b16 %v2111
      %v2256 = vunpack.c.l.b16 %v2125
      %v2257 = vunpack.c.l.b16 %v2135
      %v2258 = vunpack.c.l.b16 %v2149
      %v2259 = vunpack.c.l.b16 %v2159
      %v2260 = vunpack.c.l.b16 %v2173
      %v2261 = vunpack.c.l.b16 %v2183
      %v2262 = vunpack.c.l.b16 %v2197
      %v2263 = vunpack.c.l.b16 %v2207
      %v2264 = vunpack.c.l.b16 %v2221
      %v2265 = vunpack.c.l.b16 %v2231
      %v2266 = vpack.c.b16 %v2235, %v2234
      %v2267 = vpack.c.b16 %v2237, %v2236
      %v2268 = vpack.c.b16 %v2239, %v2238
      %v2269 = vpack.c.b16 %v2241, %v2240
      %v2270 = vpack.c.b16 %v2243, %v2242
      %v2271 = vpack.c.b16 %v2245, %v2244
      %v2272 = vpack.c.b16 %v2247, %v2246
      %v2273 = vpack.c.b16 %v2249, %v2248
      %v2274 = vpack.c.b16 %v2251, %v2250
      %v2275 = vpack.c.b16 %v2253, %v2252
      %v2276 = vpack.c.b16 %v2255, %v2254
      %v2277 = vpack.c.b16 %v2257, %v2256
      %v2278 = vpack.c.b16 %v2259, %v2258
      %v2279 = vpack.c.b16 %v2261, %v2260
      %v2280 = vpack.c.b16 %v2263, %v2262
      %v2281 = vpack.c.b16 %v2265, %v2264
      %v2283 = vsel %vm766, %v2266, 0
      %v2286 = vsel %vm766, %v2267, 0
      %v2289 = vsel %vm766, %v2268, 0
      %v2292 = vsel %vm766, %v2269, 0
      %v2295 = vsel %vm766, %v2270, 0
      %v2298 = vsel %vm766, %v2271, 0
      %v2301 = vsel %vm766, %v2272, 0
      %v2304 = vsel %vm766, %v2273, 0
      %v2307 = vsel %vm766, %v2274, 0
      %v2310 = vsel %vm766, %v2275, 0
      %v2313 = vsel %vm766, %v2276, 0
      %v2316 = vsel %vm766, %v2277, 0
      %v2319 = vsel %vm766, %v2278, 0
      %v2322 = vsel %vm766, %v2279, 0
      %v2325 = vsel %vm766, %v2280, 0
      %v2328 = vsel %vm766, %v2281, 0
      %v2331 = vsel %vm815, %v2233, 0
      %2333 = vmatpush.bf16.msra.mxu0 0
      %2334 = vmatpush.bf16.msra.mxu0 0
      %2335 = vmatpush.bf16.msra.mxu0 0
      %2336 = vmatpush.bf16.msra.mxu0 0
      %2337 = vmatpush.bf16.msra.mxu0 0
      %2338 = vmatpush.bf16.msra.mxu0 0
      %2339 = vmatpush.bf16.msra.mxu0 0
      %2340 = vmatpush.bf16.msra.mxu0 %v2331
      %2341 = vmatmul.bf16.gmra.mxu0 %v2283
      %v2342 = vpop.f32.mrf.mxu0
      %v2343 = vadd.f32 0.0, %v2342
      %v2344 = vpop.f32.mrf.mxu0
      %v2345 = vadd.f32 0.0, %v2344
      %2346 = vmatmul.bf16.gmra.mxu0 %v2286
      %v2347 = vpop.f32.mrf.mxu0
      %v2348 = vadd.f32 0.0, %v2347
      %v2349 = vpop.f32.mrf.mxu0
      %v2350 = vadd.f32 0.0, %v2349
      %2351 = vmatmul.bf16.gmra.mxu0 %v2289
      %v2352 = vpop.f32.mrf.mxu0
      %v2353 = vadd.f32 0.0, %v2352
      %v2354 = vpop.f32.mrf.mxu0
      %v2355 = vadd.f32 0.0, %v2354
      %2356 = vmatmul.bf16.gmra.mxu0 %v2292
      %v2357 = vpop.f32.mrf.mxu0
      %v2358 = vadd.f32 0.0, %v2357
      %v2359 = vpop.f32.mrf.mxu0
      %v2360 = vadd.f32 0.0, %v2359
      %2361 = vmatmul.bf16.gmra.mxu0 %v2295
      %v2362 = vpop.f32.mrf.mxu0
      %v2363 = vadd.f32 0.0, %v2362
      %v2364 = vpop.f32.mrf.mxu0
      %v2365 = vadd.f32 0.0, %v2364
      %2366 = vmatmul.bf16.gmra.mxu0 %v2298
      %v2367 = vpop.f32.mrf.mxu0
      %v2368 = vadd.f32 0.0, %v2367
      %v2369 = vpop.f32.mrf.mxu0
      %v2370 = vadd.f32 0.0, %v2369
      %2371 = vmatmul.bf16.gmra.mxu0 %v2301
      %v2372 = vpop.f32.mrf.mxu0
      %v2373 = vadd.f32 0.0, %v2372
      %v2374 = vpop.f32.mrf.mxu0
      %v2375 = vadd.f32 0.0, %v2374
      %2376 = vmatmul.bf16.gmra.mxu0 %v2304
      %v2377 = vpop.f32.mrf.mxu0
      %v2378 = vadd.f32 0.0, %v2377
      %v2379 = vpop.f32.mrf.mxu0
      %v2380 = vadd.f32 0.0, %v2379
      %2381 = vmatmul.bf16.gmra.mxu0 %v2307
      %v2382 = vpop.f32.mrf.mxu0
      %v2383 = vadd.f32 0.0, %v2382
      %v2384 = vpop.f32.mrf.mxu0
      %v2385 = vadd.f32 0.0, %v2384
      %2386 = vmatmul.bf16.gmra.mxu0 %v2310
      %v2387 = vpop.f32.mrf.mxu0
      %v2388 = vadd.f32 0.0, %v2387
      %v2389 = vpop.f32.mrf.mxu0
      %v2390 = vadd.f32 0.0, %v2389
      %2391 = vmatmul.bf16.gmra.mxu0 %v2313
      %v2392 = vpop.f32.mrf.mxu0
      %v2393 = vadd.f32 0.0, %v2392
      %v2394 = vpop.f32.mrf.mxu0
      %v2395 = vadd.f32 0.0, %v2394
      %2396 = vmatmul.bf16.gmra.mxu0 %v2316
      %v2397 = vpop.f32.mrf.mxu0
      %v2398 = vadd.f32 0.0, %v2397
      %v2399 = vpop.f32.mrf.mxu0
      %v2400 = vadd.f32 0.0, %v2399
      %2401 = vmatmul.bf16.gmra.mxu0 %v2319
      %v2402 = vpop.f32.mrf.mxu0
      %v2403 = vadd.f32 0.0, %v2402
      %v2404 = vpop.f32.mrf.mxu0
      %v2405 = vadd.f32 0.0, %v2404
      %2406 = vmatmul.bf16.gmra.mxu0 %v2322
      %v2407 = vpop.f32.mrf.mxu0
      %v2408 = vadd.f32 0.0, %v2407
      %v2409 = vpop.f32.mrf.mxu0
      %v2410 = vadd.f32 0.0, %v2409
      %2411 = vmatmul.bf16.gmra.mxu0 %v2325
      %v2412 = vpop.f32.mrf.mxu0
      %v2413 = vadd.f32 0.0, %v2412
      %v2414 = vpop.f32.mrf.mxu0
      %v2415 = vadd.f32 0.0, %v2414
      %2416 = vmatmul.bf16.gmra.mxu0 %v2328
      %v2417 = vpop.f32.mrf.mxu0
      %v2418 = vadd.f32 0.0, %v2417
      %v2419 = vpop.f32.mrf.mxu0
      %v2420 = vadd.f32 0.0, %v2419
      %2421 = vdwg.mxu0
      %v2422 = vadd.f32 %v1768, %v2343
      %v2423 = vadd.f32 %v1769, %v2345
      %v2424 = vadd.f32 %v1770, %v2348
      %v2425 = vadd.f32 %v1771, %v2350
      %v2426 = vadd.f32 %v1772, %v2353
      %v2427 = vadd.f32 %v1773, %v2355
      %v2428 = vadd.f32 %v1774, %v2358
      %v2429 = vadd.f32 %v1775, %v2360
      %v2430 = vadd.f32 %v1776, %v2363
      %v2431 = vadd.f32 %v1777, %v2365
      %v2432 = vadd.f32 %v1778, %v2368
      %v2433 = vadd.f32 %v1779, %v2370
      %v2434 = vadd.f32 %v1780, %v2373
      %v2435 = vadd.f32 %v1781, %v2375
      %v2436 = vadd.f32 %v1782, %v2378
      %v2437 = vadd.f32 %v1783, %v2380
      %v2438 = vadd.f32 %v1784, %v2383
      %v2439 = vadd.f32 %v1785, %v2385
      %v2440 = vadd.f32 %v1786, %v2388
      %v2441 = vadd.f32 %v1787, %v2390
      %v2442 = vadd.f32 %v1788, %v2393
      %v2443 = vadd.f32 %v1789, %v2395
      %v2444 = vadd.f32 %v1790, %v2398
      %v2445 = vadd.f32 %v1791, %v2400
      %v2446 = vadd.f32 %v1792, %v2403
      %v2447 = vadd.f32 %v1793, %v2405
      %v2448 = vadd.f32 %v1794, %v2408
      %v2449 = vadd.f32 %v1795, %v2410
      %v2450 = vadd.f32 %v1796, %v2413
      %v2451 = vadd.f32 %v1797, %v2415
      %v2452 = vadd.f32 %v1798, %v2418
      %v2453 = vadd.f32 %v1799, %v2420
      %v2454 = vld [vmem:[%s1513] sm:$0xe]
      %v2455 = vld [vmem:[%s1513 + $0xc] sm:$0xe]
      %v2456 = vld [vmem:[%s1513 + $0x18] sm:$0xe]
      %v2457 = vld [vmem:[%s1513 + $0x24] sm:$0xe]
      %v2458 = vld [vmem:[%s1513 + $0x30] sm:$0xe]
      %v2459 = vld [vmem:[%s1513 + $0x3c] sm:$0xe]
      %v2460 = vld [vmem:[%s1513 + $0x48] sm:$0xe]
      %v2461 = vld [vmem:[%s1513 + $0x54] sm:$0xe]
      %v2462 = vld [vmem:[%s1513 + $0x60] sm:$0xe]
      %v2463 = vld [vmem:[%s1513 + $0x6c] sm:$0xe]
      %v2464 = vld [vmem:[%s1513 + $0x78] sm:$0xe]
      %v2465 = vld [vmem:[%s1513 + $0x84] sm:$0xe]
      %v2466 = vld [vmem:[%s1513 + $0x90] sm:$0xe]
      %v2467 = vld [vmem:[%s1513 + $0x9c] sm:$0xe]
      %v2468 = vld [vmem:[%s1513 + $0xa8] sm:$0xe]
      %v2469 = vld [vmem:[%s1513 + $0xb4] sm:$0xe]
      %v2518 = vrot.slane %v2454, 5
      %v2519 = vrot.slane %v2518, 4
      %v2520 = vrot.slane %v1801, 5
      %v2521 = vsel %vm1178, %v2519, %v2520
      %v2522 = vrot.slane %v2520, 4
      %v2523 = vrot.slane %v1802, 5
      %v2524 = vsel %vm1178, %v2522, %v2523
      %v2525 = vrot.slane %v2455, 5
      %v2526 = vrot.slane %v2525, 4
      %v2527 = vrot.slane %v1804, 5
      %v2528 = vsel %vm1178, %v2526, %v2527
      %v2529 = vrot.slane %v2527, 4
      %v2530 = vrot.slane %v1805, 5
      %v2531 = vsel %vm1178, %v2529, %v2530
      %v2532 = vrot.slane %v2456, 5
      %v2533 = vrot.slane %v2532, 4
      %v2534 = vrot.slane %v1807, 5
      %v2535 = vsel %vm1178, %v2533, %v2534
      %v2536 = vrot.slane %v2534, 4
      %v2537 = vrot.slane %v1808, 5
      %v2538 = vsel %vm1178, %v2536, %v2537
      %v2539 = vrot.slane %v2457, 5
      %v2540 = vrot.slane %v2539, 4
      %v2541 = vrot.slane %v1810, 5
      %v2542 = vsel %vm1178, %v2540, %v2541
      %v2543 = vrot.slane %v2541, 4
      %v2544 = vrot.slane %v1811, 5
      %v2545 = vsel %vm1178, %v2543, %v2544
      %v2546 = vrot.slane %v2458, 5
      %v2547 = vrot.slane %v2546, 4
      %v2548 = vrot.slane %v1813, 5
      %v2549 = vsel %vm1178, %v2547, %v2548
      %v2550 = vrot.slane %v2548, 4
      %v2551 = vrot.slane %v1814, 5
      %v2552 = vsel %vm1178, %v2550, %v2551
      %v2553 = vrot.slane %v2459, 5
      %v2554 = vrot.slane %v2553, 4
      %v2555 = vrot.slane %v1816, 5
      %v2556 = vsel %vm1178, %v2554, %v2555
      %v2557 = vrot.slane %v2555, 4
      %v2558 = vrot.slane %v1817, 5
      %v2559 = vsel %vm1178, %v2557, %v2558
      %v2560 = vrot.slane %v2460, 5
      %v2561 = vrot.slane %v2560, 4
      %v2562 = vrot.slane %v1819, 5
      %v2563 = vsel %vm1178, %v2561, %v2562
      %v2564 = vrot.slane %v2562, 4
      %v2565 = vrot.slane %v1820, 5
      %v2566 = vsel %vm1178, %v2564, %v2565
      %v2567 = vrot.slane %v2461, 5
      %v2568 = vrot.slane %v2567, 4
      %v2569 = vrot.slane %v1822, 5
      %v2570 = vsel %vm1178, %v2568, %v2569
      %v2571 = vrot.slane %v2569, 4
      %v2572 = vrot.slane %v1823, 5
      %v2573 = vsel %vm1178, %v2571, %v2572
      %v2574 = vrot.slane %v2462, 5
      %v2575 = vrot.slane %v2574, 4
      %v2576 = vrot.slane %v1825, 5
      %v2577 = vsel %vm1178, %v2575, %v2576
      %v2578 = vrot.slane %v2576, 4
      %v2579 = vrot.slane %v1826, 5
      %v2580 = vsel %vm1178, %v2578, %v2579
      %v2581 = vrot.slane %v2463, 5
      %v2582 = vrot.slane %v2581, 4
      %v2583 = vrot.slane %v1828, 5
      %v2584 = vsel %vm1178, %v2582, %v2583
      %v2585 = vrot.slane %v2583, 4
      %v2586 = vrot.slane %v1829, 5
      %v2587 = vsel %vm1178, %v2585, %v2586
      %v2588 = vrot.slane %v2464, 5
      %v2589 = vrot.slane %v2588, 4
      %v2590 = vrot.slane %v1831, 5
      %v2591 = vsel %vm1178, %v2589, %v2590
      %v2592 = vrot.slane %v2590, 4
      %v2593 = vrot.slane %v1832, 5
      %v2594 = vsel %vm1178, %v2592, %v2593
      %v2595 = vrot.slane %v2465, 5
      %v2596 = vrot.slane %v2595, 4
      %v2597 = vrot.slane %v1834, 5
      %v2598 = vsel %vm1178, %v2596, %v2597
      %v2599 = vrot.slane %v2597, 4
      %v2600 = vrot.slane %v1835, 5
      %v2601 = vsel %vm1178, %v2599, %v2600
      %v2602 = vrot.slane %v2466, 5
      %v2603 = vrot.slane %v2602, 4
      %v2604 = vrot.slane %v1837, 5
      %v2605 = vsel %vm1178, %v2603, %v2604
      %v2606 = vrot.slane %v2604, 4
      %v2607 = vrot.slane %v1838, 5
      %v2608 = vsel %vm1178, %v2606, %v2607
      %v2609 = vrot.slane %v2467, 5
      %v2610 = vrot.slane %v2609, 4
      %v2611 = vrot.slane %v1840, 5
      %v2612 = vsel %vm1178, %v2610, %v2611
      %v2613 = vrot.slane %v2611, 4
      %v2614 = vrot.slane %v1841, 5
      %v2615 = vsel %vm1178, %v2613, %v2614
      %v2616 = vrot.slane %v2468, 5
      %v2617 = vrot.slane %v2616, 4
      %v2618 = vrot.slane %v1843, 5
      %v2619 = vsel %vm1178, %v2617, %v2618
      %v2620 = vrot.slane %v2618, 4
      %v2621 = vrot.slane %v1844, 5
      %v2622 = vsel %vm1178, %v2620, %v2621
      %v2623 = vrot.slane %v2469, 5
      %v2624 = vrot.slane %v2623, 4
      %v2625 = vrot.slane %v1846, 5
      %v2626 = vsel %vm1178, %v2624, %v2625
      %v2627 = vrot.slane %v2625, 4
      %v2628 = vrot.slane %v1847, 5
      %v2629 = vsel %vm1178, %v2627, %v2628
      %s2630 = scalar_lea.vmem %s1, 10
      %v2631 = vld [vmem:[%s2630] sm:$0x3]
      %v2632 = vunpack.c.l.b16 %v2521
      %v2633 = vunpack.c.l.b16 %v2524
      %v2634 = vunpack.c.l.b16 %v2528
      %v2635 = vunpack.c.l.b16 %v2531
      %v2636 = vunpack.c.l.b16 %v2535
      %v2637 = vunpack.c.l.b16 %v2538
      %v2638 = vunpack.c.l.b16 %v2542
      %v2639 = vunpack.c.l.b16 %v2545
      %v2640 = vunpack.c.l.b16 %v2549
      %v2641 = vunpack.c.l.b16 %v2552
      %v2642 = vunpack.c.l.b16 %v2556
      %v2643 = vunpack.c.l.b16 %v2559
      %v2644 = vunpack.c.l.b16 %v2563
      %v2645 = vunpack.c.l.b16 %v2566
      %v2646 = vunpack.c.l.b16 %v2570
      %v2647 = vunpack.c.l.b16 %v2573
      %v2648 = vunpack.c.l.b16 %v2577
      %v2649 = vunpack.c.l.b16 %v2580
      %v2650 = vunpack.c.l.b16 %v2584
      %v2651 = vunpack.c.l.b16 %v2587
      %v2652 = vunpack.c.l.b16 %v2591
      %v2653 = vunpack.c.l.b16 %v2594
      %v2654 = vunpack.c.l.b16 %v2598
      %v2655 = vunpack.c.l.b16 %v2601
      %v2656 = vunpack.c.l.b16 %v2605
      %v2657 = vunpack.c.l.b16 %v2608
      %v2658 = vunpack.c.l.b16 %v2612
      %v2659 = vunpack.c.l.b16 %v2615
      %v2660 = vunpack.c.l.b16 %v2619
      %v2661 = vunpack.c.l.b16 %v2622
      %v2662 = vunpack.c.l.b16 %v2626
      %v2663 = vunpack.c.l.b16 %v2629
      %v2664 = vpack.c.b16 %v2633, %v2632
      %v2665 = vpack.c.b16 %v2635, %v2634
      %v2666 = vpack.c.b16 %v2637, %v2636
      %v2667 = vpack.c.b16 %v2639, %v2638
      %v2668 = vpack.c.b16 %v2641, %v2640
      %v2669 = vpack.c.b16 %v2643, %v2642
      %v2670 = vpack.c.b16 %v2645, %v2644
      %v2671 = vpack.c.b16 %v2647, %v2646
      %v2672 = vpack.c.b16 %v2649, %v2648
      %v2673 = vpack.c.b16 %v2651, %v2650
      %v2674 = vpack.c.b16 %v2653, %v2652
      %v2675 = vpack.c.b16 %v2655, %v2654
      %v2676 = vpack.c.b16 %v2657, %v2656
      %v2677 = vpack.c.b16 %v2659, %v2658
      %v2678 = vpack.c.b16 %v2661, %v2660
      %v2679 = vpack.c.b16 %v2663, %v2662
      %v2681 = vsel %vm766, %v2664, 0
      %v2684 = vsel %vm766, %v2665, 0
      %v2687 = vsel %vm766, %v2666, 0
      %v2690 = vsel %vm766, %v2667, 0
      %v2693 = vsel %vm766, %v2668, 0
      %v2696 = vsel %vm766, %v2669, 0
      %v2699 = vsel %vm766, %v2670, 0
      %v2702 = vsel %vm766, %v2671, 0
      %v2705 = vsel %vm766, %v2672, 0
      %v2708 = vsel %vm766, %v2673, 0
      %v2711 = vsel %vm766, %v2674, 0
      %v2714 = vsel %vm766, %v2675, 0
      %v2717 = vsel %vm766, %v2676, 0
      %v2720 = vsel %vm766, %v2677, 0
      %v2723 = vsel %vm766, %v2678, 0
      %v2726 = vsel %vm766, %v2679, 0
      %v2729 = vsel %vm815, %v2631, 0
      %2731 = vmatpush.bf16.msra.mxu0 0
      %2732 = vmatpush.bf16.msra.mxu0 0
      %2733 = vmatpush.bf16.msra.mxu0 0
      %2734 = vmatpush.bf16.msra.mxu0 0
      %2735 = vmatpush.bf16.msra.mxu0 0
      %2736 = vmatpush.bf16.msra.mxu0 0
      %2737 = vmatpush.bf16.msra.mxu0 0
      %2738 = vmatpush.bf16.msra.mxu0 %v2729
      %2739 = vmatmul.bf16.gmra.mxu0 %v2681
      %v2740 = vpop.f32.mrf.mxu0
      %v2741 = vadd.f32 0.0, %v2740
      %v2742 = vpop.f32.mrf.mxu0
      %v2743 = vadd.f32 0.0, %v2742
      %2744 = vmatmul.bf16.gmra.mxu0 %v2684
      %v2745 = vpop.f32.mrf.mxu0
      %v2746 = vadd.f32 0.0, %v2745
      %v2747 = vpop.f32.mrf.mxu0
      %v2748 = vadd.f32 0.0, %v2747
      %2749 = vmatmul.bf16.gmra.mxu0 %v2687
      %v2750 = vpop.f32.mrf.mxu0
      %v2751 = vadd.f32 0.0, %v2750
      %v2752 = vpop.f32.mrf.mxu0
      %v2753 = vadd.f32 0.0, %v2752
      %2754 = vmatmul.bf16.gmra.mxu0 %v2690
      %v2755 = vpop.f32.mrf.mxu0
      %v2756 = vadd.f32 0.0, %v2755
      %v2757 = vpop.f32.mrf.mxu0
      %v2758 = vadd.f32 0.0, %v2757
      %2759 = vmatmul.bf16.gmra.mxu0 %v2693
      %v2760 = vpop.f32.mrf.mxu0
      %v2761 = vadd.f32 0.0, %v2760
      %v2762 = vpop.f32.mrf.mxu0
      %v2763 = vadd.f32 0.0, %v2762
      %2764 = vmatmul.bf16.gmra.mxu0 %v2696
      %v2765 = vpop.f32.mrf.mxu0
      %v2766 = vadd.f32 0.0, %v2765
      %v2767 = vpop.f32.mrf.mxu0
      %v2768 = vadd.f32 0.0, %v2767
      %2769 = vmatmul.bf16.gmra.mxu0 %v2699
      %v2770 = vpop.f32.mrf.mxu0
      %v2771 = vadd.f32 0.0, %v2770
      %v2772 = vpop.f32.mrf.mxu0
      %v2773 = vadd.f32 0.0, %v2772
      %2774 = vmatmul.bf16.gmra.mxu0 %v2702
      %v2775 = vpop.f32.mrf.mxu0
      %v2776 = vadd.f32 0.0, %v2775
      %v2777 = vpop.f32.mrf.mxu0
      %v2778 = vadd.f32 0.0, %v2777
      %2779 = vmatmul.bf16.gmra.mxu0 %v2705
      %v2780 = vpop.f32.mrf.mxu0
      %v2781 = vadd.f32 0.0, %v2780
      %v2782 = vpop.f32.mrf.mxu0
      %v2783 = vadd.f32 0.0, %v2782
      %2784 = vmatmul.bf16.gmra.mxu0 %v2708
      %v2785 = vpop.f32.mrf.mxu0
      %v2786 = vadd.f32 0.0, %v2785
      %v2787 = vpop.f32.mrf.mxu0
      %v2788 = vadd.f32 0.0, %v2787
      %2789 = vmatmul.bf16.gmra.mxu0 %v2711
      %v2790 = vpop.f32.mrf.mxu0
      %v2791 = vadd.f32 0.0, %v2790
      %v2792 = vpop.f32.mrf.mxu0
      %v2793 = vadd.f32 0.0, %v2792
      %2794 = vmatmul.bf16.gmra.mxu0 %v2714
      %v2795 = vpop.f32.mrf.mxu0
      %v2796 = vadd.f32 0.0, %v2795
      %v2797 = vpop.f32.mrf.mxu0
      %v2798 = vadd.f32 0.0, %v2797
      %2799 = vmatmul.bf16.gmra.mxu0 %v2717
      %v2800 = vpop.f32.mrf.mxu0
      %v2801 = vadd.f32 0.0, %v2800
      %v2802 = vpop.f32.mrf.mxu0
      %v2803 = vadd.f32 0.0, %v2802
      %2804 = vmatmul.bf16.gmra.mxu0 %v2720
      %v2805 = vpop.f32.mrf.mxu0
      %v2806 = vadd.f32 0.0, %v2805
      %v2807 = vpop.f32.mrf.mxu0
      %v2808 = vadd.f32 0.0, %v2807
      %2809 = vmatmul.bf16.gmra.mxu0 %v2723
      %v2810 = vpop.f32.mrf.mxu0
      %v2811 = vadd.f32 0.0, %v2810
      %v2812 = vpop.f32.mrf.mxu0
      %v2813 = vadd.f32 0.0, %v2812
      %2814 = vmatmul.bf16.gmra.mxu0 %v2726
      %v2815 = vpop.f32.mrf.mxu0
      %v2816 = vadd.f32 0.0, %v2815
      %v2817 = vpop.f32.mrf.mxu0
      %v2818 = vadd.f32 0.0, %v2817
      %2819 = vdwg.mxu0
      %v2820 = vadd.f32 %v2422, %v2741
      %v2821 = vadd.f32 %v2423, %v2743
      %v2822 = vadd.f32 %v2424, %v2746
      %v2823 = vadd.f32 %v2425, %v2748
      %v2824 = vadd.f32 %v2426, %v2751
      %v2825 = vadd.f32 %v2427, %v2753
      %v2826 = vadd.f32 %v2428, %v2756
      %v2827 = vadd.f32 %v2429, %v2758
      %v2828 = vadd.f32 %v2430, %v2761
      %v2829 = vadd.f32 %v2431, %v2763
      %v2830 = vadd.f32 %v2432, %v2766
      %v2831 = vadd.f32 %v2433, %v2768
      %v2832 = vadd.f32 %v2434, %v2771
      %v2833 = vadd.f32 %v2435, %v2773
      %v2834 = vadd.f32 %v2436, %v2776
      %v2835 = vadd.f32 %v2437, %v2778
      %v2836 = vadd.f32 %v2438, %v2781
      %v2837 = vadd.f32 %v2439, %v2783
      %v2838 = vadd.f32 %v2440, %v2786
      %v2839 = vadd.f32 %v2441, %v2788
      %v2840 = vadd.f32 %v2442, %v2791
      %v2841 = vadd.f32 %v2443, %v2793
      %v2842 = vadd.f32 %v2444, %v2796
      %v2843 = vadd.f32 %v2445, %v2798
      %v2844 = vadd.f32 %v2446, %v2801
      %v2845 = vadd.f32 %v2447, %v2803
      %v2846 = vadd.f32 %v2448, %v2806
      %v2847 = vadd.f32 %v2449, %v2808
      %v2848 = vadd.f32 %v2450, %v2811
      %v2849 = vadd.f32 %v2451, %v2813
      %v2850 = vadd.f32 %v2452, %v2816
      %v2851 = vadd.f32 %v2453, %v2818
      %s2852 = scalar_lea.vmem %s273, 24
      %v2853 = vld [vmem:[%s2852] sm:$0xf]
      %v2854 = vld [vmem:[%s2852 + $0x4] sm:$0xf]
      %v2855 = vld [vmem:[%s2852 + $0xc] sm:$0xf]
      %v2856 = vld [vmem:[%s2852 + $0x10] sm:$0xf]
      %v2857 = vld [vmem:[%s2852 + $0x18] sm:$0xf]
      %v2858 = vld [vmem:[%s2852 + $0x1c] sm:$0xf]
      %v2859 = vld [vmem:[%s2852 + $0x24] sm:$0xf]
      %v2860 = vld [vmem:[%s2852 + $0x28] sm:$0xf]
      %v2861 = vld [vmem:[%s2852 + $0x30] sm:$0xf]
      %v2862 = vld [vmem:[%s2852 + $0x34] sm:$0xf]
      %v2863 = vld [vmem:[%s2852 + $0x3c] sm:$0xf]
      %v2864 = vld [vmem:[%s2852 + $0x40] sm:$0xf]
      %v2865 = vld [vmem:[%s2852 + $0x48] sm:$0xf]
      %v2866 = vld [vmem:[%s2852 + $0x4c] sm:$0xf]
      %v2867 = vld [vmem:[%s2852 + $0x54] sm:$0xf]
      %v2868 = vld [vmem:[%s2852 + $0x58] sm:$0xf]
      %v2869 = vld [vmem:[%s2852 + $0x60] sm:$0xf]
      %v2870 = vld [vmem:[%s2852 + $0x64] sm:$0xf]
      %v2871 = vld [vmem:[%s2852 + $0x6c] sm:$0xf]
      %v2872 = vld [vmem:[%s2852 + $0x70] sm:$0xf]
      %v2873 = vld [vmem:[%s2852 + $0x78] sm:$0xf]
      %v2874 = vld [vmem:[%s2852 + $0x7c] sm:$0xf]
      %v2875 = vld [vmem:[%s2852 + $0x84] sm:$0xf]
      %v2876 = vld [vmem:[%s2852 + $0x88] sm:$0xf]
      %v2877 = vld [vmem:[%s2852 + $0x90] sm:$0xf]
      %v2878 = vld [vmem:[%s2852 + $0x94] sm:$0xf]
      %v2879 = vld [vmem:[%s2852 + $0x9c] sm:$0xf]
      %v2880 = vld [vmem:[%s2852 + $0xa0] sm:$0xf]
      %v2881 = vld [vmem:[%s2852 + $0xa8] sm:$0xf]
      %v2882 = vld [vmem:[%s2852 + $0xac] sm:$0xf]
      %v2883 = vld [vmem:[%s2852 + $0xb4] sm:$0xf]
      %v2884 = vld [vmem:[%s2852 + $0xb8] sm:$0xf]
      %s2885 = scalar_lea.vmem %s1, 12
      %v2886 = vld [vmem:[%s2885] sm:$0x3]
      %v2919 = vunpack.c.l.b16 %v2853
      %v2920 = vunpack.c.l.b16 %v2854
      %v2921 = vunpack.c.l.b16 %v2855
      %v2922 = vunpack.c.l.b16 %v2856
      %v2923 = vunpack.c.l.b16 %v2857
      %v2924 = vunpack.c.l.b16 %v2858
      %v2925 = vunpack.c.l.b16 %v2859
      %v2926 = vunpack.c.l.b16 %v2860
      %v2927 = vunpack.c.l.b16 %v2861
      %v2928 = vunpack.c.l.b16 %v2862
      %v2929 = vunpack.c.l.b16 %v2863
      %v2930 = vunpack.c.l.b16 %v2864
      %v2931 = vunpack.c.l.b16 %v2865
      %v2932 = vunpack.c.l.b16 %v2866
      %v2933 = vunpack.c.l.b16 %v2867
      %v2934 = vunpack.c.l.b16 %v2868
      %v2935 = vunpack.c.l.b16 %v2869
      %v2936 = vunpack.c.l.b16 %v2870
      %v2937 = vunpack.c.l.b16 %v2871
      %v2938 = vunpack.c.l.b16 %v2872
      %v2939 = vunpack.c.l.b16 %v2873
      %v2940 = vunpack.c.l.b16 %v2874
      %v2941 = vunpack.c.l.b16 %v2875
      %v2942 = vunpack.c.l.b16 %v2876
      %v2943 = vunpack.c.l.b16 %v2877
      %v2944 = vunpack.c.l.b16 %v2878
      %v2945 = vunpack.c.l.b16 %v2879
      %v2946 = vunpack.c.l.b16 %v2880
      %v2947 = vunpack.c.l.b16 %v2881
      %v2948 = vunpack.c.l.b16 %v2882
      %v2949 = vunpack.c.l.b16 %v2883
      %v2950 = vunpack.c.l.b16 %v2884
      %v2951 = vpack.c.b16 %v2920, %v2919
      %v2952 = vpack.c.b16 %v2922, %v2921
      %v2953 = vpack.c.b16 %v2924, %v2923
      %v2954 = vpack.c.b16 %v2926, %v2925
      %v2955 = vpack.c.b16 %v2928, %v2927
      %v2956 = vpack.c.b16 %v2930, %v2929
      %v2957 = vpack.c.b16 %v2932, %v2931
      %v2958 = vpack.c.b16 %v2934, %v2933
      %v2959 = vpack.c.b16 %v2936, %v2935
      %v2960 = vpack.c.b16 %v2938, %v2937
      %v2961 = vpack.c.b16 %v2940, %v2939
      %v2962 = vpack.c.b16 %v2942, %v2941
      %v2963 = vpack.c.b16 %v2944, %v2943
      %v2964 = vpack.c.b16 %v2946, %v2945
      %v2965 = vpack.c.b16 %v2948, %v2947
      %v2966 = vpack.c.b16 %v2950, %v2949
      %v2968 = vsel %vm766, %v2951, 0
      %v2971 = vsel %vm766, %v2952, 0
      %v2974 = vsel %vm766, %v2953, 0
      %v2977 = vsel %vm766, %v2954, 0
      %v2980 = vsel %vm766, %v2955, 0
      %v2983 = vsel %vm766, %v2956, 0
      %v2986 = vsel %vm766, %v2957, 0
      %v2989 = vsel %vm766, %v2958, 0
      %v2992 = vsel %vm766, %v2959, 0
      %v2995 = vsel %vm766, %v2960, 0
      %v2998 = vsel %vm766, %v2961, 0
      %v3001 = vsel %vm766, %v2962, 0
      %v3004 = vsel %vm766, %v2963, 0
      %v3007 = vsel %vm766, %v2964, 0
      %v3010 = vsel %vm766, %v2965, 0
      %v3013 = vsel %vm766, %v2966, 0
      %v3016 = vsel %vm815, %v2886, 0
      %3018 = vmatpush.bf16.msra.mxu0 0
      %3019 = vmatpush.bf16.msra.mxu0 0
      %3020 = vmatpush.bf16.msra.mxu0 0
      %3021 = vmatpush.bf16.msra.mxu0 0
      %3022 = vmatpush.bf16.msra.mxu0 0
      %3023 = vmatpush.bf16.msra.mxu0 0
      %3024 = vmatpush.bf16.msra.mxu0 0
      %3025 = vmatpush.bf16.msra.mxu0 %v3016
      %3026 = vmatmul.bf16.gmra.mxu0 %v2968
      %v3027 = vpop.f32.mrf.mxu0
      %v3028 = vadd.f32 0.0, %v3027
      %v3029 = vpop.f32.mrf.mxu0
      %v3030 = vadd.f32 0.0, %v3029
      %3031 = vmatmul.bf16.gmra.mxu0 %v2971
      %v3032 = vpop.f32.mrf.mxu0
      %v3033 = vadd.f32 0.0, %v3032
      %v3034 = vpop.f32.mrf.mxu0
      %v3035 = vadd.f32 0.0, %v3034
      %3036 = vmatmul.bf16.gmra.mxu0 %v2974
      %v3037 = vpop.f32.mrf.mxu0
      %v3038 = vadd.f32 0.0, %v3037
      %v3039 = vpop.f32.mrf.mxu0
      %v3040 = vadd.f32 0.0, %v3039
      %3041 = vmatmul.bf16.gmra.mxu0 %v2977
      %v3042 = vpop.f32.mrf.mxu0
      %v3043 = vadd.f32 0.0, %v3042
      %v3044 = vpop.f32.mrf.mxu0
      %v3045 = vadd.f32 0.0, %v3044
      %3046 = vmatmul.bf16.gmra.mxu0 %v2980
      %v3047 = vpop.f32.mrf.mxu0
      %v3048 = vadd.f32 0.0, %v3047
      %v3049 = vpop.f32.mrf.mxu0
      %v3050 = vadd.f32 0.0, %v3049
      %3051 = vmatmul.bf16.gmra.mxu0 %v2983
      %v3052 = vpop.f32.mrf.mxu0
      %v3053 = vadd.f32 0.0, %v3052
      %v3054 = vpop.f32.mrf.mxu0
      %v3055 = vadd.f32 0.0, %v3054
      %3056 = vmatmul.bf16.gmra.mxu0 %v2986
      %v3057 = vpop.f32.mrf.mxu0
      %v3058 = vadd.f32 0.0, %v3057
      %v3059 = vpop.f32.mrf.mxu0
      %v3060 = vadd.f32 0.0, %v3059
      %3061 = vmatmul.bf16.gmra.mxu0 %v2989
      %v3062 = vpop.f32.mrf.mxu0
      %v3063 = vadd.f32 0.0, %v3062
      %v3064 = vpop.f32.mrf.mxu0
      %v3065 = vadd.f32 0.0, %v3064
      %3066 = vmatmul.bf16.gmra.mxu0 %v2992
      %v3067 = vpop.f32.mrf.mxu0
      %v3068 = vadd.f32 0.0, %v3067
      %v3069 = vpop.f32.mrf.mxu0
      %v3070 = vadd.f32 0.0, %v3069
      %3071 = vmatmul.bf16.gmra.mxu0 %v2995
      %v3072 = vpop.f32.mrf.mxu0
      %v3073 = vadd.f32 0.0, %v3072
      %v3074 = vpop.f32.mrf.mxu0
      %v3075 = vadd.f32 0.0, %v3074
      %3076 = vmatmul.bf16.gmra.mxu0 %v2998
      %v3077 = vpop.f32.mrf.mxu0
      %v3078 = vadd.f32 0.0, %v3077
      %v3079 = vpop.f32.mrf.mxu0
      %v3080 = vadd.f32 0.0, %v3079
      %3081 = vmatmul.bf16.gmra.mxu0 %v3001
      %v3082 = vpop.f32.mrf.mxu0
      %v3083 = vadd.f32 0.0, %v3082
      %v3084 = vpop.f32.mrf.mxu0
      %v3085 = vadd.f32 0.0, %v3084
      %3086 = vmatmul.bf16.gmra.mxu0 %v3004
      %v3087 = vpop.f32.mrf.mxu0
      %v3088 = vadd.f32 0.0, %v3087
      %v3089 = vpop.f32.mrf.mxu0
      %v3090 = vadd.f32 0.0, %v3089
      %3091 = vmatmul.bf16.gmra.mxu0 %v3007
      %v3092 = vpop.f32.mrf.mxu0
      %v3093 = vadd.f32 0.0, %v3092
      %v3094 = vpop.f32.mrf.mxu0
      %v3095 = vadd.f32 0.0, %v3094
      %3096 = vmatmul.bf16.gmra.mxu0 %v3010
      %v3097 = vpop.f32.mrf.mxu0
      %v3098 = vadd.f32 0.0, %v3097
      %v3099 = vpop.f32.mrf.mxu0
      %v3100 = vadd.f32 0.0, %v3099
      %3101 = vmatmul.bf16.gmra.mxu0 %v3013
      %v3102 = vpop.f32.mrf.mxu0
      %v3103 = vadd.f32 0.0, %v3102
      %v3104 = vpop.f32.mrf.mxu0
      %v3105 = vadd.f32 0.0, %v3104
      %3106 = vdwg.mxu0
      %v3107 = vadd.f32 %v2820, %v3028
      %v3108 = vadd.f32 %v2821, %v3030
      %v3109 = vadd.f32 %v2822, %v3033
      %v3110 = vadd.f32 %v2823, %v3035
      %v3111 = vadd.f32 %v2824, %v3038
      %v3112 = vadd.f32 %v2825, %v3040
      %v3113 = vadd.f32 %v2826, %v3043
      %v3114 = vadd.f32 %v2827, %v3045
      %v3115 = vadd.f32 %v2828, %v3048
      %v3116 = vadd.f32 %v2829, %v3050
      %v3117 = vadd.f32 %v2830, %v3053
      %v3118 = vadd.f32 %v2831, %v3055
      %v3119 = vadd.f32 %v2832, %v3058
      %v3120 = vadd.f32 %v2833, %v3060
      %v3121 = vadd.f32 %v2834, %v3063
      %v3122 = vadd.f32 %v2835, %v3065
      %v3123 = vadd.f32 %v2836, %v3068
      %v3124 = vadd.f32 %v2837, %v3070
      %v3125 = vadd.f32 %v2838, %v3073
      %v3126 = vadd.f32 %v2839, %v3075
      %v3127 = vadd.f32 %v2840, %v3078
      %v3128 = vadd.f32 %v2841, %v3080
      %v3129 = vadd.f32 %v2842, %v3083
      %v3130 = vadd.f32 %v2843, %v3085
      %v3131 = vadd.f32 %v2844, %v3088
      %v3132 = vadd.f32 %v2845, %v3090
      %v3133 = vadd.f32 %v2846, %v3093
      %v3134 = vadd.f32 %v2847, %v3095
      %v3135 = vadd.f32 %v2848, %v3098
      %v3136 = vadd.f32 %v2849, %v3100
      %v3137 = vadd.f32 %v2850, %v3103
      %v3138 = vadd.f32 %v2851, %v3105
      %v3139 = vld [vmem:[%s2852] sm:$0xf]
      %v3140 = vld [vmem:[%s2852 + $0x4] sm:$0xf]
      %v3141 = vld [vmem:[%s2852 + $0x8] sm:$0x1]
      %v3142 = vld [vmem:[%s2852 + $0xc] sm:$0xf]
      %v3143 = vld [vmem:[%s2852 + $0x10] sm:$0xf]
      %v3144 = vld [vmem:[%s2852 + $0x14] sm:$0x1]
      %v3145 = vld [vmem:[%s2852 + $0x18] sm:$0xf]
      %v3146 = vld [vmem:[%s2852 + $0x1c] sm:$0xf]
      %v3147 = vld [vmem:[%s2852 + $0x20] sm:$0x1]
      %v3148 = vld [vmem:[%s2852 + $0x24] sm:$0xf]
      %v3149 = vld [vmem:[%s2852 + $0x28] sm:$0xf]
      %v3150 = vld [vmem:[%s2852 + $0x2c] sm:$0x1]
      %v3151 = vld [vmem:[%s2852 + $0x30] sm:$0xf]
      %v3152 = vld [vmem:[%s2852 + $0x34] sm:$0xf]
      %v3153 = vld [vmem:[%s2852 + $0x38] sm:$0x1]
      %v3154 = vld [vmem:[%s2852 + $0x3c] sm:$0xf]
      %v3155 = vld [vmem:[%s2852 + $0x40] sm:$0xf]
      %v3156 = vld [vmem:[%s2852 + $0x44] sm:$0x1]
      %v3157 = vld [vmem:[%s2852 + $0x48] sm:$0xf]
      %v3158 = vld [vmem:[%s2852 + $0x4c] sm:$0xf]
      %v3159 = vld [vmem:[%s2852 + $0x50] sm:$0x1]
      %v3160 = vld [vmem:[%s2852 + $0x54] sm:$0xf]
      %v3161 = vld [vmem:[%s2852 + $0x58] sm:$0xf]
      %v3162 = vld [vmem:[%s2852 + $0x5c] sm:$0x1]
      %v3163 = vld [vmem:[%s2852 + $0x60] sm:$0xf]
      %v3164 = vld [vmem:[%s2852 + $0x64] sm:$0xf]
      %v3165 = vld [vmem:[%s2852 + $0x68] sm:$0x1]
      %v3166 = vld [vmem:[%s2852 + $0x6c] sm:$0xf]
      %v3167 = vld [vmem:[%s2852 + $0x70] sm:$0xf]
      %v3168 = vld [vmem:[%s2852 + $0x74] sm:$0x1]
      %v3169 = vld [vmem:[%s2852 + $0x78] sm:$0xf]
      %v3170 = vld [vmem:[%s2852 + $0x7c] sm:$0xf]
      %v3171 = vld [vmem:[%s2852 + $0x80] sm:$0x1]
      %v3172 = vld [vmem:[%s2852 + $0x84] sm:$0xf]
      %v3173 = vld [vmem:[%s2852 + $0x88] sm:$0xf]
      %v3174 = vld [vmem:[%s2852 + $0x8c] sm:$0x1]
      %v3175 = vld [vmem:[%s2852 + $0x90] sm:$0xf]
      %v3176 = vld [vmem:[%s2852 + $0x94] sm:$0xf]
      %v3177 = vld [vmem:[%s2852 + $0x98] sm:$0x1]
      %v3178 = vld [vmem:[%s2852 + $0x9c] sm:$0xf]
      %v3179 = vld [vmem:[%s2852 + $0xa0] sm:$0xf]
      %v3180 = vld [vmem:[%s2852 + $0xa4] sm:$0x1]
      %v3181 = vld [vmem:[%s2852 + $0xa8] sm:$0xf]
      %v3182 = vld [vmem:[%s2852 + $0xac] sm:$0xf]
      %v3183 = vld [vmem:[%s2852 + $0xb0] sm:$0x1]
      %v3184 = vld [vmem:[%s2852 + $0xb4] sm:$0xf]
      %v3185 = vld [vmem:[%s2852 + $0xb8] sm:$0xf]
      %v3186 = vld [vmem:[%s2852 + $0xbc] sm:$0x1]
      %v3188 = vshrl.u32 %v3139, 16
      %v3190 = vrot.slane %v3188, 4
      %v3191 = vshll.u32 %v3139, 16
      %v3193 = vrot.slane %v3191, 5
      %v3194 = vor.u32 %v3190, %v3193
      %v3195 = vrot.slane %v3194, 4
      %v3197 = vshll.u32 %v3140, 16
      %v3199 = vrot.slane %v3197, 5
      %v3200 = vsel %vm331, %v3195, %v3199
      %v3201 = vshrl.u32 %v3140, 16
      %v3203 = vrot.slane %v3201, 4
      %v3204 = vor.u32 %v3203, %v3199
      %v3205 = vrot.slane %v3204, 4
      %v3207 = vshll.u32 %v3141, 16
      %v3209 = vrot.slane %v3207, 5
      %v3210 = vsel %vm331, %v3205, %v3209
      %v3212 = vshrl.u32 %v3142, 16
      %v3214 = vrot.slane %v3212, 4
      %v3215 = vshll.u32 %v3142, 16
      %v3217 = vrot.slane %v3215, 5
      %v3218 = vor.u32 %v3214, %v3217
      %v3219 = vrot.slane %v3218, 4
      %v3221 = vshll.u32 %v3143, 16
      %v3223 = vrot.slane %v3221, 5
      %v3224 = vsel %vm331, %v3219, %v3223
      %v3225 = vshrl.u32 %v3143, 16
      %v3227 = vrot.slane %v3225, 4
      %v3228 = vor.u32 %v3227, %v3223
      %v3229 = vrot.slane %v3228, 4
      %v3231 = vshll.u32 %v3144, 16
      %v3233 = vrot.slane %v3231, 5
      %v3234 = vsel %vm331, %v3229, %v3233
      %v3236 = vshrl.u32 %v3145, 16
      %v3238 = vrot.slane %v3236, 4
      %v3239 = vshll.u32 %v3145, 16
      %v3241 = vrot.slane %v3239, 5
      %v3242 = vor.u32 %v3238, %v3241
      %v3243 = vrot.slane %v3242, 4
      %v3245 = vshll.u32 %v3146, 16
      %v3247 = vrot.slane %v3245, 5
      %v3248 = vsel %vm331, %v3243, %v3247
      %v3249 = vshrl.u32 %v3146, 16
      %v3251 = vrot.slane %v3249, 4
      %v3252 = vor.u32 %v3251, %v3247
      %v3253 = vrot.slane %v3252, 4
      %v3255 = vshll.u32 %v3147, 16
      %v3257 = vrot.slane %v3255, 5
      %v3258 = vsel %vm331, %v3253, %v3257
      %v3260 = vshrl.u32 %v3148, 16
      %v3262 = vrot.slane %v3260, 4
      %v3263 = vshll.u32 %v3148, 16
      %v3265 = vrot.slane %v3263, 5
      %v3266 = vor.u32 %v3262, %v3265
      %v3267 = vrot.slane %v3266, 4
      %v3269 = vshll.u32 %v3149, 16
      %v3271 = vrot.slane %v3269, 5
      %v3272 = vsel %vm331, %v3267, %v3271
      %v3273 = vshrl.u32 %v3149, 16
      %v3275 = vrot.slane %v3273, 4
      %v3276 = vor.u32 %v3275, %v3271
      %v3277 = vrot.slane %v3276, 4
      %v3279 = vshll.u32 %v3150, 16
      %v3281 = vrot.slane %v3279, 5
      %v3282 = vsel %vm331, %v3277, %v3281
      %v3284 = vshrl.u32 %v3151, 16
      %v3286 = vrot.slane %v3284, 4
      %v3287 = vshll.u32 %v3151, 16
      %v3289 = vrot.slane %v3287, 5
      %v3290 = vor.u32 %v3286, %v3289
      %v3291 = vrot.slane %v3290, 4
      %v3293 = vshll.u32 %v3152, 16
      %v3295 = vrot.slane %v3293, 5
      %v3296 = vsel %vm331, %v3291, %v3295
      %v3297 = vshrl.u32 %v3152, 16
      %v3299 = vrot.slane %v3297, 4
      %v3300 = vor.u32 %v3299, %v3295
      %v3301 = vrot.slane %v3300, 4
      %v3303 = vshll.u32 %v3153, 16
      %v3305 = vrot.slane %v3303, 5
      %v3306 = vsel %vm331, %v3301, %v3305
      %v3308 = vshrl.u32 %v3154, 16
      %v3310 = vrot.slane %v3308, 4
      %v3311 = vshll.u32 %v3154, 16
      %v3313 = vrot.slane %v3311, 5
      %v3314 = vor.u32 %v3310, %v3313
      %v3315 = vrot.slane %v3314, 4
      %v3317 = vshll.u32 %v3155, 16
      %v3319 = vrot.slane %v3317, 5
      %v3320 = vsel %vm331, %v3315, %v3319
      %v3321 = vshrl.u32 %v3155, 16
      %v3323 = vrot.slane %v3321, 4
      %v3324 = vor.u32 %v3323, %v3319
      %v3325 = vrot.slane %v3324, 4
      %v3327 = vshll.u32 %v3156, 16
      %v3329 = vrot.slane %v3327, 5
      %v3330 = vsel %vm331, %v3325, %v3329
      %v3332 = vshrl.u32 %v3157, 16
      %v3334 = vrot.slane %v3332, 4
      %v3335 = vshll.u32 %v3157, 16
      %v3337 = vrot.slane %v3335, 5
      %v3338 = vor.u32 %v3334, %v3337
      %v3339 = vrot.slane %v3338, 4
      %v3341 = vshll.u32 %v3158, 16
      %v3343 = vrot.slane %v3341, 5
      %v3344 = vsel %vm331, %v3339, %v3343
      %v3345 = vshrl.u32 %v3158, 16
      %v3347 = vrot.slane %v3345, 4
      %v3348 = vor.u32 %v3347, %v3343
      %v3349 = vrot.slane %v3348, 4
      %v3351 = vshll.u32 %v3159, 16
      %v3353 = vrot.slane %v3351, 5
      %v3354 = vsel %vm331, %v3349, %v3353
      %v3356 = vshrl.u32 %v3160, 16
      %v3358 = vrot.slane %v3356, 4
      %v3359 = vshll.u32 %v3160, 16
      %v3361 = vrot.slane %v3359, 5
      %v3362 = vor.u32 %v3358, %v3361
      %v3363 = vrot.slane %v3362, 4
      %v3365 = vshll.u32 %v3161, 16
      %v3367 = vrot.slane %v3365, 5
      %v3368 = vsel %vm331, %v3363, %v3367
      %v3369 = vshrl.u32 %v3161, 16
      %v3371 = vrot.slane %v3369, 4
      %v3372 = vor.u32 %v3371, %v3367
      %v3373 = vrot.slane %v3372, 4
      %v3375 = vshll.u32 %v3162, 16
      %v3377 = vrot.slane %v3375, 5
      %v3378 = vsel %vm331, %v3373, %v3377
      %v3380 = vshrl.u32 %v3163, 16
      %v3382 = vrot.slane %v3380, 4
      %v3383 = vshll.u32 %v3163, 16
      %v3385 = vrot.slane %v3383, 5
      %v3386 = vor.u32 %v3382, %v3385
      %v3387 = vrot.slane %v3386, 4
      %v3389 = vshll.u32 %v3164, 16
      %v3391 = vrot.slane %v3389, 5
      %v3392 = vsel %vm331, %v3387, %v3391
      %v3393 = vshrl.u32 %v3164, 16
      %v3395 = vrot.slane %v3393, 4
      %v3396 = vor.u32 %v3395, %v3391
      %v3397 = vrot.slane %v3396, 4
      %v3399 = vshll.u32 %v3165, 16
      %v3401 = vrot.slane %v3399, 5
      %v3402 = vsel %vm331, %v3397, %v3401
      %v3404 = vshrl.u32 %v3166, 16
      %v3406 = vrot.slane %v3404, 4
      %v3407 = vshll.u32 %v3166, 16
      %v3409 = vrot.slane %v3407, 5
      %v3410 = vor.u32 %v3406, %v3409
      %v3411 = vrot.slane %v3410, 4
      %v3413 = vshll.u32 %v3167, 16
      %v3415 = vrot.slane %v3413, 5
      %v3416 = vsel %vm331, %v3411, %v3415
      %v3417 = vshrl.u32 %v3167, 16
      %v3419 = vrot.slane %v3417, 4
      %v3420 = vor.u32 %v3419, %v3415
      %v3421 = vrot.slane %v3420, 4
      %v3423 = vshll.u32 %v3168, 16
      %v3425 = vrot.slane %v3423, 5
      %v3426 = vsel %vm331, %v3421, %v3425
      %v3428 = vshrl.u32 %v3169, 16
      %v3430 = vrot.slane %v3428, 4
      %v3431 = vshll.u32 %v3169, 16
      %v3433 = vrot.slane %v3431, 5
      %v3434 = vor.u32 %v3430, %v3433
      %v3435 = vrot.slane %v3434, 4
      %v3437 = vshll.u32 %v3170, 16
      %v3439 = vrot.slane %v3437, 5
      %v3440 = vsel %vm331, %v3435, %v3439
      %v3441 = vshrl.u32 %v3170, 16
      %v3443 = vrot.slane %v3441, 4
      %v3444 = vor.u32 %v3443, %v3439
      %v3445 = vrot.slane %v3444, 4
      %v3447 = vshll.u32 %v3171, 16
      %v3449 = vrot.slane %v3447, 5
      %v3450 = vsel %vm331, %v3445, %v3449
      %v3452 = vshrl.u32 %v3172, 16
      %v3454 = vrot.slane %v3452, 4
      %v3455 = vshll.u32 %v3172, 16
      %v3457 = vrot.slane %v3455, 5
      %v3458 = vor.u32 %v3454, %v3457
      %v3459 = vrot.slane %v3458, 4
      %v3461 = vshll.u32 %v3173, 16
      %v3463 = vrot.slane %v3461, 5
      %v3464 = vsel %vm331, %v3459, %v3463
      %v3465 = vshrl.u32 %v3173, 16
      %v3467 = vrot.slane %v3465, 4
      %v3468 = vor.u32 %v3467, %v3463
      %v3469 = vrot.slane %v3468, 4
      %v3471 = vshll.u32 %v3174, 16
      %v3473 = vrot.slane %v3471, 5
      %v3474 = vsel %vm331, %v3469, %v3473
      %v3476 = vshrl.u32 %v3175, 16
      %v3478 = vrot.slane %v3476, 4
      %v3479 = vshll.u32 %v3175, 16
      %v3481 = vrot.slane %v3479, 5
      %v3482 = vor.u32 %v3478, %v3481
      %v3483 = vrot.slane %v3482, 4
      %v3485 = vshll.u32 %v3176, 16
      %v3487 = vrot.slane %v3485, 5
      %v3488 = vsel %vm331, %v3483, %v3487
      %v3489 = vshrl.u32 %v3176, 16
      %v3491 = vrot.slane %v3489, 4
      %v3492 = vor.u32 %v3491, %v3487
      %v3493 = vrot.slane %v3492, 4
      %v3495 = vshll.u32 %v3177, 16
      %v3497 = vrot.slane %v3495, 5
      %v3498 = vsel %vm331, %v3493, %v3497
      %v3500 = vshrl.u32 %v3178, 16
      %v3502 = vrot.slane %v3500, 4
      %v3503 = vshll.u32 %v3178, 16
      %v3505 = vrot.slane %v3503, 5
      %v3506 = vor.u32 %v3502, %v3505
      %v3507 = vrot.slane %v3506, 4
      %v3509 = vshll.u32 %v3179, 16
      %v3511 = vrot.slane %v3509, 5
      %v3512 = vsel %vm331, %v3507, %v3511
      %v3513 = vshrl.u32 %v3179, 16
      %v3515 = vrot.slane %v3513, 4
      %v3516 = vor.u32 %v3515, %v3511
      %v3517 = vrot.slane %v3516, 4
      %v3519 = vshll.u32 %v3180, 16
      %v3521 = vrot.slane %v3519, 5
      %v3522 = vsel %vm331, %v3517, %v3521
      %v3524 = vshrl.u32 %v3181, 16
      %v3526 = vrot.slane %v3524, 4
      %v3527 = vshll.u32 %v3181, 16
      %v3529 = vrot.slane %v3527, 5
      %v3530 = vor.u32 %v3526, %v3529
      %v3531 = vrot.slane %v3530, 4
      %v3533 = vshll.u32 %v3182, 16
      %v3535 = vrot.slane %v3533, 5
      %v3536 = vsel %vm331, %v3531, %v3535
      %v3537 = vshrl.u32 %v3182, 16
      %v3539 = vrot.slane %v3537, 4
      %v3540 = vor.u32 %v3539, %v3535
      %v3541 = vrot.slane %v3540, 4
      %v3543 = vshll.u32 %v3183, 16
      %v3545 = vrot.slane %v3543, 5
      %v3546 = vsel %vm331, %v3541, %v3545
      %v3548 = vshrl.u32 %v3184, 16
      %v3550 = vrot.slane %v3548, 4
      %v3551 = vshll.u32 %v3184, 16
      %v3553 = vrot.slane %v3551, 5
      %v3554 = vor.u32 %v3550, %v3553
      %v3555 = vrot.slane %v3554, 4
      %v3557 = vshll.u32 %v3185, 16
      %v3559 = vrot.slane %v3557, 5
      %v3560 = vsel %vm331, %v3555, %v3559
      %v3561 = vshrl.u32 %v3185, 16
      %v3563 = vrot.slane %v3561, 4
      %v3564 = vor.u32 %v3563, %v3559
      %v3565 = vrot.slane %v3564, 4
      %v3567 = vshll.u32 %v3186, 16
      %v3569 = vrot.slane %v3567, 5
      %v3570 = vsel %vm331, %v3565, %v3569
      %s3571 = scalar_lea.vmem %s1, 14
      %v3572 = vld [vmem:[%s3571] sm:$0x3]
      %v3573 = vunpack.c.l.b16 %v3200
      %v3574 = vunpack.c.l.b16 %v3210
      %v3575 = vunpack.c.l.b16 %v3224
      %v3576 = vunpack.c.l.b16 %v3234
      %v3577 = vunpack.c.l.b16 %v3248
      %v3578 = vunpack.c.l.b16 %v3258
      %v3579 = vunpack.c.l.b16 %v3272
      %v3580 = vunpack.c.l.b16 %v3282
      %v3581 = vunpack.c.l.b16 %v3296
      %v3582 = vunpack.c.l.b16 %v3306
      %v3583 = vunpack.c.l.b16 %v3320
      %v3584 = vunpack.c.l.b16 %v3330
      %v3585 = vunpack.c.l.b16 %v3344
      %v3586 = vunpack.c.l.b16 %v3354
      %v3587 = vunpack.c.l.b16 %v3368
      %v3588 = vunpack.c.l.b16 %v3378
      %v3589 = vunpack.c.l.b16 %v3392
      %v3590 = vunpack.c.l.b16 %v3402
      %v3591 = vunpack.c.l.b16 %v3416
      %v3592 = vunpack.c.l.b16 %v3426
      %v3593 = vunpack.c.l.b16 %v3440
      %v3594 = vunpack.c.l.b16 %v3450
      %v3595 = vunpack.c.l.b16 %v3464
      %v3596 = vunpack.c.l.b16 %v3474
      %v3597 = vunpack.c.l.b16 %v3488
      %v3598 = vunpack.c.l.b16 %v3498
      %v3599 = vunpack.c.l.b16 %v3512
      %v3600 = vunpack.c.l.b16 %v3522
      %v3601 = vunpack.c.l.b16 %v3536
      %v3602 = vunpack.c.l.b16 %v3546
      %v3603 = vunpack.c.l.b16 %v3560
      %v3604 = vunpack.c.l.b16 %v3570
      %v3605 = vpack.c.b16 %v3574, %v3573
      %v3606 = vpack.c.b16 %v3576, %v3575
      %v3607 = vpack.c.b16 %v3578, %v3577
      %v3608 = vpack.c.b16 %v3580, %v3579
      %v3609 = vpack.c.b16 %v3582, %v3581
      %v3610 = vpack.c.b16 %v3584, %v3583
      %v3611 = vpack.c.b16 %v3586, %v3585
      %v3612 = vpack.c.b16 %v3588, %v3587
      %v3613 = vpack.c.b16 %v3590, %v3589
      %v3614 = vpack.c.b16 %v3592, %v3591
      %v3615 = vpack.c.b16 %v3594, %v3593
      %v3616 = vpack.c.b16 %v3596, %v3595
      %v3617 = vpack.c.b16 %v3598, %v3597
      %v3618 = vpack.c.b16 %v3600, %v3599
      %v3619 = vpack.c.b16 %v3602, %v3601
      %v3620 = vpack.c.b16 %v3604, %v3603
      %v3622 = vsel %vm766, %v3605, 0
      %v3625 = vsel %vm766, %v3606, 0
      %v3628 = vsel %vm766, %v3607, 0
      %v3631 = vsel %vm766, %v3608, 0
      %v3634 = vsel %vm766, %v3609, 0
      %v3637 = vsel %vm766, %v3610, 0
      %v3640 = vsel %vm766, %v3611, 0
      %v3643 = vsel %vm766, %v3612, 0
      %v3646 = vsel %vm766, %v3613, 0
      %v3649 = vsel %vm766, %v3614, 0
      %v3652 = vsel %vm766, %v3615, 0
      %v3655 = vsel %vm766, %v3616, 0
      %v3658 = vsel %vm766, %v3617, 0
      %v3661 = vsel %vm766, %v3618, 0
      %v3664 = vsel %vm766, %v3619, 0
      %v3667 = vsel %vm766, %v3620, 0
      %v3670 = vsel %vm815, %v3572, 0
      %3672 = vmatpush.bf16.msra.mxu0 0
      %3673 = vmatpush.bf16.msra.mxu0 0
      %3674 = vmatpush.bf16.msra.mxu0 0
      %3675 = vmatpush.bf16.msra.mxu0 0
      %3676 = vmatpush.bf16.msra.mxu0 0
      %3677 = vmatpush.bf16.msra.mxu0 0
      %3678 = vmatpush.bf16.msra.mxu0 0
      %3679 = vmatpush.bf16.msra.mxu0 %v3670
      %3680 = vmatmul.bf16.gmra.mxu0 %v3622
      %v3681 = vpop.f32.mrf.mxu0
      %v3682 = vadd.f32 0.0, %v3681
      %v3683 = vpop.f32.mrf.mxu0
      %v3684 = vadd.f32 0.0, %v3683
      %3685 = vmatmul.bf16.gmra.mxu0 %v3625
      %v3686 = vpop.f32.mrf.mxu0
      %v3687 = vadd.f32 0.0, %v3686
      %v3688 = vpop.f32.mrf.mxu0
      %v3689 = vadd.f32 0.0, %v3688
      %3690 = vmatmul.bf16.gmra.mxu0 %v3628
      %v3691 = vpop.f32.mrf.mxu0
      %v3692 = vadd.f32 0.0, %v3691
      %v3693 = vpop.f32.mrf.mxu0
      %v3694 = vadd.f32 0.0, %v3693
      %3695 = vmatmul.bf16.gmra.mxu0 %v3631
      %v3696 = vpop.f32.mrf.mxu0
      %v3697 = vadd.f32 0.0, %v3696
      %v3698 = vpop.f32.mrf.mxu0
      %v3699 = vadd.f32 0.0, %v3698
      %3700 = vmatmul.bf16.gmra.mxu0 %v3634
      %v3701 = vpop.f32.mrf.mxu0
      %v3702 = vadd.f32 0.0, %v3701
      %v3703 = vpop.f32.mrf.mxu0
      %v3704 = vadd.f32 0.0, %v3703
      %3705 = vmatmul.bf16.gmra.mxu0 %v3637
      %v3706 = vpop.f32.mrf.mxu0
      %v3707 = vadd.f32 0.0, %v3706
      %v3708 = vpop.f32.mrf.mxu0
      %v3709 = vadd.f32 0.0, %v3708
      %3710 = vmatmul.bf16.gmra.mxu0 %v3640
      %v3711 = vpop.f32.mrf.mxu0
      %v3712 = vadd.f32 0.0, %v3711
      %v3713 = vpop.f32.mrf.mxu0
      %v3714 = vadd.f32 0.0, %v3713
      %3715 = vmatmul.bf16.gmra.mxu0 %v3643
      %v3716 = vpop.f32.mrf.mxu0
      %v3717 = vadd.f32 0.0, %v3716
      %v3718 = vpop.f32.mrf.mxu0
      %v3719 = vadd.f32 0.0, %v3718
      %3720 = vmatmul.bf16.gmra.mxu0 %v3646
      %v3721 = vpop.f32.mrf.mxu0
      %v3722 = vadd.f32 0.0, %v3721
      %v3723 = vpop.f32.mrf.mxu0
      %v3724 = vadd.f32 0.0, %v3723
      %3725 = vmatmul.bf16.gmra.mxu0 %v3649
      %v3726 = vpop.f32.mrf.mxu0
      %v3727 = vadd.f32 0.0, %v3726
      %v3728 = vpop.f32.mrf.mxu0
      %v3729 = vadd.f32 0.0, %v3728
      %3730 = vmatmul.bf16.gmra.mxu0 %v3652
      %v3731 = vpop.f32.mrf.mxu0
      %v3732 = vadd.f32 0.0, %v3731
      %v3733 = vpop.f32.mrf.mxu0
      %v3734 = vadd.f32 0.0, %v3733
      %3735 = vmatmul.bf16.gmra.mxu0 %v3655
      %v3736 = vpop.f32.mrf.mxu0
      %v3737 = vadd.f32 0.0, %v3736
      %v3738 = vpop.f32.mrf.mxu0
      %v3739 = vadd.f32 0.0, %v3738
      %3740 = vmatmul.bf16.gmra.mxu0 %v3658
      %v3741 = vpop.f32.mrf.mxu0
      %v3742 = vadd.f32 0.0, %v3741
      %v3743 = vpop.f32.mrf.mxu0
      %v3744 = vadd.f32 0.0, %v3743
      %3745 = vmatmul.bf16.gmra.mxu0 %v3661
      %v3746 = vpop.f32.mrf.mxu0
      %v3747 = vadd.f32 0.0, %v3746
      %v3748 = vpop.f32.mrf.mxu0
      %v3749 = vadd.f32 0.0, %v3748
      %3750 = vmatmul.bf16.gmra.mxu0 %v3664
      %v3751 = vpop.f32.mrf.mxu0
      %v3752 = vadd.f32 0.0, %v3751
      %v3753 = vpop.f32.mrf.mxu0
      %v3754 = vadd.f32 0.0, %v3753
      %3755 = vmatmul.bf16.gmra.mxu0 %v3667
      %v3756 = vpop.f32.mrf.mxu0
      %v3757 = vadd.f32 0.0, %v3756
      %v3758 = vpop.f32.mrf.mxu0
      %v3759 = vadd.f32 0.0, %v3758
      %3760 = vdwg.mxu0
      %v3761 = vadd.f32 %v3107, %v3682
      %v3762 = vadd.f32 %v3108, %v3684
      %v3763 = vadd.f32 %v3109, %v3687
      %v3764 = vadd.f32 %v3110, %v3689
      %v3765 = vadd.f32 %v3111, %v3692
      %v3766 = vadd.f32 %v3112, %v3694
      %v3767 = vadd.f32 %v3113, %v3697
      %v3768 = vadd.f32 %v3114, %v3699
      %v3769 = vadd.f32 %v3115, %v3702
      %v3770 = vadd.f32 %v3116, %v3704
      %v3771 = vadd.f32 %v3117, %v3707
      %v3772 = vadd.f32 %v3118, %v3709
      %v3773 = vadd.f32 %v3119, %v3712
      %v3774 = vadd.f32 %v3120, %v3714
      %v3775 = vadd.f32 %v3121, %v3717
      %v3776 = vadd.f32 %v3122, %v3719
      %v3777 = vadd.f32 %v3123, %v3722
      %v3778 = vadd.f32 %v3124, %v3724
      %v3779 = vadd.f32 %v3125, %v3727
      %v3780 = vadd.f32 %v3126, %v3729
      %v3781 = vadd.f32 %v3127, %v3732
      %v3782 = vadd.f32 %v3128, %v3734
      %v3783 = vadd.f32 %v3129, %v3737
      %v3784 = vadd.f32 %v3130, %v3739
      %v3785 = vadd.f32 %v3131, %v3742
      %v3786 = vadd.f32 %v3132, %v3744
      %v3787 = vadd.f32 %v3133, %v3747
      %v3788 = vadd.f32 %v3134, %v3749
      %v3789 = vadd.f32 %v3135, %v3752
      %v3790 = vadd.f32 %v3136, %v3754
      %v3791 = vadd.f32 %v3137, %v3757
      %v3792 = vadd.f32 %v3138, %v3759
      %v3793 = vld [vmem:[%s2852] sm:$0xe]
      %v3794 = vld [vmem:[%s2852 + $0xc] sm:$0xe]
      %v3795 = vld [vmem:[%s2852 + $0x18] sm:$0xe]
      %v3796 = vld [vmem:[%s2852 + $0x24] sm:$0xe]
      %v3797 = vld [vmem:[%s2852 + $0x30] sm:$0xe]
      %v3798 = vld [vmem:[%s2852 + $0x3c] sm:$0xe]
      %v3799 = vld [vmem:[%s2852 + $0x48] sm:$0xe]
      %v3800 = vld [vmem:[%s2852 + $0x54] sm:$0xe]
      %v3801 = vld [vmem:[%s2852 + $0x60] sm:$0xe]
      %v3802 = vld [vmem:[%s2852 + $0x6c] sm:$0xe]
      %v3803 = vld [vmem:[%s2852 + $0x78] sm:$0xe]
      %v3804 = vld [vmem:[%s2852 + $0x84] sm:$0xe]
      %v3805 = vld [vmem:[%s2852 + $0x90] sm:$0xe]
      %v3806 = vld [vmem:[%s2852 + $0x9c] sm:$0xe]
      %v3807 = vld [vmem:[%s2852 + $0xa8] sm:$0xe]
      %v3808 = vld [vmem:[%s2852 + $0xb4] sm:$0xe]
      %v3857 = vrot.slane %v3793, 5
      %v3858 = vrot.slane %v3857, 4
      %v3859 = vrot.slane %v3140, 5
      %v3860 = vsel %vm1178, %v3858, %v3859
      %v3861 = vrot.slane %v3859, 4
      %v3862 = vrot.slane %v3141, 5
      %v3863 = vsel %vm1178, %v3861, %v3862
      %v3864 = vrot.slane %v3794, 5
      %v3865 = vrot.slane %v3864, 4
      %v3866 = vrot.slane %v3143, 5
      %v3867 = vsel %vm1178, %v3865, %v3866
      %v3868 = vrot.slane %v3866, 4
      %v3869 = vrot.slane %v3144, 5
      %v3870 = vsel %vm1178, %v3868, %v3869
      %v3871 = vrot.slane %v3795, 5
      %v3872 = vrot.slane %v3871, 4
      %v3873 = vrot.slane %v3146, 5
      %v3874 = vsel %vm1178, %v3872, %v3873
      %v3875 = vrot.slane %v3873, 4
      %v3876 = vrot.slane %v3147, 5
      %v3877 = vsel %vm1178, %v3875, %v3876
      %v3878 = vrot.slane %v3796, 5
      %v3879 = vrot.slane %v3878, 4
      %v3880 = vrot.slane %v3149, 5
      %v3881 = vsel %vm1178, %v3879, %v3880
      %v3882 = vrot.slane %v3880, 4
      %v3883 = vrot.slane %v3150, 5
      %v3884 = vsel %vm1178, %v3882, %v3883
      %v3885 = vrot.slane %v3797, 5
      %v3886 = vrot.slane %v3885, 4
      %v3887 = vrot.slane %v3152, 5
      %v3888 = vsel %vm1178, %v3886, %v3887
      %v3889 = vrot.slane %v3887, 4
      %v3890 = vrot.slane %v3153, 5
      %v3891 = vsel %vm1178, %v3889, %v3890
      %v3892 = vrot.slane %v3798, 5
      %v3893 = vrot.slane %v3892, 4
      %v3894 = vrot.slane %v3155, 5
      %v3895 = vsel %vm1178, %v3893, %v3894
      %v3896 = vrot.slane %v3894, 4
      %v3897 = vrot.slane %v3156, 5
      %v3898 = vsel %vm1178, %v3896, %v3897
      %v3899 = vrot.slane %v3799, 5
      %v3900 = vrot.slane %v3899, 4
      %v3901 = vrot.slane %v3158, 5
      %v3902 = vsel %vm1178, %v3900, %v3901
      %v3903 = vrot.slane %v3901, 4
      %v3904 = vrot.slane %v3159, 5
      %v3905 = vsel %vm1178, %v3903, %v3904
      %v3906 = vrot.slane %v3800, 5
      %v3907 = vrot.slane %v3906, 4
      %v3908 = vrot.slane %v3161, 5
      %v3909 = vsel %vm1178, %v3907, %v3908
      %v3910 = vrot.slane %v3908, 4
      %v3911 = vrot.slane %v3162, 5
      %v3912 = vsel %vm1178, %v3910, %v3911
      %v3913 = vrot.slane %v3801, 5
      %v3914 = vrot.slane %v3913, 4
      %v3915 = vrot.slane %v3164, 5
      %v3916 = vsel %vm1178, %v3914, %v3915
      %v3917 = vrot.slane %v3915, 4
      %v3918 = vrot.slane %v3165, 5
      %v3919 = vsel %vm1178, %v3917, %v3918
      %v3920 = vrot.slane %v3802, 5
      %v3921 = vrot.slane %v3920, 4
      %v3922 = vrot.slane %v3167, 5
      %v3923 = vsel %vm1178, %v3921, %v3922
      %v3924 = vrot.slane %v3922, 4
      %v3925 = vrot.slane %v3168, 5
      %v3926 = vsel %vm1178, %v3924, %v3925
      %v3927 = vrot.slane %v3803, 5
      %v3928 = vrot.slane %v3927, 4
      %v3929 = vrot.slane %v3170, 5
      %v3930 = vsel %vm1178, %v3928, %v3929
      %v3931 = vrot.slane %v3929, 4
      %v3932 = vrot.slane %v3171, 5
      %v3933 = vsel %vm1178, %v3931, %v3932
      %v3934 = vrot.slane %v3804, 5
      %v3935 = vrot.slane %v3934, 4
      %v3936 = vrot.slane %v3173, 5
      %v3937 = vsel %vm1178, %v3935, %v3936
      %v3938 = vrot.slane %v3936, 4
      %v3939 = vrot.slane %v3174, 5
      %v3940 = vsel %vm1178, %v3938, %v3939
      %v3941 = vrot.slane %v3805, 5
      %v3942 = vrot.slane %v3941, 4
      %v3943 = vrot.slane %v3176, 5
      %v3944 = vsel %vm1178, %v3942, %v3943
      %v3945 = vrot.slane %v3943, 4
      %v3946 = vrot.slane %v3177, 5
      %v3947 = vsel %vm1178, %v3945, %v3946
      %v3948 = vrot.slane %v3806, 5
      %v3949 = vrot.slane %v3948, 4
      %v3950 = vrot.slane %v3179, 5
      %v3951 = vsel %vm1178, %v3949, %v3950
      %v3952 = vrot.slane %v3950, 4
      %v3953 = vrot.slane %v3180, 5
      %v3954 = vsel %vm1178, %v3952, %v3953
      %v3955 = vrot.slane %v3807, 5
      %v3956 = vrot.slane %v3955, 4
      %v3957 = vrot.slane %v3182, 5
      %v3958 = vsel %vm1178, %v3956, %v3957
      %v3959 = vrot.slane %v3957, 4
      %v3960 = vrot.slane %v3183, 5
      %v3961 = vsel %vm1178, %v3959, %v3960
      %v3962 = vrot.slane %v3808, 5
      %v3963 = vrot.slane %v3962, 4
      %v3964 = vrot.slane %v3185, 5
      %v3965 = vsel %vm1178, %v3963, %v3964
      %v3966 = vrot.slane %v3964, 4
      %v3967 = vrot.slane %v3186, 5
      %v3968 = vsel %vm1178, %v3966, %v3967
      %s3969 = scalar_lea.vmem %s1, 16
      %v3970 = vld [vmem:[%s3969] sm:$0x3]
      %v3971 = vunpack.c.l.b16 %v3860
      %v3972 = vunpack.c.l.b16 %v3863
      %v3973 = vunpack.c.l.b16 %v3867
      %v3974 = vunpack.c.l.b16 %v3870
      %v3975 = vunpack.c.l.b16 %v3874
      %v3976 = vunpack.c.l.b16 %v3877
      %v3977 = vunpack.c.l.b16 %v3881
      %v3978 = vunpack.c.l.b16 %v3884
      %v3979 = vunpack.c.l.b16 %v3888
      %v3980 = vunpack.c.l.b16 %v3891
      %v3981 = vunpack.c.l.b16 %v3895
      %v3982 = vunpack.c.l.b16 %v3898
      %v3983 = vunpack.c.l.b16 %v3902
      %v3984 = vunpack.c.l.b16 %v3905
      %v3985 = vunpack.c.l.b16 %v3909
      %v3986 = vunpack.c.l.b16 %v3912
      %v3987 = vunpack.c.l.b16 %v3916
      %v3988 = vunpack.c.l.b16 %v3919
      %v3989 = vunpack.c.l.b16 %v3923
      %v3990 = vunpack.c.l.b16 %v3926
      %v3991 = vunpack.c.l.b16 %v3930
      %v3992 = vunpack.c.l.b16 %v3933
      %v3993 = vunpack.c.l.b16 %v3937
      %v3994 = vunpack.c.l.b16 %v3940
      %v3995 = vunpack.c.l.b16 %v3944
      %v3996 = vunpack.c.l.b16 %v3947
      %v3997 = vunpack.c.l.b16 %v3951
      %v3998 = vunpack.c.l.b16 %v3954
      %v3999 = vunpack.c.l.b16 %v3958
      %v4000 = vunpack.c.l.b16 %v3961
      %v4001 = vunpack.c.l.b16 %v3965
      %v4002 = vunpack.c.l.b16 %v3968
      %v4003 = vpack.c.b16 %v3972, %v3971
      %v4004 = vpack.c.b16 %v3974, %v3973
      %v4005 = vpack.c.b16 %v3976, %v3975
      %v4006 = vpack.c.b16 %v3978, %v3977
      %v4007 = vpack.c.b16 %v3980, %v3979
      %v4008 = vpack.c.b16 %v3982, %v3981
      %v4009 = vpack.c.b16 %v3984, %v3983
      %v4010 = vpack.c.b16 %v3986, %v3985
      %v4011 = vpack.c.b16 %v3988, %v3987
      %v4012 = vpack.c.b16 %v3990, %v3989
      %v4013 = vpack.c.b16 %v3992, %v3991
      %v4014 = vpack.c.b16 %v3994, %v3993
      %v4015 = vpack.c.b16 %v3996, %v3995
      %v4016 = vpack.c.b16 %v3998, %v3997
      %v4017 = vpack.c.b16 %v4000, %v3999
      %v4018 = vpack.c.b16 %v4002, %v4001
      %v4020 = vsel %vm766, %v4003, 0
      %v4023 = vsel %vm766, %v4004, 0
      %v4026 = vsel %vm766, %v4005, 0
      %v4029 = vsel %vm766, %v4006, 0
      %v4032 = vsel %vm766, %v4007, 0
      %v4035 = vsel %vm766, %v4008, 0
      %v4038 = vsel %vm766, %v4009, 0
      %v4041 = vsel %vm766, %v4010, 0
      %v4044 = vsel %vm766, %v4011, 0
      %v4047 = vsel %vm766, %v4012, 0
      %v4050 = vsel %vm766, %v4013, 0
      %v4053 = vsel %vm766, %v4014, 0
      %v4056 = vsel %vm766, %v4015, 0
      %v4059 = vsel %vm766, %v4016, 0
      %v4062 = vsel %vm766, %v4017, 0
      %v4065 = vsel %vm766, %v4018, 0
      %v4068 = vsel %vm815, %v3970, 0
      %4070 = vmatpush.bf16.msra.mxu0 0
      %4071 = vmatpush.bf16.msra.mxu0 0
      %4072 = vmatpush.bf16.msra.mxu0 0
      %4073 = vmatpush.bf16.msra.mxu0 0
      %4074 = vmatpush.bf16.msra.mxu0 0
      %4075 = vmatpush.bf16.msra.mxu0 0
      %4076 = vmatpush.bf16.msra.mxu0 0
      %4077 = vmatpush.bf16.msra.mxu0 %v4068
      %4078 = vmatmul.bf16.gmra.mxu0 %v4020
      %v4079 = vpop.f32.mrf.mxu0
      %v4080 = vadd.f32 0.0, %v4079
      %v4081 = vpop.f32.mrf.mxu0
      %v4082 = vadd.f32 0.0, %v4081
      %4083 = vmatmul.bf16.gmra.mxu0 %v4023
      %v4084 = vpop.f32.mrf.mxu0
      %v4085 = vadd.f32 0.0, %v4084
      %v4086 = vpop.f32.mrf.mxu0
      %v4087 = vadd.f32 0.0, %v4086
      %4088 = vmatmul.bf16.gmra.mxu0 %v4026
      %v4089 = vpop.f32.mrf.mxu0
      %v4090 = vadd.f32 0.0, %v4089
      %v4091 = vpop.f32.mrf.mxu0
      %v4092 = vadd.f32 0.0, %v4091
      %4093 = vmatmul.bf16.gmra.mxu0 %v4029
      %v4094 = vpop.f32.mrf.mxu0
      %v4095 = vadd.f32 0.0, %v4094
      %v4096 = vpop.f32.mrf.mxu0
      %v4097 = vadd.f32 0.0, %v4096
      %4098 = vmatmul.bf16.gmra.mxu0 %v4032
      %v4099 = vpop.f32.mrf.mxu0
      %v4100 = vadd.f32 0.0, %v4099
      %v4101 = vpop.f32.mrf.mxu0
      %v4102 = vadd.f32 0.0, %v4101
      %4103 = vmatmul.bf16.gmra.mxu0 %v4035
      %v4104 = vpop.f32.mrf.mxu0
      %v4105 = vadd.f32 0.0, %v4104
      %v4106 = vpop.f32.mrf.mxu0
      %v4107 = vadd.f32 0.0, %v4106
      %4108 = vmatmul.bf16.gmra.mxu0 %v4038
      %v4109 = vpop.f32.mrf.mxu0
      %v4110 = vadd.f32 0.0, %v4109
      %v4111 = vpop.f32.mrf.mxu0
      %v4112 = vadd.f32 0.0, %v4111
      %4113 = vmatmul.bf16.gmra.mxu0 %v4041
      %v4114 = vpop.f32.mrf.mxu0
      %v4115 = vadd.f32 0.0, %v4114
      %v4116 = vpop.f32.mrf.mxu0
      %v4117 = vadd.f32 0.0, %v4116
      %4118 = vmatmul.bf16.gmra.mxu0 %v4044
      %v4119 = vpop.f32.mrf.mxu0
      %v4120 = vadd.f32 0.0, %v4119
      %v4121 = vpop.f32.mrf.mxu0
      %v4122 = vadd.f32 0.0, %v4121
      %4123 = vmatmul.bf16.gmra.mxu0 %v4047
      %v4124 = vpop.f32.mrf.mxu0
      %v4125 = vadd.f32 0.0, %v4124
      %v4126 = vpop.f32.mrf.mxu0
      %v4127 = vadd.f32 0.0, %v4126
      %4128 = vmatmul.bf16.gmra.mxu0 %v4050
      %v4129 = vpop.f32.mrf.mxu0
      %v4130 = vadd.f32 0.0, %v4129
      %v4131 = vpop.f32.mrf.mxu0
      %v4132 = vadd.f32 0.0, %v4131
      %4133 = vmatmul.bf16.gmra.mxu0 %v4053
      %v4134 = vpop.f32.mrf.mxu0
      %v4135 = vadd.f32 0.0, %v4134
      %v4136 = vpop.f32.mrf.mxu0
      %v4137 = vadd.f32 0.0, %v4136
      %4138 = vmatmul.bf16.gmra.mxu0 %v4056
      %v4139 = vpop.f32.mrf.mxu0
      %v4140 = vadd.f32 0.0, %v4139
      %v4141 = vpop.f32.mrf.mxu0
      %v4142 = vadd.f32 0.0, %v4141
      %4143 = vmatmul.bf16.gmra.mxu0 %v4059
      %v4144 = vpop.f32.mrf.mxu0
      %v4145 = vadd.f32 0.0, %v4144
      %v4146 = vpop.f32.mrf.mxu0
      %v4147 = vadd.f32 0.0, %v4146
      %4148 = vmatmul.bf16.gmra.mxu0 %v4062
      %v4149 = vpop.f32.mrf.mxu0
      %v4150 = vadd.f32 0.0, %v4149
      %v4151 = vpop.f32.mrf.mxu0
      %v4152 = vadd.f32 0.0, %v4151
      %4153 = vmatmul.bf16.gmra.mxu0 %v4065
      %v4154 = vpop.f32.mrf.mxu0
      %v4155 = vadd.f32 0.0, %v4154
      %v4156 = vpop.f32.mrf.mxu0
      %v4157 = vadd.f32 0.0, %v4156
      %4158 = vdwg.mxu0
      %v4159 = vadd.f32 %v3761, %v4080
      %v4160 = vadd.f32 %v3762, %v4082
      %v4161 = vadd.f32 %v3763, %v4085
      %v4162 = vadd.f32 %v3764, %v4087
      %v4163 = vadd.f32 %v3765, %v4090
      %v4164 = vadd.f32 %v3766, %v4092
      %v4165 = vadd.f32 %v3767, %v4095
      %v4166 = vadd.f32 %v3768, %v4097
      %v4167 = vadd.f32 %v3769, %v4100
      %v4168 = vadd.f32 %v3770, %v4102
      %v4169 = vadd.f32 %v3771, %v4105
      %v4170 = vadd.f32 %v3772, %v4107
      %v4171 = vadd.f32 %v3773, %v4110
      %v4172 = vadd.f32 %v3774, %v4112
      %v4173 = vadd.f32 %v3775, %v4115
      %v4174 = vadd.f32 %v3776, %v4117
      %v4175 = vadd.f32 %v3777, %v4120
      %v4176 = vadd.f32 %v3778, %v4122
      %v4177 = vadd.f32 %v3779, %v4125
      %v4178 = vadd.f32 %v3780, %v4127
      %v4179 = vadd.f32 %v3781, %v4130
      %v4180 = vadd.f32 %v3782, %v4132
      %v4181 = vadd.f32 %v3783, %v4135
      %v4182 = vadd.f32 %v3784, %v4137
      %v4183 = vadd.f32 %v3785, %v4140
      %v4184 = vadd.f32 %v3786, %v4142
      %v4185 = vadd.f32 %v3787, %v4145
      %v4186 = vadd.f32 %v3788, %v4147
      %v4187 = vadd.f32 %v3789, %v4150
      %v4188 = vadd.f32 %v3790, %v4152
      %v4189 = vadd.f32 %v3791, %v4155
      %v4190 = vadd.f32 %v3792, %v4157
      %v4191 = vld [vmem:[%s2] sm:$0x1]
      %v4193 = vperm.slane %v4191, 0
      %v4195 = vadd.f32 %v4159, %v4193
      %v4196 = vadd.f32 %v4160, %v4193
      %v4197 = vadd.f32 %v4161, %v4193
      %v4198 = vadd.f32 %v4162, %v4193
      %v4199 = vadd.f32 %v4163, %v4193
      %v4200 = vadd.f32 %v4164, %v4193
      %v4201 = vadd.f32 %v4165, %v4193
      %v4202 = vadd.f32 %v4166, %v4193
      %v4203 = vadd.f32 %v4167, %v4193
      %v4204 = vadd.f32 %v4168, %v4193
      %v4205 = vadd.f32 %v4169, %v4193
      %v4206 = vadd.f32 %v4170, %v4193
      %v4207 = vadd.f32 %v4171, %v4193
      %v4208 = vadd.f32 %v4172, %v4193
      %v4209 = vadd.f32 %v4173, %v4193
      %v4210 = vadd.f32 %v4174, %v4193
      %v4211 = vadd.f32 %v4175, %v4193
      %v4212 = vadd.f32 %v4176, %v4193
      %v4213 = vadd.f32 %v4177, %v4193
      %v4214 = vadd.f32 %v4178, %v4193
      %v4215 = vadd.f32 %v4179, %v4193
      %v4216 = vadd.f32 %v4180, %v4193
      %v4217 = vadd.f32 %v4181, %v4193
      %v4218 = vadd.f32 %v4182, %v4193
      %v4219 = vadd.f32 %v4183, %v4193
      %v4220 = vadd.f32 %v4184, %v4193
      %v4221 = vadd.f32 %v4185, %v4193
      %v4222 = vadd.f32 %v4186, %v4193
      %v4223 = vadd.f32 %v4187, %v4193
      %v4224 = vadd.f32 %v4188, %v4193
      %v4225 = vadd.f32 %v4189, %v4193
      %v4226 = vadd.f32 %v4190, %v4193
      %v4227 = vmax.f32 %v4195, 0.0
      %v4228 = vmax.f32 %v4196, 0.0
      %v4229 = vmax.f32 %v4197, 0.0
      %v4230 = vmax.f32 %v4198, 0.0
      %v4231 = vmax.f32 %v4199, 0.0
      %v4232 = vmax.f32 %v4200, 0.0
      %v4233 = vmax.f32 %v4201, 0.0
      %v4234 = vmax.f32 %v4202, 0.0
      %v4235 = vmax.f32 %v4203, 0.0
      %v4236 = vmax.f32 %v4204, 0.0
      %v4237 = vmax.f32 %v4205, 0.0
      %v4238 = vmax.f32 %v4206, 0.0
      %v4239 = vmax.f32 %v4207, 0.0
      %v4240 = vmax.f32 %v4208, 0.0
      %v4241 = vmax.f32 %v4209, 0.0
      %v4242 = vmax.f32 %v4210, 0.0
      %v4243 = vmax.f32 %v4211, 0.0
      %v4244 = vmax.f32 %v4212, 0.0
      %v4245 = vmax.f32 %v4213, 0.0
      %v4246 = vmax.f32 %v4214, 0.0
      %v4247 = vmax.f32 %v4215, 0.0
      %v4248 = vmax.f32 %v4216, 0.0
      %v4249 = vmax.f32 %v4217, 0.0
      %v4250 = vmax.f32 %v4218, 0.0
      %v4251 = vmax.f32 %v4219, 0.0
      %v4252 = vmax.f32 %v4220, 0.0
      %v4253 = vmax.f32 %v4221, 0.0
      %v4254 = vmax.f32 %v4222, 0.0
      %v4255 = vmax.f32 %v4223, 0.0
      %v4256 = vmax.f32 %v4224, 0.0
      %v4257 = vmax.f32 %v4225, 0.0
      %v4258 = vmax.f32 %v4226, 0.0
      %v4259 = vpack.c.bf16 %v4227, %v4227
      %v4260 = vpack.c.bf16 %v4228, %v4228
      %v4261 = vpack.c.bf16 %v4229, %v4229
      %v4262 = vpack.c.bf16 %v4230, %v4230
      %v4263 = vpack.c.bf16 %v4231, %v4231
      %v4264 = vpack.c.bf16 %v4232, %v4232
      %v4265 = vpack.c.bf16 %v4233, %v4233
      %v4266 = vpack.c.bf16 %v4234, %v4234
      %v4267 = vpack.c.bf16 %v4235, %v4235
      %v4268 = vpack.c.bf16 %v4236, %v4236
      %v4269 = vpack.c.bf16 %v4237, %v4237
      %v4270 = vpack.c.bf16 %v4238, %v4238
      %v4271 = vpack.c.bf16 %v4239, %v4239
      %v4272 = vpack.c.bf16 %v4240, %v4240
      %v4273 = vpack.c.bf16 %v4241, %v4241
      %v4274 = vpack.c.bf16 %v4242, %v4242
      %v4275 = vpack.c.bf16 %v4243, %v4243
      %v4276 = vpack.c.bf16 %v4244, %v4244
      %v4277 = vpack.c.bf16 %v4245, %v4245
      %v4278 = vpack.c.bf16 %v4246, %v4246
      %v4279 = vpack.c.bf16 %v4247, %v4247
      %v4280 = vpack.c.bf16 %v4248, %v4248
      %v4281 = vpack.c.bf16 %v4249, %v4249
      %v4282 = vpack.c.bf16 %v4250, %v4250
      %v4283 = vpack.c.bf16 %v4251, %v4251
      %v4284 = vpack.c.bf16 %v4252, %v4252
      %v4285 = vpack.c.bf16 %v4253, %v4253
      %v4286 = vpack.c.bf16 %v4254, %v4254
      %v4287 = vpack.c.bf16 %v4255, %v4255
      %v4288 = vpack.c.bf16 %v4256, %v4256
      %v4289 = vpack.c.bf16 %v4257, %v4257
      %v4290 = vpack.c.bf16 %v4258, %v4258
      %vm4291 = vcmask 60416
      %4292 = vst.msk [vmem:[#allocation2] sm:$0xf] %vm4291, 0
      %4293 = vst.msk [vmem:[#allocation2 + $0x4] sm:$0xf] %vm4291, 0
      %vm4294 = vcmask 57344
      %4295 = vst.msk [vmem:[#allocation2 + $0x8] sm:$0x1] %vm4294, 0
      %4296 = vst.msk [vmem:[#allocation2 + $0xc] sm:$0xf] %vm4291, 0
      %4297 = vst.msk [vmem:[#allocation2 + $0x10] sm:$0xf] %vm4291, 0
      %4298 = vst.msk [vmem:[#allocation2 + $0x14] sm:$0x1] %vm4294, 0
      %4299 = vst.msk [vmem:[#allocation2 + $0x18] sm:$0xf] %vm4291, 0
      %4300 = vst.msk [vmem:[#allocation2 + $0x1c] sm:$0xf] %vm4291, 0
      %4301 = vst.msk [vmem:[#allocation2 + $0x20] sm:$0x1] %vm4294, 0
      %4302 = vst.msk [vmem:[#allocation2 + $0x24] sm:$0xf] %vm4291, 0
      %4303 = vst.msk [vmem:[#allocation2 + $0x28] sm:$0xf] %vm4291, 0
      %4304 = vst.msk [vmem:[#allocation2 + $0x2c] sm:$0x1] %vm4294, 0
      %4305 = vst.msk [vmem:[#allocation2 + $0x30] sm:$0xf] %vm4291, 0
      %4306 = vst.msk [vmem:[#allocation2 + $0x34] sm:$0xf] %vm4291, 0
      %4307 = vst.msk [vmem:[#allocation2 + $0x38] sm:$0x1] %vm4294, 0
      %4308 = vst.msk [vmem:[#allocation2 + $0x3c] sm:$0xf] %vm4291, 0
      %4309 = vst.msk [vmem:[#allocation2 + $0x40] sm:$0xf] %vm4291, 0
      %4310 = vst.msk [vmem:[#allocation2 + $0x44] sm:$0x1] %vm4294, 0
      %4311 = vst.msk [vmem:[#allocation2 + $0x48] sm:$0xf] %vm4291, 0
      %4312 = vst.msk [vmem:[#allocation2 + $0x4c] sm:$0xf] %vm4291, 0
      %4313 = vst.msk [vmem:[#allocation2 + $0x50] sm:$0x1] %vm4294, 0
      %4314 = vst.msk [vmem:[#allocation2 + $0x54] sm:$0xf] %vm4291, 0
      %4315 = vst.msk [vmem:[#allocation2 + $0x58] sm:$0xf] %vm4291, 0
      %4316 = vst.msk [vmem:[#allocation2 + $0x5c] sm:$0x1] %vm4294, 0
      %4317 = vst.msk [vmem:[#allocation2 + $0x60] sm:$0xf] %vm4291, 0
      %4318 = vst.msk [vmem:[#allocation2 + $0x64] sm:$0xf] %vm4291, 0
      %4319 = vst.msk [vmem:[#allocation2 + $0x68] sm:$0x1] %vm4294, 0
      %4320 = vst.msk [vmem:[#allocation2 + $0x6c] sm:$0xf] %vm4291, 0
      %4321 = vst.msk [vmem:[#allocation2 + $0x70] sm:$0xf] %vm4291, 0
      %4322 = vst.msk [vmem:[#allocation2 + $0x74] sm:$0x1] %vm4294, 0
      %4323 = vst.msk [vmem:[#allocation2 + $0x78] sm:$0xf] %vm4291, 0
      %4324 = vst.msk [vmem:[#allocation2 + $0x7c] sm:$0xf] %vm4291, 0
      %4325 = vst.msk [vmem:[#allocation2 + $0x80] sm:$0x1] %vm4294, 0
      %4326 = vst.msk [vmem:[#allocation2 + $0x84] sm:$0xf] %vm4291, 0
      %4327 = vst.msk [vmem:[#allocation2 + $0x88] sm:$0xf] %vm4291, 0
      %4328 = vst.msk [vmem:[#allocation2 + $0x8c] sm:$0x1] %vm4294, 0
      %4329 = vst.msk [vmem:[#allocation2 + $0x90] sm:$0xf] %vm4291, 0
      %4330 = vst.msk [vmem:[#allocation2 + $0x94] sm:$0xf] %vm4291, 0
      %4331 = vst.msk [vmem:[#allocation2 + $0x98] sm:$0x1] %vm4294, 0
      %4332 = vst.msk [vmem:[#allocation2 + $0x9c] sm:$0xf] %vm4291, 0
      %4333 = vst.msk [vmem:[#allocation2 + $0xa0] sm:$0xf] %vm4291, 0
      %4334 = vst.msk [vmem:[#allocation2 + $0xa4] sm:$0x1] %vm4294, 0
      %4335 = vst.msk [vmem:[#allocation2 + $0xa8] sm:$0xf] %vm4291, 0
      %4336 = vst.msk [vmem:[#allocation2 + $0xac] sm:$0xf] %vm4291, 0
      %4337 = vst.msk [vmem:[#allocation2 + $0xb0] sm:$0x1] %vm4294, 0
      %4338 = vst.msk [vmem:[#allocation2 + $0xb4] sm:$0xf] %vm4291, 0
      %4339 = vst.msk [vmem:[#allocation2 + $0xb8] sm:$0xf] %vm4291, 0
      %4340 = vst.msk [vmem:[#allocation2 + $0xbc] sm:$0x1] %vm4294, 0
      %4341 = vst.msk [vmem:[#allocation2 + $0xc0] sm:$0xf] %vm4291, 0
      %4342 = vst.msk [vmem:[#allocation2 + $0xc4] sm:$0xf] %vm4291, 0
      %4343 = vst.msk [vmem:[#allocation2 + $0xc8] sm:$0x1] %vm4294, 0
      %4344 = vst.msk [vmem:[#allocation2 + $0xcc] sm:$0xf] %vm4291, 0
      %4345 = vst.msk [vmem:[#allocation2 + $0xd0] sm:$0xf] %vm4291, 0
      %4346 = vst.msk [vmem:[#allocation2 + $0xd4] sm:$0x1] %vm4294, 0
      %vm4347 = vsmask.f32 256
      %vm4348 = vsmask.f32 4368
      %vm4349 = vmor %vm4347, %vm4348
      %v4351 = vshrl.u32 %v4259, 16
      %v4353 = vrot.slane %v4351, 7
      %v4354 = vshll.u32 %v4259, 16
      %v4356 = vor.u32 %v4353, %v4354
      %v4357 = vrot.slane %v4353, 4
      %v4359 = vshrl.u32 %v4260, 16
      %v4361 = vrot.slane %v4359, 7
      %v4362 = vshll.u32 %v4260, 16
      %v4364 = vor.u32 %v4361, %v4362
      %v4365 = vsel %vm4349, %v4357, %v4364
      %v4366 = vrot.slane %v4361, 4
      %v4368 = vshrl.u32 %v4261, 16
      %v4370 = vrot.slane %v4368, 7
      %v4371 = vshll.u32 %v4261, 16
      %v4373 = vor.u32 %v4370, %v4371
      %v4374 = vrot.slane %v4370, 4
      %v4376 = vshrl.u32 %v4262, 16
      %v4378 = vrot.slane %v4376, 7
      %v4379 = vshll.u32 %v4262, 16
      %v4381 = vor.u32 %v4378, %v4379
      %v4382 = vsel %vm4349, %v4374, %v4381
      %v4383 = vrot.slane %v4378, 4
      %v4385 = vshrl.u32 %v4263, 16
      %v4387 = vrot.slane %v4385, 7
      %v4388 = vshll.u32 %v4263, 16
      %v4390 = vor.u32 %v4387, %v4388
      %v4391 = vrot.slane %v4387, 4
      %v4393 = vshrl.u32 %v4264, 16
      %v4395 = vrot.slane %v4393, 7
      %v4396 = vshll.u32 %v4264, 16
      %v4398 = vor.u32 %v4395, %v4396
      %v4399 = vsel %vm4349, %v4391, %v4398
      %v4400 = vrot.slane %v4395, 4
      %v4402 = vshrl.u32 %v4265, 16
      %v4404 = vrot.slane %v4402, 7
      %v4405 = vshll.u32 %v4265, 16
      %v4407 = vor.u32 %v4404, %v4405
      %v4408 = vrot.slane %v4404, 4
      %v4410 = vshrl.u32 %v4266, 16
      %v4412 = vrot.slane %v4410, 7
      %v4413 = vshll.u32 %v4266, 16
      %v4415 = vor.u32 %v4412, %v4413
      %v4416 = vsel %vm4349, %v4408, %v4415
      %v4417 = vrot.slane %v4412, 4
      %v4419 = vshrl.u32 %v4267, 16
      %v4421 = vrot.slane %v4419, 7
      %v4422 = vshll.u32 %v4267, 16
      %v4424 = vor.u32 %v4421, %v4422
      %v4425 = vrot.slane %v4421, 4
      %v4427 = vshrl.u32 %v4268, 16
      %v4429 = vrot.slane %v4427, 7
      %v4430 = vshll.u32 %v4268, 16
      %v4432 = vor.u32 %v4429, %v4430
      %v4433 = vsel %vm4349, %v4425, %v4432
      %v4434 = vrot.slane %v4429, 4
      %v4436 = vshrl.u32 %v4269, 16
      %v4438 = vrot.slane %v4436, 7
      %v4439 = vshll.u32 %v4269, 16
      %v4441 = vor.u32 %v4438, %v4439
      %v4442 = vrot.slane %v4438, 4
      %v4444 = vshrl.u32 %v4270, 16
      %v4446 = vrot.slane %v4444, 7
      %v4447 = vshll.u32 %v4270, 16
      %v4449 = vor.u32 %v4446, %v4447
      %v4450 = vsel %vm4349, %v4442, %v4449
      %v4451 = vrot.slane %v4446, 4
      %v4453 = vshrl.u32 %v4271, 16
      %v4455 = vrot.slane %v4453, 7
      %v4456 = vshll.u32 %v4271, 16
      %v4458 = vor.u32 %v4455, %v4456
      %v4459 = vrot.slane %v4455, 4
      %v4461 = vshrl.u32 %v4272, 16
      %v4463 = vrot.slane %v4461, 7
      %v4464 = vshll.u32 %v4272, 16
      %v4466 = vor.u32 %v4463, %v4464
      %v4467 = vsel %vm4349, %v4459, %v4466
      %v4468 = vrot.slane %v4463, 4
      %v4470 = vshrl.u32 %v4273, 16
      %v4472 = vrot.slane %v4470, 7
      %v4473 = vshll.u32 %v4273, 16
      %v4475 = vor.u32 %v4472, %v4473
      %v4476 = vrot.slane %v4472, 4
      %v4478 = vshrl.u32 %v4274, 16
      %v4480 = vrot.slane %v4478, 7
      %v4481 = vshll.u32 %v4274, 16
      %v4483 = vor.u32 %v4480, %v4481
      %v4484 = vsel %vm4349, %v4476, %v4483
      %v4485 = vrot.slane %v4480, 4
      %v4487 = vshrl.u32 %v4275, 16
      %v4489 = vrot.slane %v4487, 7
      %v4490 = vshll.u32 %v4275, 16
      %v4492 = vor.u32 %v4489, %v4490
      %v4493 = vrot.slane %v4489, 4
      %v4495 = vshrl.u32 %v4276, 16
      %v4497 = vrot.slane %v4495, 7
      %v4498 = vshll.u32 %v4276, 16
      %v4500 = vor.u32 %v4497, %v4498
      %v4501 = vsel %vm4349, %v4493, %v4500
      %v4502 = vrot.slane %v4497, 4
      %v4504 = vshrl.u32 %v4277, 16
      %v4506 = vrot.slane %v4504, 7
      %v4507 = vshll.u32 %v4277, 16
      %v4509 = vor.u32 %v4506, %v4507
      %v4510 = vrot.slane %v4506, 4
      %v4512 = vshrl.u32 %v4278, 16
      %v4514 = vrot.slane %v4512, 7
      %v4515 = vshll.u32 %v4278, 16
      %v4517 = vor.u32 %v4514, %v4515
      %v4518 = vsel %vm4349, %v4510, %v4517
      %v4519 = vrot.slane %v4514, 4
      %v4521 = vshrl.u32 %v4279, 16
      %v4523 = vrot.slane %v4521, 7
      %v4524 = vshll.u32 %v4279, 16
      %v4526 = vor.u32 %v4523, %v4524
      %v4527 = vrot.slane %v4523, 4
      %v4529 = vshrl.u32 %v4280, 16
      %v4531 = vrot.slane %v4529, 7
      %v4532 = vshll.u32 %v4280, 16
      %v4534 = vor.u32 %v4531, %v4532
      %v4535 = vsel %vm4349, %v4527, %v4534
      %v4536 = vrot.slane %v4531, 4
      %v4538 = vshrl.u32 %v4281, 16
      %v4540 = vrot.slane %v4538, 7
      %v4541 = vshll.u32 %v4281, 16
      %v4543 = vor.u32 %v4540, %v4541
      %v4544 = vrot.slane %v4540, 4
      %v4546 = vshrl.u32 %v4282, 16
      %v4548 = vrot.slane %v4546, 7
      %v4549 = vshll.u32 %v4282, 16
      %v4551 = vor.u32 %v4548, %v4549
      %v4552 = vsel %vm4349, %v4544, %v4551
      %v4553 = vrot.slane %v4548, 4
      %v4555 = vshrl.u32 %v4283, 16
      %v4557 = vrot.slane %v4555, 7
      %v4558 = vshll.u32 %v4283, 16
      %v4560 = vor.u32 %v4557, %v4558
      %v4561 = vrot.slane %v4557, 4
      %v4563 = vshrl.u32 %v4284, 16
      %v4565 = vrot.slane %v4563, 7
      %v4566 = vshll.u32 %v4284, 16
      %v4568 = vor.u32 %v4565, %v4566
      %v4569 = vsel %vm4349, %v4561, %v4568
      %v4570 = vrot.slane %v4565, 4
      %v4572 = vshrl.u32 %v4285, 16
      %v4574 = vrot.slane %v4572, 7
      %v4575 = vshll.u32 %v4285, 16
      %v4577 = vor.u32 %v4574, %v4575
      %v4578 = vrot.slane %v4574, 4
      %v4580 = vshrl.u32 %v4286, 16
      %v4582 = vrot.slane %v4580, 7
      %v4583 = vshll.u32 %v4286, 16
      %v4585 = vor.u32 %v4582, %v4583
      %v4586 = vsel %vm4349, %v4578, %v4585
      %v4587 = vrot.slane %v4582, 4
      %v4589 = vshrl.u32 %v4287, 16
      %v4591 = vrot.slane %v4589, 7
      %v4592 = vshll.u32 %v4287, 16
      %v4594 = vor.u32 %v4591, %v4592
      %v4595 = vrot.slane %v4591, 4
      %v4597 = vshrl.u32 %v4288, 16
      %v4599 = vrot.slane %v4597, 7
      %v4600 = vshll.u32 %v4288, 16
      %v4602 = vor.u32 %v4599, %v4600
      %v4603 = vsel %vm4349, %v4595, %v4602
      %v4604 = vrot.slane %v4599, 4
      %v4606 = vshrl.u32 %v4289, 16
      %v4608 = vrot.slane %v4606, 7
      %v4609 = vshll.u32 %v4289, 16
      %v4611 = vor.u32 %v4608, %v4609
      %v4612 = vrot.slane %v4608, 4
      %v4614 = vshrl.u32 %v4290, 16
      %v4616 = vrot.slane %v4614, 7
      %v4617 = vshll.u32 %v4290, 16
      %v4619 = vor.u32 %v4616, %v4617
      %v4620 = vsel %vm4349, %v4612, %v4619
      %v4621 = vrot.slane %v4616, 4
      %s4670 = scalar_lea.vmem [#allocation2], 12
      %vm4671 = vcmask 60416
      %vm4672 = vsmask.f32 7938
      %vm4673 = vmand %vm4671, %vm4672
      %v4674 = vld [vmem:[%s4670] sm:$0xf]
      %v4675 = vsel %vm4673, %v4356, %v4674
      %4676 = vst [vmem:[%s4670] sm:$0xf] %v4675
      %4677 = vst.msk [vmem:[%s4670 + $0x4] sm:$0xf] %vm4291, %v4365
      %vm4678 = vcmask 57344
      %vm4679 = vmand %vm4678, %vm4347
      %v4680 = vld [vmem:[%s4670 + $0x8] sm:$0x1]
      %v4681 = vsel %vm4679, %v4366, %v4680
      %4682 = vst [vmem:[%s4670 + $0x8] sm:$0x1] %v4681
      %v4683 = vld [vmem:[%s4670 + $0xc] sm:$0xf]
      %v4684 = vsel %vm4673, %v4373, %v4683
      %4685 = vst [vmem:[%s4670 + $0xc] sm:$0xf] %v4684
      %4686 = vst.msk [vmem:[%s4670 + $0x10] sm:$0xf] %vm4291, %v4382
      %v4687 = vld [vmem:[%s4670 + $0x14] sm:$0x1]
      %v4688 = vsel %vm4679, %v4383, %v4687
      %4689 = vst [vmem:[%s4670 + $0x14] sm:$0x1] %v4688
      %v4690 = vld [vmem:[%s4670 + $0x18] sm:$0xf]
      %v4691 = vsel %vm4673, %v4390, %v4690
      %4692 = vst [vmem:[%s4670 + $0x18] sm:$0xf] %v4691
      %4693 = vst.msk [vmem:[%s4670 + $0x1c] sm:$0xf] %vm4291, %v4399
      %v4694 = vld [vmem:[%s4670 + $0x20] sm:$0x1]
      %v4695 = vsel %vm4679, %v4400, %v4694
      %4696 = vst [vmem:[%s4670 + $0x20] sm:$0x1] %v4695
      %v4697 = vld [vmem:[%s4670 + $0x24] sm:$0xf]
      %v4698 = vsel %vm4673, %v4407, %v4697
      %4699 = vst [vmem:[%s4670 + $0x24] sm:$0xf] %v4698
      %4700 = vst.msk [vmem:[%s4670 + $0x28] sm:$0xf] %vm4291, %v4416
      %v4701 = vld [vmem:[%s4670 + $0x2c] sm:$0x1]
      %v4702 = vsel %vm4679, %v4417, %v4701
      %4703 = vst [vmem:[%s4670 + $0x2c] sm:$0x1] %v4702
      %v4704 = vld [vmem:[%s4670 + $0x30] sm:$0xf]
      %v4705 = vsel %vm4673, %v4424, %v4704
      %4706 = vst [vmem:[%s4670 + $0x30] sm:$0xf] %v4705
      %4707 = vst.msk [vmem:[%s4670 + $0x34] sm:$0xf] %vm4291, %v4433
      %v4708 = vld [vmem:[%s4670 + $0x38] sm:$0x1]
      %v4709 = vsel %vm4679, %v4434, %v4708
      %4710 = vst [vmem:[%s4670 + $0x38] sm:$0x1] %v4709
      %v4711 = vld [vmem:[%s4670 + $0x3c] sm:$0xf]
      %v4712 = vsel %vm4673, %v4441, %v4711
      %4713 = vst [vmem:[%s4670 + $0x3c] sm:$0xf] %v4712
      %4714 = vst.msk [vmem:[%s4670 + $0x40] sm:$0xf] %vm4291, %v4450
      %v4715 = vld [vmem:[%s4670 + $0x44] sm:$0x1]
      %v4716 = vsel %vm4679, %v4451, %v4715
      %4717 = vst [vmem:[%s4670 + $0x44] sm:$0x1] %v4716
      %v4718 = vld [vmem:[%s4670 + $0x48] sm:$0xf]
      %v4719 = vsel %vm4673, %v4458, %v4718
      %4720 = vst [vmem:[%s4670 + $0x48] sm:$0xf] %v4719
      %4721 = vst.msk [vmem:[%s4670 + $0x4c] sm:$0xf] %vm4291, %v4467
      %v4722 = vld [vmem:[%s4670 + $0x50] sm:$0x1]
      %v4723 = vsel %vm4679, %v4468, %v4722
      %4724 = vst [vmem:[%s4670 + $0x50] sm:$0x1] %v4723
      %v4725 = vld [vmem:[%s4670 + $0x54] sm:$0xf]
      %v4726 = vsel %vm4673, %v4475, %v4725
      %4727 = vst [vmem:[%s4670 + $0x54] sm:$0xf] %v4726
      %4728 = vst.msk [vmem:[%s4670 + $0x58] sm:$0xf] %vm4291, %v4484
      %v4729 = vld [vmem:[%s4670 + $0x5c] sm:$0x1]
      %v4730 = vsel %vm4679, %v4485, %v4729
      %4731 = vst [vmem:[%s4670 + $0x5c] sm:$0x1] %v4730
      %v4732 = vld [vmem:[%s4670 + $0x60] sm:$0xf]
      %v4733 = vsel %vm4673, %v4492, %v4732
      %4734 = vst [vmem:[%s4670 + $0x60] sm:$0xf] %v4733
      %4735 = vst.msk [vmem:[%s4670 + $0x64] sm:$0xf] %vm4291, %v4501
      %v4736 = vld [vmem:[%s4670 + $0x68] sm:$0x1]
      %v4737 = vsel %vm4679, %v4502, %v4736
      %4738 = vst [vmem:[%s4670 + $0x68] sm:$0x1] %v4737
      %v4739 = vld [vmem:[%s4670 + $0x6c] sm:$0xf]
      %v4740 = vsel %vm4673, %v4509, %v4739
      %4741 = vst [vmem:[%s4670 + $0x6c] sm:$0xf] %v4740
      %4742 = vst.msk [vmem:[%s4670 + $0x70] sm:$0xf] %vm4291, %v4518
      %v4743 = vld [vmem:[%s4670 + $0x74] sm:$0x1]
      %v4744 = vsel %vm4679, %v4519, %v4743
      %4745 = vst [vmem:[%s4670 + $0x74] sm:$0x1] %v4744
      %v4746 = vld [vmem:[%s4670 + $0x78] sm:$0xf]
      %v4747 = vsel %vm4673, %v4526, %v4746
      %4748 = vst [vmem:[%s4670 + $0x78] sm:$0xf] %v4747
      %4749 = vst.msk [vmem:[%s4670 + $0x7c] sm:$0xf] %vm4291, %v4535
      %v4750 = vld [vmem:[%s4670 + $0x80] sm:$0x1]
      %v4751 = vsel %vm4679, %v4536, %v4750
      %4752 = vst [vmem:[%s4670 + $0x80] sm:$0x1] %v4751
      %v4753 = vld [vmem:[%s4670 + $0x84] sm:$0xf]
      %v4754 = vsel %vm4673, %v4543, %v4753
      %4755 = vst [vmem:[%s4670 + $0x84] sm:$0xf] %v4754
      %4756 = vst.msk [vmem:[%s4670 + $0x88] sm:$0xf] %vm4291, %v4552
      %v4757 = vld [vmem:[%s4670 + $0x8c] sm:$0x1]
      %v4758 = vsel %vm4679, %v4553, %v4757
      %4759 = vst [vmem:[%s4670 + $0x8c] sm:$0x1] %v4758
      %v4760 = vld [vmem:[%s4670 + $0x90] sm:$0xf]
      %v4761 = vsel %vm4673, %v4560, %v4760
      %4762 = vst [vmem:[%s4670 + $0x90] sm:$0xf] %v4761
      %4763 = vst.msk [vmem:[%s4670 + $0x94] sm:$0xf] %vm4291, %v4569
      %v4764 = vld [vmem:[%s4670 + $0x98] sm:$0x1]
      %v4765 = vsel %vm4679, %v4570, %v4764
      %4766 = vst [vmem:[%s4670 + $0x98] sm:$0x1] %v4765
      %v4767 = vld [vmem:[%s4670 + $0x9c] sm:$0xf]
      %v4768 = vsel %vm4673, %v4577, %v4767
      %4769 = vst [vmem:[%s4670 + $0x9c] sm:$0xf] %v4768
      %4770 = vst.msk [vmem:[%s4670 + $0xa0] sm:$0xf] %vm4291, %v4586
      %v4771 = vld [vmem:[%s4670 + $0xa4] sm:$0x1]
      %v4772 = vsel %vm4679, %v4587, %v4771
      %4773 = vst [vmem:[%s4670 + $0xa4] sm:$0x1] %v4772
      %v4774 = vld [vmem:[%s4670 + $0xa8] sm:$0xf]
      %v4775 = vsel %vm4673, %v4594, %v4774
      %4776 = vst [vmem:[%s4670 + $0xa8] sm:$0xf] %v4775
      %4777 = vst.msk [vmem:[%s4670 + $0xac] sm:$0xf] %vm4291, %v4603
      %v4778 = vld [vmem:[%s4670 + $0xb0] sm:$0x1]
      %v4779 = vsel %vm4679, %v4604, %v4778
      %4780 = vst [vmem:[%s4670 + $0xb0] sm:$0x1] %v4779
      %v4781 = vld [vmem:[%s4670 + $0xb4] sm:$0xf]
      %v4782 = vsel %vm4673, %v4611, %v4781
      %4783 = vst [vmem:[%s4670 + $0xb4] sm:$0xf] %v4782
      %4784 = vst.msk [vmem:[%s4670 + $0xb8] sm:$0xf] %vm4291, %v4620
      %v4785 = vld [vmem:[%s4670 + $0xbc] sm:$0x1]
      %v4786 = vsel %vm4679, %v4621, %v4785
      %4787 = vst [vmem:[%s4670 + $0xbc] sm:$0x1] %v4786
      %v4788 = vld [vmem:[#allocation2] sm:$0xf]
      %v4789 = vld [vmem:[#allocation2 + $0x4] sm:$0xf]
      %v4790 = vld [vmem:[#allocation2 + $0xc] sm:$0xf]
      %v4791 = vld [vmem:[#allocation2 + $0x10] sm:$0xf]
      %v4792 = vld [vmem:[#allocation2 + $0x18] sm:$0xf]
      %v4793 = vld [vmem:[#allocation2 + $0x1c] sm:$0xf]
      %v4794 = vld [vmem:[#allocation2 + $0x24] sm:$0xf]
      %v4795 = vld [vmem:[#allocation2 + $0x28] sm:$0xf]
      %v4796 = vld [vmem:[#allocation2 + $0x30] sm:$0xf]
      %v4797 = vld [vmem:[#allocation2 + $0x34] sm:$0xf]
      %v4798 = vld [vmem:[#allocation2 + $0x3c] sm:$0xf]
      %v4799 = vld [vmem:[#allocation2 + $0x40] sm:$0xf]
      %v4800 = vld [vmem:[#allocation2 + $0x48] sm:$0xf]
      %v4801 = vld [vmem:[#allocation2 + $0x4c] sm:$0xf]
      %v4802 = vld [vmem:[#allocation2 + $0x54] sm:$0xf]
      %v4803 = vld [vmem:[#allocation2 + $0x58] sm:$0xf]
      %v4804 = vld [vmem:[#allocation2 + $0x60] sm:$0xf]
      %v4805 = vld [vmem:[#allocation2 + $0x64] sm:$0xf]
      %v4806 = vld [vmem:[#allocation2 + $0x6c] sm:$0xf]
      %v4807 = vld [vmem:[#allocation2 + $0x70] sm:$0xf]
      %v4808 = vld [vmem:[#allocation2 + $0x78] sm:$0xf]
      %v4809 = vld [vmem:[#allocation2 + $0x7c] sm:$0xf]
      %v4810 = vld [vmem:[#allocation2 + $0x84] sm:$0xf]
      %v4811 = vld [vmem:[#allocation2 + $0x88] sm:$0xf]
      %v4812 = vld [vmem:[#allocation2 + $0x90] sm:$0xf]
      %v4813 = vld [vmem:[#allocation2 + $0x94] sm:$0xf]
      %v4814 = vld [vmem:[#allocation2 + $0x9c] sm:$0xf]
      %v4815 = vld [vmem:[#allocation2 + $0xa0] sm:$0xf]
      %v4816 = vld [vmem:[#allocation2 + $0xa8] sm:$0xf]
      %v4817 = vld [vmem:[#allocation2 + $0xac] sm:$0xf]
      %v4818 = vld [vmem:[#allocation2 + $0xb4] sm:$0xf]
      %v4819 = vld [vmem:[#allocation2 + $0xb8] sm:$0xf]
      %v4820 = vld [vmem:[%s3] sm:$0xf]
      %v4821 = vld [vmem:[#allocation2 + $0x8] sm:$0x1]
      %v4822 = vld [vmem:[#allocation2 + $0x14] sm:$0x1]
      %v4823 = vld [vmem:[#allocation2 + $0x20] sm:$0x1]
      %v4824 = vld [vmem:[#allocation2 + $0x2c] sm:$0x1]
      %v4825 = vld [vmem:[#allocation2 + $0x38] sm:$0x1]
      %v4826 = vld [vmem:[#allocation2 + $0x44] sm:$0x1]
      %v4827 = vld [vmem:[#allocation2 + $0x50] sm:$0x1]
      %v4828 = vld [vmem:[#allocation2 + $0x5c] sm:$0x1]
      %v4829 = vld [vmem:[#allocation2 + $0x68] sm:$0x1]
      %v4830 = vld [vmem:[#allocation2 + $0x74] sm:$0x1]
      %v4831 = vld [vmem:[#allocation2 + $0x80] sm:$0x1]
      %v4832 = vld [vmem:[#allocation2 + $0x8c] sm:$0x1]
      %v4833 = vld [vmem:[#allocation2 + $0x98] sm:$0x1]
      %v4834 = vld [vmem:[#allocation2 + $0xa4] sm:$0x1]
      %v4835 = vld [vmem:[#allocation2 + $0xb0] sm:$0x1]
      %v4836 = vld [vmem:[#allocation2 + $0xbc] sm:$0x1]
      %v4838 = vshrl.u32 %v4788, 16
      %v4840 = vrot.slane %v4838, 4
      %v4841 = vshll.u32 %v4788, 16
      %v4843 = vrot.slane %v4841, 5
      %v4844 = vor.u32 %v4840, %v4843
      %v4845 = vrot.slane %v4844, 4
      %v4847 = vshll.u32 %v4789, 16
      %v4849 = vrot.slane %v4847, 5
      %v4850 = vsel %vm331, %v4845, %v4849
      %v4851 = vshrl.u32 %v4789, 16
      %v4853 = vrot.slane %v4851, 4
      %v4854 = vor.u32 %v4853, %v4849
      %v4855 = vrot.slane %v4854, 4
      %v4857 = vshll.u32 %v4821, 16
      %v4859 = vrot.slane %v4857, 5
      %v4860 = vsel %vm331, %v4855, %v4859
      %v4862 = vshrl.u32 %v4790, 16
      %v4864 = vrot.slane %v4862, 4
      %v4865 = vshll.u32 %v4790, 16
      %v4867 = vrot.slane %v4865, 5
      %v4868 = vor.u32 %v4864, %v4867
      %v4869 = vrot.slane %v4868, 4
      %v4871 = vshll.u32 %v4791, 16
      %v4873 = vrot.slane %v4871, 5
      %v4874 = vsel %vm331, %v4869, %v4873
      %v4875 = vshrl.u32 %v4791, 16
      %v4877 = vrot.slane %v4875, 4
      %v4878 = vor.u32 %v4877, %v4873
      %v4879 = vrot.slane %v4878, 4
      %v4881 = vshll.u32 %v4822, 16
      %v4883 = vrot.slane %v4881, 5
      %v4884 = vsel %vm331, %v4879, %v4883
      %v4886 = vshrl.u32 %v4792, 16
      %v4888 = vrot.slane %v4886, 4
      %v4889 = vshll.u32 %v4792, 16
      %v4891 = vrot.slane %v4889, 5
      %v4892 = vor.u32 %v4888, %v4891
      %v4893 = vrot.slane %v4892, 4
      %v4895 = vshll.u32 %v4793, 16
      %v4897 = vrot.slane %v4895, 5
      %v4898 = vsel %vm331, %v4893, %v4897
      %v4899 = vshrl.u32 %v4793, 16
      %v4901 = vrot.slane %v4899, 4
      %v4902 = vor.u32 %v4901, %v4897
      %v4903 = vrot.slane %v4902, 4
      %v4905 = vshll.u32 %v4823, 16
      %v4907 = vrot.slane %v4905, 5
      %v4908 = vsel %vm331, %v4903, %v4907
      %v4910 = vshrl.u32 %v4794, 16
      %v4912 = vrot.slane %v4910, 4
      %v4913 = vshll.u32 %v4794, 16
      %v4915 = vrot.slane %v4913, 5
      %v4916 = vor.u32 %v4912, %v4915
      %v4917 = vrot.slane %v4916, 4
      %v4919 = vshll.u32 %v4795, 16
      %v4921 = vrot.slane %v4919, 5
      %v4922 = vsel %vm331, %v4917, %v4921
      %v4923 = vshrl.u32 %v4795, 16
      %v4925 = vrot.slane %v4923, 4
      %v4926 = vor.u32 %v4925, %v4921
      %v4927 = vrot.slane %v4926, 4
      %v4929 = vshll.u32 %v4824, 16
      %v4931 = vrot.slane %v4929, 5
      %v4932 = vsel %vm331, %v4927, %v4931
      %v4934 = vshrl.u32 %v4796, 16
      %v4936 = vrot.slane %v4934, 4
      %v4937 = vshll.u32 %v4796, 16
      %v4939 = vrot.slane %v4937, 5
      %v4940 = vor.u32 %v4936, %v4939
      %v4941 = vrot.slane %v4940, 4
      %v4943 = vshll.u32 %v4797, 16
      %v4945 = vrot.slane %v4943, 5
      %v4946 = vsel %vm331, %v4941, %v4945
      %v4947 = vshrl.u32 %v4797, 16
      %v4949 = vrot.slane %v4947, 4
      %v4950 = vor.u32 %v4949, %v4945
      %v4951 = vrot.slane %v4950, 4
      %v4953 = vshll.u32 %v4825, 16
      %v4955 = vrot.slane %v4953, 5
      %v4956 = vsel %vm331, %v4951, %v4955
      %v4958 = vshrl.u32 %v4798, 16
      %v4960 = vrot.slane %v4958, 4
      %v4961 = vshll.u32 %v4798, 16
      %v4963 = vrot.slane %v4961, 5
      %v4964 = vor.u32 %v4960, %v4963
      %v4965 = vrot.slane %v4964, 4
      %v4967 = vshll.u32 %v4799, 16
      %v4969 = vrot.slane %v4967, 5
      %v4970 = vsel %vm331, %v4965, %v4969
      %v4971 = vshrl.u32 %v4799, 16
      %v4973 = vrot.slane %v4971, 4
      %v4974 = vor.u32 %v4973, %v4969
      %v4975 = vrot.slane %v4974, 4
      %v4977 = vshll.u32 %v4826, 16
      %v4979 = vrot.slane %v4977, 5
      %v4980 = vsel %vm331, %v4975, %v4979
      %v4982 = vshrl.u32 %v4800, 16
      %v4984 = vrot.slane %v4982, 4
      %v4985 = vshll.u32 %v4800, 16
      %v4987 = vrot.slane %v4985, 5
      %v4988 = vor.u32 %v4984, %v4987
      %v4989 = vrot.slane %v4988, 4
      %v4991 = vshll.u32 %v4801, 16
      %v4993 = vrot.slane %v4991, 5
      %v4994 = vsel %vm331, %v4989, %v4993
      %v4995 = vshrl.u32 %v4801, 16
      %v4997 = vrot.slane %v4995, 4
      %v4998 = vor.u32 %v4997, %v4993
      %v4999 = vrot.slane %v4998, 4
      %v5001 = vshll.u32 %v4827, 16
      %v5003 = vrot.slane %v5001, 5
      %v5004 = vsel %vm331, %v4999, %v5003
      %v5006 = vshrl.u32 %v4802, 16
      %v5008 = vrot.slane %v5006, 4
      %v5009 = vshll.u32 %v4802, 16
      %v5011 = vrot.slane %v5009, 5
      %v5012 = vor.u32 %v5008, %v5011
      %v5013 = vrot.slane %v5012, 4
      %v5015 = vshll.u32 %v4803, 16
      %v5017 = vrot.slane %v5015, 5
      %v5018 = vsel %vm331, %v5013, %v5017
      %v5019 = vshrl.u32 %v4803, 16
      %v5021 = vrot.slane %v5019, 4
      %v5022 = vor.u32 %v5021, %v5017
      %v5023 = vrot.slane %v5022, 4
      %v5025 = vshll.u32 %v4828, 16
      %v5027 = vrot.slane %v5025, 5
      %v5028 = vsel %vm331, %v5023, %v5027
      %v5030 = vshrl.u32 %v4804, 16
      %v5032 = vrot.slane %v5030, 4
      %v5033 = vshll.u32 %v4804, 16
      %v5035 = vrot.slane %v5033, 5
      %v5036 = vor.u32 %v5032, %v5035
      %v5037 = vrot.slane %v5036, 4
      %v5039 = vshll.u32 %v4805, 16
      %v5041 = vrot.slane %v5039, 5
      %v5042 = vsel %vm331, %v5037, %v5041
      %v5043 = vshrl.u32 %v4805, 16
      %v5045 = vrot.slane %v5043, 4
      %v5046 = vor.u32 %v5045, %v5041
      %v5047 = vrot.slane %v5046, 4
      %v5049 = vshll.u32 %v4829, 16
      %v5051 = vrot.slane %v5049, 5
      %v5052 = vsel %vm331, %v5047, %v5051
      %v5054 = vshrl.u32 %v4806, 16
      %v5056 = vrot.slane %v5054, 4
      %v5057 = vshll.u32 %v4806, 16
      %v5059 = vrot.slane %v5057, 5
      %v5060 = vor.u32 %v5056, %v5059
      %v5061 = vrot.slane %v5060, 4
      %v5063 = vshll.u32 %v4807, 16
      %v5065 = vrot.slane %v5063, 5
      %v5066 = vsel %vm331, %v5061, %v5065
      %v5067 = vshrl.u32 %v4807, 16
      %v5069 = vrot.slane %v5067, 4
      %v5070 = vor.u32 %v5069, %v5065
      %v5071 = vrot.slane %v5070, 4
      %v5073 = vshll.u32 %v4830, 16
      %v5075 = vrot.slane %v5073, 5
      %v5076 = vsel %vm331, %v5071, %v5075
      %v5078 = vshrl.u32 %v4808, 16
      %v5080 = vrot.slane %v5078, 4
      %v5081 = vshll.u32 %v4808, 16
      %v5083 = vrot.slane %v5081, 5
      %v5084 = vor.u32 %v5080, %v5083
      %v5085 = vrot.slane %v5084, 4
      %v5087 = vshll.u32 %v4809, 16
      %v5089 = vrot.slane %v5087, 5
      %v5090 = vsel %vm331, %v5085, %v5089
      %v5091 = vshrl.u32 %v4809, 16
      %v5093 = vrot.slane %v5091, 4
      %v5094 = vor.u32 %v5093, %v5089
      %v5095 = vrot.slane %v5094, 4
      %v5097 = vshll.u32 %v4831, 16
      %v5099 = vrot.slane %v5097, 5
      %v5100 = vsel %vm331, %v5095, %v5099
      %v5102 = vshrl.u32 %v4810, 16
      %v5104 = vrot.slane %v5102, 4
      %v5105 = vshll.u32 %v4810, 16
      %v5107 = vrot.slane %v5105, 5
      %v5108 = vor.u32 %v5104, %v5107
      %v5109 = vrot.slane %v5108, 4
      %v5111 = vshll.u32 %v4811, 16
      %v5113 = vrot.slane %v5111, 5
      %v5114 = vsel %vm331, %v5109, %v5113
      %v5115 = vshrl.u32 %v4811, 16
      %v5117 = vrot.slane %v5115, 4
      %v5118 = vor.u32 %v5117, %v5113
      %v5119 = vrot.slane %v5118, 4
      %v5121 = vshll.u32 %v4832, 16
      %v5123 = vrot.slane %v5121, 5
      %v5124 = vsel %vm331, %v5119, %v5123
      %v5126 = vshrl.u32 %v4812, 16
      %v5128 = vrot.slane %v5126, 4
      %v5129 = vshll.u32 %v4812, 16
      %v5131 = vrot.slane %v5129, 5
      %v5132 = vor.u32 %v5128, %v5131
      %v5133 = vrot.slane %v5132, 4
      %v5135 = vshll.u32 %v4813, 16
      %v5137 = vrot.slane %v5135, 5
      %v5138 = vsel %vm331, %v5133, %v5137
      %v5139 = vshrl.u32 %v4813, 16
      %v5141 = vrot.slane %v5139, 4
      %v5142 = vor.u32 %v5141, %v5137
      %v5143 = vrot.slane %v5142, 4
      %v5145 = vshll.u32 %v4833, 16
      %v5147 = vrot.slane %v5145, 5
      %v5148 = vsel %vm331, %v5143, %v5147
      %v5150 = vshrl.u32 %v4814, 16
      %v5152 = vrot.slane %v5150, 4
      %v5153 = vshll.u32 %v4814, 16
      %v5155 = vrot.slane %v5153, 5
      %v5156 = vor.u32 %v5152, %v5155
      %v5157 = vrot.slane %v5156, 4
      %v5159 = vshll.u32 %v4815, 16
      %v5161 = vrot.slane %v5159, 5
      %v5162 = vsel %vm331, %v5157, %v5161
      %v5163 = vshrl.u32 %v4815, 16
      %v5165 = vrot.slane %v5163, 4
      %v5166 = vor.u32 %v5165, %v5161
      %v5167 = vrot.slane %v5166, 4
      %v5169 = vshll.u32 %v4834, 16
      %v5171 = vrot.slane %v5169, 5
      %v5172 = vsel %vm331, %v5167, %v5171
      %v5174 = vshrl.u32 %v4816, 16
      %v5176 = vrot.slane %v5174, 4
      %v5177 = vshll.u32 %v4816, 16
      %v5179 = vrot.slane %v5177, 5
      %v5180 = vor.u32 %v5176, %v5179
      %v5181 = vrot.slane %v5180, 4
      %v5183 = vshll.u32 %v4817, 16
      %v5185 = vrot.slane %v5183, 5
      %v5186 = vsel %vm331, %v5181, %v5185
      %v5187 = vshrl.u32 %v4817, 16
      %v5189 = vrot.slane %v5187, 4
      %v5190 = vor.u32 %v5189, %v5185
      %v5191 = vrot.slane %v5190, 4
      %v5193 = vshll.u32 %v4835, 16
      %v5195 = vrot.slane %v5193, 5
      %v5196 = vsel %vm331, %v5191, %v5195
      %v5198 = vshrl.u32 %v4818, 16
      %v5200 = vrot.slane %v5198, 4
      %v5201 = vshll.u32 %v4818, 16
      %v5203 = vrot.slane %v5201, 5
      %v5204 = vor.u32 %v5200, %v5203
      %v5205 = vrot.slane %v5204, 4
      %v5207 = vshll.u32 %v4819, 16
      %v5209 = vrot.slane %v5207, 5
      %v5210 = vsel %vm331, %v5205, %v5209
      %v5211 = vshrl.u32 %v4819, 16
      %v5213 = vrot.slane %v5211, 4
      %v5214 = vor.u32 %v5213, %v5209
      %v5215 = vrot.slane %v5214, 4
      %v5217 = vshll.u32 %v4836, 16
      %v5219 = vrot.slane %v5217, 5
      %v5220 = vsel %vm331, %v5215, %v5219
      %s5221 = scalar_lea.vmem %s3, 4
      %v5222 = vld [vmem:[%s5221] sm:$0xf]
      %v5223 = vunpack.c.l.b16 %v4850
      %v5224 = vunpack.c.l.b16 %v4860
      %v5225 = vunpack.c.l.b16 %v4874
      %v5226 = vunpack.c.l.b16 %v4884
      %v5227 = vunpack.c.l.b16 %v4898
      %v5228 = vunpack.c.l.b16 %v4908
      %v5229 = vunpack.c.l.b16 %v4922
      %v5230 = vunpack.c.l.b16 %v4932
      %v5231 = vunpack.c.l.b16 %v4946
      %v5232 = vunpack.c.l.b16 %v4956
      %v5233 = vunpack.c.l.b16 %v4970
      %v5234 = vunpack.c.l.b16 %v4980
      %v5235 = vunpack.c.l.b16 %v4994
      %v5236 = vunpack.c.l.b16 %v5004
      %v5237 = vunpack.c.l.b16 %v5018
      %v5238 = vunpack.c.l.b16 %v5028
      %v5239 = vunpack.c.l.b16 %v5042
      %v5240 = vunpack.c.l.b16 %v5052
      %v5241 = vunpack.c.l.b16 %v5066
      %v5242 = vunpack.c.l.b16 %v5076
      %v5243 = vunpack.c.l.b16 %v5090
      %v5244 = vunpack.c.l.b16 %v5100
      %v5245 = vunpack.c.l.b16 %v5114
      %v5246 = vunpack.c.l.b16 %v5124
      %v5247 = vunpack.c.l.b16 %v5138
      %v5248 = vunpack.c.l.b16 %v5148
      %v5249 = vunpack.c.l.b16 %v5162
      %v5250 = vunpack.c.l.b16 %v5172
      %v5251 = vunpack.c.l.b16 %v5186
      %v5252 = vunpack.c.l.b16 %v5196
      %v5253 = vunpack.c.l.b16 %v5210
      %v5254 = vunpack.c.l.b16 %v5220
      %v5255 = vpack.c.b16 %v5224, %v5223
      %v5256 = vpack.c.b16 %v5226, %v5225
      %v5257 = vpack.c.b16 %v5228, %v5227
      %v5258 = vpack.c.b16 %v5230, %v5229
      %v5259 = vpack.c.b16 %v5232, %v5231
      %v5260 = vpack.c.b16 %v5234, %v5233
      %v5261 = vpack.c.b16 %v5236, %v5235
      %v5262 = vpack.c.b16 %v5238, %v5237
      %v5263 = vpack.c.b16 %v5240, %v5239
      %v5264 = vpack.c.b16 %v5242, %v5241
      %v5265 = vpack.c.b16 %v5244, %v5243
      %v5266 = vpack.c.b16 %v5246, %v5245
      %v5267 = vpack.c.b16 %v5248, %v5247
      %v5268 = vpack.c.b16 %v5250, %v5249
      %v5269 = vpack.c.b16 %v5252, %v5251
      %v5270 = vpack.c.b16 %v5254, %v5253
      %vm5271 = vcmask 64512
      %v5273 = vsel %vm5271, %v5255, 0
      %v5276 = vsel %vm5271, %v5256, 0
      %v5279 = vsel %vm5271, %v5257, 0
      %v5282 = vsel %vm5271, %v5258, 0
      %v5285 = vsel %vm5271, %v5259, 0
      %v5288 = vsel %vm5271, %v5260, 0
      %v5291 = vsel %vm5271, %v5261, 0
      %v5294 = vsel %vm5271, %v5262, 0
      %v5297 = vsel %vm5271, %v5263, 0
      %v5300 = vsel %vm5271, %v5264, 0
      %v5303 = vsel %vm5271, %v5265, 0
      %v5306 = vsel %vm5271, %v5266, 0
      %v5309 = vsel %vm5271, %v5267, 0
      %v5312 = vsel %vm5271, %v5268, 0
      %v5315 = vsel %vm5271, %v5269, 0
      %v5318 = vsel %vm5271, %v5270, 0
      %vm5320 = vcmask 1043456
      %v5322 = vsel %vm5320, %v5222, 0
      %5324 = vmatpush.bf16.msra.mxu0 0
      %5325 = vmatpush.bf16.msra.mxu0 0
      %5326 = vmatpush.bf16.msra.mxu0 0
      %5327 = vmatpush.bf16.msra.mxu0 0
      %5328 = vmatpush.bf16.msra.mxu0 0
      %5329 = vmatpush.bf16.msra.mxu0 0
      %5330 = vmatpush.bf16.msra.mxu0 0
      %5331 = vmatpush.bf16.msra.mxu0 %v5322
      %5332 = vmatmul.bf16.gmra.mxu0 %v5273
      %v5333 = vpop.f32.mrf.mxu0
      %v5334 = vadd.f32 0.0, %v5333
      %v5335 = vpop.f32.mrf.mxu0
      %v5336 = vadd.f32 0.0, %v5335
      %5337 = vmatmul.bf16.gmra.mxu0 %v5276
      %v5338 = vpop.f32.mrf.mxu0
      %v5339 = vadd.f32 0.0, %v5338
      %v5340 = vpop.f32.mrf.mxu0
      %v5341 = vadd.f32 0.0, %v5340
      %5342 = vmatmul.bf16.gmra.mxu0 %v5279
      %v5343 = vpop.f32.mrf.mxu0
      %v5344 = vadd.f32 0.0, %v5343
      %v5345 = vpop.f32.mrf.mxu0
      %v5346 = vadd.f32 0.0, %v5345
      %5347 = vmatmul.bf16.gmra.mxu0 %v5282
      %v5348 = vpop.f32.mrf.mxu0
      %v5349 = vadd.f32 0.0, %v5348
      %v5350 = vpop.f32.mrf.mxu0
      %v5351 = vadd.f32 0.0, %v5350
      %5352 = vmatmul.bf16.gmra.mxu0 %v5285
      %v5353 = vpop.f32.mrf.mxu0
      %v5354 = vadd.f32 0.0, %v5353
      %v5355 = vpop.f32.mrf.mxu0
      %v5356 = vadd.f32 0.0, %v5355
      %5357 = vmatmul.bf16.gmra.mxu0 %v5288
      %v5358 = vpop.f32.mrf.mxu0
      %v5359 = vadd.f32 0.0, %v5358
      %v5360 = vpop.f32.mrf.mxu0
      %v5361 = vadd.f32 0.0, %v5360
      %5362 = vmatmul.bf16.gmra.mxu0 %v5291
      %v5363 = vpop.f32.mrf.mxu0
      %v5364 = vadd.f32 0.0, %v5363
      %v5365 = vpop.f32.mrf.mxu0
      %v5366 = vadd.f32 0.0, %v5365
      %5367 = vmatmul.bf16.gmra.mxu0 %v5294
      %v5368 = vpop.f32.mrf.mxu0
      %v5369 = vadd.f32 0.0, %v5368
      %v5370 = vpop.f32.mrf.mxu0
      %v5371 = vadd.f32 0.0, %v5370
      %5372 = vmatmul.bf16.gmra.mxu0 %v5297
      %v5373 = vpop.f32.mrf.mxu0
      %v5374 = vadd.f32 0.0, %v5373
      %v5375 = vpop.f32.mrf.mxu0
      %v5376 = vadd.f32 0.0, %v5375
      %5377 = vmatmul.bf16.gmra.mxu0 %v5300
      %v5378 = vpop.f32.mrf.mxu0
      %v5379 = vadd.f32 0.0, %v5378
      %v5380 = vpop.f32.mrf.mxu0
      %v5381 = vadd.f32 0.0, %v5380
      %5382 = vmatmul.bf16.gmra.mxu0 %v5303
      %v5383 = vpop.f32.mrf.mxu0
      %v5384 = vadd.f32 0.0, %v5383
      %v5385 = vpop.f32.mrf.mxu0
      %v5386 = vadd.f32 0.0, %v5385
      %5387 = vmatmul.bf16.gmra.mxu0 %v5306
      %v5388 = vpop.f32.mrf.mxu0
      %v5389 = vadd.f32 0.0, %v5388
      %v5390 = vpop.f32.mrf.mxu0
      %v5391 = vadd.f32 0.0, %v5390
      %5392 = vmatmul.bf16.gmra.mxu0 %v5309
      %v5393 = vpop.f32.mrf.mxu0
      %v5394 = vadd.f32 0.0, %v5393
      %v5395 = vpop.f32.mrf.mxu0
      %v5396 = vadd.f32 0.0, %v5395
      %5397 = vmatmul.bf16.gmra.mxu0 %v5312
      %v5398 = vpop.f32.mrf.mxu0
      %v5399 = vadd.f32 0.0, %v5398
      %v5400 = vpop.f32.mrf.mxu0
      %v5401 = vadd.f32 0.0, %v5400
      %5402 = vmatmul.bf16.gmra.mxu0 %v5315
      %v5403 = vpop.f32.mrf.mxu0
      %v5404 = vadd.f32 0.0, %v5403
      %v5405 = vpop.f32.mrf.mxu0
      %v5406 = vadd.f32 0.0, %v5405
      %5407 = vmatmul.bf16.gmra.mxu0 %v5318
      %v5408 = vpop.f32.mrf.mxu0
      %v5409 = vadd.f32 0.0, %v5408
      %v5410 = vpop.f32.mrf.mxu0
      %v5411 = vadd.f32 0.0, %v5410
      %5412 = vdwg.mxu0
      %v5445 = vunpack.c.l.b16 %v4788
      %v5446 = vunpack.c.l.b16 %v4789
      %v5447 = vunpack.c.l.b16 %v4790
      %v5448 = vunpack.c.l.b16 %v4791
      %v5449 = vunpack.c.l.b16 %v4792
      %v5450 = vunpack.c.l.b16 %v4793
      %v5451 = vunpack.c.l.b16 %v4794
      %v5452 = vunpack.c.l.b16 %v4795
      %v5453 = vunpack.c.l.b16 %v4796
      %v5454 = vunpack.c.l.b16 %v4797
      %v5455 = vunpack.c.l.b16 %v4798
      %v5456 = vunpack.c.l.b16 %v4799
      %v5457 = vunpack.c.l.b16 %v4800
      %v5458 = vunpack.c.l.b16 %v4801
      %v5459 = vunpack.c.l.b16 %v4802
      %v5460 = vunpack.c.l.b16 %v4803
      %v5461 = vunpack.c.l.b16 %v4804
      %v5462 = vunpack.c.l.b16 %v4805
      %v5463 = vunpack.c.l.b16 %v4806
      %v5464 = vunpack.c.l.b16 %v4807
      %v5465 = vunpack.c.l.b16 %v4808
      %v5466 = vunpack.c.l.b16 %v4809
      %v5467 = vunpack.c.l.b16 %v4810
      %v5468 = vunpack.c.l.b16 %v4811
      %v5469 = vunpack.c.l.b16 %v4812
      %v5470 = vunpack.c.l.b16 %v4813
      %v5471 = vunpack.c.l.b16 %v4814
      %v5472 = vunpack.c.l.b16 %v4815
      %v5473 = vunpack.c.l.b16 %v4816
      %v5474 = vunpack.c.l.b16 %v4817
      %v5475 = vunpack.c.l.b16 %v4818
      %v5476 = vunpack.c.l.b16 %v4819
      %v5477 = vpack.c.b16 %v5446, %v5445
      %v5478 = vpack.c.b16 %v5448, %v5447
      %v5479 = vpack.c.b16 %v5450, %v5449
      %v5480 = vpack.c.b16 %v5452, %v5451
      %v5481 = vpack.c.b16 %v5454, %v5453
      %v5482 = vpack.c.b16 %v5456, %v5455
      %v5483 = vpack.c.b16 %v5458, %v5457
      %v5484 = vpack.c.b16 %v5460, %v5459
      %v5485 = vpack.c.b16 %v5462, %v5461
      %v5486 = vpack.c.b16 %v5464, %v5463
      %v5487 = vpack.c.b16 %v5466, %v5465
      %v5488 = vpack.c.b16 %v5468, %v5467
      %v5489 = vpack.c.b16 %v5470, %v5469
      %v5490 = vpack.c.b16 %v5472, %v5471
      %v5491 = vpack.c.b16 %v5474, %v5473
      %v5492 = vpack.c.b16 %v5476, %v5475
      %v5494 = vsel %vm5271, %v5477, 0
      %v5497 = vsel %vm5271, %v5478, 0
      %v5500 = vsel %vm5271, %v5479, 0
      %v5503 = vsel %vm5271, %v5480, 0
      %v5506 = vsel %vm5271, %v5481, 0
      %v5509 = vsel %vm5271, %v5482, 0
      %v5512 = vsel %vm5271, %v5483, 0
      %v5515 = vsel %vm5271, %v5484, 0
      %v5518 = vsel %vm5271, %v5485, 0
      %v5521 = vsel %vm5271, %v5486, 0
      %v5524 = vsel %vm5271, %v5487, 0
      %v5527 = vsel %vm5271, %v5488, 0
      %v5530 = vsel %vm5271, %v5489, 0
      %v5533 = vsel %vm5271, %v5490, 0
      %v5536 = vsel %vm5271, %v5491, 0
      %v5539 = vsel %vm5271, %v5492, 0
      %v5542 = vsel %vm5320, %v4820, 0
      %5544 = vmatpush.bf16.msra.mxu0 0
      %5545 = vmatpush.bf16.msra.mxu0 0
      %5546 = vmatpush.bf16.msra.mxu0 0
      %5547 = vmatpush.bf16.msra.mxu0 0
      %5548 = vmatpush.bf16.msra.mxu0 0
      %5549 = vmatpush.bf16.msra.mxu0 0
      %5550 = vmatpush.bf16.msra.mxu0 0
      %5551 = vmatpush.bf16.msra.mxu0 %v5542
      %5552 = vmatmul.bf16.gmra.mxu0 %v5494
      %v5553 = vpop.f32.mrf.mxu0
      %v5554 = vadd.f32 %v5334, %v5553
      %v5555 = vpop.f32.mrf.mxu0
      %v5556 = vadd.f32 %v5336, %v5555
      %5557 = vmatmul.bf16.gmra.mxu0 %v5497
      %v5558 = vpop.f32.mrf.mxu0
      %v5559 = vadd.f32 %v5339, %v5558
      %v5560 = vpop.f32.mrf.mxu0
      %v5561 = vadd.f32 %v5341, %v5560
      %5562 = vmatmul.bf16.gmra.mxu0 %v5500
      %v5563 = vpop.f32.mrf.mxu0
      %v5564 = vadd.f32 %v5344, %v5563
      %v5565 = vpop.f32.mrf.mxu0
      %v5566 = vadd.f32 %v5346, %v5565
      %5567 = vmatmul.bf16.gmra.mxu0 %v5503
      %v5568 = vpop.f32.mrf.mxu0
      %v5569 = vadd.f32 %v5349, %v5568
      %v5570 = vpop.f32.mrf.mxu0
      %v5571 = vadd.f32 %v5351, %v5570
      %5572 = vmatmul.bf16.gmra.mxu0 %v5506
      %v5573 = vpop.f32.mrf.mxu0
      %v5574 = vadd.f32 %v5354, %v5573
      %v5575 = vpop.f32.mrf.mxu0
      %v5576 = vadd.f32 %v5356, %v5575
      %5577 = vmatmul.bf16.gmra.mxu0 %v5509
      %v5578 = vpop.f32.mrf.mxu0
      %v5579 = vadd.f32 %v5359, %v5578
      %v5580 = vpop.f32.mrf.mxu0
      %v5581 = vadd.f32 %v5361, %v5580
      %5582 = vmatmul.bf16.gmra.mxu0 %v5512
      %v5583 = vpop.f32.mrf.mxu0
      %v5584 = vadd.f32 %v5364, %v5583
      %v5585 = vpop.f32.mrf.mxu0
      %v5586 = vadd.f32 %v5366, %v5585
      %5587 = vmatmul.bf16.gmra.mxu0 %v5515
      %v5588 = vpop.f32.mrf.mxu0
      %v5589 = vadd.f32 %v5369, %v5588
      %v5590 = vpop.f32.mrf.mxu0
      %v5591 = vadd.f32 %v5371, %v5590
      %5592 = vmatmul.bf16.gmra.mxu0 %v5518
      %v5593 = vpop.f32.mrf.mxu0
      %v5594 = vadd.f32 %v5374, %v5593
      %v5595 = vpop.f32.mrf.mxu0
      %v5596 = vadd.f32 %v5376, %v5595
      %5597 = vmatmul.bf16.gmra.mxu0 %v5521
      %v5598 = vpop.f32.mrf.mxu0
      %v5599 = vadd.f32 %v5379, %v5598
      %v5600 = vpop.f32.mrf.mxu0
      %v5601 = vadd.f32 %v5381, %v5600
      %5602 = vmatmul.bf16.gmra.mxu0 %v5524
      %v5603 = vpop.f32.mrf.mxu0
      %v5604 = vadd.f32 %v5384, %v5603
      %v5605 = vpop.f32.mrf.mxu0
      %v5606 = vadd.f32 %v5386, %v5605
      %5607 = vmatmul.bf16.gmra.mxu0 %v5527
      %v5608 = vpop.f32.mrf.mxu0
      %v5609 = vadd.f32 %v5389, %v5608
      %v5610 = vpop.f32.mrf.mxu0
      %v5611 = vadd.f32 %v5391, %v5610
      %5612 = vmatmul.bf16.gmra.mxu0 %v5530
      %v5613 = vpop.f32.mrf.mxu0
      %v5614 = vadd.f32 %v5394, %v5613
      %v5615 = vpop.f32.mrf.mxu0
      %v5616 = vadd.f32 %v5396, %v5615
      %5617 = vmatmul.bf16.gmra.mxu0 %v5533
      %v5618 = vpop.f32.mrf.mxu0
      %v5619 = vadd.f32 %v5399, %v5618
      %v5620 = vpop.f32.mrf.mxu0
      %v5621 = vadd.f32 %v5401, %v5620
      %5622 = vmatmul.bf16.gmra.mxu0 %v5536
      %v5623 = vpop.f32.mrf.mxu0
      %v5624 = vadd.f32 %v5404, %v5623
      %v5625 = vpop.f32.mrf.mxu0
      %v5626 = vadd.f32 %v5406, %v5625
      %5627 = vmatmul.bf16.gmra.mxu0 %v5539
      %v5628 = vpop.f32.mrf.mxu0
      %v5629 = vadd.f32 %v5409, %v5628
      %v5630 = vpop.f32.mrf.mxu0
      %v5631 = vadd.f32 %v5411, %v5630
      %5632 = vdwg.mxu0
      %v5633 = vld [vmem:[#allocation2] sm:$0xe]
      %v5634 = vld [vmem:[#allocation2 + $0xc] sm:$0xe]
      %v5635 = vld [vmem:[#allocation2 + $0x18] sm:$0xe]
      %v5636 = vld [vmem:[#allocation2 + $0x24] sm:$0xe]
      %v5637 = vld [vmem:[#allocation2 + $0x30] sm:$0xe]
      %v5638 = vld [vmem:[#allocation2 + $0x3c] sm:$0xe]
      %v5639 = vld [vmem:[#allocation2 + $0x48] sm:$0xe]
      %v5640 = vld [vmem:[#allocation2 + $0x54] sm:$0xe]
      %v5641 = vld [vmem:[#allocation2 + $0x60] sm:$0xe]
      %v5642 = vld [vmem:[#allocation2 + $0x6c] sm:$0xe]
      %v5643 = vld [vmem:[#allocation2 + $0x78] sm:$0xe]
      %v5644 = vld [vmem:[#allocation2 + $0x84] sm:$0xe]
      %v5645 = vld [vmem:[#allocation2 + $0x90] sm:$0xe]
      %v5646 = vld [vmem:[#allocation2 + $0x9c] sm:$0xe]
      %v5647 = vld [vmem:[#allocation2 + $0xa8] sm:$0xe]
      %v5648 = vld [vmem:[#allocation2 + $0xb4] sm:$0xe]
      %v5681 = vrot.slane %v5633, 5
      %v5682 = vrot.slane %v5681, 4
      %v5683 = vrot.slane %v4789, 5
      %v5684 = vsel %vm1178, %v5682, %v5683
      %v5685 = vrot.slane %v5683, 4
      %v5686 = vrot.slane %v4821, 5
      %v5687 = vsel %vm1178, %v5685, %v5686
      %v5688 = vrot.slane %v5634, 5
      %v5689 = vrot.slane %v5688, 4
      %v5690 = vrot.slane %v4791, 5
      %v5691 = vsel %vm1178, %v5689, %v5690
      %v5692 = vrot.slane %v5690, 4
      %v5693 = vrot.slane %v4822, 5
      %v5694 = vsel %vm1178, %v5692, %v5693
      %v5695 = vrot.slane %v5635, 5
      %v5696 = vrot.slane %v5695, 4
      %v5697 = vrot.slane %v4793, 5
      %v5698 = vsel %vm1178, %v5696, %v5697
      %v5699 = vrot.slane %v5697, 4
      %v5700 = vrot.slane %v4823, 5
      %v5701 = vsel %vm1178, %v5699, %v5700
      %v5702 = vrot.slane %v5636, 5
      %v5703 = vrot.slane %v5702, 4
      %v5704 = vrot.slane %v4795, 5
      %v5705 = vsel %vm1178, %v5703, %v5704
      %v5706 = vrot.slane %v5704, 4
      %v5707 = vrot.slane %v4824, 5
      %v5708 = vsel %vm1178, %v5706, %v5707
      %v5709 = vrot.slane %v5637, 5
      %v5710 = vrot.slane %v5709, 4
      %v5711 = vrot.slane %v4797, 5
      %v5712 = vsel %vm1178, %v5710, %v5711
      %v5713 = vrot.slane %v5711, 4
      %v5714 = vrot.slane %v4825, 5
      %v5715 = vsel %vm1178, %v5713, %v5714
      %v5716 = vrot.slane %v5638, 5
      %v5717 = vrot.slane %v5716, 4
      %v5718 = vrot.slane %v4799, 5
      %v5719 = vsel %vm1178, %v5717, %v5718
      %v5720 = vrot.slane %v5718, 4
      %v5721 = vrot.slane %v4826, 5
      %v5722 = vsel %vm1178, %v5720, %v5721
      %v5723 = vrot.slane %v5639, 5
      %v5724 = vrot.slane %v5723, 4
      %v5725 = vrot.slane %v4801, 5
      %v5726 = vsel %vm1178, %v5724, %v5725
      %v5727 = vrot.slane %v5725, 4
      %v5728 = vrot.slane %v4827, 5
      %v5729 = vsel %vm1178, %v5727, %v5728
      %v5730 = vrot.slane %v5640, 5
      %v5731 = vrot.slane %v5730, 4
      %v5732 = vrot.slane %v4803, 5
      %v5733 = vsel %vm1178, %v5731, %v5732
      %v5734 = vrot.slane %v5732, 4
      %v5735 = vrot.slane %v4828, 5
      %v5736 = vsel %vm1178, %v5734, %v5735
      %v5737 = vrot.slane %v5641, 5
      %v5738 = vrot.slane %v5737, 4
      %v5739 = vrot.slane %v4805, 5
      %v5740 = vsel %vm1178, %v5738, %v5739
      %v5741 = vrot.slane %v5739, 4
      %v5742 = vrot.slane %v4829, 5
      %v5743 = vsel %vm1178, %v5741, %v5742
      %v5744 = vrot.slane %v5642, 5
      %v5745 = vrot.slane %v5744, 4
      %v5746 = vrot.slane %v4807, 5
      %v5747 = vsel %vm1178, %v5745, %v5746
      %v5748 = vrot.slane %v5746, 4
      %v5749 = vrot.slane %v4830, 5
      %v5750 = vsel %vm1178, %v5748, %v5749
      %v5751 = vrot.slane %v5643, 5
      %v5752 = vrot.slane %v5751, 4
      %v5753 = vrot.slane %v4809, 5
      %v5754 = vsel %vm1178, %v5752, %v5753
      %v5755 = vrot.slane %v5753, 4
      %v5756 = vrot.slane %v4831, 5
      %v5757 = vsel %vm1178, %v5755, %v5756
      %v5758 = vrot.slane %v5644, 5
      %v5759 = vrot.slane %v5758, 4
      %v5760 = vrot.slane %v4811, 5
      %v5761 = vsel %vm1178, %v5759, %v5760
      %v5762 = vrot.slane %v5760, 4
      %v5763 = vrot.slane %v4832, 5
      %v5764 = vsel %vm1178, %v5762, %v5763
      %v5765 = vrot.slane %v5645, 5
      %v5766 = vrot.slane %v5765, 4
      %v5767 = vrot.slane %v4813, 5
      %v5768 = vsel %vm1178, %v5766, %v5767
      %v5769 = vrot.slane %v5767, 4
      %v5770 = vrot.slane %v4833, 5
      %v5771 = vsel %vm1178, %v5769, %v5770
      %v5772 = vrot.slane %v5646, 5
      %v5773 = vrot.slane %v5772, 4
      %v5774 = vrot.slane %v4815, 5
      %v5775 = vsel %vm1178, %v5773, %v5774
      %v5776 = vrot.slane %v5774, 4
      %v5777 = vrot.slane %v4834, 5
      %v5778 = vsel %vm1178, %v5776, %v5777
      %v5779 = vrot.slane %v5647, 5
      %v5780 = vrot.slane %v5779, 4
      %v5781 = vrot.slane %v4817, 5
      %v5782 = vsel %vm1178, %v5780, %v5781
      %v5783 = vrot.slane %v5781, 4
      %v5784 = vrot.slane %v4835, 5
      %v5785 = vsel %vm1178, %v5783, %v5784
      %v5786 = vrot.slane %v5648, 5
      %v5787 = vrot.slane %v5786, 4
      %v5788 = vrot.slane %v4819, 5
      %v5789 = vsel %vm1178, %v5787, %v5788
      %v5790 = vrot.slane %v5788, 4
      %v5791 = vrot.slane %v4836, 5
      %v5792 = vsel %vm1178, %v5790, %v5791
      %s5793 = scalar_lea.vmem %s3, 8
      %v5794 = vld [vmem:[%s5793] sm:$0xf]
      %v5795 = vunpack.c.l.b16 %v5684
      %v5796 = vunpack.c.l.b16 %v5687
      %v5797 = vunpack.c.l.b16 %v5691
      %v5798 = vunpack.c.l.b16 %v5694
      %v5799 = vunpack.c.l.b16 %v5698
      %v5800 = vunpack.c.l.b16 %v5701
      %v5801 = vunpack.c.l.b16 %v5705
      %v5802 = vunpack.c.l.b16 %v5708
      %v5803 = vunpack.c.l.b16 %v5712
      %v5804 = vunpack.c.l.b16 %v5715
      %v5805 = vunpack.c.l.b16 %v5719
      %v5806 = vunpack.c.l.b16 %v5722
      %v5807 = vunpack.c.l.b16 %v5726
      %v5808 = vunpack.c.l.b16 %v5729
      %v5809 = vunpack.c.l.b16 %v5733
      %v5810 = vunpack.c.l.b16 %v5736
      %v5811 = vunpack.c.l.b16 %v5740
      %v5812 = vunpack.c.l.b16 %v5743
      %v5813 = vunpack.c.l.b16 %v5747
      %v5814 = vunpack.c.l.b16 %v5750
      %v5815 = vunpack.c.l.b16 %v5754
      %v5816 = vunpack.c.l.b16 %v5757
      %v5817 = vunpack.c.l.b16 %v5761
      %v5818 = vunpack.c.l.b16 %v5764
      %v5819 = vunpack.c.l.b16 %v5768
      %v5820 = vunpack.c.l.b16 %v5771
      %v5821 = vunpack.c.l.b16 %v5775
      %v5822 = vunpack.c.l.b16 %v5778
      %v5823 = vunpack.c.l.b16 %v5782
      %v5824 = vunpack.c.l.b16 %v5785
      %v5825 = vunpack.c.l.b16 %v5789
      %v5826 = vunpack.c.l.b16 %v5792
      %v5827 = vpack.c.b16 %v5796, %v5795
      %v5828 = vpack.c.b16 %v5798, %v5797
      %v5829 = vpack.c.b16 %v5800, %v5799
      %v5830 = vpack.c.b16 %v5802, %v5801
      %v5831 = vpack.c.b16 %v5804, %v5803
      %v5832 = vpack.c.b16 %v5806, %v5805
      %v5833 = vpack.c.b16 %v5808, %v5807
      %v5834 = vpack.c.b16 %v5810, %v5809
      %v5835 = vpack.c.b16 %v5812, %v5811
      %v5836 = vpack.c.b16 %v5814, %v5813
      %v5837 = vpack.c.b16 %v5816, %v5815
      %v5838 = vpack.c.b16 %v5818, %v5817
      %v5839 = vpack.c.b16 %v5820, %v5819
      %v5840 = vpack.c.b16 %v5822, %v5821
      %v5841 = vpack.c.b16 %v5824, %v5823
      %v5842 = vpack.c.b16 %v5826, %v5825
      %v5844 = vsel %vm5271, %v5827, 0
      %v5847 = vsel %vm5271, %v5828, 0
      %v5850 = vsel %vm5271, %v5829, 0
      %v5853 = vsel %vm5271, %v5830, 0
      %v5856 = vsel %vm5271, %v5831, 0
      %v5859 = vsel %vm5271, %v5832, 0
      %v5862 = vsel %vm5271, %v5833, 0
      %v5865 = vsel %vm5271, %v5834, 0
      %v5868 = vsel %vm5271, %v5835, 0
      %v5871 = vsel %vm5271, %v5836, 0
      %v5874 = vsel %vm5271, %v5837, 0
      %v5877 = vsel %vm5271, %v5838, 0
      %v5880 = vsel %vm5271, %v5839, 0
      %v5883 = vsel %vm5271, %v5840, 0
      %v5886 = vsel %vm5271, %v5841, 0
      %v5889 = vsel %vm5271, %v5842, 0
      %v5892 = vsel %vm5320, %v5794, 0
      %5894 = vmatpush.bf16.msra.mxu0 0
      %5895 = vmatpush.bf16.msra.mxu0 0
      %5896 = vmatpush.bf16.msra.mxu0 0
      %5897 = vmatpush.bf16.msra.mxu0 0
      %5898 = vmatpush.bf16.msra.mxu0 0
      %5899 = vmatpush.bf16.msra.mxu0 0
      %5900 = vmatpush.bf16.msra.mxu0 0
      %5901 = vmatpush.bf16.msra.mxu0 %v5892
      %5902 = vmatmul.bf16.gmra.mxu0 %v5844
      %v5903 = vpop.f32.mrf.mxu0
      %v5904 = vadd.f32 0.0, %v5903
      %v5905 = vpop.f32.mrf.mxu0
      %v5906 = vadd.f32 0.0, %v5905
      %5907 = vmatmul.bf16.gmra.mxu0 %v5847
      %v5908 = vpop.f32.mrf.mxu0
      %v5909 = vadd.f32 0.0, %v5908
      %v5910 = vpop.f32.mrf.mxu0
      %v5911 = vadd.f32 0.0, %v5910
      %5912 = vmatmul.bf16.gmra.mxu0 %v5850
      %v5913 = vpop.f32.mrf.mxu0
      %v5914 = vadd.f32 0.0, %v5913
      %v5915 = vpop.f32.mrf.mxu0
      %v5916 = vadd.f32 0.0, %v5915
      %5917 = vmatmul.bf16.gmra.mxu0 %v5853
      %v5918 = vpop.f32.mrf.mxu0
      %v5919 = vadd.f32 0.0, %v5918
      %v5920 = vpop.f32.mrf.mxu0
      %v5921 = vadd.f32 0.0, %v5920
      %5922 = vmatmul.bf16.gmra.mxu0 %v5856
      %v5923 = vpop.f32.mrf.mxu0
      %v5924 = vadd.f32 0.0, %v5923
      %v5925 = vpop.f32.mrf.mxu0
      %v5926 = vadd.f32 0.0, %v5925
      %5927 = vmatmul.bf16.gmra.mxu0 %v5859
      %v5928 = vpop.f32.mrf.mxu0
      %v5929 = vadd.f32 0.0, %v5928
      %v5930 = vpop.f32.mrf.mxu0
      %v5931 = vadd.f32 0.0, %v5930
      %5932 = vmatmul.bf16.gmra.mxu0 %v5862
      %v5933 = vpop.f32.mrf.mxu0
      %v5934 = vadd.f32 0.0, %v5933
      %v5935 = vpop.f32.mrf.mxu0
      %v5936 = vadd.f32 0.0, %v5935
      %5937 = vmatmul.bf16.gmra.mxu0 %v5865
      %v5938 = vpop.f32.mrf.mxu0
      %v5939 = vadd.f32 0.0, %v5938
      %v5940 = vpop.f32.mrf.mxu0
      %v5941 = vadd.f32 0.0, %v5940
      %5942 = vmatmul.bf16.gmra.mxu0 %v5868
      %v5943 = vpop.f32.mrf.mxu0
      %v5944 = vadd.f32 0.0, %v5943
      %v5945 = vpop.f32.mrf.mxu0
      %v5946 = vadd.f32 0.0, %v5945
      %5947 = vmatmul.bf16.gmra.mxu0 %v5871
      %v5948 = vpop.f32.mrf.mxu0
      %v5949 = vadd.f32 0.0, %v5948
      %v5950 = vpop.f32.mrf.mxu0
      %v5951 = vadd.f32 0.0, %v5950
      %5952 = vmatmul.bf16.gmra.mxu0 %v5874
      %v5953 = vpop.f32.mrf.mxu0
      %v5954 = vadd.f32 0.0, %v5953
      %v5955 = vpop.f32.mrf.mxu0
      %v5956 = vadd.f32 0.0, %v5955
      %5957 = vmatmul.bf16.gmra.mxu0 %v5877
      %v5958 = vpop.f32.mrf.mxu0
      %v5959 = vadd.f32 0.0, %v5958
      %v5960 = vpop.f32.mrf.mxu0
      %v5961 = vadd.f32 0.0, %v5960
      %5962 = vmatmul.bf16.gmra.mxu0 %v5880
      %v5963 = vpop.f32.mrf.mxu0
      %v5964 = vadd.f32 0.0, %v5963
      %v5965 = vpop.f32.mrf.mxu0
      %v5966 = vadd.f32 0.0, %v5965
      %5967 = vmatmul.bf16.gmra.mxu0 %v5883
      %v5968 = vpop.f32.mrf.mxu0
      %v5969 = vadd.f32 0.0, %v5968
      %v5970 = vpop.f32.mrf.mxu0
      %v5971 = vadd.f32 0.0, %v5970
      %5972 = vmatmul.bf16.gmra.mxu0 %v5886
      %v5973 = vpop.f32.mrf.mxu0
      %v5974 = vadd.f32 0.0, %v5973
      %v5975 = vpop.f32.mrf.mxu0
      %v5976 = vadd.f32 0.0, %v5975
      %5977 = vmatmul.bf16.gmra.mxu0 %v5889
      %v5978 = vpop.f32.mrf.mxu0
      %v5979 = vadd.f32 0.0, %v5978
      %v5980 = vpop.f32.mrf.mxu0
      %v5981 = vadd.f32 0.0, %v5980
      %5982 = vdwg.mxu0
      %v5983 = vadd.f32 %v5554, %v5904
      %v5984 = vadd.f32 %v5556, %v5906
      %v5985 = vadd.f32 %v5559, %v5909
      %v5986 = vadd.f32 %v5561, %v5911
      %v5987 = vadd.f32 %v5564, %v5914
      %v5988 = vadd.f32 %v5566, %v5916
      %v5989 = vadd.f32 %v5569, %v5919
      %v5990 = vadd.f32 %v5571, %v5921
      %v5991 = vadd.f32 %v5574, %v5924
      %v5992 = vadd.f32 %v5576, %v5926
      %v5993 = vadd.f32 %v5579, %v5929
      %v5994 = vadd.f32 %v5581, %v5931
      %v5995 = vadd.f32 %v5584, %v5934
      %v5996 = vadd.f32 %v5586, %v5936
      %v5997 = vadd.f32 %v5589, %v5939
      %v5998 = vadd.f32 %v5591, %v5941
      %v5999 = vadd.f32 %v5594, %v5944
      %v6000 = vadd.f32 %v5596, %v5946
      %v6001 = vadd.f32 %v5599, %v5949
      %v6002 = vadd.f32 %v5601, %v5951
      %v6003 = vadd.f32 %v5604, %v5954
      %v6004 = vadd.f32 %v5606, %v5956
      %v6005 = vadd.f32 %v5609, %v5959
      %v6006 = vadd.f32 %v5611, %v5961
      %v6007 = vadd.f32 %v5614, %v5964
      %v6008 = vadd.f32 %v5616, %v5966
      %v6009 = vadd.f32 %v5619, %v5969
      %v6010 = vadd.f32 %v5621, %v5971
      %v6011 = vadd.f32 %v5624, %v5974
      %v6012 = vadd.f32 %v5626, %v5976
      %v6013 = vadd.f32 %v5629, %v5979
      %v6014 = vadd.f32 %v5631, %v5981
      %v6015 = vld [vmem:[%s4670] sm:$0xf]
      %v6016 = vld [vmem:[%s4670 + $0x4] sm:$0xf]
      %v6017 = vld [vmem:[%s4670 + $0xc] sm:$0xf]
      %v6018 = vld [vmem:[%s4670 + $0x10] sm:$0xf]
      %v6019 = vld [vmem:[%s4670 + $0x18] sm:$0xf]
      %v6020 = vld [vmem:[%s4670 + $0x1c] sm:$0xf]
      %v6021 = vld [vmem:[%s4670 + $0x24] sm:$0xf]
      %v6022 = vld [vmem:[%s4670 + $0x28] sm:$0xf]
      %v6023 = vld [vmem:[%s4670 + $0x30] sm:$0xf]
      %v6024 = vld [vmem:[%s4670 + $0x34] sm:$0xf]
      %v6025 = vld [vmem:[%s4670 + $0x3c] sm:$0xf]
      %v6026 = vld [vmem:[%s4670 + $0x40] sm:$0xf]
      %v6027 = vld [vmem:[%s4670 + $0x48] sm:$0xf]
      %v6028 = vld [vmem:[%s4670 + $0x4c] sm:$0xf]
      %v6029 = vld [vmem:[%s4670 + $0x54] sm:$0xf]
      %v6030 = vld [vmem:[%s4670 + $0x58] sm:$0xf]
      %v6031 = vld [vmem:[%s4670 + $0x60] sm:$0xf]
      %v6032 = vld [vmem:[%s4670 + $0x64] sm:$0xf]
      %v6033 = vld [vmem:[%s4670 + $0x6c] sm:$0xf]
      %v6034 = vld [vmem:[%s4670 + $0x70] sm:$0xf]
      %v6035 = vld [vmem:[%s4670 + $0x78] sm:$0xf]
      %v6036 = vld [vmem:[%s4670 + $0x7c] sm:$0xf]
      %v6037 = vld [vmem:[%s4670 + $0x84] sm:$0xf]
      %v6038 = vld [vmem:[%s4670 + $0x88] sm:$0xf]
      %v6039 = vld [vmem:[%s4670 + $0x90] sm:$0xf]
      %v6040 = vld [vmem:[%s4670 + $0x94] sm:$0xf]
      %v6041 = vld [vmem:[%s4670 + $0x9c] sm:$0xf]
      %v6042 = vld [vmem:[%s4670 + $0xa0] sm:$0xf]
      %v6043 = vld [vmem:[%s4670 + $0xa8] sm:$0xf]
      %v6044 = vld [vmem:[%s4670 + $0xac] sm:$0xf]
      %v6045 = vld [vmem:[%s4670 + $0xb4] sm:$0xf]
      %v6046 = vld [vmem:[%s4670 + $0xb8] sm:$0xf]
      %s6047 = scalar_lea.vmem %s3, 12
      %v6048 = vld [vmem:[%s6047] sm:$0xf]
      %v6081 = vunpack.c.l.b16 %v6015
      %v6082 = vunpack.c.l.b16 %v6016
      %v6083 = vunpack.c.l.b16 %v6017
      %v6084 = vunpack.c.l.b16 %v6018
      %v6085 = vunpack.c.l.b16 %v6019
      %v6086 = vunpack.c.l.b16 %v6020
      %v6087 = vunpack.c.l.b16 %v6021
      %v6088 = vunpack.c.l.b16 %v6022
      %v6089 = vunpack.c.l.b16 %v6023
      %v6090 = vunpack.c.l.b16 %v6024
      %v6091 = vunpack.c.l.b16 %v6025
      %v6092 = vunpack.c.l.b16 %v6026
      %v6093 = vunpack.c.l.b16 %v6027
      %v6094 = vunpack.c.l.b16 %v6028
      %v6095 = vunpack.c.l.b16 %v6029
      %v6096 = vunpack.c.l.b16 %v6030
      %v6097 = vunpack.c.l.b16 %v6031
      %v6098 = vunpack.c.l.b16 %v6032
      %v6099 = vunpack.c.l.b16 %v6033
      %v6100 = vunpack.c.l.b16 %v6034
      %v6101 = vunpack.c.l.b16 %v6035
      %v6102 = vunpack.c.l.b16 %v6036
      %v6103 = vunpack.c.l.b16 %v6037
      %v6104 = vunpack.c.l.b16 %v6038
      %v6105 = vunpack.c.l.b16 %v6039
      %v6106 = vunpack.c.l.b16 %v6040
      %v6107 = vunpack.c.l.b16 %v6041
      %v6108 = vunpack.c.l.b16 %v6042
      %v6109 = vunpack.c.l.b16 %v6043
      %v6110 = vunpack.c.l.b16 %v6044
      %v6111 = vunpack.c.l.b16 %v6045
      %v6112 = vunpack.c.l.b16 %v6046
      %v6113 = vpack.c.b16 %v6082, %v6081
      %v6114 = vpack.c.b16 %v6084, %v6083
      %v6115 = vpack.c.b16 %v6086, %v6085
      %v6116 = vpack.c.b16 %v6088, %v6087
      %v6117 = vpack.c.b16 %v6090, %v6089
      %v6118 = vpack.c.b16 %v6092, %v6091
      %v6119 = vpack.c.b16 %v6094, %v6093
      %v6120 = vpack.c.b16 %v6096, %v6095
      %v6121 = vpack.c.b16 %v6098, %v6097
      %v6122 = vpack.c.b16 %v6100, %v6099
      %v6123 = vpack.c.b16 %v6102, %v6101
      %v6124 = vpack.c.b16 %v6104, %v6103
      %v6125 = vpack.c.b16 %v6106, %v6105
      %v6126 = vpack.c.b16 %v6108, %v6107
      %v6127 = vpack.c.b16 %v6110, %v6109
      %v6128 = vpack.c.b16 %v6112, %v6111
      %v6130 = vsel %vm5271, %v6113, 0
      %v6133 = vsel %vm5271, %v6114, 0
      %v6136 = vsel %vm5271, %v6115, 0
      %v6139 = vsel %vm5271, %v6116, 0
      %v6142 = vsel %vm5271, %v6117, 0
      %v6145 = vsel %vm5271, %v6118, 0
      %v6148 = vsel %vm5271, %v6119, 0
      %v6151 = vsel %vm5271, %v6120, 0
      %v6154 = vsel %vm5271, %v6121, 0
      %v6157 = vsel %vm5271, %v6122, 0
      %v6160 = vsel %vm5271, %v6123, 0
      %v6163 = vsel %vm5271, %v6124, 0
      %v6166 = vsel %vm5271, %v6125, 0
      %v6169 = vsel %vm5271, %v6126, 0
      %v6172 = vsel %vm5271, %v6127, 0
      %v6175 = vsel %vm5271, %v6128, 0
      %v6178 = vsel %vm5320, %v6048, 0
      %6180 = vmatpush.bf16.msra.mxu0 0
      %6181 = vmatpush.bf16.msra.mxu0 0
      %6182 = vmatpush.bf16.msra.mxu0 0
      %6183 = vmatpush.bf16.msra.mxu0 0
      %6184 = vmatpush.bf16.msra.mxu0 0
      %6185 = vmatpush.bf16.msra.mxu0 0
      %6186 = vmatpush.bf16.msra.mxu0 0
      %6187 = vmatpush.bf16.msra.mxu0 %v6178
      %6188 = vmatmul.bf16.gmra.mxu0 %v6130
      %v6189 = vpop.f32.mrf.mxu0
      %v6190 = vadd.f32 0.0, %v6189
      %v6191 = vpop.f32.mrf.mxu0
      %v6192 = vadd.f32 0.0, %v6191
      %6193 = vmatmul.bf16.gmra.mxu0 %v6133
      %v6194 = vpop.f32.mrf.mxu0
      %v6195 = vadd.f32 0.0, %v6194
      %v6196 = vpop.f32.mrf.mxu0
      %v6197 = vadd.f32 0.0, %v6196
      %6198 = vmatmul.bf16.gmra.mxu0 %v6136
      %v6199 = vpop.f32.mrf.mxu0
      %v6200 = vadd.f32 0.0, %v6199
      %v6201 = vpop.f32.mrf.mxu0
      %v6202 = vadd.f32 0.0, %v6201
      %6203 = vmatmul.bf16.gmra.mxu0 %v6139
      %v6204 = vpop.f32.mrf.mxu0
      %v6205 = vadd.f32 0.0, %v6204
      %v6206 = vpop.f32.mrf.mxu0
      %v6207 = vadd.f32 0.0, %v6206
      %6208 = vmatmul.bf16.gmra.mxu0 %v6142
      %v6209 = vpop.f32.mrf.mxu0
      %v6210 = vadd.f32 0.0, %v6209
      %v6211 = vpop.f32.mrf.mxu0
      %v6212 = vadd.f32 0.0, %v6211
      %6213 = vmatmul.bf16.gmra.mxu0 %v6145
      %v6214 = vpop.f32.mrf.mxu0
      %v6215 = vadd.f32 0.0, %v6214
      %v6216 = vpop.f32.mrf.mxu0
      %v6217 = vadd.f32 0.0, %v6216
      %6218 = vmatmul.bf16.gmra.mxu0 %v6148
      %v6219 = vpop.f32.mrf.mxu0
      %v6220 = vadd.f32 0.0, %v6219
      %v6221 = vpop.f32.mrf.mxu0
      %v6222 = vadd.f32 0.0, %v6221
      %6223 = vmatmul.bf16.gmra.mxu0 %v6151
      %v6224 = vpop.f32.mrf.mxu0
      %v6225 = vadd.f32 0.0, %v6224
      %v6226 = vpop.f32.mrf.mxu0
      %v6227 = vadd.f32 0.0, %v6226
      %6228 = vmatmul.bf16.gmra.mxu0 %v6154
      %v6229 = vpop.f32.mrf.mxu0
      %v6230 = vadd.f32 0.0, %v6229
      %v6231 = vpop.f32.mrf.mxu0
      %v6232 = vadd.f32 0.0, %v6231
      %6233 = vmatmul.bf16.gmra.mxu0 %v6157
      %v6234 = vpop.f32.mrf.mxu0
      %v6235 = vadd.f32 0.0, %v6234
      %v6236 = vpop.f32.mrf.mxu0
      %v6237 = vadd.f32 0.0, %v6236
      %6238 = vmatmul.bf16.gmra.mxu0 %v6160
      %v6239 = vpop.f32.mrf.mxu0
      %v6240 = vadd.f32 0.0, %v6239
      %v6241 = vpop.f32.mrf.mxu0
      %v6242 = vadd.f32 0.0, %v6241
      %6243 = vmatmul.bf16.gmra.mxu0 %v6163
      %v6244 = vpop.f32.mrf.mxu0
      %v6245 = vadd.f32 0.0, %v6244
      %v6246 = vpop.f32.mrf.mxu0
      %v6247 = vadd.f32 0.0, %v6246
      %6248 = vmatmul.bf16.gmra.mxu0 %v6166
      %v6249 = vpop.f32.mrf.mxu0
      %v6250 = vadd.f32 0.0, %v6249
      %v6251 = vpop.f32.mrf.mxu0
      %v6252 = vadd.f32 0.0, %v6251
      %6253 = vmatmul.bf16.gmra.mxu0 %v6169
      %v6254 = vpop.f32.mrf.mxu0
      %v6255 = vadd.f32 0.0, %v6254
      %v6256 = vpop.f32.mrf.mxu0
      %v6257 = vadd.f32 0.0, %v6256
      %6258 = vmatmul.bf16.gmra.mxu0 %v6172
      %v6259 = vpop.f32.mrf.mxu0
      %v6260 = vadd.f32 0.0, %v6259
      %v6261 = vpop.f32.mrf.mxu0
      %v6262 = vadd.f32 0.0, %v6261
      %6263 = vmatmul.bf16.gmra.mxu0 %v6175
      %v6264 = vpop.f32.mrf.mxu0
      %v6265 = vadd.f32 0.0, %v6264
      %v6266 = vpop.f32.mrf.mxu0
      %v6267 = vadd.f32 0.0, %v6266
      %6268 = vdwg.mxu0
      %v6269 = vadd.f32 %v5983, %v6190
      %v6270 = vadd.f32 %v5984, %v6192
      %v6271 = vadd.f32 %v5985, %v6195
      %v6272 = vadd.f32 %v5986, %v6197
      %v6273 = vadd.f32 %v5987, %v6200
      %v6274 = vadd.f32 %v5988, %v6202
      %v6275 = vadd.f32 %v5989, %v6205
      %v6276 = vadd.f32 %v5990, %v6207
      %v6277 = vadd.f32 %v5991, %v6210
      %v6278 = vadd.f32 %v5992, %v6212
      %v6279 = vadd.f32 %v5993, %v6215
      %v6280 = vadd.f32 %v5994, %v6217
      %v6281 = vadd.f32 %v5995, %v6220
      %v6282 = vadd.f32 %v5996, %v6222
      %v6283 = vadd.f32 %v5997, %v6225
      %v6284 = vadd.f32 %v5998, %v6227
      %v6285 = vadd.f32 %v5999, %v6230
      %v6286 = vadd.f32 %v6000, %v6232
      %v6287 = vadd.f32 %v6001, %v6235
      %v6288 = vadd.f32 %v6002, %v6237
      %v6289 = vadd.f32 %v6003, %v6240
      %v6290 = vadd.f32 %v6004, %v6242
      %v6291 = vadd.f32 %v6005, %v6245
      %v6292 = vadd.f32 %v6006, %v6247
      %v6293 = vadd.f32 %v6007, %v6250
      %v6294 = vadd.f32 %v6008, %v6252
      %v6295 = vadd.f32 %v6009, %v6255
      %v6296 = vadd.f32 %v6010, %v6257
      %v6297 = vadd.f32 %v6011, %v6260
      %v6298 = vadd.f32 %v6012, %v6262
      %v6299 = vadd.f32 %v6013, %v6265
      %v6300 = vadd.f32 %v6014, %v6267
      %v6301 = vld [vmem:[%s4670] sm:$0xf]
      %v6302 = vld [vmem:[%s4670 + $0x4] sm:$0xf]
      %v6303 = vld [vmem:[%s4670 + $0x8] sm:$0x1]
      %v6304 = vld [vmem:[%s4670 + $0xc] sm:$0xf]
      %v6305 = vld [vmem:[%s4670 + $0x10] sm:$0xf]
      %v6306 = vld [vmem:[%s4670 + $0x14] sm:$0x1]
      %v6307 = vld [vmem:[%s4670 + $0x18] sm:$0xf]
      %v6308 = vld [vmem:[%s4670 + $0x1c] sm:$0xf]
      %v6309 = vld [vmem:[%s4670 + $0x20] sm:$0x1]
      %v6310 = vld [vmem:[%s4670 + $0x24] sm:$0xf]
      %v6311 = vld [vmem:[%s4670 + $0x28] sm:$0xf]
      %v6312 = vld [vmem:[%s4670 + $0x2c] sm:$0x1]
      %v6313 = vld [vmem:[%s4670 + $0x30] sm:$0xf]
      %v6314 = vld [vmem:[%s4670 + $0x34] sm:$0xf]
      %v6315 = vld [vmem:[%s4670 + $0x38] sm:$0x1]
      %v6316 = vld [vmem:[%s4670 + $0x3c] sm:$0xf]
      %v6317 = vld [vmem:[%s4670 + $0x40] sm:$0xf]
      %v6318 = vld [vmem:[%s4670 + $0x44] sm:$0x1]
      %v6319 = vld [vmem:[%s4670 + $0x48] sm:$0xf]
      %v6320 = vld [vmem:[%s4670 + $0x4c] sm:$0xf]
      %v6321 = vld [vmem:[%s4670 + $0x50] sm:$0x1]
      %v6322 = vld [vmem:[%s4670 + $0x54] sm:$0xf]
      %v6323 = vld [vmem:[%s4670 + $0x58] sm:$0xf]
      %v6324 = vld [vmem:[%s4670 + $0x5c] sm:$0x1]
      %v6325 = vld [vmem:[%s4670 + $0x60] sm:$0xf]
      %v6326 = vld [vmem:[%s4670 + $0x64] sm:$0xf]
      %v6327 = vld [vmem:[%s4670 + $0x68] sm:$0x1]
      %v6328 = vld [vmem:[%s4670 + $0x6c] sm:$0xf]
      %v6329 = vld [vmem:[%s4670 + $0x70] sm:$0xf]
      %v6330 = vld [vmem:[%s4670 + $0x74] sm:$0x1]
      %v6331 = vld [vmem:[%s4670 + $0x78] sm:$0xf]
      %v6332 = vld [vmem:[%s4670 + $0x7c] sm:$0xf]
      %v6333 = vld [vmem:[%s4670 + $0x80] sm:$0x1]
      %v6334 = vld [vmem:[%s4670 + $0x84] sm:$0xf]
      %v6335 = vld [vmem:[%s4670 + $0x88] sm:$0xf]
      %v6336 = vld [vmem:[%s4670 + $0x8c] sm:$0x1]
      %v6337 = vld [vmem:[%s4670 + $0x90] sm:$0xf]
      %v6338 = vld [vmem:[%s4670 + $0x94] sm:$0xf]
      %v6339 = vld [vmem:[%s4670 + $0x98] sm:$0x1]
      %v6340 = vld [vmem:[%s4670 + $0x9c] sm:$0xf]
      %v6341 = vld [vmem:[%s4670 + $0xa0] sm:$0xf]
      %v6342 = vld [vmem:[%s4670 + $0xa4] sm:$0x1]
      %v6343 = vld [vmem:[%s4670 + $0xa8] sm:$0xf]
      %v6344 = vld [vmem:[%s4670 + $0xac] sm:$0xf]
      %v6345 = vld [vmem:[%s4670 + $0xb0] sm:$0x1]
      %v6346 = vld [vmem:[%s4670 + $0xb4] sm:$0xf]
      %v6347 = vld [vmem:[%s4670 + $0xb8] sm:$0xf]
      %v6348 = vld [vmem:[%s4670 + $0xbc] sm:$0x1]
      %v6350 = vshrl.u32 %v6301, 16
      %v6352 = vrot.slane %v6350, 4
      %v6353 = vshll.u32 %v6301, 16
      %v6355 = vrot.slane %v6353, 5
      %v6356 = vor.u32 %v6352, %v6355
      %v6357 = vrot.slane %v6356, 4
      %v6359 = vshll.u32 %v6302, 16
      %v6361 = vrot.slane %v6359, 5
      %v6362 = vsel %vm331, %v6357, %v6361
      %v6363 = vshrl.u32 %v6302, 16
      %v6365 = vrot.slane %v6363, 4
      %v6366 = vor.u32 %v6365, %v6361
      %v6367 = vrot.slane %v6366, 4
      %v6369 = vshll.u32 %v6303, 16
      %v6371 = vrot.slane %v6369, 5
      %v6372 = vsel %vm331, %v6367, %v6371
      %v6374 = vshrl.u32 %v6304, 16
      %v6376 = vrot.slane %v6374, 4
      %v6377 = vshll.u32 %v6304, 16
      %v6379 = vrot.slane %v6377, 5
      %v6380 = vor.u32 %v6376, %v6379
      %v6381 = vrot.slane %v6380, 4
      %v6383 = vshll.u32 %v6305, 16
      %v6385 = vrot.slane %v6383, 5
      %v6386 = vsel %vm331, %v6381, %v6385
      %v6387 = vshrl.u32 %v6305, 16
      %v6389 = vrot.slane %v6387, 4
      %v6390 = vor.u32 %v6389, %v6385
      %v6391 = vrot.slane %v6390, 4
      %v6393 = vshll.u32 %v6306, 16
      %v6395 = vrot.slane %v6393, 5
      %v6396 = vsel %vm331, %v6391, %v6395
      %v6398 = vshrl.u32 %v6307, 16
      %v6400 = vrot.slane %v6398, 4
      %v6401 = vshll.u32 %v6307, 16
      %v6403 = vrot.slane %v6401, 5
      %v6404 = vor.u32 %v6400, %v6403
      %v6405 = vrot.slane %v6404, 4
      %v6407 = vshll.u32 %v6308, 16
      %v6409 = vrot.slane %v6407, 5
      %v6410 = vsel %vm331, %v6405, %v6409
      %v6411 = vshrl.u32 %v6308, 16
      %v6413 = vrot.slane %v6411, 4
      %v6414 = vor.u32 %v6413, %v6409
      %v6415 = vrot.slane %v6414, 4
      %v6417 = vshll.u32 %v6309, 16
      %v6419 = vrot.slane %v6417, 5
      %v6420 = vsel %vm331, %v6415, %v6419
      %v6422 = vshrl.u32 %v6310, 16
      %v6424 = vrot.slane %v6422, 4
      %v6425 = vshll.u32 %v6310, 16
      %v6427 = vrot.slane %v6425, 5
      %v6428 = vor.u32 %v6424, %v6427
      %v6429 = vrot.slane %v6428, 4
      %v6431 = vshll.u32 %v6311, 16
      %v6433 = vrot.slane %v6431, 5
      %v6434 = vsel %vm331, %v6429, %v6433
      %v6435 = vshrl.u32 %v6311, 16
      %v6437 = vrot.slane %v6435, 4
      %v6438 = vor.u32 %v6437, %v6433
      %v6439 = vrot.slane %v6438, 4
      %v6441 = vshll.u32 %v6312, 16
      %v6443 = vrot.slane %v6441, 5
      %v6444 = vsel %vm331, %v6439, %v6443
      %v6446 = vshrl.u32 %v6313, 16
      %v6448 = vrot.slane %v6446, 4
      %v6449 = vshll.u32 %v6313, 16
      %v6451 = vrot.slane %v6449, 5
      %v6452 = vor.u32 %v6448, %v6451
      %v6453 = vrot.slane %v6452, 4
      %v6455 = vshll.u32 %v6314, 16
      %v6457 = vrot.slane %v6455, 5
      %v6458 = vsel %vm331, %v6453, %v6457
      %v6459 = vshrl.u32 %v6314, 16
      %v6461 = vrot.slane %v6459, 4
      %v6462 = vor.u32 %v6461, %v6457
      %v6463 = vrot.slane %v6462, 4
      %v6465 = vshll.u32 %v6315, 16
      %v6467 = vrot.slane %v6465, 5
      %v6468 = vsel %vm331, %v6463, %v6467
      %v6470 = vshrl.u32 %v6316, 16
      %v6472 = vrot.slane %v6470, 4
      %v6473 = vshll.u32 %v6316, 16
      %v6475 = vrot.slane %v6473, 5
      %v6476 = vor.u32 %v6472, %v6475
      %v6477 = vrot.slane %v6476, 4
      %v6479 = vshll.u32 %v6317, 16
      %v6481 = vrot.slane %v6479, 5
      %v6482 = vsel %vm331, %v6477, %v6481
      %v6483 = vshrl.u32 %v6317, 16
      %v6485 = vrot.slane %v6483, 4
      %v6486 = vor.u32 %v6485, %v6481
      %v6487 = vrot.slane %v6486, 4
      %v6489 = vshll.u32 %v6318, 16
      %v6491 = vrot.slane %v6489, 5
      %v6492 = vsel %vm331, %v6487, %v6491
      %v6494 = vshrl.u32 %v6319, 16
      %v6496 = vrot.slane %v6494, 4
      %v6497 = vshll.u32 %v6319, 16
      %v6499 = vrot.slane %v6497, 5
      %v6500 = vor.u32 %v6496, %v6499
      %v6501 = vrot.slane %v6500, 4
      %v6503 = vshll.u32 %v6320, 16
      %v6505 = vrot.slane %v6503, 5
      %v6506 = vsel %vm331, %v6501, %v6505
      %v6507 = vshrl.u32 %v6320, 16
      %v6509 = vrot.slane %v6507, 4
      %v6510 = vor.u32 %v6509, %v6505
      %v6511 = vrot.slane %v6510, 4
      %v6513 = vshll.u32 %v6321, 16
      %v6515 = vrot.slane %v6513, 5
      %v6516 = vsel %vm331, %v6511, %v6515
      %v6518 = vshrl.u32 %v6322, 16
      %v6520 = vrot.slane %v6518, 4
      %v6521 = vshll.u32 %v6322, 16
      %v6523 = vrot.slane %v6521, 5
      %v6524 = vor.u32 %v6520, %v6523
      %v6525 = vrot.slane %v6524, 4
      %v6527 = vshll.u32 %v6323, 16
      %v6529 = vrot.slane %v6527, 5
      %v6530 = vsel %vm331, %v6525, %v6529
      %v6531 = vshrl.u32 %v6323, 16
      %v6533 = vrot.slane %v6531, 4
      %v6534 = vor.u32 %v6533, %v6529
      %v6535 = vrot.slane %v6534, 4
      %v6537 = vshll.u32 %v6324, 16
      %v6539 = vrot.slane %v6537, 5
      %v6540 = vsel %vm331, %v6535, %v6539
      %v6542 = vshrl.u32 %v6325, 16
      %v6544 = vrot.slane %v6542, 4
      %v6545 = vshll.u32 %v6325, 16
      %v6547 = vrot.slane %v6545, 5
      %v6548 = vor.u32 %v6544, %v6547
      %v6549 = vrot.slane %v6548, 4
      %v6551 = vshll.u32 %v6326, 16
      %v6553 = vrot.slane %v6551, 5
      %v6554 = vsel %vm331, %v6549, %v6553
      %v6555 = vshrl.u32 %v6326, 16
      %v6557 = vrot.slane %v6555, 4
      %v6558 = vor.u32 %v6557, %v6553
      %v6559 = vrot.slane %v6558, 4
      %v6561 = vshll.u32 %v6327, 16
      %v6563 = vrot.slane %v6561, 5
      %v6564 = vsel %vm331, %v6559, %v6563
      %v6566 = vshrl.u32 %v6328, 16
      %v6568 = vrot.slane %v6566, 4
      %v6569 = vshll.u32 %v6328, 16
      %v6571 = vrot.slane %v6569, 5
      %v6572 = vor.u32 %v6568, %v6571
      %v6573 = vrot.slane %v6572, 4
      %v6575 = vshll.u32 %v6329, 16
      %v6577 = vrot.slane %v6575, 5
      %v6578 = vsel %vm331, %v6573, %v6577
      %v6579 = vshrl.u32 %v6329, 16
      %v6581 = vrot.slane %v6579, 4
      %v6582 = vor.u32 %v6581, %v6577
      %v6583 = vrot.slane %v6582, 4
      %v6585 = vshll.u32 %v6330, 16
      %v6587 = vrot.slane %v6585, 5
      %v6588 = vsel %vm331, %v6583, %v6587
      %v6590 = vshrl.u32 %v6331, 16
      %v6592 = vrot.slane %v6590, 4
      %v6593 = vshll.u32 %v6331, 16
      %v6595 = vrot.slane %v6593, 5
      %v6596 = vor.u32 %v6592, %v6595
      %v6597 = vrot.slane %v6596, 4
      %v6599 = vshll.u32 %v6332, 16
      %v6601 = vrot.slane %v6599, 5
      %v6602 = vsel %vm331, %v6597, %v6601
      %v6603 = vshrl.u32 %v6332, 16
      %v6605 = vrot.slane %v6603, 4
      %v6606 = vor.u32 %v6605, %v6601
      %v6607 = vrot.slane %v6606, 4
      %v6609 = vshll.u32 %v6333, 16
      %v6611 = vrot.slane %v6609, 5
      %v6612 = vsel %vm331, %v6607, %v6611
      %v6614 = vshrl.u32 %v6334, 16
      %v6616 = vrot.slane %v6614, 4
      %v6617 = vshll.u32 %v6334, 16
      %v6619 = vrot.slane %v6617, 5
      %v6620 = vor.u32 %v6616, %v6619
      %v6621 = vrot.slane %v6620, 4
      %v6623 = vshll.u32 %v6335, 16
      %v6625 = vrot.slane %v6623, 5
      %v6626 = vsel %vm331, %v6621, %v6625
      %v6627 = vshrl.u32 %v6335, 16
      %v6629 = vrot.slane %v6627, 4
      %v6630 = vor.u32 %v6629, %v6625
      %v6631 = vrot.slane %v6630, 4
      %v6633 = vshll.u32 %v6336, 16
      %v6635 = vrot.slane %v6633, 5
      %v6636 = vsel %vm331, %v6631, %v6635
      %v6638 = vshrl.u32 %v6337, 16
      %v6640 = vrot.slane %v6638, 4
      %v6641 = vshll.u32 %v6337, 16
      %v6643 = vrot.slane %v6641, 5
      %v6644 = vor.u32 %v6640, %v6643
      %v6645 = vrot.slane %v6644, 4
      %v6647 = vshll.u32 %v6338, 16
      %v6649 = vrot.slane %v6647, 5
      %v6650 = vsel %vm331, %v6645, %v6649
      %v6651 = vshrl.u32 %v6338, 16
      %v6653 = vrot.slane %v6651, 4
      %v6654 = vor.u32 %v6653, %v6649
      %v6655 = vrot.slane %v6654, 4
      %v6657 = vshll.u32 %v6339, 16
      %v6659 = vrot.slane %v6657, 5
      %v6660 = vsel %vm331, %v6655, %v6659
      %v6662 = vshrl.u32 %v6340, 16
      %v6664 = vrot.slane %v6662, 4
      %v6665 = vshll.u32 %v6340, 16
      %v6667 = vrot.slane %v6665, 5
      %v6668 = vor.u32 %v6664, %v6667
      %v6669 = vrot.slane %v6668, 4
      %v6671 = vshll.u32 %v6341, 16
      %v6673 = vrot.slane %v6671, 5
      %v6674 = vsel %vm331, %v6669, %v6673
      %v6675 = vshrl.u32 %v6341, 16
      %v6677 = vrot.slane %v6675, 4
      %v6678 = vor.u32 %v6677, %v6673
      %v6679 = vrot.slane %v6678, 4
      %v6681 = vshll.u32 %v6342, 16
      %v6683 = vrot.slane %v6681, 5
      %v6684 = vsel %vm331, %v6679, %v6683
      %v6686 = vshrl.u32 %v6343, 16
      %v6688 = vrot.slane %v6686, 4
      %v6689 = vshll.u32 %v6343, 16
      %v6691 = vrot.slane %v6689, 5
      %v6692 = vor.u32 %v6688, %v6691
      %v6693 = vrot.slane %v6692, 4
      %v6695 = vshll.u32 %v6344, 16
      %v6697 = vrot.slane %v6695, 5
      %v6698 = vsel %vm331, %v6693, %v6697
      %v6699 = vshrl.u32 %v6344, 16
      %v6701 = vrot.slane %v6699, 4
      %v6702 = vor.u32 %v6701, %v6697
      %v6703 = vrot.slane %v6702, 4
      %v6705 = vshll.u32 %v6345, 16
      %v6707 = vrot.slane %v6705, 5
      %v6708 = vsel %vm331, %v6703, %v6707
      %v6710 = vshrl.u32 %v6346, 16
      %v6712 = vrot.slane %v6710, 4
      %v6713 = vshll.u32 %v6346, 16
      %v6715 = vrot.slane %v6713, 5
      %v6716 = vor.u32 %v6712, %v6715
      %v6717 = vrot.slane %v6716, 4
      %v6719 = vshll.u32 %v6347, 16
      %v6721 = vrot.slane %v6719, 5
      %v6722 = vsel %vm331, %v6717, %v6721
      %v6723 = vshrl.u32 %v6347, 16
      %v6725 = vrot.slane %v6723, 4
      %v6726 = vor.u32 %v6725, %v6721
      %v6727 = vrot.slane %v6726, 4
      %v6729 = vshll.u32 %v6348, 16
      %v6731 = vrot.slane %v6729, 5
      %v6732 = vsel %vm331, %v6727, %v6731
      %s6733 = scalar_lea.vmem %s3, 16
      %v6734 = vld [vmem:[%s6733] sm:$0xf]
      %v6735 = vunpack.c.l.b16 %v6362
      %v6736 = vunpack.c.l.b16 %v6372
      %v6737 = vunpack.c.l.b16 %v6386
      %v6738 = vunpack.c.l.b16 %v6396
      %v6739 = vunpack.c.l.b16 %v6410
      %v6740 = vunpack.c.l.b16 %v6420
      %v6741 = vunpack.c.l.b16 %v6434
      %v6742 = vunpack.c.l.b16 %v6444
      %v6743 = vunpack.c.l.b16 %v6458
      %v6744 = vunpack.c.l.b16 %v6468
      %v6745 = vunpack.c.l.b16 %v6482
      %v6746 = vunpack.c.l.b16 %v6492
      %v6747 = vunpack.c.l.b16 %v6506
      %v6748 = vunpack.c.l.b16 %v6516
      %v6749 = vunpack.c.l.b16 %v6530
      %v6750 = vunpack.c.l.b16 %v6540
      %v6751 = vunpack.c.l.b16 %v6554
      %v6752 = vunpack.c.l.b16 %v6564
      %v6753 = vunpack.c.l.b16 %v6578
      %v6754 = vunpack.c.l.b16 %v6588
      %v6755 = vunpack.c.l.b16 %v6602
      %v6756 = vunpack.c.l.b16 %v6612
      %v6757 = vunpack.c.l.b16 %v6626
      %v6758 = vunpack.c.l.b16 %v6636
      %v6759 = vunpack.c.l.b16 %v6650
      %v6760 = vunpack.c.l.b16 %v6660
      %v6761 = vunpack.c.l.b16 %v6674
      %v6762 = vunpack.c.l.b16 %v6684
      %v6763 = vunpack.c.l.b16 %v6698
      %v6764 = vunpack.c.l.b16 %v6708
      %v6765 = vunpack.c.l.b16 %v6722
      %v6766 = vunpack.c.l.b16 %v6732
      %v6767 = vpack.c.b16 %v6736, %v6735
      %v6768 = vpack.c.b16 %v6738, %v6737
      %v6769 = vpack.c.b16 %v6740, %v6739
      %v6770 = vpack.c.b16 %v6742, %v6741
      %v6771 = vpack.c.b16 %v6744, %v6743
      %v6772 = vpack.c.b16 %v6746, %v6745
      %v6773 = vpack.c.b16 %v6748, %v6747
      %v6774 = vpack.c.b16 %v6750, %v6749
      %v6775 = vpack.c.b16 %v6752, %v6751
      %v6776 = vpack.c.b16 %v6754, %v6753
      %v6777 = vpack.c.b16 %v6756, %v6755
      %v6778 = vpack.c.b16 %v6758, %v6757
      %v6779 = vpack.c.b16 %v6760, %v6759
      %v6780 = vpack.c.b16 %v6762, %v6761
      %v6781 = vpack.c.b16 %v6764, %v6763
      %v6782 = vpack.c.b16 %v6766, %v6765
      %v6784 = vsel %vm5271, %v6767, 0
      %v6787 = vsel %vm5271, %v6768, 0
      %v6790 = vsel %vm5271, %v6769, 0
      %v6793 = vsel %vm5271, %v6770, 0
      %v6796 = vsel %vm5271, %v6771, 0
      %v6799 = vsel %vm5271, %v6772, 0
      %v6802 = vsel %vm5271, %v6773, 0
      %v6805 = vsel %vm5271, %v6774, 0
      %v6808 = vsel %vm5271, %v6775, 0
      %v6811 = vsel %vm5271, %v6776, 0
      %v6814 = vsel %vm5271, %v6777, 0
      %v6817 = vsel %vm5271, %v6778, 0
      %v6820 = vsel %vm5271, %v6779, 0
      %v6823 = vsel %vm5271, %v6780, 0
      %v6826 = vsel %vm5271, %v6781, 0
      %v6829 = vsel %vm5271, %v6782, 0
      %v6832 = vsel %vm5320, %v6734, 0
      %6834 = vmatpush.bf16.msra.mxu0 0
      %6835 = vmatpush.bf16.msra.mxu0 0
      %6836 = vmatpush.bf16.msra.mxu0 0
      %6837 = vmatpush.bf16.msra.mxu0 0
      %6838 = vmatpush.bf16.msra.mxu0 0
      %6839 = vmatpush.bf16.msra.mxu0 0
      %6840 = vmatpush.bf16.msra.mxu0 0
      %6841 = vmatpush.bf16.msra.mxu0 %v6832
      %6842 = vmatmul.bf16.gmra.mxu0 %v6784
      %v6843 = vpop.f32.mrf.mxu0
      %v6844 = vadd.f32 0.0, %v6843
      %v6845 = vpop.f32.mrf.mxu0
      %v6846 = vadd.f32 0.0, %v6845
      %6847 = vmatmul.bf16.gmra.mxu0 %v6787
      %v6848 = vpop.f32.mrf.mxu0
      %v6849 = vadd.f32 0.0, %v6848
      %v6850 = vpop.f32.mrf.mxu0
      %v6851 = vadd.f32 0.0, %v6850
      %6852 = vmatmul.bf16.gmra.mxu0 %v6790
      %v6853 = vpop.f32.mrf.mxu0
      %v6854 = vadd.f32 0.0, %v6853
      %v6855 = vpop.f32.mrf.mxu0
      %v6856 = vadd.f32 0.0, %v6855
      %6857 = vmatmul.bf16.gmra.mxu0 %v6793
      %v6858 = vpop.f32.mrf.mxu0
      %v6859 = vadd.f32 0.0, %v6858
      %v6860 = vpop.f32.mrf.mxu0
      %v6861 = vadd.f32 0.0, %v6860
      %6862 = vmatmul.bf16.gmra.mxu0 %v6796
      %v6863 = vpop.f32.mrf.mxu0
      %v6864 = vadd.f32 0.0, %v6863
      %v6865 = vpop.f32.mrf.mxu0
      %v6866 = vadd.f32 0.0, %v6865
      %6867 = vmatmul.bf16.gmra.mxu0 %v6799
      %v6868 = vpop.f32.mrf.mxu0
      %v6869 = vadd.f32 0.0, %v6868
      %v6870 = vpop.f32.mrf.mxu0
      %v6871 = vadd.f32 0.0, %v6870
      %6872 = vmatmul.bf16.gmra.mxu0 %v6802
      %v6873 = vpop.f32.mrf.mxu0
      %v6874 = vadd.f32 0.0, %v6873
      %v6875 = vpop.f32.mrf.mxu0
      %v6876 = vadd.f32 0.0, %v6875
      %6877 = vmatmul.bf16.gmra.mxu0 %v6805
      %v6878 = vpop.f32.mrf.mxu0
      %v6879 = vadd.f32 0.0, %v6878
      %v6880 = vpop.f32.mrf.mxu0
      %v6881 = vadd.f32 0.0, %v6880
      %6882 = vmatmul.bf16.gmra.mxu0 %v6808
      %v6883 = vpop.f32.mrf.mxu0
      %v6884 = vadd.f32 0.0, %v6883
      %v6885 = vpop.f32.mrf.mxu0
      %v6886 = vadd.f32 0.0, %v6885
      %6887 = vmatmul.bf16.gmra.mxu0 %v6811
      %v6888 = vpop.f32.mrf.mxu0
      %v6889 = vadd.f32 0.0, %v6888
      %v6890 = vpop.f32.mrf.mxu0
      %v6891 = vadd.f32 0.0, %v6890
      %6892 = vmatmul.bf16.gmra.mxu0 %v6814
      %v6893 = vpop.f32.mrf.mxu0
      %v6894 = vadd.f32 0.0, %v6893
      %v6895 = vpop.f32.mrf.mxu0
      %v6896 = vadd.f32 0.0, %v6895
      %6897 = vmatmul.bf16.gmra.mxu0 %v6817
      %v6898 = vpop.f32.mrf.mxu0
      %v6899 = vadd.f32 0.0, %v6898
      %v6900 = vpop.f32.mrf.mxu0
      %v6901 = vadd.f32 0.0, %v6900
      %6902 = vmatmul.bf16.gmra.mxu0 %v6820
      %v6903 = vpop.f32.mrf.mxu0
      %v6904 = vadd.f32 0.0, %v6903
      %v6905 = vpop.f32.mrf.mxu0
      %v6906 = vadd.f32 0.0, %v6905
      %6907 = vmatmul.bf16.gmra.mxu0 %v6823
      %v6908 = vpop.f32.mrf.mxu0
      %v6909 = vadd.f32 0.0, %v6908
      %v6910 = vpop.f32.mrf.mxu0
      %v6911 = vadd.f32 0.0, %v6910
      %6912 = vmatmul.bf16.gmra.mxu0 %v6826
      %v6913 = vpop.f32.mrf.mxu0
      %v6914 = vadd.f32 0.0, %v6913
      %v6915 = vpop.f32.mrf.mxu0
      %v6916 = vadd.f32 0.0, %v6915
      %6917 = vmatmul.bf16.gmra.mxu0 %v6829
      %v6918 = vpop.f32.mrf.mxu0
      %v6919 = vadd.f32 0.0, %v6918
      %v6920 = vpop.f32.mrf.mxu0
      %v6921 = vadd.f32 0.0, %v6920
      %6922 = vdwg.mxu0
      %v6923 = vadd.f32 %v6269, %v6844
      %v6924 = vadd.f32 %v6270, %v6846
      %v6925 = vadd.f32 %v6271, %v6849
      %v6926 = vadd.f32 %v6272, %v6851
      %v6927 = vadd.f32 %v6273, %v6854
      %v6928 = vadd.f32 %v6274, %v6856
      %v6929 = vadd.f32 %v6275, %v6859
      %v6930 = vadd.f32 %v6276, %v6861
      %v6931 = vadd.f32 %v6277, %v6864
      %v6932 = vadd.f32 %v6278, %v6866
      %v6933 = vadd.f32 %v6279, %v6869
      %v6934 = vadd.f32 %v6280, %v6871
      %v6935 = vadd.f32 %v6281, %v6874
      %v6936 = vadd.f32 %v6282, %v6876
      %v6937 = vadd.f32 %v6283, %v6879
      %v6938 = vadd.f32 %v6284, %v6881
      %v6939 = vadd.f32 %v6285, %v6884
      %v6940 = vadd.f32 %v6286, %v6886
      %v6941 = vadd.f32 %v6287, %v6889
      %v6942 = vadd.f32 %v6288, %v6891
      %v6943 = vadd.f32 %v6289, %v6894
      %v6944 = vadd.f32 %v6290, %v6896
      %v6945 = vadd.f32 %v6291, %v6899
      %v6946 = vadd.f32 %v6292, %v6901
      %v6947 = vadd.f32 %v6293, %v6904
      %v6948 = vadd.f32 %v6294, %v6906
      %v6949 = vadd.f32 %v6295, %v6909
      %v6950 = vadd.f32 %v6296, %v6911
      %v6951 = vadd.f32 %v6297, %v6914
      %v6952 = vadd.f32 %v6298, %v6916
      %v6953 = vadd.f32 %v6299, %v6919
      %v6954 = vadd.f32 %v6300, %v6921
      %v6955 = vld [vmem:[%s4670] sm:$0xe]
      %v6956 = vld [vmem:[%s4670 + $0xc] sm:$0xe]
      %v6957 = vld [vmem:[%s4670 + $0x18] sm:$0xe]
      %v6958 = vld [vmem:[%s4670 + $0x24] sm:$0xe]
      %v6959 = vld [vmem:[%s4670 + $0x30] sm:$0xe]
      %v6960 = vld [vmem:[%s4670 + $0x3c] sm:$0xe]
      %v6961 = vld [vmem:[%s4670 + $0x48] sm:$0xe]
      %v6962 = vld [vmem:[%s4670 + $0x54] sm:$0xe]
      %v6963 = vld [vmem:[%s4670 + $0x60] sm:$0xe]
      %v6964 = vld [vmem:[%s4670 + $0x6c] sm:$0xe]
      %v6965 = vld [vmem:[%s4670 + $0x78] sm:$0xe]
      %v6966 = vld [vmem:[%s4670 + $0x84] sm:$0xe]
      %v6967 = vld [vmem:[%s4670 + $0x90] sm:$0xe]
      %v6968 = vld [vmem:[%s4670 + $0x9c] sm:$0xe]
      %v6969 = vld [vmem:[%s4670 + $0xa8] sm:$0xe]
      %v6970 = vld [vmem:[%s4670 + $0xb4] sm:$0xe]
      %v7019 = vrot.slane %v6955, 5
      %v7020 = vrot.slane %v7019, 4
      %v7021 = vrot.slane %v6302, 5
      %v7022 = vsel %vm1178, %v7020, %v7021
      %v7023 = vrot.slane %v7021, 4
      %v7024 = vrot.slane %v6303, 5
      %v7025 = vsel %vm1178, %v7023, %v7024
      %v7026 = vrot.slane %v6956, 5
      %v7027 = vrot.slane %v7026, 4
      %v7028 = vrot.slane %v6305, 5
      %v7029 = vsel %vm1178, %v7027, %v7028
      %v7030 = vrot.slane %v7028, 4
      %v7031 = vrot.slane %v6306, 5
      %v7032 = vsel %vm1178, %v7030, %v7031
      %v7033 = vrot.slane %v6957, 5
      %v7034 = vrot.slane %v7033, 4
      %v7035 = vrot.slane %v6308, 5
      %v7036 = vsel %vm1178, %v7034, %v7035
      %v7037 = vrot.slane %v7035, 4
      %v7038 = vrot.slane %v6309, 5
      %v7039 = vsel %vm1178, %v7037, %v7038
      %v7040 = vrot.slane %v6958, 5
      %v7041 = vrot.slane %v7040, 4
      %v7042 = vrot.slane %v6311, 5
      %v7043 = vsel %vm1178, %v7041, %v7042
      %v7044 = vrot.slane %v7042, 4
      %v7045 = vrot.slane %v6312, 5
      %v7046 = vsel %vm1178, %v7044, %v7045
      %v7047 = vrot.slane %v6959, 5
      %v7048 = vrot.slane %v7047, 4
      %v7049 = vrot.slane %v6314, 5
      %v7050 = vsel %vm1178, %v7048, %v7049
      %v7051 = vrot.slane %v7049, 4
      %v7052 = vrot.slane %v6315, 5
      %v7053 = vsel %vm1178, %v7051, %v7052
      %v7054 = vrot.slane %v6960, 5
      %v7055 = vrot.slane %v7054, 4
      %v7056 = vrot.slane %v6317, 5
      %v7057 = vsel %vm1178, %v7055, %v7056
      %v7058 = vrot.slane %v7056, 4
      %v7059 = vrot.slane %v6318, 5
      %v7060 = vsel %vm1178, %v7058, %v7059
      %v7061 = vrot.slane %v6961, 5
      %v7062 = vrot.slane %v7061, 4
      %v7063 = vrot.slane %v6320, 5
      %v7064 = vsel %vm1178, %v7062, %v7063
      %v7065 = vrot.slane %v7063, 4
      %v7066 = vrot.slane %v6321, 5
      %v7067 = vsel %vm1178, %v7065, %v7066
      %v7068 = vrot.slane %v6962, 5
      %v7069 = vrot.slane %v7068, 4
      %v7070 = vrot.slane %v6323, 5
      %v7071 = vsel %vm1178, %v7069, %v7070
      %v7072 = vrot.slane %v7070, 4
      %v7073 = vrot.slane %v6324, 5
      %v7074 = vsel %vm1178, %v7072, %v7073
      %v7075 = vrot.slane %v6963, 5
      %v7076 = vrot.slane %v7075, 4
      %v7077 = vrot.slane %v6326, 5
      %v7078 = vsel %vm1178, %v7076, %v7077
      %v7079 = vrot.slane %v7077, 4
      %v7080 = vrot.slane %v6327, 5
      %v7081 = vsel %vm1178, %v7079, %v7080
      %v7082 = vrot.slane %v6964, 5
      %v7083 = vrot.slane %v7082, 4
      %v7084 = vrot.slane %v6329, 5
      %v7085 = vsel %vm1178, %v7083, %v7084
      %v7086 = vrot.slane %v7084, 4
      %v7087 = vrot.slane %v6330, 5
      %v7088 = vsel %vm1178, %v7086, %v7087
      %v7089 = vrot.slane %v6965, 5
      %v7090 = vrot.slane %v7089, 4
      %v7091 = vrot.slane %v6332, 5
      %v7092 = vsel %vm1178, %v7090, %v7091
      %v7093 = vrot.slane %v7091, 4
      %v7094 = vrot.slane %v6333, 5
      %v7095 = vsel %vm1178, %v7093, %v7094
      %v7096 = vrot.slane %v6966, 5
      %v7097 = vrot.slane %v7096, 4
      %v7098 = vrot.slane %v6335, 5
      %v7099 = vsel %vm1178, %v7097, %v7098
      %v7100 = vrot.slane %v7098, 4
      %v7101 = vrot.slane %v6336, 5
      %v7102 = vsel %vm1178, %v7100, %v7101
      %v7103 = vrot.slane %v6967, 5
      %v7104 = vrot.slane %v7103, 4
      %v7105 = vrot.slane %v6338, 5
      %v7106 = vsel %vm1178, %v7104, %v7105
      %v7107 = vrot.slane %v7105, 4
      %v7108 = vrot.slane %v6339, 5
      %v7109 = vsel %vm1178, %v7107, %v7108
      %v7110 = vrot.slane %v6968, 5
      %v7111 = vrot.slane %v7110, 4
      %v7112 = vrot.slane %v6341, 5
      %v7113 = vsel %vm1178, %v7111, %v7112
      %v7114 = vrot.slane %v7112, 4
      %v7115 = vrot.slane %v6342, 5
      %v7116 = vsel %vm1178, %v7114, %v7115
      %v7117 = vrot.slane %v6969, 5
      %v7118 = vrot.slane %v7117, 4
      %v7119 = vrot.slane %v6344, 5
      %v7120 = vsel %vm1178, %v7118, %v7119
      %v7121 = vrot.slane %v7119, 4
      %v7122 = vrot.slane %v6345, 5
      %v7123 = vsel %vm1178, %v7121, %v7122
      %v7124 = vrot.slane %v6970, 5
      %v7125 = vrot.slane %v7124, 4
      %v7126 = vrot.slane %v6347, 5
      %v7127 = vsel %vm1178, %v7125, %v7126
      %v7128 = vrot.slane %v7126, 4
      %v7129 = vrot.slane %v6348, 5
      %v7130 = vsel %vm1178, %v7128, %v7129
      %s7131 = scalar_lea.vmem %s3, 20
      %v7132 = vld [vmem:[%s7131] sm:$0xf]
      %v7133 = vunpack.c.l.b16 %v7022
      %v7134 = vunpack.c.l.b16 %v7025
      %v7135 = vunpack.c.l.b16 %v7029
      %v7136 = vunpack.c.l.b16 %v7032
      %v7137 = vunpack.c.l.b16 %v7036
      %v7138 = vunpack.c.l.b16 %v7039
      %v7139 = vunpack.c.l.b16 %v7043
      %v7140 = vunpack.c.l.b16 %v7046
      %v7141 = vunpack.c.l.b16 %v7050
      %v7142 = vunpack.c.l.b16 %v7053
      %v7143 = vunpack.c.l.b16 %v7057
      %v7144 = vunpack.c.l.b16 %v7060
      %v7145 = vunpack.c.l.b16 %v7064
      %v7146 = vunpack.c.l.b16 %v7067
      %v7147 = vunpack.c.l.b16 %v7071
      %v7148 = vunpack.c.l.b16 %v7074
      %v7149 = vunpack.c.l.b16 %v7078
      %v7150 = vunpack.c.l.b16 %v7081
      %v7151 = vunpack.c.l.b16 %v7085
      %v7152 = vunpack.c.l.b16 %v7088
      %v7153 = vunpack.c.l.b16 %v7092
      %v7154 = vunpack.c.l.b16 %v7095
      %v7155 = vunpack.c.l.b16 %v7099
      %v7156 = vunpack.c.l.b16 %v7102
      %v7157 = vunpack.c.l.b16 %v7106
      %v7158 = vunpack.c.l.b16 %v7109
      %v7159 = vunpack.c.l.b16 %v7113
      %v7160 = vunpack.c.l.b16 %v7116
      %v7161 = vunpack.c.l.b16 %v7120
      %v7162 = vunpack.c.l.b16 %v7123
      %v7163 = vunpack.c.l.b16 %v7127
      %v7164 = vunpack.c.l.b16 %v7130
      %v7165 = vpack.c.b16 %v7134, %v7133
      %v7166 = vpack.c.b16 %v7136, %v7135
      %v7167 = vpack.c.b16 %v7138, %v7137
      %v7168 = vpack.c.b16 %v7140, %v7139
      %v7169 = vpack.c.b16 %v7142, %v7141
      %v7170 = vpack.c.b16 %v7144, %v7143
      %v7171 = vpack.c.b16 %v7146, %v7145
      %v7172 = vpack.c.b16 %v7148, %v7147
      %v7173 = vpack.c.b16 %v7150, %v7149
      %v7174 = vpack.c.b16 %v7152, %v7151
      %v7175 = vpack.c.b16 %v7154, %v7153
      %v7176 = vpack.c.b16 %v7156, %v7155
      %v7177 = vpack.c.b16 %v7158, %v7157
      %v7178 = vpack.c.b16 %v7160, %v7159
      %v7179 = vpack.c.b16 %v7162, %v7161
      %v7180 = vpack.c.b16 %v7164, %v7163
      %v7182 = vsel %vm5271, %v7165, 0
      %v7185 = vsel %vm5271, %v7166, 0
      %v7188 = vsel %vm5271, %v7167, 0
      %v7191 = vsel %vm5271, %v7168, 0
      %v7194 = vsel %vm5271, %v7169, 0
      %v7197 = vsel %vm5271, %v7170, 0
      %v7200 = vsel %vm5271, %v7171, 0
      %v7203 = vsel %vm5271, %v7172, 0
      %v7206 = vsel %vm5271, %v7173, 0
      %v7209 = vsel %vm5271, %v7174, 0
      %v7212 = vsel %vm5271, %v7175, 0
      %v7215 = vsel %vm5271, %v7176, 0
      %v7218 = vsel %vm5271, %v7177, 0
      %v7221 = vsel %vm5271, %v7178, 0
      %v7224 = vsel %vm5271, %v7179, 0
      %v7227 = vsel %vm5271, %v7180, 0
      %v7230 = vsel %vm5320, %v7132, 0
      %7232 = vmatpush.bf16.msra.mxu0 0
      %7233 = vmatpush.bf16.msra.mxu0 0
      %7234 = vmatpush.bf16.msra.mxu0 0
      %7235 = vmatpush.bf16.msra.mxu0 0
      %7236 = vmatpush.bf16.msra.mxu0 0
      %7237 = vmatpush.bf16.msra.mxu0 0
      %7238 = vmatpush.bf16.msra.mxu0 0
      %7239 = vmatpush.bf16.msra.mxu0 %v7230
      %7240 = vmatmul.bf16.gmra.mxu0 %v7182
      %v7241 = vpop.f32.mrf.mxu0
      %v7242 = vadd.f32 0.0, %v7241
      %v7243 = vpop.f32.mrf.mxu0
      %v7244 = vadd.f32 0.0, %v7243
      %7245 = vmatmul.bf16.gmra.mxu0 %v7185
      %v7246 = vpop.f32.mrf.mxu0
      %v7247 = vadd.f32 0.0, %v7246
      %v7248 = vpop.f32.mrf.mxu0
      %v7249 = vadd.f32 0.0, %v7248
      %7250 = vmatmul.bf16.gmra.mxu0 %v7188
      %v7251 = vpop.f32.mrf.mxu0
      %v7252 = vadd.f32 0.0, %v7251
      %v7253 = vpop.f32.mrf.mxu0
      %v7254 = vadd.f32 0.0, %v7253
      %7255 = vmatmul.bf16.gmra.mxu0 %v7191
      %v7256 = vpop.f32.mrf.mxu0
      %v7257 = vadd.f32 0.0, %v7256
      %v7258 = vpop.f32.mrf.mxu0
      %v7259 = vadd.f32 0.0, %v7258
      %7260 = vmatmul.bf16.gmra.mxu0 %v7194
      %v7261 = vpop.f32.mrf.mxu0
      %v7262 = vadd.f32 0.0, %v7261
      %v7263 = vpop.f32.mrf.mxu0
      %v7264 = vadd.f32 0.0, %v7263
      %7265 = vmatmul.bf16.gmra.mxu0 %v7197
      %v7266 = vpop.f32.mrf.mxu0
      %v7267 = vadd.f32 0.0, %v7266
      %v7268 = vpop.f32.mrf.mxu0
      %v7269 = vadd.f32 0.0, %v7268
      %7270 = vmatmul.bf16.gmra.mxu0 %v7200
      %v7271 = vpop.f32.mrf.mxu0
      %v7272 = vadd.f32 0.0, %v7271
      %v7273 = vpop.f32.mrf.mxu0
      %v7274 = vadd.f32 0.0, %v7273
      %7275 = vmatmul.bf16.gmra.mxu0 %v7203
      %v7276 = vpop.f32.mrf.mxu0
      %v7277 = vadd.f32 0.0, %v7276
      %v7278 = vpop.f32.mrf.mxu0
      %v7279 = vadd.f32 0.0, %v7278
      %7280 = vmatmul.bf16.gmra.mxu0 %v7206
      %v7281 = vpop.f32.mrf.mxu0
      %v7282 = vadd.f32 0.0, %v7281
      %v7283 = vpop.f32.mrf.mxu0
      %v7284 = vadd.f32 0.0, %v7283
      %7285 = vmatmul.bf16.gmra.mxu0 %v7209
      %v7286 = vpop.f32.mrf.mxu0
      %v7287 = vadd.f32 0.0, %v7286
      %v7288 = vpop.f32.mrf.mxu0
      %v7289 = vadd.f32 0.0, %v7288
      %7290 = vmatmul.bf16.gmra.mxu0 %v7212
      %v7291 = vpop.f32.mrf.mxu0
      %v7292 = vadd.f32 0.0, %v7291
      %v7293 = vpop.f32.mrf.mxu0
      %v7294 = vadd.f32 0.0, %v7293
      %7295 = vmatmul.bf16.gmra.mxu0 %v7215
      %v7296 = vpop.f32.mrf.mxu0
      %v7297 = vadd.f32 0.0, %v7296
      %v7298 = vpop.f32.mrf.mxu0
      %v7299 = vadd.f32 0.0, %v7298
      %7300 = vmatmul.bf16.gmra.mxu0 %v7218
      %v7301 = vpop.f32.mrf.mxu0
      %v7302 = vadd.f32 0.0, %v7301
      %v7303 = vpop.f32.mrf.mxu0
      %v7304 = vadd.f32 0.0, %v7303
      %7305 = vmatmul.bf16.gmra.mxu0 %v7221
      %v7306 = vpop.f32.mrf.mxu0
      %v7307 = vadd.f32 0.0, %v7306
      %v7308 = vpop.f32.mrf.mxu0
      %v7309 = vadd.f32 0.0, %v7308
      %7310 = vmatmul.bf16.gmra.mxu0 %v7224
      %v7311 = vpop.f32.mrf.mxu0
      %v7312 = vadd.f32 0.0, %v7311
      %v7313 = vpop.f32.mrf.mxu0
      %v7314 = vadd.f32 0.0, %v7313
      %7315 = vmatmul.bf16.gmra.mxu0 %v7227
      %v7316 = vpop.f32.mrf.mxu0
      %v7317 = vadd.f32 0.0, %v7316
      %v7318 = vpop.f32.mrf.mxu0
      %v7319 = vadd.f32 0.0, %v7318
      %7320 = vdwg.mxu0
      %v7321 = vadd.f32 %v6923, %v7242
      %v7322 = vadd.f32 %v6924, %v7244
      %v7323 = vadd.f32 %v6925, %v7247
      %v7324 = vadd.f32 %v6926, %v7249
      %v7325 = vadd.f32 %v6927, %v7252
      %v7326 = vadd.f32 %v6928, %v7254
      %v7327 = vadd.f32 %v6929, %v7257
      %v7328 = vadd.f32 %v6930, %v7259
      %v7329 = vadd.f32 %v6931, %v7262
      %v7330 = vadd.f32 %v6932, %v7264
      %v7331 = vadd.f32 %v6933, %v7267
      %v7332 = vadd.f32 %v6934, %v7269
      %v7333 = vadd.f32 %v6935, %v7272
      %v7334 = vadd.f32 %v6936, %v7274
      %v7335 = vadd.f32 %v6937, %v7277
      %v7336 = vadd.f32 %v6938, %v7279
      %v7337 = vadd.f32 %v6939, %v7282
      %v7338 = vadd.f32 %v6940, %v7284
      %v7339 = vadd.f32 %v6941, %v7287
      %v7340 = vadd.f32 %v6942, %v7289
      %v7341 = vadd.f32 %v6943, %v7292
      %v7342 = vadd.f32 %v6944, %v7294
      %v7343 = vadd.f32 %v6945, %v7297
      %v7344 = vadd.f32 %v6946, %v7299
      %v7345 = vadd.f32 %v6947, %v7302
      %v7346 = vadd.f32 %v6948, %v7304
      %v7347 = vadd.f32 %v6949, %v7307
      %v7348 = vadd.f32 %v6950, %v7309
      %v7349 = vadd.f32 %v6951, %v7312
      %v7350 = vadd.f32 %v6952, %v7314
      %v7351 = vadd.f32 %v6953, %v7317
      %v7352 = vadd.f32 %v6954, %v7319
      %s7353 = scalar_lea.vmem [#allocation2], 24
      %v7354 = vld [vmem:[%s7353] sm:$0xf]
      %v7355 = vld [vmem:[%s7353 + $0x4] sm:$0xf]
      %v7356 = vld [vmem:[%s7353 + $0xc] sm:$0xf]
      %v7357 = vld [vmem:[%s7353 + $0x10] sm:$0xf]
      %v7358 = vld [vmem:[%s7353 + $0x18] sm:$0xf]
      %v7359 = vld [vmem:[%s7353 + $0x1c] sm:$0xf]
      %v7360 = vld [vmem:[%s7353 + $0x24] sm:$0xf]
      %v7361 = vld [vmem:[%s7353 + $0x28] sm:$0xf]
      %v7362 = vld [vmem:[%s7353 + $0x30] sm:$0xf]
      %v7363 = vld [vmem:[%s7353 + $0x34] sm:$0xf]
      %v7364 = vld [vmem:[%s7353 + $0x3c] sm:$0xf]
      %v7365 = vld [vmem:[%s7353 + $0x40] sm:$0xf]
      %v7366 = vld [vmem:[%s7353 + $0x48] sm:$0xf]
      %v7367 = vld [vmem:[%s7353 + $0x4c] sm:$0xf]
      %v7368 = vld [vmem:[%s7353 + $0x54] sm:$0xf]
      %v7369 = vld [vmem:[%s7353 + $0x58] sm:$0xf]
      %v7370 = vld [vmem:[%s7353 + $0x60] sm:$0xf]
      %v7371 = vld [vmem:[%s7353 + $0x64] sm:$0xf]
      %v7372 = vld [vmem:[%s7353 + $0x6c] sm:$0xf]
      %v7373 = vld [vmem:[%s7353 + $0x70] sm:$0xf]
      %v7374 = vld [vmem:[%s7353 + $0x78] sm:$0xf]
      %v7375 = vld [vmem:[%s7353 + $0x7c] sm:$0xf]
      %v7376 = vld [vmem:[%s7353 + $0x84] sm:$0xf]
      %v7377 = vld [vmem:[%s7353 + $0x88] sm:$0xf]
      %v7378 = vld [vmem:[%s7353 + $0x90] sm:$0xf]
      %v7379 = vld [vmem:[%s7353 + $0x94] sm:$0xf]
      %v7380 = vld [vmem:[%s7353 + $0x9c] sm:$0xf]
      %v7381 = vld [vmem:[%s7353 + $0xa0] sm:$0xf]
      %v7382 = vld [vmem:[%s7353 + $0xa8] sm:$0xf]
      %v7383 = vld [vmem:[%s7353 + $0xac] sm:$0xf]
      %v7384 = vld [vmem:[%s7353 + $0xb4] sm:$0xf]
      %v7385 = vld [vmem:[%s7353 + $0xb8] sm:$0xf]
      %s7386 = scalar_lea.vmem %s3, 24
      %v7387 = vld [vmem:[%s7386] sm:$0xf]
      %v7420 = vunpack.c.l.b16 %v7354
      %v7421 = vunpack.c.l.b16 %v7355
      %v7422 = vunpack.c.l.b16 %v7356
      %v7423 = vunpack.c.l.b16 %v7357
      %v7424 = vunpack.c.l.b16 %v7358
      %v7425 = vunpack.c.l.b16 %v7359
      %v7426 = vunpack.c.l.b16 %v7360
      %v7427 = vunpack.c.l.b16 %v7361
      %v7428 = vunpack.c.l.b16 %v7362
      %v7429 = vunpack.c.l.b16 %v7363
      %v7430 = vunpack.c.l.b16 %v7364
      %v7431 = vunpack.c.l.b16 %v7365
      %v7432 = vunpack.c.l.b16 %v7366
      %v7433 = vunpack.c.l.b16 %v7367
      %v7434 = vunpack.c.l.b16 %v7368
      %v7435 = vunpack.c.l.b16 %v7369
      %v7436 = vunpack.c.l.b16 %v7370
      %v7437 = vunpack.c.l.b16 %v7371
      %v7438 = vunpack.c.l.b16 %v7372
      %v7439 = vunpack.c.l.b16 %v7373
      %v7440 = vunpack.c.l.b16 %v7374
      %v7441 = vunpack.c.l.b16 %v7375
      %v7442 = vunpack.c.l.b16 %v7376
      %v7443 = vunpack.c.l.b16 %v7377
      %v7444 = vunpack.c.l.b16 %v7378
      %v7445 = vunpack.c.l.b16 %v7379
      %v7446 = vunpack.c.l.b16 %v7380
      %v7447 = vunpack.c.l.b16 %v7381
      %v7448 = vunpack.c.l.b16 %v7382
      %v7449 = vunpack.c.l.b16 %v7383
      %v7450 = vunpack.c.l.b16 %v7384
      %v7451 = vunpack.c.l.b16 %v7385
      %v7452 = vpack.c.b16 %v7421, %v7420
      %v7453 = vpack.c.b16 %v7423, %v7422
      %v7454 = vpack.c.b16 %v7425, %v7424
      %v7455 = vpack.c.b16 %v7427, %v7426
      %v7456 = vpack.c.b16 %v7429, %v7428
      %v7457 = vpack.c.b16 %v7431, %v7430
      %v7458 = vpack.c.b16 %v7433, %v7432
      %v7459 = vpack.c.b16 %v7435, %v7434
      %v7460 = vpack.c.b16 %v7437, %v7436
      %v7461 = vpack.c.b16 %v7439, %v7438
      %v7462 = vpack.c.b16 %v7441, %v7440
      %v7463 = vpack.c.b16 %v7443, %v7442
      %v7464 = vpack.c.b16 %v7445, %v7444
      %v7465 = vpack.c.b16 %v7447, %v7446
      %v7466 = vpack.c.b16 %v7449, %v7448
      %v7467 = vpack.c.b16 %v7451, %v7450
      %v7469 = vsel %vm5271, %v7452, 0
      %v7472 = vsel %vm5271, %v7453, 0
      %v7475 = vsel %vm5271, %v7454, 0
      %v7478 = vsel %vm5271, %v7455, 0
      %v7481 = vsel %vm5271, %v7456, 0
      %v7484 = vsel %vm5271, %v7457, 0
      %v7487 = vsel %vm5271, %v7458, 0
      %v7490 = vsel %vm5271, %v7459, 0
      %v7493 = vsel %vm5271, %v7460, 0
      %v7496 = vsel %vm5271, %v7461, 0
      %v7499 = vsel %vm5271, %v7462, 0
      %v7502 = vsel %vm5271, %v7463, 0
      %v7505 = vsel %vm5271, %v7464, 0
      %v7508 = vsel %vm5271, %v7465, 0
      %v7511 = vsel %vm5271, %v7466, 0
      %v7514 = vsel %vm5271, %v7467, 0
      %v7517 = vsel %vm5320, %v7387, 0
      %7519 = vmatpush.bf16.msra.mxu0 0
      %7520 = vmatpush.bf16.msra.mxu0 0
      %7521 = vmatpush.bf16.msra.mxu0 0
      %7522 = vmatpush.bf16.msra.mxu0 0
      %7523 = vmatpush.bf16.msra.mxu0 0
      %7524 = vmatpush.bf16.msra.mxu0 0
      %7525 = vmatpush.bf16.msra.mxu0 0
      %7526 = vmatpush.bf16.msra.mxu0 %v7517
      %7527 = vmatmul.bf16.gmra.mxu0 %v7469
      %v7528 = vpop.f32.mrf.mxu0
      %v7529 = vadd.f32 0.0, %v7528
      %v7530 = vpop.f32.mrf.mxu0
      %v7531 = vadd.f32 0.0, %v7530
      %7532 = vmatmul.bf16.gmra.mxu0 %v7472
      %v7533 = vpop.f32.mrf.mxu0
      %v7534 = vadd.f32 0.0, %v7533
      %v7535 = vpop.f32.mrf.mxu0
      %v7536 = vadd.f32 0.0, %v7535
      %7537 = vmatmul.bf16.gmra.mxu0 %v7475
      %v7538 = vpop.f32.mrf.mxu0
      %v7539 = vadd.f32 0.0, %v7538
      %v7540 = vpop.f32.mrf.mxu0
      %v7541 = vadd.f32 0.0, %v7540
      %7542 = vmatmul.bf16.gmra.mxu0 %v7478
      %v7543 = vpop.f32.mrf.mxu0
      %v7544 = vadd.f32 0.0, %v7543
      %v7545 = vpop.f32.mrf.mxu0
      %v7546 = vadd.f32 0.0, %v7545
      %7547 = vmatmul.bf16.gmra.mxu0 %v7481
      %v7548 = vpop.f32.mrf.mxu0
      %v7549 = vadd.f32 0.0, %v7548
      %v7550 = vpop.f32.mrf.mxu0
      %v7551 = vadd.f32 0.0, %v7550
      %7552 = vmatmul.bf16.gmra.mxu0 %v7484
      %v7553 = vpop.f32.mrf.mxu0
      %v7554 = vadd.f32 0.0, %v7553
      %v7555 = vpop.f32.mrf.mxu0
      %v7556 = vadd.f32 0.0, %v7555
      %7557 = vmatmul.bf16.gmra.mxu0 %v7487
      %v7558 = vpop.f32.mrf.mxu0
      %v7559 = vadd.f32 0.0, %v7558
      %v7560 = vpop.f32.mrf.mxu0
      %v7561 = vadd.f32 0.0, %v7560
      %7562 = vmatmul.bf16.gmra.mxu0 %v7490
      %v7563 = vpop.f32.mrf.mxu0
      %v7564 = vadd.f32 0.0, %v7563
      %v7565 = vpop.f32.mrf.mxu0
      %v7566 = vadd.f32 0.0, %v7565
      %7567 = vmatmul.bf16.gmra.mxu0 %v7493
      %v7568 = vpop.f32.mrf.mxu0
      %v7569 = vadd.f32 0.0, %v7568
      %v7570 = vpop.f32.mrf.mxu0
      %v7571 = vadd.f32 0.0, %v7570
      %7572 = vmatmul.bf16.gmra.mxu0 %v7496
      %v7573 = vpop.f32.mrf.mxu0
      %v7574 = vadd.f32 0.0, %v7573
      %v7575 = vpop.f32.mrf.mxu0
      %v7576 = vadd.f32 0.0, %v7575
      %7577 = vmatmul.bf16.gmra.mxu0 %v7499
      %v7578 = vpop.f32.mrf.mxu0
      %v7579 = vadd.f32 0.0, %v7578
      %v7580 = vpop.f32.mrf.mxu0
      %v7581 = vadd.f32 0.0, %v7580
      %7582 = vmatmul.bf16.gmra.mxu0 %v7502
      %v7583 = vpop.f32.mrf.mxu0
      %v7584 = vadd.f32 0.0, %v7583
      %v7585 = vpop.f32.mrf.mxu0
      %v7586 = vadd.f32 0.0, %v7585
      %7587 = vmatmul.bf16.gmra.mxu0 %v7505
      %v7588 = vpop.f32.mrf.mxu0
      %v7589 = vadd.f32 0.0, %v7588
      %v7590 = vpop.f32.mrf.mxu0
      %v7591 = vadd.f32 0.0, %v7590
      %7592 = vmatmul.bf16.gmra.mxu0 %v7508
      %v7593 = vpop.f32.mrf.mxu0
      %v7594 = vadd.f32 0.0, %v7593
      %v7595 = vpop.f32.mrf.mxu0
      %v7596 = vadd.f32 0.0, %v7595
      %7597 = vmatmul.bf16.gmra.mxu0 %v7511
      %v7598 = vpop.f32.mrf.mxu0
      %v7599 = vadd.f32 0.0, %v7598
      %v7600 = vpop.f32.mrf.mxu0
      %v7601 = vadd.f32 0.0, %v7600
      %7602 = vmatmul.bf16.gmra.mxu0 %v7514
      %v7603 = vpop.f32.mrf.mxu0
      %v7604 = vadd.f32 0.0, %v7603
      %v7605 = vpop.f32.mrf.mxu0
      %v7606 = vadd.f32 0.0, %v7605
      %7607 = vdwg.mxu0
      %v7608 = vadd.f32 %v7321, %v7529
      %v7609 = vadd.f32 %v7322, %v7531
      %v7610 = vadd.f32 %v7323, %v7534
      %v7611 = vadd.f32 %v7324, %v7536
      %v7612 = vadd.f32 %v7325, %v7539
      %v7613 = vadd.f32 %v7326, %v7541
      %v7614 = vadd.f32 %v7327, %v7544
      %v7615 = vadd.f32 %v7328, %v7546
      %v7616 = vadd.f32 %v7329, %v7549
      %v7617 = vadd.f32 %v7330, %v7551
      %v7618 = vadd.f32 %v7331, %v7554
      %v7619 = vadd.f32 %v7332, %v7556
      %v7620 = vadd.f32 %v7333, %v7559
      %v7621 = vadd.f32 %v7334, %v7561
      %v7622 = vadd.f32 %v7335, %v7564
      %v7623 = vadd.f32 %v7336, %v7566
      %v7624 = vadd.f32 %v7337, %v7569
      %v7625 = vadd.f32 %v7338, %v7571
      %v7626 = vadd.f32 %v7339, %v7574
      %v7627 = vadd.f32 %v7340, %v7576
      %v7628 = vadd.f32 %v7341, %v7579
      %v7629 = vadd.f32 %v7342, %v7581
      %v7630 = vadd.f32 %v7343, %v7584
      %v7631 = vadd.f32 %v7344, %v7586
      %v7632 = vadd.f32 %v7345, %v7589
      %v7633 = vadd.f32 %v7346, %v7591
      %v7634 = vadd.f32 %v7347, %v7594
      %v7635 = vadd.f32 %v7348, %v7596
      %v7636 = vadd.f32 %v7349, %v7599
      %v7637 = vadd.f32 %v7350, %v7601
      %v7638 = vadd.f32 %v7351, %v7604
      %v7639 = vadd.f32 %v7352, %v7606
      %v7640 = vld [vmem:[%s7353] sm:$0xf]
      %v7641 = vld [vmem:[%s7353 + $0x4] sm:$0xf]
      %v7642 = vld [vmem:[%s7353 + $0x8] sm:$0x1]
      %v7643 = vld [vmem:[%s7353 + $0xc] sm:$0xf]
      %v7644 = vld [vmem:[%s7353 + $0x10] sm:$0xf]
      %v7645 = vld [vmem:[%s7353 + $0x14] sm:$0x1]
      %v7646 = vld [vmem:[%s7353 + $0x18] sm:$0xf]
      %v7647 = vld [vmem:[%s7353 + $0x1c] sm:$0xf]
      %v7648 = vld [vmem:[%s7353 + $0x20] sm:$0x1]
      %v7649 = vld [vmem:[%s7353 + $0x24] sm:$0xf]
      %v7650 = vld [vmem:[%s7353 + $0x28] sm:$0xf]
      %v7651 = vld [vmem:[%s7353 + $0x2c] sm:$0x1]
      %v7652 = vld [vmem:[%s7353 + $0x30] sm:$0xf]
      %v7653 = vld [vmem:[%s7353 + $0x34] sm:$0xf]
      %v7654 = vld [vmem:[%s7353 + $0x38] sm:$0x1]
      %v7655 = vld [vmem:[%s7353 + $0x3c] sm:$0xf]
      %v7656 = vld [vmem:[%s7353 + $0x40] sm:$0xf]
      %v7657 = vld [vmem:[%s7353 + $0x44] sm:$0x1]
      %v7658 = vld [vmem:[%s7353 + $0x48] sm:$0xf]
      %v7659 = vld [vmem:[%s7353 + $0x4c] sm:$0xf]
      %v7660 = vld [vmem:[%s7353 + $0x50] sm:$0x1]
      %v7661 = vld [vmem:[%s7353 + $0x54] sm:$0xf]
      %v7662 = vld [vmem:[%s7353 + $0x58] sm:$0xf]
      %v7663 = vld [vmem:[%s7353 + $0x5c] sm:$0x1]
      %v7664 = vld [vmem:[%s7353 + $0x60] sm:$0xf]
      %v7665 = vld [vmem:[%s7353 + $0x64] sm:$0xf]
      %v7666 = vld [vmem:[%s7353 + $0x68] sm:$0x1]
      %v7667 = vld [vmem:[%s7353 + $0x6c] sm:$0xf]
      %v7668 = vld [vmem:[%s7353 + $0x70] sm:$0xf]
      %v7669 = vld [vmem:[%s7353 + $0x74] sm:$0x1]
      %v7670 = vld [vmem:[%s7353 + $0x78] sm:$0xf]
      %v7671 = vld [vmem:[%s7353 + $0x7c] sm:$0xf]
      %v7672 = vld [vmem:[%s7353 + $0x80] sm:$0x1]
      %v7673 = vld [vmem:[%s7353 + $0x84] sm:$0xf]
      %v7674 = vld [vmem:[%s7353 + $0x88] sm:$0xf]
      %v7675 = vld [vmem:[%s7353 + $0x8c] sm:$0x1]
      %v7676 = vld [vmem:[%s7353 + $0x90] sm:$0xf]
      %v7677 = vld [vmem:[%s7353 + $0x94] sm:$0xf]
      %v7678 = vld [vmem:[%s7353 + $0x98] sm:$0x1]
      %v7679 = vld [vmem:[%s7353 + $0x9c] sm:$0xf]
      %v7680 = vld [vmem:[%s7353 + $0xa0] sm:$0xf]
      %v7681 = vld [vmem:[%s7353 + $0xa4] sm:$0x1]
      %v7682 = vld [vmem:[%s7353 + $0xa8] sm:$0xf]
      %v7683 = vld [vmem:[%s7353 + $0xac] sm:$0xf]
      %v7684 = vld [vmem:[%s7353 + $0xb0] sm:$0x1]
      %v7685 = vld [vmem:[%s7353 + $0xb4] sm:$0xf]
      %v7686 = vld [vmem:[%s7353 + $0xb8] sm:$0xf]
      %v7687 = vld [vmem:[%s7353 + $0xbc] sm:$0x1]
      %v7689 = vshrl.u32 %v7640, 16
      %v7691 = vrot.slane %v7689, 4
      %v7692 = vshll.u32 %v7640, 16
      %v7694 = vrot.slane %v7692, 5
      %v7695 = vor.u32 %v7691, %v7694
      %v7696 = vrot.slane %v7695, 4
      %v7698 = vshll.u32 %v7641, 16
      %v7700 = vrot.slane %v7698, 5
      %v7701 = vsel %vm331, %v7696, %v7700
      %v7702 = vshrl.u32 %v7641, 16
      %v7704 = vrot.slane %v7702, 4
      %v7705 = vor.u32 %v7704, %v7700
      %v7706 = vrot.slane %v7705, 4
      %v7708 = vshll.u32 %v7642, 16
      %v7710 = vrot.slane %v7708, 5
      %v7711 = vsel %vm331, %v7706, %v7710
      %v7713 = vshrl.u32 %v7643, 16
      %v7715 = vrot.slane %v7713, 4
      %v7716 = vshll.u32 %v7643, 16
      %v7718 = vrot.slane %v7716, 5
      %v7719 = vor.u32 %v7715, %v7718
      %v7720 = vrot.slane %v7719, 4
      %v7722 = vshll.u32 %v7644, 16
      %v7724 = vrot.slane %v7722, 5
      %v7725 = vsel %vm331, %v7720, %v7724
      %v7726 = vshrl.u32 %v7644, 16
      %v7728 = vrot.slane %v7726, 4
      %v7729 = vor.u32 %v7728, %v7724
      %v7730 = vrot.slane %v7729, 4
      %v7732 = vshll.u32 %v7645, 16
      %v7734 = vrot.slane %v7732, 5
      %v7735 = vsel %vm331, %v7730, %v7734
      %v7737 = vshrl.u32 %v7646, 16
      %v7739 = vrot.slane %v7737, 4
      %v7740 = vshll.u32 %v7646, 16
      %v7742 = vrot.slane %v7740, 5
      %v7743 = vor.u32 %v7739, %v7742
      %v7744 = vrot.slane %v7743, 4
      %v7746 = vshll.u32 %v7647, 16
      %v7748 = vrot.slane %v7746, 5
      %v7749 = vsel %vm331, %v7744, %v7748
      %v7750 = vshrl.u32 %v7647, 16
      %v7752 = vrot.slane %v7750, 4
      %v7753 = vor.u32 %v7752, %v7748
      %v7754 = vrot.slane %v7753, 4
      %v7756 = vshll.u32 %v7648, 16
      %v7758 = vrot.slane %v7756, 5
      %v7759 = vsel %vm331, %v7754, %v7758
      %v7761 = vshrl.u32 %v7649, 16
      %v7763 = vrot.slane %v7761, 4
      %v7764 = vshll.u32 %v7649, 16
      %v7766 = vrot.slane %v7764, 5
      %v7767 = vor.u32 %v7763, %v7766
      %v7768 = vrot.slane %v7767, 4
      %v7770 = vshll.u32 %v7650, 16
      %v7772 = vrot.slane %v7770, 5
      %v7773 = vsel %vm331, %v7768, %v7772
      %v7774 = vshrl.u32 %v7650, 16
      %v7776 = vrot.slane %v7774, 4
      %v7777 = vor.u32 %v7776, %v7772
      %v7778 = vrot.slane %v7777, 4
      %v7780 = vshll.u32 %v7651, 16
      %v7782 = vrot.slane %v7780, 5
      %v7783 = vsel %vm331, %v7778, %v7782
      %v7785 = vshrl.u32 %v7652, 16
      %v7787 = vrot.slane %v7785, 4
      %v7788 = vshll.u32 %v7652, 16
      %v7790 = vrot.slane %v7788, 5
      %v7791 = vor.u32 %v7787, %v7790
      %v7792 = vrot.slane %v7791, 4
      %v7794 = vshll.u32 %v7653, 16
      %v7796 = vrot.slane %v7794, 5
      %v7797 = vsel %vm331, %v7792, %v7796
      %v7798 = vshrl.u32 %v7653, 16
      %v7800 = vrot.slane %v7798, 4
      %v7801 = vor.u32 %v7800, %v7796
      %v7802 = vrot.slane %v7801, 4
      %v7804 = vshll.u32 %v7654, 16
      %v7806 = vrot.slane %v7804, 5
      %v7807 = vsel %vm331, %v7802, %v7806
      %v7809 = vshrl.u32 %v7655, 16
      %v7811 = vrot.slane %v7809, 4
      %v7812 = vshll.u32 %v7655, 16
      %v7814 = vrot.slane %v7812, 5
      %v7815 = vor.u32 %v7811, %v7814
      %v7816 = vrot.slane %v7815, 4
      %v7818 = vshll.u32 %v7656, 16
      %v7820 = vrot.slane %v7818, 5
      %v7821 = vsel %vm331, %v7816, %v7820
      %v7822 = vshrl.u32 %v7656, 16
      %v7824 = vrot.slane %v7822, 4
      %v7825 = vor.u32 %v7824, %v7820
      %v7826 = vrot.slane %v7825, 4
      %v7828 = vshll.u32 %v7657, 16
      %v7830 = vrot.slane %v7828, 5
      %v7831 = vsel %vm331, %v7826, %v7830
      %v7833 = vshrl.u32 %v7658, 16
      %v7835 = vrot.slane %v7833, 4
      %v7836 = vshll.u32 %v7658, 16
      %v7838 = vrot.slane %v7836, 5
      %v7839 = vor.u32 %v7835, %v7838
      %v7840 = vrot.slane %v7839, 4
      %v7842 = vshll.u32 %v7659, 16
      %v7844 = vrot.slane %v7842, 5
      %v7845 = vsel %vm331, %v7840, %v7844
      %v7846 = vshrl.u32 %v7659, 16
      %v7848 = vrot.slane %v7846, 4
      %v7849 = vor.u32 %v7848, %v7844
      %v7850 = vrot.slane %v7849, 4
      %v7852 = vshll.u32 %v7660, 16
      %v7854 = vrot.slane %v7852, 5
      %v7855 = vsel %vm331, %v7850, %v7854
      %v7857 = vshrl.u32 %v7661, 16
      %v7859 = vrot.slane %v7857, 4
      %v7860 = vshll.u32 %v7661, 16
      %v7862 = vrot.slane %v7860, 5
      %v7863 = vor.u32 %v7859, %v7862
      %v7864 = vrot.slane %v7863, 4
      %v7866 = vshll.u32 %v7662, 16
      %v7868 = vrot.slane %v7866, 5
      %v7869 = vsel %vm331, %v7864, %v7868
      %v7870 = vshrl.u32 %v7662, 16
      %v7872 = vrot.slane %v7870, 4
      %v7873 = vor.u32 %v7872, %v7868
      %v7874 = vrot.slane %v7873, 4
      %v7876 = vshll.u32 %v7663, 16
      %v7878 = vrot.slane %v7876, 5
      %v7879 = vsel %vm331, %v7874, %v7878
      %v7881 = vshrl.u32 %v7664, 16
      %v7883 = vrot.slane %v7881, 4
      %v7884 = vshll.u32 %v7664, 16
      %v7886 = vrot.slane %v7884, 5
      %v7887 = vor.u32 %v7883, %v7886
      %v7888 = vrot.slane %v7887, 4
      %v7890 = vshll.u32 %v7665, 16
      %v7892 = vrot.slane %v7890, 5
      %v7893 = vsel %vm331, %v7888, %v7892
      %v7894 = vshrl.u32 %v7665, 16
      %v7896 = vrot.slane %v7894, 4
      %v7897 = vor.u32 %v7896, %v7892
      %v7898 = vrot.slane %v7897, 4
      %v7900 = vshll.u32 %v7666, 16
      %v7902 = vrot.slane %v7900, 5
      %v7903 = vsel %vm331, %v7898, %v7902
      %v7905 = vshrl.u32 %v7667, 16
      %v7907 = vrot.slane %v7905, 4
      %v7908 = vshll.u32 %v7667, 16
      %v7910 = vrot.slane %v7908, 5
      %v7911 = vor.u32 %v7907, %v7910
      %v7912 = vrot.slane %v7911, 4
      %v7914 = vshll.u32 %v7668, 16
      %v7916 = vrot.slane %v7914, 5
      %v7917 = vsel %vm331, %v7912, %v7916
      %v7918 = vshrl.u32 %v7668, 16
      %v7920 = vrot.slane %v7918, 4
      %v7921 = vor.u32 %v7920, %v7916
      %v7922 = vrot.slane %v7921, 4
      %v7924 = vshll.u32 %v7669, 16
      %v7926 = vrot.slane %v7924, 5
      %v7927 = vsel %vm331, %v7922, %v7926
      %v7929 = vshrl.u32 %v7670, 16
      %v7931 = vrot.slane %v7929, 4
      %v7932 = vshll.u32 %v7670, 16
      %v7934 = vrot.slane %v7932, 5
      %v7935 = vor.u32 %v7931, %v7934
      %v7936 = vrot.slane %v7935, 4
      %v7938 = vshll.u32 %v7671, 16
      %v7940 = vrot.slane %v7938, 5
      %v7941 = vsel %vm331, %v7936, %v7940
      %v7942 = vshrl.u32 %v7671, 16
      %v7944 = vrot.slane %v7942, 4
      %v7945 = vor.u32 %v7944, %v7940
      %v7946 = vrot.slane %v7945, 4
      %v7948 = vshll.u32 %v7672, 16
      %v7950 = vrot.slane %v7948, 5
      %v7951 = vsel %vm331, %v7946, %v7950
      %v7953 = vshrl.u32 %v7673, 16
      %v7955 = vrot.slane %v7953, 4
      %v7956 = vshll.u32 %v7673, 16
      %v7958 = vrot.slane %v7956, 5
      %v7959 = vor.u32 %v7955, %v7958
      %v7960 = vrot.slane %v7959, 4
      %v7962 = vshll.u32 %v7674, 16
      %v7964 = vrot.slane %v7962, 5
      %v7965 = vsel %vm331, %v7960, %v7964
      %v7966 = vshrl.u32 %v7674, 16
      %v7968 = vrot.slane %v7966, 4
      %v7969 = vor.u32 %v7968, %v7964
      %v7970 = vrot.slane %v7969, 4
      %v7972 = vshll.u32 %v7675, 16
      %v7974 = vrot.slane %v7972, 5
      %v7975 = vsel %vm331, %v7970, %v7974
      %v7977 = vshrl.u32 %v7676, 16
      %v7979 = vrot.slane %v7977, 4
      %v7980 = vshll.u32 %v7676, 16
      %v7982 = vrot.slane %v7980, 5
      %v7983 = vor.u32 %v7979, %v7982
      %v7984 = vrot.slane %v7983, 4
      %v7986 = vshll.u32 %v7677, 16
      %v7988 = vrot.slane %v7986, 5
      %v7989 = vsel %vm331, %v7984, %v7988
      %v7990 = vshrl.u32 %v7677, 16
      %v7992 = vrot.slane %v7990, 4
      %v7993 = vor.u32 %v7992, %v7988
      %v7994 = vrot.slane %v7993, 4
      %v7996 = vshll.u32 %v7678, 16
      %v7998 = vrot.slane %v7996, 5
      %v7999 = vsel %vm331, %v7994, %v7998
      %v8001 = vshrl.u32 %v7679, 16
      %v8003 = vrot.slane %v8001, 4
      %v8004 = vshll.u32 %v7679, 16
      %v8006 = vrot.slane %v8004, 5
      %v8007 = vor.u32 %v8003, %v8006
      %v8008 = vrot.slane %v8007, 4
      %v8010 = vshll.u32 %v7680, 16
      %v8012 = vrot.slane %v8010, 5
      %v8013 = vsel %vm331, %v8008, %v8012
      %v8014 = vshrl.u32 %v7680, 16
      %v8016 = vrot.slane %v8014, 4
      %v8017 = vor.u32 %v8016, %v8012
      %v8018 = vrot.slane %v8017, 4
      %v8020 = vshll.u32 %v7681, 16
      %v8022 = vrot.slane %v8020, 5
      %v8023 = vsel %vm331, %v8018, %v8022
      %v8025 = vshrl.u32 %v7682, 16
      %v8027 = vrot.slane %v8025, 4
      %v8028 = vshll.u32 %v7682, 16
      %v8030 = vrot.slane %v8028, 5
      %v8031 = vor.u32 %v8027, %v8030
      %v8032 = vrot.slane %v8031, 4
      %v8034 = vshll.u32 %v7683, 16
      %v8036 = vrot.slane %v8034, 5
      %v8037 = vsel %vm331, %v8032, %v8036
      %v8038 = vshrl.u32 %v7683, 16
      %v8040 = vrot.slane %v8038, 4
      %v8041 = vor.u32 %v8040, %v8036
      %v8042 = vrot.slane %v8041, 4
      %v8044 = vshll.u32 %v7684, 16
      %v8046 = vrot.slane %v8044, 5
      %v8047 = vsel %vm331, %v8042, %v8046
      %v8049 = vshrl.u32 %v7685, 16
      %v8051 = vrot.slane %v8049, 4
      %v8052 = vshll.u32 %v7685, 16
      %v8054 = vrot.slane %v8052, 5
      %v8055 = vor.u32 %v8051, %v8054
      %v8056 = vrot.slane %v8055, 4
      %v8058 = vshll.u32 %v7686, 16
      %v8060 = vrot.slane %v8058, 5
      %v8061 = vsel %vm331, %v8056, %v8060
      %v8062 = vshrl.u32 %v7686, 16
      %v8064 = vrot.slane %v8062, 4
      %v8065 = vor.u32 %v8064, %v8060
      %v8066 = vrot.slane %v8065, 4
      %v8068 = vshll.u32 %v7687, 16
      %v8070 = vrot.slane %v8068, 5
      %v8071 = vsel %vm331, %v8066, %v8070
      %s8072 = scalar_lea.vmem %s3, 28
      %v8073 = vld [vmem:[%s8072] sm:$0xf]
      %v8074 = vunpack.c.l.b16 %v7701
      %v8075 = vunpack.c.l.b16 %v7711
      %v8076 = vunpack.c.l.b16 %v7725
      %v8077 = vunpack.c.l.b16 %v7735
      %v8078 = vunpack.c.l.b16 %v7749
      %v8079 = vunpack.c.l.b16 %v7759
      %v8080 = vunpack.c.l.b16 %v7773
      %v8081 = vunpack.c.l.b16 %v7783
      %v8082 = vunpack.c.l.b16 %v7797
      %v8083 = vunpack.c.l.b16 %v7807
      %v8084 = vunpack.c.l.b16 %v7821
      %v8085 = vunpack.c.l.b16 %v7831
      %v8086 = vunpack.c.l.b16 %v7845
      %v8087 = vunpack.c.l.b16 %v7855
      %v8088 = vunpack.c.l.b16 %v7869
      %v8089 = vunpack.c.l.b16 %v7879
      %v8090 = vunpack.c.l.b16 %v7893
      %v8091 = vunpack.c.l.b16 %v7903
      %v8092 = vunpack.c.l.b16 %v7917
      %v8093 = vunpack.c.l.b16 %v7927
      %v8094 = vunpack.c.l.b16 %v7941
      %v8095 = vunpack.c.l.b16 %v7951
      %v8096 = vunpack.c.l.b16 %v7965
      %v8097 = vunpack.c.l.b16 %v7975
      %v8098 = vunpack.c.l.b16 %v7989
      %v8099 = vunpack.c.l.b16 %v7999
      %v8100 = vunpack.c.l.b16 %v8013
      %v8101 = vunpack.c.l.b16 %v8023
      %v8102 = vunpack.c.l.b16 %v8037
      %v8103 = vunpack.c.l.b16 %v8047
      %v8104 = vunpack.c.l.b16 %v8061
      %v8105 = vunpack.c.l.b16 %v8071
      %v8106 = vpack.c.b16 %v8075, %v8074
      %v8107 = vpack.c.b16 %v8077, %v8076
      %v8108 = vpack.c.b16 %v8079, %v8078
      %v8109 = vpack.c.b16 %v8081, %v8080
      %v8110 = vpack.c.b16 %v8083, %v8082
      %v8111 = vpack.c.b16 %v8085, %v8084
      %v8112 = vpack.c.b16 %v8087, %v8086
      %v8113 = vpack.c.b16 %v8089, %v8088
      %v8114 = vpack.c.b16 %v8091, %v8090
      %v8115 = vpack.c.b16 %v8093, %v8092
      %v8116 = vpack.c.b16 %v8095, %v8094
      %v8117 = vpack.c.b16 %v8097, %v8096
      %v8118 = vpack.c.b16 %v8099, %v8098
      %v8119 = vpack.c.b16 %v8101, %v8100
      %v8120 = vpack.c.b16 %v8103, %v8102
      %v8121 = vpack.c.b16 %v8105, %v8104
      %v8123 = vsel %vm5271, %v8106, 0
      %v8126 = vsel %vm5271, %v8107, 0
      %v8129 = vsel %vm5271, %v8108, 0
      %v8132 = vsel %vm5271, %v8109, 0
      %v8135 = vsel %vm5271, %v8110, 0
      %v8138 = vsel %vm5271, %v8111, 0
      %v8141 = vsel %vm5271, %v8112, 0
      %v8144 = vsel %vm5271, %v8113, 0
      %v8147 = vsel %vm5271, %v8114, 0
      %v8150 = vsel %vm5271, %v8115, 0
      %v8153 = vsel %vm5271, %v8116, 0
      %v8156 = vsel %vm5271, %v8117, 0
      %v8159 = vsel %vm5271, %v8118, 0
      %v8162 = vsel %vm5271, %v8119, 0
      %v8165 = vsel %vm5271, %v8120, 0
      %v8168 = vsel %vm5271, %v8121, 0
      %v8171 = vsel %vm5320, %v8073, 0
      %8173 = vmatpush.bf16.msra.mxu0 0
      %8174 = vmatpush.bf16.msra.mxu0 0
      %8175 = vmatpush.bf16.msra.mxu0 0
      %8176 = vmatpush.bf16.msra.mxu0 0
      %8177 = vmatpush.bf16.msra.mxu0 0
      %8178 = vmatpush.bf16.msra.mxu0 0
      %8179 = vmatpush.bf16.msra.mxu0 0
      %8180 = vmatpush.bf16.msra.mxu0 %v8171
      %8181 = vmatmul.bf16.gmra.mxu0 %v8123
      %v8182 = vpop.f32.mrf.mxu0
      %v8183 = vadd.f32 0.0, %v8182
      %v8184 = vpop.f32.mrf.mxu0
      %v8185 = vadd.f32 0.0, %v8184
      %8186 = vmatmul.bf16.gmra.mxu0 %v8126
      %v8187 = vpop.f32.mrf.mxu0
      %v8188 = vadd.f32 0.0, %v8187
      %v8189 = vpop.f32.mrf.mxu0
      %v8190 = vadd.f32 0.0, %v8189
      %8191 = vmatmul.bf16.gmra.mxu0 %v8129
      %v8192 = vpop.f32.mrf.mxu0
      %v8193 = vadd.f32 0.0, %v8192
      %v8194 = vpop.f32.mrf.mxu0
      %v8195 = vadd.f32 0.0, %v8194
      %8196 = vmatmul.bf16.gmra.mxu0 %v8132
      %v8197 = vpop.f32.mrf.mxu0
      %v8198 = vadd.f32 0.0, %v8197
      %v8199 = vpop.f32.mrf.mxu0
      %v8200 = vadd.f32 0.0, %v8199
      %8201 = vmatmul.bf16.gmra.mxu0 %v8135
      %v8202 = vpop.f32.mrf.mxu0
      %v8203 = vadd.f32 0.0, %v8202
      %v8204 = vpop.f32.mrf.mxu0
      %v8205 = vadd.f32 0.0, %v8204
      %8206 = vmatmul.bf16.gmra.mxu0 %v8138
      %v8207 = vpop.f32.mrf.mxu0
      %v8208 = vadd.f32 0.0, %v8207
      %v8209 = vpop.f32.mrf.mxu0
      %v8210 = vadd.f32 0.0, %v8209
      %8211 = vmatmul.bf16.gmra.mxu0 %v8141
      %v8212 = vpop.f32.mrf.mxu0
      %v8213 = vadd.f32 0.0, %v8212
      %v8214 = vpop.f32.mrf.mxu0
      %v8215 = vadd.f32 0.0, %v8214
      %8216 = vmatmul.bf16.gmra.mxu0 %v8144
      %v8217 = vpop.f32.mrf.mxu0
      %v8218 = vadd.f32 0.0, %v8217
      %v8219 = vpop.f32.mrf.mxu0
      %v8220 = vadd.f32 0.0, %v8219
      %8221 = vmatmul.bf16.gmra.mxu0 %v8147
      %v8222 = vpop.f32.mrf.mxu0
      %v8223 = vadd.f32 0.0, %v8222
      %v8224 = vpop.f32.mrf.mxu0
      %v8225 = vadd.f32 0.0, %v8224
      %8226 = vmatmul.bf16.gmra.mxu0 %v8150
      %v8227 = vpop.f32.mrf.mxu0
      %v8228 = vadd.f32 0.0, %v8227
      %v8229 = vpop.f32.mrf.mxu0
      %v8230 = vadd.f32 0.0, %v8229
      %8231 = vmatmul.bf16.gmra.mxu0 %v8153
      %v8232 = vpop.f32.mrf.mxu0
      %v8233 = vadd.f32 0.0, %v8232
      %v8234 = vpop.f32.mrf.mxu0
      %v8235 = vadd.f32 0.0, %v8234
      %8236 = vmatmul.bf16.gmra.mxu0 %v8156
      %v8237 = vpop.f32.mrf.mxu0
      %v8238 = vadd.f32 0.0, %v8237
      %v8239 = vpop.f32.mrf.mxu0
      %v8240 = vadd.f32 0.0, %v8239
      %8241 = vmatmul.bf16.gmra.mxu0 %v8159
      %v8242 = vpop.f32.mrf.mxu0
      %v8243 = vadd.f32 0.0, %v8242
      %v8244 = vpop.f32.mrf.mxu0
      %v8245 = vadd.f32 0.0, %v8244
      %8246 = vmatmul.bf16.gmra.mxu0 %v8162
      %v8247 = vpop.f32.mrf.mxu0
      %v8248 = vadd.f32 0.0, %v8247
      %v8249 = vpop.f32.mrf.mxu0
      %v8250 = vadd.f32 0.0, %v8249
      %8251 = vmatmul.bf16.gmra.mxu0 %v8165
      %v8252 = vpop.f32.mrf.mxu0
      %v8253 = vadd.f32 0.0, %v8252
      %v8254 = vpop.f32.mrf.mxu0
      %v8255 = vadd.f32 0.0, %v8254
      %8256 = vmatmul.bf16.gmra.mxu0 %v8168
      %v8257 = vpop.f32.mrf.mxu0
      %v8258 = vadd.f32 0.0, %v8257
      %v8259 = vpop.f32.mrf.mxu0
      %v8260 = vadd.f32 0.0, %v8259
      %8261 = vdwg.mxu0
      %v8262 = vadd.f32 %v7608, %v8183
      %v8263 = vadd.f32 %v7609, %v8185
      %v8264 = vadd.f32 %v7610, %v8188
      %v8265 = vadd.f32 %v7611, %v8190
      %v8266 = vadd.f32 %v7612, %v8193
      %v8267 = vadd.f32 %v7613, %v8195
      %v8268 = vadd.f32 %v7614, %v8198
      %v8269 = vadd.f32 %v7615, %v8200
      %v8270 = vadd.f32 %v7616, %v8203
      %v8271 = vadd.f32 %v7617, %v8205
      %v8272 = vadd.f32 %v7618, %v8208
      %v8273 = vadd.f32 %v7619, %v8210
      %v8274 = vadd.f32 %v7620, %v8213
      %v8275 = vadd.f32 %v7621, %v8215
      %v8276 = vadd.f32 %v7622, %v8218
      %v8277 = vadd.f32 %v7623, %v8220
      %v8278 = vadd.f32 %v7624, %v8223
      %v8279 = vadd.f32 %v7625, %v8225
      %v8280 = vadd.f32 %v7626, %v8228
      %v8281 = vadd.f32 %v7627, %v8230
      %v8282 = vadd.f32 %v7628, %v8233
      %v8283 = vadd.f32 %v7629, %v8235
      %v8284 = vadd.f32 %v7630, %v8238
      %v8285 = vadd.f32 %v7631, %v8240
      %v8286 = vadd.f32 %v7632, %v8243
      %v8287 = vadd.f32 %v7633, %v8245
      %v8288 = vadd.f32 %v7634, %v8248
      %v8289 = vadd.f32 %v7635, %v8250
      %v8290 = vadd.f32 %v7636, %v8253
      %v8291 = vadd.f32 %v7637, %v8255
      %v8292 = vadd.f32 %v7638, %v8258
      %v8293 = vadd.f32 %v7639, %v8260
      %v8294 = vld [vmem:[%s7353] sm:$0xe]
      %v8295 = vld [vmem:[%s7353 + $0xc] sm:$0xe]
      %v8296 = vld [vmem:[%s7353 + $0x18] sm:$0xe]
      %v8297 = vld [vmem:[%s7353 + $0x24] sm:$0xe]
      %v8298 = vld [vmem:[%s7353 + $0x30] sm:$0xe]
      %v8299 = vld [vmem:[%s7353 + $0x3c] sm:$0xe]
      %v8300 = vld [vmem:[%s7353 + $0x48] sm:$0xe]
      %v8301 = vld [vmem:[%s7353 + $0x54] sm:$0xe]
      %v8302 = vld [vmem:[%s7353 + $0x60] sm:$0xe]
      %v8303 = vld [vmem:[%s7353 + $0x6c] sm:$0xe]
      %v8304 = vld [vmem:[%s7353 + $0x78] sm:$0xe]
      %v8305 = vld [vmem:[%s7353 + $0x84] sm:$0xe]
      %v8306 = vld [vmem:[%s7353 + $0x90] sm:$0xe]
      %v8307 = vld [vmem:[%s7353 + $0x9c] sm:$0xe]
      %v8308 = vld [vmem:[%s7353 + $0xa8] sm:$0xe]
      %v8309 = vld [vmem:[%s7353 + $0xb4] sm:$0xe]
      %v8358 = vrot.slane %v8294, 5
      %v8359 = vrot.slane %v8358, 4
      %v8360 = vrot.slane %v7641, 5
      %v8361 = vsel %vm1178, %v8359, %v8360
      %v8362 = vrot.slane %v8360, 4
      %v8363 = vrot.slane %v7642, 5
      %v8364 = vsel %vm1178, %v8362, %v8363
      %v8365 = vrot.slane %v8295, 5
      %v8366 = vrot.slane %v8365, 4
      %v8367 = vrot.slane %v7644, 5
      %v8368 = vsel %vm1178, %v8366, %v8367
      %v8369 = vrot.slane %v8367, 4
      %v8370 = vrot.slane %v7645, 5
      %v8371 = vsel %vm1178, %v8369, %v8370
      %v8372 = vrot.slane %v8296, 5
      %v8373 = vrot.slane %v8372, 4
      %v8374 = vrot.slane %v7647, 5
      %v8375 = vsel %vm1178, %v8373, %v8374
      %v8376 = vrot.slane %v8374, 4
      %v8377 = vrot.slane %v7648, 5
      %v8378 = vsel %vm1178, %v8376, %v8377
      %v8379 = vrot.slane %v8297, 5
      %v8380 = vrot.slane %v8379, 4
      %v8381 = vrot.slane %v7650, 5
      %v8382 = vsel %vm1178, %v8380, %v8381
      %v8383 = vrot.slane %v8381, 4
      %v8384 = vrot.slane %v7651, 5
      %v8385 = vsel %vm1178, %v8383, %v8384
      %v8386 = vrot.slane %v8298, 5
      %v8387 = vrot.slane %v8386, 4
      %v8388 = vrot.slane %v7653, 5
      %v8389 = vsel %vm1178, %v8387, %v8388
      %v8390 = vrot.slane %v8388, 4
      %v8391 = vrot.slane %v7654, 5
      %v8392 = vsel %vm1178, %v8390, %v8391
      %v8393 = vrot.slane %v8299, 5
      %v8394 = vrot.slane %v8393, 4
      %v8395 = vrot.slane %v7656, 5
      %v8396 = vsel %vm1178, %v8394, %v8395
      %v8397 = vrot.slane %v8395, 4
      %v8398 = vrot.slane %v7657, 5
      %v8399 = vsel %vm1178, %v8397, %v8398
      %v8400 = vrot.slane %v8300, 5
      %v8401 = vrot.slane %v8400, 4
      %v8402 = vrot.slane %v7659, 5
      %v8403 = vsel %vm1178, %v8401, %v8402
      %v8404 = vrot.slane %v8402, 4
      %v8405 = vrot.slane %v7660, 5
      %v8406 = vsel %vm1178, %v8404, %v8405
      %v8407 = vrot.slane %v8301, 5
      %v8408 = vrot.slane %v8407, 4
      %v8409 = vrot.slane %v7662, 5
      %v8410 = vsel %vm1178, %v8408, %v8409
      %v8411 = vrot.slane %v8409, 4
      %v8412 = vrot.slane %v7663, 5
      %v8413 = vsel %vm1178, %v8411, %v8412
      %v8414 = vrot.slane %v8302, 5
      %v8415 = vrot.slane %v8414, 4
      %v8416 = vrot.slane %v7665, 5
      %v8417 = vsel %vm1178, %v8415, %v8416
      %v8418 = vrot.slane %v8416, 4
      %v8419 = vrot.slane %v7666, 5
      %v8420 = vsel %vm1178, %v8418, %v8419
      %v8421 = vrot.slane %v8303, 5
      %v8422 = vrot.slane %v8421, 4
      %v8423 = vrot.slane %v7668, 5
      %v8424 = vsel %vm1178, %v8422, %v8423
      %v8425 = vrot.slane %v8423, 4
      %v8426 = vrot.slane %v7669, 5
      %v8427 = vsel %vm1178, %v8425, %v8426
      %v8428 = vrot.slane %v8304, 5
      %v8429 = vrot.slane %v8428, 4
      %v8430 = vrot.slane %v7671, 5
      %v8431 = vsel %vm1178, %v8429, %v8430
      %v8432 = vrot.slane %v8430, 4
      %v8433 = vrot.slane %v7672, 5
      %v8434 = vsel %vm1178, %v8432, %v8433
      %v8435 = vrot.slane %v8305, 5
      %v8436 = vrot.slane %v8435, 4
      %v8437 = vrot.slane %v7674, 5
      %v8438 = vsel %vm1178, %v8436, %v8437
      %v8439 = vrot.slane %v8437, 4
      %v8440 = vrot.slane %v7675, 5
      %v8441 = vsel %vm1178, %v8439, %v8440
      %v8442 = vrot.slane %v8306, 5
      %v8443 = vrot.slane %v8442, 4
      %v8444 = vrot.slane %v7677, 5
      %v8445 = vsel %vm1178, %v8443, %v8444
      %v8446 = vrot.slane %v8444, 4
      %v8447 = vrot.slane %v7678, 5
      %v8448 = vsel %vm1178, %v8446, %v8447
      %v8449 = vrot.slane %v8307, 5
      %v8450 = vrot.slane %v8449, 4
      %v8451 = vrot.slane %v7680, 5
      %v8452 = vsel %vm1178, %v8450, %v8451
      %v8453 = vrot.slane %v8451, 4
      %v8454 = vrot.slane %v7681, 5
      %v8455 = vsel %vm1178, %v8453, %v8454
      %v8456 = vrot.slane %v8308, 5
      %v8457 = vrot.slane %v8456, 4
      %v8458 = vrot.slane %v7683, 5
      %v8459 = vsel %vm1178, %v8457, %v8458
      %v8460 = vrot.slane %v8458, 4
      %v8461 = vrot.slane %v7684, 5
      %v8462 = vsel %vm1178, %v8460, %v8461
      %v8463 = vrot.slane %v8309, 5
      %v8464 = vrot.slane %v8463, 4
      %v8465 = vrot.slane %v7686, 5
      %v8466 = vsel %vm1178, %v8464, %v8465
      %v8467 = vrot.slane %v8465, 4
      %v8468 = vrot.slane %v7687, 5
      %v8469 = vsel %vm1178, %v8467, %v8468
      %s8470 = scalar_lea.vmem %s3, 32
      %v8471 = vld [vmem:[%s8470] sm:$0xf]
      %v8472 = vunpack.c.l.b16 %v8361
      %v8473 = vunpack.c.l.b16 %v8364
      %v8474 = vunpack.c.l.b16 %v8368
      %v8475 = vunpack.c.l.b16 %v8371
      %v8476 = vunpack.c.l.b16 %v8375
      %v8477 = vunpack.c.l.b16 %v8378
      %v8478 = vunpack.c.l.b16 %v8382
      %v8479 = vunpack.c.l.b16 %v8385
      %v8480 = vunpack.c.l.b16 %v8389
      %v8481 = vunpack.c.l.b16 %v8392
      %v8482 = vunpack.c.l.b16 %v8396
      %v8483 = vunpack.c.l.b16 %v8399
      %v8484 = vunpack.c.l.b16 %v8403
      %v8485 = vunpack.c.l.b16 %v8406
      %v8486 = vunpack.c.l.b16 %v8410
      %v8487 = vunpack.c.l.b16 %v8413
      %v8488 = vunpack.c.l.b16 %v8417
      %v8489 = vunpack.c.l.b16 %v8420
      %v8490 = vunpack.c.l.b16 %v8424
      %v8491 = vunpack.c.l.b16 %v8427
      %v8492 = vunpack.c.l.b16 %v8431
      %v8493 = vunpack.c.l.b16 %v8434
      %v8494 = vunpack.c.l.b16 %v8438
      %v8495 = vunpack.c.l.b16 %v8441
      %v8496 = vunpack.c.l.b16 %v8445
      %v8497 = vunpack.c.l.b16 %v8448
      %v8498 = vunpack.c.l.b16 %v8452
      %v8499 = vunpack.c.l.b16 %v8455
      %v8500 = vunpack.c.l.b16 %v8459
      %v8501 = vunpack.c.l.b16 %v8462
      %v8502 = vunpack.c.l.b16 %v8466
      %v8503 = vunpack.c.l.b16 %v8469
      %v8504 = vpack.c.b16 %v8473, %v8472
      %v8505 = vpack.c.b16 %v8475, %v8474
      %v8506 = vpack.c.b16 %v8477, %v8476
      %v8507 = vpack.c.b16 %v8479, %v8478
      %v8508 = vpack.c.b16 %v8481, %v8480
      %v8509 = vpack.c.b16 %v8483, %v8482
      %v8510 = vpack.c.b16 %v8485, %v8484
      %v8511 = vpack.c.b16 %v8487, %v8486
      %v8512 = vpack.c.b16 %v8489, %v8488
      %v8513 = vpack.c.b16 %v8491, %v8490
      %v8514 = vpack.c.b16 %v8493, %v8492
      %v8515 = vpack.c.b16 %v8495, %v8494
      %v8516 = vpack.c.b16 %v8497, %v8496
      %v8517 = vpack.c.b16 %v8499, %v8498
      %v8518 = vpack.c.b16 %v8501, %v8500
      %v8519 = vpack.c.b16 %v8503, %v8502
      %v8521 = vsel %vm5271, %v8504, 0
      %v8524 = vsel %vm5271, %v8505, 0
      %v8527 = vsel %vm5271, %v8506, 0
      %v8530 = vsel %vm5271, %v8507, 0
      %v8533 = vsel %vm5271, %v8508, 0
      %v8536 = vsel %vm5271, %v8509, 0
      %v8539 = vsel %vm5271, %v8510, 0
      %v8542 = vsel %vm5271, %v8511, 0
      %v8545 = vsel %vm5271, %v8512, 0
      %v8548 = vsel %vm5271, %v8513, 0
      %v8551 = vsel %vm5271, %v8514, 0
      %v8554 = vsel %vm5271, %v8515, 0
      %v8557 = vsel %vm5271, %v8516, 0
      %v8560 = vsel %vm5271, %v8517, 0
      %v8563 = vsel %vm5271, %v8518, 0
      %v8566 = vsel %vm5271, %v8519, 0
      %v8569 = vsel %vm5320, %v8471, 0
      %8571 = vmatpush.bf16.msra.mxu0 0
      %8572 = vmatpush.bf16.msra.mxu0 0
      %8573 = vmatpush.bf16.msra.mxu0 0
      %8574 = vmatpush.bf16.msra.mxu0 0
      %8575 = vmatpush.bf16.msra.mxu0 0
      %8576 = vmatpush.bf16.msra.mxu0 0
      %8577 = vmatpush.bf16.msra.mxu0 0
      %8578 = vmatpush.bf16.msra.mxu0 %v8569
      %8579 = vmatmul.bf16.gmra.mxu0 %v8521
      %v8580 = vpop.f32.mrf.mxu0
      %v8581 = vadd.f32 0.0, %v8580
      %v8582 = vpop.f32.mrf.mxu0
      %v8583 = vadd.f32 0.0, %v8582
      %8584 = vmatmul.bf16.gmra.mxu0 %v8524
      %v8585 = vpop.f32.mrf.mxu0
      %v8586 = vadd.f32 0.0, %v8585
      %v8587 = vpop.f32.mrf.mxu0
      %v8588 = vadd.f32 0.0, %v8587
      %8589 = vmatmul.bf16.gmra.mxu0 %v8527
      %v8590 = vpop.f32.mrf.mxu0
      %v8591 = vadd.f32 0.0, %v8590
      %v8592 = vpop.f32.mrf.mxu0
      %v8593 = vadd.f32 0.0, %v8592
      %8594 = vmatmul.bf16.gmra.mxu0 %v8530
      %v8595 = vpop.f32.mrf.mxu0
      %v8596 = vadd.f32 0.0, %v8595
      %v8597 = vpop.f32.mrf.mxu0
      %v8598 = vadd.f32 0.0, %v8597
      %8599 = vmatmul.bf16.gmra.mxu0 %v8533
      %v8600 = vpop.f32.mrf.mxu0
      %v8601 = vadd.f32 0.0, %v8600
      %v8602 = vpop.f32.mrf.mxu0
      %v8603 = vadd.f32 0.0, %v8602
      %8604 = vmatmul.bf16.gmra.mxu0 %v8536
      %v8605 = vpop.f32.mrf.mxu0
      %v8606 = vadd.f32 0.0, %v8605
      %v8607 = vpop.f32.mrf.mxu0
      %v8608 = vadd.f32 0.0, %v8607
      %8609 = vmatmul.bf16.gmra.mxu0 %v8539
      %v8610 = vpop.f32.mrf.mxu0
      %v8611 = vadd.f32 0.0, %v8610
      %v8612 = vpop.f32.mrf.mxu0
      %v8613 = vadd.f32 0.0, %v8612
      %8614 = vmatmul.bf16.gmra.mxu0 %v8542
      %v8615 = vpop.f32.mrf.mxu0
      %v8616 = vadd.f32 0.0, %v8615
      %v8617 = vpop.f32.mrf.mxu0
      %v8618 = vadd.f32 0.0, %v8617
      %8619 = vmatmul.bf16.gmra.mxu0 %v8545
      %v8620 = vpop.f32.mrf.mxu0
      %v8621 = vadd.f32 0.0, %v8620
      %v8622 = vpop.f32.mrf.mxu0
      %v8623 = vadd.f32 0.0, %v8622
      %8624 = vmatmul.bf16.gmra.mxu0 %v8548
      %v8625 = vpop.f32.mrf.mxu0
      %v8626 = vadd.f32 0.0, %v8625
      %v8627 = vpop.f32.mrf.mxu0
      %v8628 = vadd.f32 0.0, %v8627
      %8629 = vmatmul.bf16.gmra.mxu0 %v8551
      %v8630 = vpop.f32.mrf.mxu0
      %v8631 = vadd.f32 0.0, %v8630
      %v8632 = vpop.f32.mrf.mxu0
      %v8633 = vadd.f32 0.0, %v8632
      %8634 = vmatmul.bf16.gmra.mxu0 %v8554
      %v8635 = vpop.f32.mrf.mxu0
      %v8636 = vadd.f32 0.0, %v8635
      %v8637 = vpop.f32.mrf.mxu0
      %v8638 = vadd.f32 0.0, %v8637
      %8639 = vmatmul.bf16.gmra.mxu0 %v8557
      %v8640 = vpop.f32.mrf.mxu0
      %v8641 = vadd.f32 0.0, %v8640
      %v8642 = vpop.f32.mrf.mxu0
      %v8643 = vadd.f32 0.0, %v8642
      %8644 = vmatmul.bf16.gmra.mxu0 %v8560
      %v8645 = vpop.f32.mrf.mxu0
      %v8646 = vadd.f32 0.0, %v8645
      %v8647 = vpop.f32.mrf.mxu0
      %v8648 = vadd.f32 0.0, %v8647
      %8649 = vmatmul.bf16.gmra.mxu0 %v8563
      %v8650 = vpop.f32.mrf.mxu0
      %v8651 = vadd.f32 0.0, %v8650
      %v8652 = vpop.f32.mrf.mxu0
      %v8653 = vadd.f32 0.0, %v8652
      %8654 = vmatmul.bf16.gmra.mxu0 %v8566
      %v8655 = vpop.f32.mrf.mxu0
      %v8656 = vadd.f32 0.0, %v8655
      %v8657 = vpop.f32.mrf.mxu0
      %v8658 = vadd.f32 0.0, %v8657
      %8659 = vdwg.mxu0
      %v8660 = vadd.f32 %v8262, %v8581
      %v8661 = vadd.f32 %v8263, %v8583
      %v8662 = vadd.f32 %v8264, %v8586
      %v8663 = vadd.f32 %v8265, %v8588
      %v8664 = vadd.f32 %v8266, %v8591
      %v8665 = vadd.f32 %v8267, %v8593
      %v8666 = vadd.f32 %v8268, %v8596
      %v8667 = vadd.f32 %v8269, %v8598
      %v8668 = vadd.f32 %v8270, %v8601
      %v8669 = vadd.f32 %v8271, %v8603
      %v8670 = vadd.f32 %v8272, %v8606
      %v8671 = vadd.f32 %v8273, %v8608
      %v8672 = vadd.f32 %v8274, %v8611
      %v8673 = vadd.f32 %v8275, %v8613
      %v8674 = vadd.f32 %v8276, %v8616
      %v8675 = vadd.f32 %v8277, %v8618
      %v8676 = vadd.f32 %v8278, %v8621
      %v8677 = vadd.f32 %v8279, %v8623
      %v8678 = vadd.f32 %v8280, %v8626
      %v8679 = vadd.f32 %v8281, %v8628
      %v8680 = vadd.f32 %v8282, %v8631
      %v8681 = vadd.f32 %v8283, %v8633
      %v8682 = vadd.f32 %v8284, %v8636
      %v8683 = vadd.f32 %v8285, %v8638
      %v8684 = vadd.f32 %v8286, %v8641
      %v8685 = vadd.f32 %v8287, %v8643
      %v8686 = vadd.f32 %v8288, %v8646
      %v8687 = vadd.f32 %v8289, %v8648
      %v8688 = vadd.f32 %v8290, %v8651
      %v8689 = vadd.f32 %v8291, %v8653
      %v8690 = vadd.f32 %v8292, %v8656
      %v8691 = vadd.f32 %v8293, %v8658
      %v8692 = vld [vmem:[%s4] sm:$0x1]
      %v8694 = vperm.slane %v8692, 0
      %v8696 = vadd.f32 %v8660, %v8694
      %v8697 = vadd.f32 %v8661, %v8694
      %v8698 = vadd.f32 %v8662, %v8694
      %v8699 = vadd.f32 %v8663, %v8694
      %v8700 = vadd.f32 %v8664, %v8694
      %v8701 = vadd.f32 %v8665, %v8694
      %v8702 = vadd.f32 %v8666, %v8694
      %v8703 = vadd.f32 %v8667, %v8694
      %v8704 = vadd.f32 %v8668, %v8694
      %v8705 = vadd.f32 %v8669, %v8694
      %v8706 = vadd.f32 %v8670, %v8694
      %v8707 = vadd.f32 %v8671, %v8694
      %v8708 = vadd.f32 %v8672, %v8694
      %v8709 = vadd.f32 %v8673, %v8694
      %v8710 = vadd.f32 %v8674, %v8694
      %v8711 = vadd.f32 %v8675, %v8694
      %v8712 = vadd.f32 %v8676, %v8694
      %v8713 = vadd.f32 %v8677, %v8694
      %v8714 = vadd.f32 %v8678, %v8694
      %v8715 = vadd.f32 %v8679, %v8694
      %v8716 = vadd.f32 %v8680, %v8694
      %v8717 = vadd.f32 %v8681, %v8694
      %v8718 = vadd.f32 %v8682, %v8694
      %v8719 = vadd.f32 %v8683, %v8694
      %v8720 = vadd.f32 %v8684, %v8694
      %v8721 = vadd.f32 %v8685, %v8694
      %v8722 = vadd.f32 %v8686, %v8694
      %v8723 = vadd.f32 %v8687, %v8694
      %v8724 = vadd.f32 %v8688, %v8694
      %v8725 = vadd.f32 %v8689, %v8694
      %v8726 = vadd.f32 %v8690, %v8694
      %v8727 = vadd.f32 %v8691, %v8694
      %v8728 = vld [vmem:[%s1513] sm:$0xf]
      %v8729 = vld [vmem:[%s1513 + $0x4] sm:$0xf]
      %v8730 = vld [vmem:[%s1513 + $0x8] sm:$0x1]
      %v8731 = vld [vmem:[%s1513 + $0xc] sm:$0xf]
      %v8732 = vld [vmem:[%s1513 + $0x10] sm:$0xf]
      %v8733 = vld [vmem:[%s1513 + $0x14] sm:$0x1]
      %v8734 = vld [vmem:[%s1513 + $0x18] sm:$0xf]
      %v8735 = vld [vmem:[%s1513 + $0x1c] sm:$0xf]
      %v8736 = vld [vmem:[%s1513 + $0x20] sm:$0x1]
      %v8737 = vld [vmem:[%s1513 + $0x24] sm:$0xf]
      %v8738 = vld [vmem:[%s1513 + $0x28] sm:$0xf]
      %v8739 = vld [vmem:[%s1513 + $0x2c] sm:$0x1]
      %v8740 = vld [vmem:[%s1513 + $0x30] sm:$0xf]
      %v8741 = vld [vmem:[%s1513 + $0x34] sm:$0xf]
      %v8742 = vld [vmem:[%s1513 + $0x38] sm:$0x1]
      %v8743 = vld [vmem:[%s1513 + $0x3c] sm:$0xf]
      %v8744 = vld [vmem:[%s1513 + $0x40] sm:$0xf]
      %v8745 = vld [vmem:[%s1513 + $0x44] sm:$0x1]
      %v8746 = vld [vmem:[%s1513 + $0x48] sm:$0xf]
      %v8747 = vld [vmem:[%s1513 + $0x4c] sm:$0xf]
      %v8748 = vld [vmem:[%s1513 + $0x50] sm:$0x1]
      %v8749 = vld [vmem:[%s1513 + $0x54] sm:$0xf]
      %v8750 = vld [vmem:[%s1513 + $0x58] sm:$0xf]
      %v8751 = vld [vmem:[%s1513 + $0x5c] sm:$0x1]
      %v8752 = vld [vmem:[%s1513 + $0x60] sm:$0xf]
      %v8753 = vld [vmem:[%s1513 + $0x64] sm:$0xf]
      %v8754 = vld [vmem:[%s1513 + $0x68] sm:$0x1]
      %v8755 = vld [vmem:[%s1513 + $0x6c] sm:$0xf]
      %v8756 = vld [vmem:[%s1513 + $0x70] sm:$0xf]
      %v8757 = vld [vmem:[%s1513 + $0x74] sm:$0x1]
      %v8758 = vld [vmem:[%s1513 + $0x78] sm:$0xf]
      %v8759 = vld [vmem:[%s1513 + $0x7c] sm:$0xf]
      %v8760 = vld [vmem:[%s1513 + $0x80] sm:$0x1]
      %v8761 = vld [vmem:[%s1513 + $0x84] sm:$0xf]
      %v8762 = vld [vmem:[%s1513 + $0x88] sm:$0xf]
      %v8763 = vld [vmem:[%s1513 + $0x8c] sm:$0x1]
      %v8764 = vld [vmem:[%s1513 + $0x90] sm:$0xf]
      %v8765 = vld [vmem:[%s1513 + $0x94] sm:$0xf]
      %v8766 = vld [vmem:[%s1513 + $0x98] sm:$0x1]
      %v8767 = vld [vmem:[%s1513 + $0x9c] sm:$0xf]
      %v8768 = vld [vmem:[%s1513 + $0xa0] sm:$0xf]
      %v8769 = vld [vmem:[%s1513 + $0xa4] sm:$0x1]
      %v8770 = vld [vmem:[%s1513 + $0xa8] sm:$0xf]
      %v8771 = vld [vmem:[%s1513 + $0xac] sm:$0xf]
      %v8772 = vld [vmem:[%s1513 + $0xb0] sm:$0x1]
      %v8773 = vld [vmem:[%s1513 + $0xb4] sm:$0xf]
      %v8774 = vld [vmem:[%s1513 + $0xb8] sm:$0xf]
      %v8775 = vld [vmem:[%s1513 + $0xbc] sm:$0x1]
      %v8777 = vshrl.u32 %v8728, 16
      %v8779 = vrot.slane %v8777, 4
      %v8780 = vshll.u32 %v8728, 16
      %v8782 = vrot.slane %v8780, 5
      %v8783 = vor.u32 %v8779, %v8782
      %v8784 = vrot.slane %v8783, 4
      %v8786 = vshll.u32 %v8729, 16
      %v8788 = vrot.slane %v8786, 5
      %v8789 = vsel %vm331, %v8784, %v8788
      %v8790 = vshrl.u32 %v8729, 16
      %v8792 = vrot.slane %v8790, 4
      %v8793 = vor.u32 %v8792, %v8788
      %v8794 = vrot.slane %v8793, 4
      %v8796 = vshll.u32 %v8730, 16
      %v8798 = vrot.slane %v8796, 5
      %v8799 = vsel %vm331, %v8794, %v8798
      %v8801 = vshrl.u32 %v8731, 16
      %v8803 = vrot.slane %v8801, 4
      %v8804 = vshll.u32 %v8731, 16
      %v8806 = vrot.slane %v8804, 5
      %v8807 = vor.u32 %v8803, %v8806
      %v8808 = vrot.slane %v8807, 4
      %v8810 = vshll.u32 %v8732, 16
      %v8812 = vrot.slane %v8810, 5
      %v8813 = vsel %vm331, %v8808, %v8812
      %v8814 = vshrl.u32 %v8732, 16
      %v8816 = vrot.slane %v8814, 4
      %v8817 = vor.u32 %v8816, %v8812
      %v8818 = vrot.slane %v8817, 4
      %v8820 = vshll.u32 %v8733, 16
      %v8822 = vrot.slane %v8820, 5
      %v8823 = vsel %vm331, %v8818, %v8822
      %v8825 = vshrl.u32 %v8734, 16
      %v8827 = vrot.slane %v8825, 4
      %v8828 = vshll.u32 %v8734, 16
      %v8830 = vrot.slane %v8828, 5
      %v8831 = vor.u32 %v8827, %v8830
      %v8832 = vrot.slane %v8831, 4
      %v8834 = vshll.u32 %v8735, 16
      %v8836 = vrot.slane %v8834, 5
      %v8837 = vsel %vm331, %v8832, %v8836
      %v8838 = vshrl.u32 %v8735, 16
      %v8840 = vrot.slane %v8838, 4
      %v8841 = vor.u32 %v8840, %v8836
      %v8842 = vrot.slane %v8841, 4
      %v8844 = vshll.u32 %v8736, 16
      %v8846 = vrot.slane %v8844, 5
      %v8847 = vsel %vm331, %v8842, %v8846
      %v8849 = vshrl.u32 %v8737, 16
      %v8851 = vrot.slane %v8849, 4
      %v8852 = vshll.u32 %v8737, 16
      %v8854 = vrot.slane %v8852, 5
      %v8855 = vor.u32 %v8851, %v8854
      %v8856 = vrot.slane %v8855, 4
      %v8858 = vshll.u32 %v8738, 16
      %v8860 = vrot.slane %v8858, 5
      %v8861 = vsel %vm331, %v8856, %v8860
      %v8862 = vshrl.u32 %v8738, 16
      %v8864 = vrot.slane %v8862, 4
      %v8865 = vor.u32 %v8864, %v8860
      %v8866 = vrot.slane %v8865, 4
      %v8868 = vshll.u32 %v8739, 16
      %v8870 = vrot.slane %v8868, 5
      %v8871 = vsel %vm331, %v8866, %v8870
      %v8873 = vshrl.u32 %v8740, 16
      %v8875 = vrot.slane %v8873, 4
      %v8876 = vshll.u32 %v8740, 16
      %v8878 = vrot.slane %v8876, 5
      %v8879 = vor.u32 %v8875, %v8878
      %v8880 = vrot.slane %v8879, 4
      %v8882 = vshll.u32 %v8741, 16
      %v8884 = vrot.slane %v8882, 5
      %v8885 = vsel %vm331, %v8880, %v8884
      %v8886 = vshrl.u32 %v8741, 16
      %v8888 = vrot.slane %v8886, 4
      %v8889 = vor.u32 %v8888, %v8884
      %v8890 = vrot.slane %v8889, 4
      %v8892 = vshll.u32 %v8742, 16
      %v8894 = vrot.slane %v8892, 5
      %v8895 = vsel %vm331, %v8890, %v8894
      %v8897 = vshrl.u32 %v8743, 16
      %v8899 = vrot.slane %v8897, 4
      %v8900 = vshll.u32 %v8743, 16
      %v8902 = vrot.slane %v8900, 5
      %v8903 = vor.u32 %v8899, %v8902
      %v8904 = vrot.slane %v8903, 4
      %v8906 = vshll.u32 %v8744, 16
      %v8908 = vrot.slane %v8906, 5
      %v8909 = vsel %vm331, %v8904, %v8908
      %v8910 = vshrl.u32 %v8744, 16
      %v8912 = vrot.slane %v8910, 4
      %v8913 = vor.u32 %v8912, %v8908
      %v8914 = vrot.slane %v8913, 4
      %v8916 = vshll.u32 %v8745, 16
      %v8918 = vrot.slane %v8916, 5
      %v8919 = vsel %vm331, %v8914, %v8918
      %v8921 = vshrl.u32 %v8746, 16
      %v8923 = vrot.slane %v8921, 4
      %v8924 = vshll.u32 %v8746, 16
      %v8926 = vrot.slane %v8924, 5
      %v8927 = vor.u32 %v8923, %v8926
      %v8928 = vrot.slane %v8927, 4
      %v8930 = vshll.u32 %v8747, 16
      %v8932 = vrot.slane %v8930, 5
      %v8933 = vsel %vm331, %v8928, %v8932
      %v8934 = vshrl.u32 %v8747, 16
      %v8936 = vrot.slane %v8934, 4
      %v8937 = vor.u32 %v8936, %v8932
      %v8938 = vrot.slane %v8937, 4
      %v8940 = vshll.u32 %v8748, 16
      %v8942 = vrot.slane %v8940, 5
      %v8943 = vsel %vm331, %v8938, %v8942
      %v8945 = vshrl.u32 %v8749, 16
      %v8947 = vrot.slane %v8945, 4
      %v8948 = vshll.u32 %v8749, 16
      %v8950 = vrot.slane %v8948, 5
      %v8951 = vor.u32 %v8947, %v8950
      %v8952 = vrot.slane %v8951, 4
      %v8954 = vshll.u32 %v8750, 16
      %v8956 = vrot.slane %v8954, 5
      %v8957 = vsel %vm331, %v8952, %v8956
      %v8958 = vshrl.u32 %v8750, 16
      %v8960 = vrot.slane %v8958, 4
      %v8961 = vor.u32 %v8960, %v8956
      %v8962 = vrot.slane %v8961, 4
      %v8964 = vshll.u32 %v8751, 16
      %v8966 = vrot.slane %v8964, 5
      %v8967 = vsel %vm331, %v8962, %v8966
      %v8969 = vshrl.u32 %v8752, 16
      %v8971 = vrot.slane %v8969, 4
      %v8972 = vshll.u32 %v8752, 16
      %v8974 = vrot.slane %v8972, 5
      %v8975 = vor.u32 %v8971, %v8974
      %v8976 = vrot.slane %v8975, 4
      %v8978 = vshll.u32 %v8753, 16
      %v8980 = vrot.slane %v8978, 5
      %v8981 = vsel %vm331, %v8976, %v8980
      %v8982 = vshrl.u32 %v8753, 16
      %v8984 = vrot.slane %v8982, 4
      %v8985 = vor.u32 %v8984, %v8980
      %v8986 = vrot.slane %v8985, 4
      %v8988 = vshll.u32 %v8754, 16
      %v8990 = vrot.slane %v8988, 5
      %v8991 = vsel %vm331, %v8986, %v8990
      %v8993 = vshrl.u32 %v8755, 16
      %v8995 = vrot.slane %v8993, 4
      %v8996 = vshll.u32 %v8755, 16
      %v8998 = vrot.slane %v8996, 5
      %v8999 = vor.u32 %v8995, %v8998
      %v9000 = vrot.slane %v8999, 4
      %v9002 = vshll.u32 %v8756, 16
      %v9004 = vrot.slane %v9002, 5
      %v9005 = vsel %vm331, %v9000, %v9004
      %v9006 = vshrl.u32 %v8756, 16
      %v9008 = vrot.slane %v9006, 4
      %v9009 = vor.u32 %v9008, %v9004
      %v9010 = vrot.slane %v9009, 4
      %v9012 = vshll.u32 %v8757, 16
      %v9014 = vrot.slane %v9012, 5
      %v9015 = vsel %vm331, %v9010, %v9014
      %v9017 = vshrl.u32 %v8758, 16
      %v9019 = vrot.slane %v9017, 4
      %v9020 = vshll.u32 %v8758, 16
      %v9022 = vrot.slane %v9020, 5
      %v9023 = vor.u32 %v9019, %v9022
      %v9024 = vrot.slane %v9023, 4
      %v9026 = vshll.u32 %v8759, 16
      %v9028 = vrot.slane %v9026, 5
      %v9029 = vsel %vm331, %v9024, %v9028
      %v9030 = vshrl.u32 %v8759, 16
      %v9032 = vrot.slane %v9030, 4
      %v9033 = vor.u32 %v9032, %v9028
      %v9034 = vrot.slane %v9033, 4
      %v9036 = vshll.u32 %v8760, 16
      %v9038 = vrot.slane %v9036, 5
      %v9039 = vsel %vm331, %v9034, %v9038
      %v9041 = vshrl.u32 %v8761, 16
      %v9043 = vrot.slane %v9041, 4
      %v9044 = vshll.u32 %v8761, 16
      %v9046 = vrot.slane %v9044, 5
      %v9047 = vor.u32 %v9043, %v9046
      %v9048 = vrot.slane %v9047, 4
      %v9050 = vshll.u32 %v8762, 16
      %v9052 = vrot.slane %v9050, 5
      %v9053 = vsel %vm331, %v9048, %v9052
      %v9054 = vshrl.u32 %v8762, 16
      %v9056 = vrot.slane %v9054, 4
      %v9057 = vor.u32 %v9056, %v9052
      %v9058 = vrot.slane %v9057, 4
      %v9060 = vshll.u32 %v8763, 16
      %v9062 = vrot.slane %v9060, 5
      %v9063 = vsel %vm331, %v9058, %v9062
      %v9065 = vshrl.u32 %v8764, 16
      %v9067 = vrot.slane %v9065, 4
      %v9068 = vshll.u32 %v8764, 16
      %v9070 = vrot.slane %v9068, 5
      %v9071 = vor.u32 %v9067, %v9070
      %v9072 = vrot.slane %v9071, 4
      %v9074 = vshll.u32 %v8765, 16
      %v9076 = vrot.slane %v9074, 5
      %v9077 = vsel %vm331, %v9072, %v9076
      %v9078 = vshrl.u32 %v8765, 16
      %v9080 = vrot.slane %v9078, 4
      %v9081 = vor.u32 %v9080, %v9076
      %v9082 = vrot.slane %v9081, 4
      %v9084 = vshll.u32 %v8766, 16
      %v9086 = vrot.slane %v9084, 5
      %v9087 = vsel %vm331, %v9082, %v9086
      %v9089 = vshrl.u32 %v8767, 16
      %v9091 = vrot.slane %v9089, 4
      %v9092 = vshll.u32 %v8767, 16
      %v9094 = vrot.slane %v9092, 5
      %v9095 = vor.u32 %v9091, %v9094
      %v9096 = vrot.slane %v9095, 4
      %v9098 = vshll.u32 %v8768, 16
      %v9100 = vrot.slane %v9098, 5
      %v9101 = vsel %vm331, %v9096, %v9100
      %v9102 = vshrl.u32 %v8768, 16
      %v9104 = vrot.slane %v9102, 4
      %v9105 = vor.u32 %v9104, %v9100
      %v9106 = vrot.slane %v9105, 4
      %v9108 = vshll.u32 %v8769, 16
      %v9110 = vrot.slane %v9108, 5
      %v9111 = vsel %vm331, %v9106, %v9110
      %v9113 = vshrl.u32 %v8770, 16
      %v9115 = vrot.slane %v9113, 4
      %v9116 = vshll.u32 %v8770, 16
      %v9118 = vrot.slane %v9116, 5
      %v9119 = vor.u32 %v9115, %v9118
      %v9120 = vrot.slane %v9119, 4
      %v9122 = vshll.u32 %v8771, 16
      %v9124 = vrot.slane %v9122, 5
      %v9125 = vsel %vm331, %v9120, %v9124
      %v9126 = vshrl.u32 %v8771, 16
      %v9128 = vrot.slane %v9126, 4
      %v9129 = vor.u32 %v9128, %v9124
      %v9130 = vrot.slane %v9129, 4
      %v9132 = vshll.u32 %v8772, 16
      %v9134 = vrot.slane %v9132, 5
      %v9135 = vsel %vm331, %v9130, %v9134
      %v9137 = vshrl.u32 %v8773, 16
      %v9139 = vrot.slane %v9137, 4
      %v9140 = vshll.u32 %v8773, 16
      %v9142 = vrot.slane %v9140, 5
      %v9143 = vor.u32 %v9139, %v9142
      %v9144 = vrot.slane %v9143, 4
      %v9146 = vshll.u32 %v8774, 16
      %v9148 = vrot.slane %v9146, 5
      %v9149 = vsel %vm331, %v9144, %v9148
      %v9150 = vshrl.u32 %v8774, 16
      %v9152 = vrot.slane %v9150, 4
      %v9153 = vor.u32 %v9152, %v9148
      %v9154 = vrot.slane %v9153, 4
      %v9156 = vshll.u32 %v8775, 16
      %v9158 = vrot.slane %v9156, 5
      %v9159 = vsel %vm331, %v9154, %v9158
      %v9160 = vld [vmem:[%s5] sm:$0x3]
      %v9161 = vunpack.c.l.b16 %v8789
      %v9162 = vunpack.c.l.b16 %v8799
      %v9163 = vunpack.c.l.b16 %v8813
      %v9164 = vunpack.c.l.b16 %v8823
      %v9165 = vunpack.c.l.b16 %v8837
      %v9166 = vunpack.c.l.b16 %v8847
      %v9167 = vunpack.c.l.b16 %v8861
      %v9168 = vunpack.c.l.b16 %v8871
      %v9169 = vunpack.c.l.b16 %v8885
      %v9170 = vunpack.c.l.b16 %v8895
      %v9171 = vunpack.c.l.b16 %v8909
      %v9172 = vunpack.c.l.b16 %v8919
      %v9173 = vunpack.c.l.b16 %v8933
      %v9174 = vunpack.c.l.b16 %v8943
      %v9175 = vunpack.c.l.b16 %v8957
      %v9176 = vunpack.c.l.b16 %v8967
      %v9177 = vunpack.c.l.b16 %v8981
      %v9178 = vunpack.c.l.b16 %v8991
      %v9179 = vunpack.c.l.b16 %v9005
      %v9180 = vunpack.c.l.b16 %v9015
      %v9181 = vunpack.c.l.b16 %v9029
      %v9182 = vunpack.c.l.b16 %v9039
      %v9183 = vunpack.c.l.b16 %v9053
      %v9184 = vunpack.c.l.b16 %v9063
      %v9185 = vunpack.c.l.b16 %v9077
      %v9186 = vunpack.c.l.b16 %v9087
      %v9187 = vunpack.c.l.b16 %v9101
      %v9188 = vunpack.c.l.b16 %v9111
      %v9189 = vunpack.c.l.b16 %v9125
      %v9190 = vunpack.c.l.b16 %v9135
      %v9191 = vunpack.c.l.b16 %v9149
      %v9192 = vunpack.c.l.b16 %v9159
      %v9193 = vpack.c.b16 %v9162, %v9161
      %v9194 = vpack.c.b16 %v9164, %v9163
      %v9195 = vpack.c.b16 %v9166, %v9165
      %v9196 = vpack.c.b16 %v9168, %v9167
      %v9197 = vpack.c.b16 %v9170, %v9169
      %v9198 = vpack.c.b16 %v9172, %v9171
      %v9199 = vpack.c.b16 %v9174, %v9173
      %v9200 = vpack.c.b16 %v9176, %v9175
      %v9201 = vpack.c.b16 %v9178, %v9177
      %v9202 = vpack.c.b16 %v9180, %v9179
      %v9203 = vpack.c.b16 %v9182, %v9181
      %v9204 = vpack.c.b16 %v9184, %v9183
      %v9205 = vpack.c.b16 %v9186, %v9185
      %v9206 = vpack.c.b16 %v9188, %v9187
      %v9207 = vpack.c.b16 %v9190, %v9189
      %v9208 = vpack.c.b16 %v9192, %v9191
      %v9210 = vsel %vm766, %v9193, 0
      %v9213 = vsel %vm766, %v9194, 0
      %v9216 = vsel %vm766, %v9195, 0
      %v9219 = vsel %vm766, %v9196, 0
      %v9222 = vsel %vm766, %v9197, 0
      %v9225 = vsel %vm766, %v9198, 0
      %v9228 = vsel %vm766, %v9199, 0
      %v9231 = vsel %vm766, %v9200, 0
      %v9234 = vsel %vm766, %v9201, 0
      %v9237 = vsel %vm766, %v9202, 0
      %v9240 = vsel %vm766, %v9203, 0
      %v9243 = vsel %vm766, %v9204, 0
      %v9246 = vsel %vm766, %v9205, 0
      %v9249 = vsel %vm766, %v9206, 0
      %v9252 = vsel %vm766, %v9207, 0
      %v9255 = vsel %vm766, %v9208, 0
      %v9258 = vsel %vm815, %v9160, 0
      %9260 = vmatpush.bf16.msra.mxu0 0
      %9261 = vmatpush.bf16.msra.mxu0 0
      %9262 = vmatpush.bf16.msra.mxu0 0
      %9263 = vmatpush.bf16.msra.mxu0 0
      %9264 = vmatpush.bf16.msra.mxu0 0
      %9265 = vmatpush.bf16.msra.mxu0 0
      %9266 = vmatpush.bf16.msra.mxu0 0
      %9267 = vmatpush.bf16.msra.mxu0 %v9258
      %9268 = vmatmul.bf16.gmra.mxu0 %v9210
      %v9269 = vpop.f32.mrf.mxu0
      %v9270 = vadd.f32 0.0, %v9269
      %v9271 = vpop.f32.mrf.mxu0
      %v9272 = vadd.f32 0.0, %v9271
      %9273 = vmatmul.bf16.gmra.mxu0 %v9213
      %v9274 = vpop.f32.mrf.mxu0
      %v9275 = vadd.f32 0.0, %v9274
      %v9276 = vpop.f32.mrf.mxu0
      %v9277 = vadd.f32 0.0, %v9276
      %9278 = vmatmul.bf16.gmra.mxu0 %v9216
      %v9279 = vpop.f32.mrf.mxu0
      %v9280 = vadd.f32 0.0, %v9279
      %v9281 = vpop.f32.mrf.mxu0
      %v9282 = vadd.f32 0.0, %v9281
      %9283 = vmatmul.bf16.gmra.mxu0 %v9219
      %v9284 = vpop.f32.mrf.mxu0
      %v9285 = vadd.f32 0.0, %v9284
      %v9286 = vpop.f32.mrf.mxu0
      %v9287 = vadd.f32 0.0, %v9286
      %9288 = vmatmul.bf16.gmra.mxu0 %v9222
      %v9289 = vpop.f32.mrf.mxu0
      %v9290 = vadd.f32 0.0, %v9289
      %v9291 = vpop.f32.mrf.mxu0
      %v9292 = vadd.f32 0.0, %v9291
      %9293 = vmatmul.bf16.gmra.mxu0 %v9225
      %v9294 = vpop.f32.mrf.mxu0
      %v9295 = vadd.f32 0.0, %v9294
      %v9296 = vpop.f32.mrf.mxu0
      %v9297 = vadd.f32 0.0, %v9296
      %9298 = vmatmul.bf16.gmra.mxu0 %v9228
      %v9299 = vpop.f32.mrf.mxu0
      %v9300 = vadd.f32 0.0, %v9299
      %v9301 = vpop.f32.mrf.mxu0
      %v9302 = vadd.f32 0.0, %v9301
      %9303 = vmatmul.bf16.gmra.mxu0 %v9231
      %v9304 = vpop.f32.mrf.mxu0
      %v9305 = vadd.f32 0.0, %v9304
      %v9306 = vpop.f32.mrf.mxu0
      %v9307 = vadd.f32 0.0, %v9306
      %9308 = vmatmul.bf16.gmra.mxu0 %v9234
      %v9309 = vpop.f32.mrf.mxu0
      %v9310 = vadd.f32 0.0, %v9309
      %v9311 = vpop.f32.mrf.mxu0
      %v9312 = vadd.f32 0.0, %v9311
      %9313 = vmatmul.bf16.gmra.mxu0 %v9237
      %v9314 = vpop.f32.mrf.mxu0
      %v9315 = vadd.f32 0.0, %v9314
      %v9316 = vpop.f32.mrf.mxu0
      %v9317 = vadd.f32 0.0, %v9316
      %9318 = vmatmul.bf16.gmra.mxu0 %v9240
      %v9319 = vpop.f32.mrf.mxu0
      %v9320 = vadd.f32 0.0, %v9319
      %v9321 = vpop.f32.mrf.mxu0
      %v9322 = vadd.f32 0.0, %v9321
      %9323 = vmatmul.bf16.gmra.mxu0 %v9243
      %v9324 = vpop.f32.mrf.mxu0
      %v9325 = vadd.f32 0.0, %v9324
      %v9326 = vpop.f32.mrf.mxu0
      %v9327 = vadd.f32 0.0, %v9326
      %9328 = vmatmul.bf16.gmra.mxu0 %v9246
      %v9329 = vpop.f32.mrf.mxu0
      %v9330 = vadd.f32 0.0, %v9329
      %v9331 = vpop.f32.mrf.mxu0
      %v9332 = vadd.f32 0.0, %v9331
      %9333 = vmatmul.bf16.gmra.mxu0 %v9249
      %v9334 = vpop.f32.mrf.mxu0
      %v9335 = vadd.f32 0.0, %v9334
      %v9336 = vpop.f32.mrf.mxu0
      %v9337 = vadd.f32 0.0, %v9336
      %9338 = vmatmul.bf16.gmra.mxu0 %v9252
      %v9339 = vpop.f32.mrf.mxu0
      %v9340 = vadd.f32 0.0, %v9339
      %v9341 = vpop.f32.mrf.mxu0
      %v9342 = vadd.f32 0.0, %v9341
      %9343 = vmatmul.bf16.gmra.mxu0 %v9255
      %v9344 = vpop.f32.mrf.mxu0
      %v9345 = vadd.f32 0.0, %v9344
      %v9346 = vpop.f32.mrf.mxu0
      %v9347 = vadd.f32 0.0, %v9346
      %9348 = vdwg.mxu0
      %v9349 = vadd.f32 %v8696, %v9270
      %v9350 = vadd.f32 %v8697, %v9272
      %v9351 = vadd.f32 %v8698, %v9275
      %v9352 = vadd.f32 %v8699, %v9277
      %v9353 = vadd.f32 %v8700, %v9280
      %v9354 = vadd.f32 %v8701, %v9282
      %v9355 = vadd.f32 %v8702, %v9285
      %v9356 = vadd.f32 %v8703, %v9287
      %v9357 = vadd.f32 %v8704, %v9290
      %v9358 = vadd.f32 %v8705, %v9292
      %v9359 = vadd.f32 %v8706, %v9295
      %v9360 = vadd.f32 %v8707, %v9297
      %v9361 = vadd.f32 %v8708, %v9300
      %v9362 = vadd.f32 %v8709, %v9302
      %v9363 = vadd.f32 %v8710, %v9305
      %v9364 = vadd.f32 %v8711, %v9307
      %v9365 = vadd.f32 %v8712, %v9310
      %v9366 = vadd.f32 %v8713, %v9312
      %v9367 = vadd.f32 %v8714, %v9315
      %v9368 = vadd.f32 %v8715, %v9317
      %v9369 = vadd.f32 %v8716, %v9320
      %v9370 = vadd.f32 %v8717, %v9322
      %v9371 = vadd.f32 %v8718, %v9325
      %v9372 = vadd.f32 %v8719, %v9327
      %v9373 = vadd.f32 %v8720, %v9330
      %v9374 = vadd.f32 %v8721, %v9332
      %v9375 = vadd.f32 %v8722, %v9335
      %v9376 = vadd.f32 %v8723, %v9337
      %v9377 = vadd.f32 %v8724, %v9340
      %v9378 = vadd.f32 %v8725, %v9342
      %v9379 = vadd.f32 %v8726, %v9345
      %v9380 = vadd.f32 %v8727, %v9347
      %v9381 = vld [vmem:[%s6] sm:$0x1]
      %v9383 = vperm.slane %v9381, 0
      %v9385 = vadd.f32 %v9349, %v9383
      %v9386 = vadd.f32 %v9350, %v9383
      %v9387 = vadd.f32 %v9351, %v9383
      %v9388 = vadd.f32 %v9352, %v9383
      %v9389 = vadd.f32 %v9353, %v9383
      %v9390 = vadd.f32 %v9354, %v9383
      %v9391 = vadd.f32 %v9355, %v9383
      %v9392 = vadd.f32 %v9356, %v9383
      %v9393 = vadd.f32 %v9357, %v9383
      %v9394 = vadd.f32 %v9358, %v9383
      %v9395 = vadd.f32 %v9359, %v9383
      %v9396 = vadd.f32 %v9360, %v9383
      %v9397 = vadd.f32 %v9361, %v9383
      %v9398 = vadd.f32 %v9362, %v9383
      %v9399 = vadd.f32 %v9363, %v9383
      %v9400 = vadd.f32 %v9364, %v9383
      %v9401 = vadd.f32 %v9365, %v9383
      %v9402 = vadd.f32 %v9366, %v9383
      %v9403 = vadd.f32 %v9367, %v9383
      %v9404 = vadd.f32 %v9368, %v9383
      %v9405 = vadd.f32 %v9369, %v9383
      %v9406 = vadd.f32 %v9370, %v9383
      %v9407 = vadd.f32 %v9371, %v9383
      %v9408 = vadd.f32 %v9372, %v9383
      %v9409 = vadd.f32 %v9373, %v9383
      %v9410 = vadd.f32 %v9374, %v9383
      %v9411 = vadd.f32 %v9375, %v9383
      %v9412 = vadd.f32 %v9376, %v9383
      %v9413 = vadd.f32 %v9377, %v9383
      %v9414 = vadd.f32 %v9378, %v9383
      %v9415 = vadd.f32 %v9379, %v9383
      %v9416 = vadd.f32 %v9380, %v9383
      %v9417 = vmax.f32 %v9385, 0.0
      %v9418 = vmax.f32 %v9386, 0.0
      %v9419 = vmax.f32 %v9387, 0.0
      %v9420 = vmax.f32 %v9388, 0.0
      %v9421 = vmax.f32 %v9389, 0.0
      %v9422 = vmax.f32 %v9390, 0.0
      %v9423 = vmax.f32 %v9391, 0.0
      %v9424 = vmax.f32 %v9392, 0.0
      %v9425 = vmax.f32 %v9393, 0.0
      %v9426 = vmax.f32 %v9394, 0.0
      %v9427 = vmax.f32 %v9395, 0.0
      %v9428 = vmax.f32 %v9396, 0.0
      %v9429 = vmax.f32 %v9397, 0.0
      %v9430 = vmax.f32 %v9398, 0.0
      %v9431 = vmax.f32 %v9399, 0.0
      %v9432 = vmax.f32 %v9400, 0.0
      %v9433 = vmax.f32 %v9401, 0.0
      %v9434 = vmax.f32 %v9402, 0.0
      %v9435 = vmax.f32 %v9403, 0.0
      %v9436 = vmax.f32 %v9404, 0.0
      %v9437 = vmax.f32 %v9405, 0.0
      %v9438 = vmax.f32 %v9406, 0.0
      %v9439 = vmax.f32 %v9407, 0.0
      %v9440 = vmax.f32 %v9408, 0.0
      %v9441 = vmax.f32 %v9409, 0.0
      %v9442 = vmax.f32 %v9410, 0.0
      %v9443 = vmax.f32 %v9411, 0.0
      %v9444 = vmax.f32 %v9412, 0.0
      %v9445 = vmax.f32 %v9413, 0.0
      %v9446 = vmax.f32 %v9414, 0.0
      %v9447 = vmax.f32 %v9415, 0.0
      %v9448 = vmax.f32 %v9416, 0.0
      %9449 = vst.msk [vmem:[%s278] sm:$0xff] %vm5271, %v9417
      %9450 = vst.msk [vmem:[%s278 + $0x8] sm:$0xff] %vm5271, %v9418
      %9451 = vst.msk [vmem:[%s278 + $0x10] sm:$0xff] %vm5271, %v9419
      %9452 = vst.msk [vmem:[%s278 + $0x18] sm:$0xff] %vm5271, %v9420
      %9453 = vst.msk [vmem:[%s278 + $0x20] sm:$0xff] %vm5271, %v9421
      %9454 = vst.msk [vmem:[%s278 + $0x28] sm:$0xff] %vm5271, %v9422
      %9455 = vst.msk [vmem:[%s278 + $0x30] sm:$0xff] %vm5271, %v9423
      %9456 = vst.msk [vmem:[%s278 + $0x38] sm:$0xff] %vm5271, %v9424
      %9457 = vst.msk [vmem:[%s278 + $0x40] sm:$0xff] %vm5271, %v9425
      %9458 = vst.msk [vmem:[%s278 + $0x48] sm:$0xff] %vm5271, %v9426
      %9459 = vst.msk [vmem:[%s278 + $0x50] sm:$0xff] %vm5271, %v9427
      %9460 = vst.msk [vmem:[%s278 + $0x58] sm:$0xff] %vm5271, %v9428
      %9461 = vst.msk [vmem:[%s278 + $0x60] sm:$0xff] %vm5271, %v9429
      %9462 = vst.msk [vmem:[%s278 + $0x68] sm:$0xff] %vm5271, %v9430
      %9463 = vst.msk [vmem:[%s278 + $0x70] sm:$0xff] %vm5271, %v9431
      %9464 = vst.msk [vmem:[%s278 + $0x78] sm:$0xff] %vm5271, %v9432
      %9465 = vst.msk [vmem:[%s278 + $0x80] sm:$0xff] %vm5271, %v9433
      %9466 = vst.msk [vmem:[%s278 + $0x88] sm:$0xff] %vm5271, %v9434
      %9467 = vst.msk [vmem:[%s278 + $0x90] sm:$0xff] %vm5271, %v9435
      %9468 = vst.msk [vmem:[%s278 + $0x98] sm:$0xff] %vm5271, %v9436
      %9469 = vst.msk [vmem:[%s278 + $0xa0] sm:$0xff] %vm5271, %v9437
      %9470 = vst.msk [vmem:[%s278 + $0xa8] sm:$0xff] %vm5271, %v9438
      %9471 = vst.msk [vmem:[%s278 + $0xb0] sm:$0xff] %vm5271, %v9439
      %9472 = vst.msk [vmem:[%s278 + $0xb8] sm:$0xff] %vm5271, %v9440
      %9473 = vst.msk [vmem:[%s278 + $0xc0] sm:$0xff] %vm5271, %v9441
      %9474 = vst.msk [vmem:[%s278 + $0xc8] sm:$0xff] %vm5271, %v9442
      %9475 = vst.msk [vmem:[%s278 + $0xd0] sm:$0xff] %vm5271, %v9443
      %9476 = vst.msk [vmem:[%s278 + $0xd8] sm:$0xff] %vm5271, %v9444
      %9477 = vst.msk [vmem:[%s278 + $0xe0] sm:$0xff] %vm5271, %v9445
      %9478 = vst.msk [vmem:[%s278 + $0xe8] sm:$0xff] %vm5271, %v9446
      %9479 = vst.msk [vmem:[%s278 + $0xf0] sm:$0xff] %vm5271, %v9447
      %9480 = vst.msk [vmem:[%s278 + $0xf8] sm:$0xff] %vm5271, %v9448
      %p9481 = scmp.lt.s32.totalorder %s18, 1
      %s9482 = scalar_select %p9481, %s18, 1
      %s9483 = smul.addr %s9482, 32
      %s9484 = smul.addr %s9483, 8
      %s9485 = scalar_lea.vmem %s7, %s9484
      // Predicated region
      $region49: #{basic_block_forward.1} parent=47 // pred_check
        %p9486 = pneg %p188
      $region50: #{basic_block_forward.1} parent=47 // pred_check_branch
        %9488 = sbr.rel (%p9486) target = $region52
      $region51: #{basic_block_forward.1} parent=47 // pred_region
        _
      $region52: #{basic_block_forward.1} parent=47 // pred_fallthru
        _
    $region48: #{basic_block_forward.1} parent=5 // pred_fallthru
      _
    %p9489 = scmp.le.s32.totalorder 2, %s13
    // Predicated region
    $region53: #{basic_block_forward.1} parent=5 // pred_check
      %p9490 = pneg %p9489
    $region54: #{basic_block_forward.1} parent=5 // pred_check_branch
      %9492 = sbr.rel (%p9490) target = $region56
    $region55: #{basic_block_forward.1} parent=5 // pred_region
      %s9493 = ssub.s32 %s13, 2
      // Predicated region
      $region57: #{basic_block_forward.1} parent=55 // pred_check
        %p9494 = pneg %p194
      $region58: #{basic_block_forward.1} parent=55 // pred_check_branch
        %9496 = sbr.rel (%p9494) target = $region60
      $region59: #{basic_block_forward.1} parent=55 // pred_region
        %p9497 = scmp.lt.s32.totalorder %s19, 1
        %s9498 = scalar_select %p9497, %s19, 1
        %s9499 = smul.addr %s9498, 32
        %s9500 = smul.addr %s9499, 8
        %s9501 = scalar_lea.vmem %s7, %s9500
      $region60: #{basic_block_forward.1} parent=55 // pred_fallthru
        _
    $region56: #{basic_block_forward.1} parent=5 // pred_fallthru
      _
  $region6: #{basic_block_forward.1} parent=0 // loop_footer
    %s17 = sadd.s32 1, %s13
  $region7: #{basic_block_forward.1} parent=0 // loop_footer_branch
    %12 = sbr.rel target = $region3
  $region8: #{basic_block_forward.1} parent=0 // loop_exit
    _

</llo_original>
